<compile_context>
chip_gen: v7x
topology: tpu7x:2x2x1
jax: 0.10.0
libtpu: 0.0.40
codegen_flags: <defaults>
</compile_context>

<pallas_src>
import functools

import jax
import jax.numpy as jnp
from jax.experimental import pallas as pl
from jax.experimental.pallas import tpu as pltpu


def conv_v_kernel(x_ref, w_ref, scale_ref, bias_ref, o_ref, *,
                  fh, fw, c_in, h_out, w_out):
    """One grid step == one batch sample.  Lane axis = time (W).

    x_ref:     (1, C_in, H, W_pad)   NCHW input tile, W lane-dense (VMEM)
    w_ref:     (C_out, C_in*fh*fw)   conv weights, one column per tap
    scale_ref: (C_out, 1)            folded BN scale
    bias_ref:  (C_out, 1)            folded BN bias (includes conv bias)
    o_ref:     (1, C_out, W_out)     output tile (freq max already applied), lane-dense
    """
    x = x_ref[0]                     # (C_in, H, W_pad)
    scale = scale_ref[...]           # (C_out, 1)
    bias = bias_ref[...]             # (C_out, 1)
    w = w_ref[...]                   # (C_out, K)

    # Hoist the per-tap weight columns once (static lane slices, reused by every row).
    wcols = [w[:, k:k + 1] for k in range(c_in * fh * fw)]   # each (C_out, 1)

    run_max = None
    # Incremental max over the freq (H) axis: accumulator is only (C_out, W_out).
    for h0 in range(h_out):
        acc = None
        for ci in range(c_in):
            for kh in range(fh):
                row = x[ci, h0 + kh:h0 + kh + 1, :]          # (1, W_pad)
                for kw in range(fw):
                    k = (ci * fh + kh) * fw + kw
                    seg = row[:, kw:kw + w_out]              # (1, W_out), static slice
                    tap = wcols[k] * seg                     # (C_out, W_out) outer product (VPU)
                    acc = tap if acc is None else acc + tap
        y = jnp.maximum(acc * scale + bias, 0.0)             # folded BN + ReLU
        run_max = y if run_max is None else jnp.maximum(run_max, y)

    o_ref[0] = run_max                                       # (C_out, W_out), lane-dense write


def conv_v_forward(x_nchw, weight, conv_bias, gamma, beta, running_mean, running_var,
                   eps=1e-5):
    """Forward pass matching Conv_V.forward (inference-mode BN).

    x_nchw: (N, C_in, H, W) float32
    weight: (C_out, C_in, fh, fw) float32 (PyTorch conv weight layout)
    returns: (N, C_out, W_out) float32  (== PyTorch `out.squeeze(2)`)
    """
    n, c_in, h, w = x_nchw.shape
    c_out, _, fh, fw = weight.shape
    pad_w = fw // 2
    h_out = h - fh + 1
    w_out = w + 2 * pad_w - fw + 1
    w_pad = w + 2 * pad_w

    # Glue: only W-padding; input stays NCHW (W stays on the lane axis).
    x_pad = jnp.pad(x_nchw, ((0, 0), (0, 0), (0, 0), (pad_w, pad_w)))
    # One weight column per tap, indexed k = (ci*fh + kh)*fw + kw (row-major flatten).
    w2 = weight.reshape(c_out, c_in * fh * fw)

    # Fold BatchNorm (running stats) + conv bias into per-channel scale/bias, (C_out, 1).
    inv_std = 1.0 / jnp.sqrt(running_var + eps)
    scale = (gamma * inv_std).reshape(c_out, 1)
    bias = (beta + (conv_bias - running_mean) * gamma * inv_std).reshape(c_out, 1)

    kernel = functools.partial(conv_v_kernel, fh=fh, fw=fw, c_in=c_in,
                               h_out=h_out, w_out=w_out)

    out = pl.pallas_call(
        kernel,
        out_shape=jax.ShapeDtypeStruct((n, c_out, w_out), jnp.float32),
        grid=(n,),
        in_specs=[
            pl.BlockSpec((1, c_in, h, w_pad), lambda b: (b, 0, 0, 0)),
            pl.BlockSpec((c_out, c_in * fh * fw), lambda b: (0, 0)),
            pl.BlockSpec((c_out, 1), lambda b: (0, 0)),
            pl.BlockSpec((c_out, 1), lambda b: (0, 0)),
        ],
        out_specs=pl.BlockSpec((1, c_out, w_out), lambda b: (b, 0, 0)),
        compiler_params=pltpu.CompilerParams(
            dimension_semantics=("parallel",),
            vmem_limit_bytes=32 * 1024 * 1024,
        ),
    )(x_pad, w2, scale, bias)

    # Already (N, C_out, W_out): no wrapper transpose needed.
    return out


def conv_v_reference(x, weight, conv_bias, gamma, beta, running_mean, running_var,
                     eps=1e-5):
    """Pure-JAX reference (inference-mode BN), for a correctness check."""
    pad_w = weight.shape[-1] // 2
    y = jax.lax.conv_general_dilated(
        x, weight, window_strides=(1, 1),
        padding=((0, 0), (pad_w, pad_w)),
        dimension_numbers=("NCHW", "OIHW", "NCHW"),
        precision=jax.lax.Precision.HIGHEST)
    y = y + conv_bias[None, :, None, None]
    inv_std = 1.0 / jnp.sqrt(running_var + eps)
    y = ((y - running_mean[None, :, None, None]) * (gamma * inv_std)[None, :, None, None]
         + beta[None, :, None, None])
    y = jnp.maximum(y, 0.0)
    return jnp.max(y, axis=2)        # MaxPool2d((freq,1)) + squeeze(2) -> (N, C_out, W_out)


if __name__ == "__main__":
    # Small deterministic shapes consistent with the module.
    N, C_in, H, W = 2, 4, 16, 16
    C_out = 8
    fh, fw = 3, 3

    key = jax.random.PRNGKey(0)
    kx, kw_, kb, kg, kbe, km, kv = jax.random.split(key, 7)

    x = jax.random.normal(kx, (N, C_in, H, W), dtype=jnp.float32)
    weight = jax.random.normal(kw_, (C_out, C_in, fh, fw), dtype=jnp.float32) * 0.1
    conv_bias = jax.random.normal(kb, (C_out,), dtype=jnp.float32) * 0.1
    gamma = 1.0 + 0.1 * jax.random.normal(kg, (C_out,), dtype=jnp.float32)
    beta = 0.1 * jax.random.normal(kbe, (C_out,), dtype=jnp.float32)
    running_mean = 0.1 * jax.random.normal(km, (C_out,), dtype=jnp.float32)
    running_var = 1.0 + 0.1 * jax.random.uniform(kv, (C_out,), dtype=jnp.float32)

    out = conv_v_forward(x, weight, conv_bias, gamma, beta, running_mean, running_var)
    out = jax.block_until_ready(out)
    assert out.shape == (N, C_out, W), out.shape

    ref = conv_v_reference(x, weight, conv_bias, gamma, beta, running_mean, running_var)
    ref = jax.block_until_ready(ref)
    max_err = float(jnp.max(jnp.abs(out - ref)))
    assert max_err < 1e-3, f"max abs error vs reference: {max_err}"

    print("KERNEL_OK")
</pallas_src>

<mosaic_0001>
module attributes {stable_mosaic.version = 11 : i64} {
  func.func @conv_v_kernel(%arg0: i32, %arg1: memref<1x4x16x18xf32, #tpu.memory_space<vmem>>, %arg2: memref<8x36xf32, #tpu.memory_space<vmem>>, %arg3: memref<8x1xf32, #tpu.memory_space<vmem>>, %arg4: memref<8x1xf32, #tpu.memory_space<vmem>>, %arg5: memref<1x8x16xf32, #tpu.memory_space<vmem>>) attributes {dimension_semantics = [#tpu.dimension_semantics<parallel>], iteration_bounds = array<i64: 2>, scalar_prefetch = 0 : i64, scratch_operands = 0 : i64, tpu.core_type = #tpu.core_type<tc>, window_params = [{transform_indices = @transform_0, window_bounds = array<i64: 1, 4, 16, 18>}, {pipeline_mode = #tpu.pipeline_mode<synchronous>, transform_indices = @transform_1, window_bounds = array<i64: 8, 36>}, {pipeline_mode = #tpu.pipeline_mode<synchronous>, transform_indices = @transform_2, window_bounds = array<i64: 8, 1>}, {pipeline_mode = #tpu.pipeline_mode<synchronous>, transform_indices = @transform_3, window_bounds = array<i64: 8, 1>}, {transform_indices = @transform_4, window_bounds = array<i64: 1, 8, 16>}]} {
    %c0 = arith.constant 0 : index
    %c0_0 = arith.constant 0 : index
    %c0_1 = arith.constant 0 : index
    %c0_2 = arith.constant 0 : index
    %0 = vector.load %arg1[%c0, %c0_0, %c0_1, %c0_2] : memref<1x4x16x18xf32, #tpu.memory_space<vmem>>, vector<1x4x16x18xf32>
    %1 = vector.shape_cast %0 : vector<1x4x16x18xf32> to vector<4x16x18xf32>
    %c0_3 = arith.constant 0 : index
    %c0_4 = arith.constant 0 : index
    %2 = vector.load %arg3[%c0_3, %c0_4] : memref<8x1xf32, #tpu.memory_space<vmem>>, vector<8x1xf32>
    %c0_5 = arith.constant 0 : index
    %c0_6 = arith.constant 0 : index
    %3 = vector.load %arg4[%c0_5, %c0_6] : memref<8x1xf32, #tpu.memory_space<vmem>>, vector<8x1xf32>
    %c0_7 = arith.constant 0 : index
    %c0_8 = arith.constant 0 : index
    %4 = vector.load %arg2[%c0_7, %c0_8] : memref<8x36xf32, #tpu.memory_space<vmem>>, vector<8x36xf32>
    %5 = vector.extract_strided_slice %4 {offsets = [0, 0], sizes = [8, 1], strides = [1, 1]} : vector<8x36xf32> to vector<8x1xf32>
    %6 = vector.extract_strided_slice %4 {offsets = [0, 1], sizes = [8, 1], strides = [1, 1]} : vector<8x36xf32> to vector<8x1xf32>
    %7 = vector.extract_strided_slice %4 {offsets = [0, 2], sizes = [8, 1], strides = [1, 1]} : vector<8x36xf32> to vector<8x1xf32>
    %8 = vector.extract_strided_slice %4 {offsets = [0, 3], sizes = [8, 1], strides = [1, 1]} : vector<8x36xf32> to vector<8x1xf32>
    %9 = vector.extract_strided_slice %4 {offsets = [0, 4], sizes = [8, 1], strides = [1, 1]} : vector<8x36xf32> to vector<8x1xf32>
    %10 = vector.extract_strided_slice %4 {offsets = [0, 5], sizes = [8, 1], strides = [1, 1]} : vector<8x36xf32> to vector<8x1xf32>
    %11 = vector.extract_strided_slice %4 {offsets = [0, 6], sizes = [8, 1], strides = [1, 1]} : vector<8x36xf32> to vector<8x1xf32>
    %12 = vector.extract_strided_slice %4 {offsets = [0, 7], sizes = [8, 1], strides = [1, 1]} : vector<8x36xf32> to vector<8x1xf32>
    %13 = vector.extract_strided_slice %4 {offsets = [0, 8], sizes = [8, 1], strides = [1, 1]} : vector<8x36xf32> to vector<8x1xf32>
    %14 = vector.extract_strided_slice %4 {offsets = [0, 9], sizes = [8, 1], strides = [1, 1]} : vector<8x36xf32> to vector<8x1xf32>
    %15 = vector.extract_strided_slice %4 {offsets = [0, 10], sizes = [8, 1], strides = [1, 1]} : vector<8x36xf32> to vector<8x1xf32>
    %16 = vector.extract_strided_slice %4 {offsets = [0, 11], sizes = [8, 1], strides = [1, 1]} : vector<8x36xf32> to vector<8x1xf32>
    %17 = vector.extract_strided_slice %4 {offsets = [0, 12], sizes = [8, 1], strides = [1, 1]} : vector<8x36xf32> to vector<8x1xf32>
    %18 = vector.extract_strided_slice %4 {offsets = [0, 13], sizes = [8, 1], strides = [1, 1]} : vector<8x36xf32> to vector<8x1xf32>
    %19 = vector.extract_strided_slice %4 {offsets = [0, 14], sizes = [8, 1], strides = [1, 1]} : vector<8x36xf32> to vector<8x1xf32>
    %20 = vector.extract_strided_slice %4 {offsets = [0, 15], sizes = [8, 1], strides = [1, 1]} : vector<8x36xf32> to vector<8x1xf32>
    %21 = vector.extract_strided_slice %4 {offsets = [0, 16], sizes = [8, 1], strides = [1, 1]} : vector<8x36xf32> to vector<8x1xf32>
    %22 = vector.extract_strided_slice %4 {offsets = [0, 17], sizes = [8, 1], strides = [1, 1]} : vector<8x36xf32> to vector<8x1xf32>
    %23 = vector.extract_strided_slice %4 {offsets = [0, 18], sizes = [8, 1], strides = [1, 1]} : vector<8x36xf32> to vector<8x1xf32>
    %24 = vector.extract_strided_slice %4 {offsets = [0, 19], sizes = [8, 1], strides = [1, 1]} : vector<8x36xf32> to vector<8x1xf32>
    %25 = vector.extract_strided_slice %4 {offsets = [0, 20], sizes = [8, 1], strides = [1, 1]} : vector<8x36xf32> to vector<8x1xf32>
    %26 = vector.extract_strided_slice %4 {offsets = [0, 21], sizes = [8, 1], strides = [1, 1]} : vector<8x36xf32> to vector<8x1xf32>
    %27 = vector.extract_strided_slice %4 {offsets = [0, 22], sizes = [8, 1], strides = [1, 1]} : vector<8x36xf32> to vector<8x1xf32>
    %28 = vector.extract_strided_slice %4 {offsets = [0, 23], sizes = [8, 1], strides = [1, 1]} : vector<8x36xf32> to vector<8x1xf32>
    %29 = vector.extract_strided_slice %4 {offsets = [0, 24], sizes = [8, 1], strides = [1, 1]} : vector<8x36xf32> to vector<8x1xf32>
    %30 = vector.extract_strided_slice %4 {offsets = [0, 25], sizes = [8, 1], strides = [1, 1]} : vector<8x36xf32> to vector<8x1xf32>
    %31 = vector.extract_strided_slice %4 {offsets = [0, 26], sizes = [8, 1], strides = [1, 1]} : vector<8x36xf32> to vector<8x1xf32>
    %32 = vector.extract_strided_slice %4 {offsets = [0, 27], sizes = [8, 1], strides = [1, 1]} : vector<8x36xf32> to vector<8x1xf32>
    %33 = vector.extract_strided_slice %4 {offsets = [0, 28], sizes = [8, 1], strides = [1, 1]} : vector<8x36xf32> to vector<8x1xf32>
    %34 = vector.extract_strided_slice %4 {offsets = [0, 29], sizes = [8, 1], strides = [1, 1]} : vector<8x36xf32> to vector<8x1xf32>
    %35 = vector.extract_strided_slice %4 {offsets = [0, 30], sizes = [8, 1], strides = [1, 1]} : vector<8x36xf32> to vector<8x1xf32>
    %36 = vector.extract_strided_slice %4 {offsets = [0, 31], sizes = [8, 1], strides = [1, 1]} : vector<8x36xf32> to vector<8x1xf32>
    %37 = vector.extract_strided_slice %4 {offsets = [0, 32], sizes = [8, 1], strides = [1, 1]} : vector<8x36xf32> to vector<8x1xf32>
    %38 = vector.extract_strided_slice %4 {offsets = [0, 33], sizes = [8, 1], strides = [1, 1]} : vector<8x36xf32> to vector<8x1xf32>
    %39 = vector.extract_strided_slice %4 {offsets = [0, 34], sizes = [8, 1], strides = [1, 1]} : vector<8x36xf32> to vector<8x1xf32>
    %40 = vector.extract_strided_slice %4 {offsets = [0, 35], sizes = [8, 1], strides = [1, 1]} : vector<8x36xf32> to vector<8x1xf32>
    %41 = vector.extract_strided_slice %1 {offsets = [0, 0, 0], sizes = [1, 1, 18], strides = [1, 1, 1]} : vector<4x16x18xf32> to vector<1x1x18xf32>
    %42 = vector.shape_cast %41 : vector<1x1x18xf32> to vector<1x18xf32>
    %43 = vector.extract_strided_slice %42 {offsets = [0, 0], sizes = [1, 16], strides = [1, 1]} : vector<1x18xf32> to vector<1x16xf32>
    %44 = vector.broadcast %5 : vector<8x1xf32> to vector<8x16xf32>
    %45 = vector.broadcast %43 : vector<1x16xf32> to vector<8x16xf32>
    %46 = arith.mulf %44, %45 : vector<8x16xf32>
    %47 = vector.extract_strided_slice %42 {offsets = [0, 1], sizes = [1, 16], strides = [1, 1]} : vector<1x18xf32> to vector<1x16xf32>
    %48 = vector.broadcast %6 : vector<8x1xf32> to vector<8x16xf32>
    %49 = vector.broadcast %47 : vector<1x16xf32> to vector<8x16xf32>
    %50 = arith.mulf %48, %49 : vector<8x16xf32>
    %51 = arith.addf %46, %50 : vector<8x16xf32>
    %52 = vector.extract_strided_slice %42 {offsets = [0, 2], sizes = [1, 16], strides = [1, 1]} : vector<1x18xf32> to vector<1x16xf32>
    %53 = vector.broadcast %7 : vector<8x1xf32> to vector<8x16xf32>
    %54 = vector.broadcast %52 : vector<1x16xf32> to vector<8x16xf32>
    %55 = arith.mulf %53, %54 : vector<8x16xf32>
    %56 = arith.addf %51, %55 : vector<8x16xf32>
    %57 = vector.extract_strided_slice %1 {offsets = [0, 1, 0], sizes = [1, 1, 18], strides = [1, 1, 1]} : vector<4x16x18xf32> to vector<1x1x18xf32>
    %58 = vector.shape_cast %57 : vector<1x1x18xf32> to vector<1x18xf32>
    %59 = vector.extract_strided_slice %58 {offsets = [0, 0], sizes = [1, 16], strides = [1, 1]} : vector<1x18xf32> to vector<1x16xf32>
    %60 = vector.broadcast %8 : vector<8x1xf32> to vector<8x16xf32>
    %61 = vector.broadcast %59 : vector<1x16xf32> to vector<8x16xf32>
    %62 = arith.mulf %60, %61 : vector<8x16xf32>
    %63 = arith.addf %56, %62 : vector<8x16xf32>
    %64 = vector.extract_strided_slice %58 {offsets = [0, 1], sizes = [1, 16], strides = [1, 1]} : vector<1x18xf32> to vector<1x16xf32>
    %65 = vector.broadcast %9 : vector<8x1xf32> to vector<8x16xf32>
    %66 = vector.broadcast %64 : vector<1x16xf32> to vector<8x16xf32>
    %67 = arith.mulf %65, %66 : vector<8x16xf32>
    %68 = arith.addf %63, %67 : vector<8x16xf32>
    %69 = vector.extract_strided_slice %58 {offsets = [0, 2], sizes = [1, 16], strides = [1, 1]} : vector<1x18xf32> to vector<1x16xf32>
    %70 = vector.broadcast %10 : vector<8x1xf32> to vector<8x16xf32>
    %71 = vector.broadcast %69 : vector<1x16xf32> to vector<8x16xf32>
    %72 = arith.mulf %70, %71 : vector<8x16xf32>
    %73 = arith.addf %68, %72 : vector<8x16xf32>
    %74 = vector.extract_strided_slice %1 {offsets = [0, 2, 0], sizes = [1, 1, 18], strides = [1, 1, 1]} : vector<4x16x18xf32> to vector<1x1x18xf32>
    %75 = vector.shape_cast %74 : vector<1x1x18xf32> to vector<1x18xf32>
    %76 = vector.extract_strided_slice %75 {offsets = [0, 0], sizes = [1, 16], strides = [1, 1]} : vector<1x18xf32> to vector<1x16xf32>
    %77 = vector.broadcast %11 : vector<8x1xf32> to vector<8x16xf32>
    %78 = vector.broadcast %76 : vector<1x16xf32> to vector<8x16xf32>
    %79 = arith.mulf %77, %78 : vector<8x16xf32>
    %80 = arith.addf %73, %79 : vector<8x16xf32>
    %81 = vector.extract_strided_slice %75 {offsets = [0, 1], sizes = [1, 16], strides = [1, 1]} : vector<1x18xf32> to vector<1x16xf32>
    %82 = vector.broadcast %12 : vector<8x1xf32> to vector<8x16xf32>
    %83 = vector.broadcast %81 : vector<1x16xf32> to vector<8x16xf32>
    %84 = arith.mulf %82, %83 : vector<8x16xf32>
    %85 = arith.addf %80, %84 : vector<8x16xf32>
    %86 = vector.extract_strided_slice %75 {offsets = [0, 2], sizes = [1, 16], strides = [1, 1]} : vector<1x18xf32> to vector<1x16xf32>
    %87 = vector.broadcast %13 : vector<8x1xf32> to vector<8x16xf32>
    %88 = vector.broadcast %86 : vector<1x16xf32> to vector<8x16xf32>
    %89 = arith.mulf %87, %88 : vector<8x16xf32>
    %90 = arith.addf %85, %89 : vector<8x16xf32>
    %91 = vector.extract_strided_slice %1 {offsets = [1, 0, 0], sizes = [1, 1, 18], strides = [1, 1, 1]} : vector<4x16x18xf32> to vector<1x1x18xf32>
    %92 = vector.shape_cast %91 : vector<1x1x18xf32> to vector<1x18xf32>
    %93 = vector.extract_strided_slice %92 {offsets = [0, 0], sizes = [1, 16], strides = [1, 1]} : vector<1x18xf32> to vector<1x16xf32>
    %94 = vector.broadcast %14 : vector<8x1xf32> to vector<8x16xf32>
    %95 = vector.broadcast %93 : vector<1x16xf32> to vector<8x16xf32>
    %96 = arith.mulf %94, %95 : vector<8x16xf32>
    %97 = arith.addf %90, %96 : vector<8x16xf32>
    %98 = vector.extract_strided_slice %92 {offsets = [0, 1], sizes = [1, 16], strides = [1, 1]} : vector<1x18xf32> to vector<1x16xf32>
    %99 = vector.broadcast %15 : vector<8x1xf32> to vector<8x16xf32>
    %100 = vector.broadcast %98 : vector<1x16xf32> to vector<8x16xf32>
    %101 = arith.mulf %99, %100 : vector<8x16xf32>
    %102 = arith.addf %97, %101 : vector<8x16xf32>
    %103 = vector.extract_strided_slice %92 {offsets = [0, 2], sizes = [1, 16], strides = [1, 1]} : vector<1x18xf32> to vector<1x16xf32>
    %104 = vector.broadcast %16 : vector<8x1xf32> to vector<8x16xf32>
    %105 = vector.broadcast %103 : vector<1x16xf32> to vector<8x16xf32>
    %106 = arith.mulf %104, %105 : vector<8x16xf32>
    %107 = arith.addf %102, %106 : vector<8x16xf32>
    %108 = vector.extract_strided_slice %1 {offsets = [1, 1, 0], sizes = [1, 1, 18], strides = [1, 1, 1]} : vector<4x16x18xf32> to vector<1x1x18xf32>
    %109 = vector.shape_cast %108 : vector<1x1x18xf32> to vector<1x18xf32>
    %110 = vector.extract_strided_slice %109 {offsets = [0, 0], sizes = [1, 16], strides = [1, 1]} : vector<1x18xf32> to vector<1x16xf32>
    %111 = vector.broadcast %17 : vector<8x1xf32> to vector<8x16xf32>
    %112 = vector.broadcast %110 : vector<1x16xf32> to vector<8x16xf32>
    %113 = arith.mulf %111, %112 : vector<8x16xf32>
    %114 = arith.addf %107, %113 : vector<8x16xf32>
    %115 = vector.extract_strided_slice %109 {offsets = [0, 1], sizes = [1, 16], strides = [1, 1]} : vector<1x18xf32> to vector<1x16xf32>
    %116 = vector.broadcast %18 : vector<8x1xf32> to vector<8x16xf32>
    %117 = vector.broadcast %115 : vector<1x16xf32> to vector<8x16xf32>
    %118 = arith.mulf %116, %117 : vector<8x16xf32>
    %119 = arith.addf %114, %118 : vector<8x16xf32>
    %120 = vector.extract_strided_slice %109 {offsets = [0, 2], sizes = [1, 16], strides = [1, 1]} : vector<1x18xf32> to vector<1x16xf32>
    %121 = vector.broadcast %19 : vector<8x1xf32> to vector<8x16xf32>
    %122 = vector.broadcast %120 : vector<1x16xf32> to vector<8x16xf32>
    %123 = arith.mulf %121, %122 : vector<8x16xf32>
    %124 = arith.addf %119, %123 : vector<8x16xf32>
    %125 = vector.extract_strided_slice %1 {offsets = [1, 2, 0], sizes = [1, 1, 18], strides = [1, 1, 1]} : vector<4x16x18xf32> to vector<1x1x18xf32>
    %126 = vector.shape_cast %125 : vector<1x1x18xf32> to vector<1x18xf32>
    %127 = vector.extract_strided_slice %126 {offsets = [0, 0], sizes = [1, 16], strides = [1, 1]} : vector<1x18xf32> to vector<1x16xf32>
    %128 = vector.broadcast %20 : vector<8x1xf32> to vector<8x16xf32>
    %129 = vector.broadcast %127 : vector<1x16xf32> to vector<8x16xf32>
    %130 = arith.mulf %128, %129 : vector<8x16xf32>
    %131 = arith.addf %124, %130 : vector<8x16xf32>
    %132 = vector.extract_strided_slice %126 {offsets = [0, 1], sizes = [1, 16], strides = [1, 1]} : vector<1x18xf32> to vector<1x16xf32>
    %133 = vector.broadcast %21 : vector<8x1xf32> to vector<8x16xf32>
    %134 = vector.broadcast %132 : vector<1x16xf32> to vector<8x16xf32>
    %135 = arith.mulf %133, %134 : vector<8x16xf32>
    %136 = arith.addf %131, %135 : vector<8x16xf32>
    %137 = vector.extract_strided_slice %126 {offsets = [0, 2], sizes = [1, 16], strides = [1, 1]} : vector<1x18xf32> to vector<1x16xf32>
    %138 = vector.broadcast %22 : vector<8x1xf32> to vector<8x16xf32>
    %139 = vector.broadcast %137 : vector<1x16xf32> to vector<8x16xf32>
    %140 = arith.mulf %138, %139 : vector<8x16xf32>
    %141 = arith.addf %136, %140 : vector<8x16xf32>
    %142 = vector.extract_strided_slice %1 {offsets = [2, 0, 0], sizes = [1, 1, 18], strides = [1, 1, 1]} : vector<4x16x18xf32> to vector<1x1x18xf32>
    %143 = vector.shape_cast %142 : vector<1x1x18xf32> to vector<1x18xf32>
    %144 = vector.extract_strided_slice %143 {offsets = [0, 0], sizes = [1, 16], strides = [1, 1]} : vector<1x18xf32> to vector<1x16xf32>
    %145 = vector.broadcast %23 : vector<8x1xf32> to vector<8x16xf32>
    %146 = vector.broadcast %144 : vector<1x16xf32> to vector<8x16xf32>
    %147 = arith.mulf %145, %146 : vector<8x16xf32>
    %148 = arith.addf %141, %147 : vector<8x16xf32>
    %149 = vector.extract_strided_slice %143 {offsets = [0, 1], sizes = [1, 16], strides = [1, 1]} : vector<1x18xf32> to vector<1x16xf32>
    %150 = vector.broadcast %24 : vector<8x1xf32> to vector<8x16xf32>
    %151 = vector.broadcast %149 : vector<1x16xf32> to vector<8x16xf32>
    %152 = arith.mulf %150, %151 : vector<8x16xf32>
    %153 = arith.addf %148, %152 : vector<8x16xf32>
    %154 = vector.extract_strided_slice %143 {offsets = [0, 2], sizes = [1, 16], strides = [1, 1]} : vector<1x18xf32> to vector<1x16xf32>
    %155 = vector.broadcast %25 : vector<8x1xf32> to vector<8x16xf32>
    %156 = vector.broadcast %154 : vector<1x16xf32> to vector<8x16xf32>
    %157 = arith.mulf %155, %156 : vector<8x16xf32>
    %158 = arith.addf %153, %157 : vector<8x16xf32>
    %159 = vector.extract_strided_slice %1 {offsets = [2, 1, 0], sizes = [1, 1, 18], strides = [1, 1, 1]} : vector<4x16x18xf32> to vector<1x1x18xf32>
    %160 = vector.shape_cast %159 : vector<1x1x18xf32> to vector<1x18xf32>
    %161 = vector.extract_strided_slice %160 {offsets = [0, 0], sizes = [1, 16], strides = [1, 1]} : vector<1x18xf32> to vector<1x16xf32>
    %162 = vector.broadcast %26 : vector<8x1xf32> to vector<8x16xf32>
    %163 = vector.broadcast %161 : vector<1x16xf32> to vector<8x16xf32>
    %164 = arith.mulf %162, %163 : vector<8x16xf32>
    %165 = arith.addf %158, %164 : vector<8x16xf32>
    %166 = vector.extract_strided_slice %160 {offsets = [0, 1], sizes = [1, 16], strides = [1, 1]} : vector<1x18xf32> to vector<1x16xf32>
    %167 = vector.broadcast %27 : vector<8x1xf32> to vector<8x16xf32>
    %168 = vector.broadcast %166 : vector<1x16xf32> to vector<8x16xf32>
    %169 = arith.mulf %167, %168 : vector<8x16xf32>
    %170 = arith.addf %165, %169 : vector<8x16xf32>
    %171 = vector.extract_strided_slice %160 {offsets = [0, 2], sizes = [1, 16], strides = [1, 1]} : vector<1x18xf32> to vector<1x16xf32>
    %172 = vector.broadcast %28 : vector<8x1xf32> to vector<8x16xf32>
    %173 = vector.broadcast %171 : vector<1x16xf32> to vector<8x16xf32>
    %174 = arith.mulf %172, %173 : vector<8x16xf32>
    %175 = arith.addf %170, %174 : vector<8x16xf32>
    %176 = vector.extract_strided_slice %1 {offsets = [2, 2, 0], sizes = [1, 1, 18], strides = [1, 1, 1]} : vector<4x16x18xf32> to vector<1x1x18xf32>
    %177 = vector.shape_cast %176 : vector<1x1x18xf32> to vector<1x18xf32>
    %178 = vector.extract_strided_slice %177 {offsets = [0, 0], sizes = [1, 16], strides = [1, 1]} : vector<1x18xf32> to vector<1x16xf32>
    %179 = vector.broadcast %29 : vector<8x1xf32> to vector<8x16xf32>
    %180 = vector.broadcast %178 : vector<1x16xf32> to vector<8x16xf32>
    %181 = arith.mulf %179, %180 : vector<8x16xf32>
    %182 = arith.addf %175, %181 : vector<8x16xf32>
    %183 = vector.extract_strided_slice %177 {offsets = [0, 1], sizes = [1, 16], strides = [1, 1]} : vector<1x18xf32> to vector<1x16xf32>
    %184 = vector.broadcast %30 : vector<8x1xf32> to vector<8x16xf32>
    %185 = vector.broadcast %183 : vector<1x16xf32> to vector<8x16xf32>
    %186 = arith.mulf %184, %185 : vector<8x16xf32>
    %187 = arith.addf %182, %186 : vector<8x16xf32>
    %188 = vector.extract_strided_slice %177 {offsets = [0, 2], sizes = [1, 16], strides = [1, 1]} : vector<1x18xf32> to vector<1x16xf32>
    %189 = vector.broadcast %31 : vector<8x1xf32> to vector<8x16xf32>
    %190 = vector.broadcast %188 : vector<1x16xf32> to vector<8x16xf32>
    %191 = arith.mulf %189, %190 : vector<8x16xf32>
    %192 = arith.addf %187, %191 : vector<8x16xf32>
    %193 = vector.extract_strided_slice %1 {offsets = [3, 0, 0], sizes = [1, 1, 18], strides = [1, 1, 1]} : vector<4x16x18xf32> to vector<1x1x18xf32>
    %194 = vector.shape_cast %193 : vector<1x1x18xf32> to vector<1x18xf32>
    %195 = vector.extract_strided_slice %194 {offsets = [0, 0], sizes = [1, 16], strides = [1, 1]} : vector<1x18xf32> to vector<1x16xf32>
    %196 = vector.broadcast %32 : vector<8x1xf32> to vector<8x16xf32>
    %197 = vector.broadcast %195 : vector<1x16xf32> to vector<8x16xf32>
    %198 = arith.mulf %196, %197 : vector<8x16xf32>
    %199 = arith.addf %192, %198 : vector<8x16xf32>
    %200 = vector.extract_strided_slice %194 {offsets = [0, 1], sizes = [1, 16], strides = [1, 1]} : vector<1x18xf32> to vector<1x16xf32>
    %201 = vector.broadcast %33 : vector<8x1xf32> to vector<8x16xf32>
    %202 = vector.broadcast %200 : vector<1x16xf32> to vector<8x16xf32>
    %203 = arith.mulf %201, %202 : vector<8x16xf32>
    %204 = arith.addf %199, %203 : vector<8x16xf32>
    %205 = vector.extract_strided_slice %194 {offsets = [0, 2], sizes = [1, 16], strides = [1, 1]} : vector<1x18xf32> to vector<1x16xf32>
    %206 = vector.broadcast %34 : vector<8x1xf32> to vector<8x16xf32>
    %207 = vector.broadcast %205 : vector<1x16xf32> to vector<8x16xf32>
    %208 = arith.mulf %206, %207 : vector<8x16xf32>
    %209 = arith.addf %204, %208 : vector<8x16xf32>
    %210 = vector.extract_strided_slice %1 {offsets = [3, 1, 0], sizes = [1, 1, 18], strides = [1, 1, 1]} : vector<4x16x18xf32> to vector<1x1x18xf32>
    %211 = vector.shape_cast %210 : vector<1x1x18xf32> to vector<1x18xf32>
    %212 = vector.extract_strided_slice %211 {offsets = [0, 0], sizes = [1, 16], strides = [1, 1]} : vector<1x18xf32> to vector<1x16xf32>
    %213 = vector.broadcast %35 : vector<8x1xf32> to vector<8x16xf32>
    %214 = vector.broadcast %212 : vector<1x16xf32> to vector<8x16xf32>
    %215 = arith.mulf %213, %214 : vector<8x16xf32>
    %216 = arith.addf %209, %215 : vector<8x16xf32>
    %217 = vector.extract_strided_slice %211 {offsets = [0, 1], sizes = [1, 16], strides = [1, 1]} : vector<1x18xf32> to vector<1x16xf32>
    %218 = vector.broadcast %36 : vector<8x1xf32> to vector<8x16xf32>
    %219 = vector.broadcast %217 : vector<1x16xf32> to vector<8x16xf32>
    %220 = arith.mulf %218, %219 : vector<8x16xf32>
    %221 = arith.addf %216, %220 : vector<8x16xf32>
    %222 = vector.extract_strided_slice %211 {offsets = [0, 2], sizes = [1, 16], strides = [1, 1]} : vector<1x18xf32> to vector<1x16xf32>
    %223 = vector.broadcast %37 : vector<8x1xf32> to vector<8x16xf32>
    %224 = vector.broadcast %222 : vector<1x16xf32> to vector<8x16xf32>
    %225 = arith.mulf %223, %224 : vector<8x16xf32>
    %226 = arith.addf %221, %225 : vector<8x16xf32>
    %227 = vector.extract_strided_slice %1 {offsets = [3, 2, 0], sizes = [1, 1, 18], strides = [1, 1, 1]} : vector<4x16x18xf32> to vector<1x1x18xf32>
    %228 = vector.shape_cast %227 : vector<1x1x18xf32> to vector<1x18xf32>
    %229 = vector.extract_strided_slice %228 {offsets = [0, 0], sizes = [1, 16], strides = [1, 1]} : vector<1x18xf32> to vector<1x16xf32>
    %230 = vector.broadcast %38 : vector<8x1xf32> to vector<8x16xf32>
    %231 = vector.broadcast %229 : vector<1x16xf32> to vector<8x16xf32>
    %232 = arith.mulf %230, %231 : vector<8x16xf32>
    %233 = arith.addf %226, %232 : vector<8x16xf32>
    %234 = vector.extract_strided_slice %228 {offsets = [0, 1], sizes = [1, 16], strides = [1, 1]} : vector<1x18xf32> to vector<1x16xf32>
    %235 = vector.broadcast %39 : vector<8x1xf32> to vector<8x16xf32>
    %236 = vector.broadcast %234 : vector<1x16xf32> to vector<8x16xf32>
    %237 = arith.mulf %235, %236 : vector<8x16xf32>
    %238 = arith.addf %233, %237 : vector<8x16xf32>
    %239 = vector.extract_strided_slice %228 {offsets = [0, 2], sizes = [1, 16], strides = [1, 1]} : vector<1x18xf32> to vector<1x16xf32>
    %240 = vector.broadcast %40 : vector<8x1xf32> to vector<8x16xf32>
    %241 = vector.broadcast %239 : vector<1x16xf32> to vector<8x16xf32>
    %242 = arith.mulf %240, %241 : vector<8x16xf32>
    %243 = arith.addf %238, %242 : vector<8x16xf32>
    %244 = vector.broadcast %2 : vector<8x1xf32> to vector<8x16xf32>
    %245 = arith.mulf %243, %244 : vector<8x16xf32>
    %246 = vector.broadcast %3 : vector<8x1xf32> to vector<8x16xf32>
    %247 = arith.addf %245, %246 : vector<8x16xf32>
    %cst = arith.constant 0.000000e+00 : f32
    %248 = vector.broadcast %cst : f32 to vector<8x16xf32>
    %249 = arith.maximumf %247, %248 : vector<8x16xf32>
    %250 = vector.extract_strided_slice %1 {offsets = [0, 1, 0], sizes = [1, 1, 18], strides = [1, 1, 1]} : vector<4x16x18xf32> to vector<1x1x18xf32>
    %251 = vector.shape_cast %250 : vector<1x1x18xf32> to vector<1x18xf32>
    %252 = vector.extract_strided_slice %251 {offsets = [0, 0], sizes = [1, 16], strides = [1, 1]} : vector<1x18xf32> to vector<1x16xf32>
    %253 = vector.broadcast %5 : vector<8x1xf32> to vector<8x16xf32>
    %254 = vector.broadcast %252 : vector<1x16xf32> to vector<8x16xf32>
    %255 = arith.mulf %253, %254 : vector<8x16xf32>
    %256 = vector.extract_strided_slice %251 {offsets = [0, 1], sizes = [1, 16], strides = [1, 1]} : vector<1x18xf32> to vector<1x16xf32>
    %257 = vector.broadcast %6 : vector<8x1xf32> to vector<8x16xf32>
    %258 = vector.broadcast %256 : vector<1x16xf32> to vector<8x16xf32>
    %259 = arith.mulf %257, %258 : vector<8x16xf32>
    %260 = arith.addf %255, %259 : vector<8x16xf32>
    %261 = vector.extract_strided_slice %251 {offsets = [0, 2], sizes = [1, 16], strides = [1, 1]} : vector<1x18xf32> to vector<1x16xf32>
    %262 = vector.broadcast %7 : vector<8x1xf32> to vector<8x16xf32>
    %263 = vector.broadcast %261 : vector<1x16xf32> to vector<8x16xf32>
    %264 = arith.mulf %262, %263 : vector<8x16xf32>
    %265 = arith.addf %260, %264 : vector<8x16xf32>
    %266 = vector.extract_strided_slice %1 {offsets = [0, 2, 0], sizes = [1, 1, 18], strides = [1, 1, 1]} : vector<4x16x18xf32> to vector<1x1x18xf32>
    %267 = vector.shape_cast %266 : vector<1x1x18xf32> to vector<1x18xf32>
    %268 = vector.extract_strided_slice %267 {offsets = [0, 0], sizes = [1, 16], strides = [1, 1]} : vector<1x18xf32> to vector<1x16xf32>
    %269 = vector.broadcast %8 : vector<8x1xf32> to vector<8x16xf32>
    %270 = vector.broadcast %268 : vector<1x16xf32> to vector<8x16xf32>
    %271 = arith.mulf %269, %270 : vector<8x16xf32>
    %272 = arith.addf %265, %271 : vector<8x16xf32>
    %273 = vector.extract_strided_slice %267 {offsets = [0, 1], sizes = [1, 16], strides = [1, 1]} : vector<1x18xf32> to vector<1x16xf32>
    %274 = vector.broadcast %9 : vector<8x1xf32> to vector<8x16xf32>
    %275 = vector.broadcast %273 : vector<1x16xf32> to vector<8x16xf32>
    %276 = arith.mulf %274, %275 : vector<8x16xf32>
    %277 = arith.addf %272, %276 : vector<8x16xf32>
    %278 = vector.extract_strided_slice %267 {offsets = [0, 2], sizes = [1, 16], strides = [1, 1]} : vector<1x18xf32> to vector<1x16xf32>
    %279 = vector.broadcast %10 : vector<8x1xf32> to vector<8x16xf32>
    %280 = vector.broadcast %278 : vector<1x16xf32> to vector<8x16xf32>
    %281 = arith.mulf %279, %280 : vector<8x16xf32>
    %282 = arith.addf %277, %281 : vector<8x16xf32>
    %283 = vector.extract_strided_slice %1 {offsets = [0, 3, 0], sizes = [1, 1, 18], strides = [1, 1, 1]} : vector<4x16x18xf32> to vector<1x1x18xf32>
    %284 = vector.shape_cast %283 : vector<1x1x18xf32> to vector<1x18xf32>
    %285 = vector.extract_strided_slice %284 {offsets = [0, 0], sizes = [1, 16], strides = [1, 1]} : vector<1x18xf32> to vector<1x16xf32>
    %286 = vector.broadcast %11 : vector<8x1xf32> to vector<8x16xf32>
    %287 = vector.broadcast %285 : vector<1x16xf32> to vector<8x16xf32>
    %288 = arith.mulf %286, %287 : vector<8x16xf32>
    %289 = arith.addf %282, %288 : vector<8x16xf32>
    %290 = vector.extract_strided_slice %284 {offsets = [0, 1], sizes = [1, 16], strides = [1, 1]} : vector<1x18xf32> to vector<1x16xf32>
    %291 = vector.broadcast %12 : vector<8x1xf32> to vector<8x16xf32>
    %292 = vector.broadcast %290 : vector<1x16xf32> to vector<8x16xf32>
    %293 = arith.mulf %291, %292 : vector<8x16xf32>
    %294 = arith.addf %289, %293 : vector<8x16xf32>
    %295 = vector.extract_strided_slice %284 {offsets = [0, 2], sizes = [1, 16], strides = [1, 1]} : vector<1x18xf32> to vector<1x16xf32>
    %296 = vector.broadcast %13 : vector<8x1xf32> to vector<8x16xf32>
    %297 = vector.broadcast %295 : vector<1x16xf32> to vector<8x16xf32>
    %298 = arith.mulf %296, %297 : vector<8x16xf32>
    %299 = arith.addf %294, %298 : vector<8x16xf32>
    %300 = vector.extract_strided_slice %1 {offsets = [1, 1, 0], sizes = [1, 1, 18], strides = [1, 1, 1]} : vector<4x16x18xf32> to vector<1x1x18xf32>
    %301 = vector.shape_cast %300 : vector<1x1x18xf32> to vector<1x18xf32>
    %302 = vector.extract_strided_slice %301 {offsets = [0, 0], sizes = [1, 16], strides = [1, 1]} : vector<1x18xf32> to vector<1x16xf32>
    %303 = vector.broadcast %14 : vector<8x1xf32> to vector<8x16xf32>
    %304 = vector.broadcast %302 : vector<1x16xf32> to vector<8x16xf32>
    %305 = arith.mulf %303, %304 : vector<8x16xf32>
    %306 = arith.addf %299, %305 : vector<8x16xf32>
    %307 = vector.extract_strided_slice %301 {offsets = [0, 1], sizes = [1, 16], strides = [1, 1]} : vector<1x18xf32> to vector<1x16xf32>
    %308 = vector.broadcast %15 : vector<8x1xf32> to vector<8x16xf32>
    %309 = vector.broadcast %307 : vector<1x16xf32> to vector<8x16xf32>
    %310 = arith.mulf %308, %309 : vector<8x16xf32>
    %311 = arith.addf %306, %310 : vector<8x16xf32>
    %312 = vector.extract_strided_slice %301 {offsets = [0, 2], sizes = [1, 16], strides = [1, 1]} : vector<1x18xf32> to vector<1x16xf32>
    %313 = vector.broadcast %16 : vector<8x1xf32> to vector<8x16xf32>
    %314 = vector.broadcast %312 : vector<1x16xf32> to vector<8x16xf32>
    %315 = arith.mulf %313, %314 : vector<8x16xf32>
    %316 = arith.addf %311, %315 : vector<8x16xf32>
    %317 = vector.extract_strided_slice %1 {offsets = [1, 2, 0], sizes = [1, 1, 18], strides = [1, 1, 1]} : vector<4x16x18xf32> to vector<1x1x18xf32>
    %318 = vector.shape_cast %317 : vector<1x1x18xf32> to vector<1x18xf32>
    %319 = vector.extract_strided_slice %318 {offsets = [0, 0], sizes = [1, 16], strides = [1, 1]} : vector<1x18xf32> to vector<1x16xf32>
    %320 = vector.broadcast %17 : vector<8x1xf32> to vector<8x16xf32>
    %321 = vector.broadcast %319 : vector<1x16xf32> to vector<8x16xf32>
    %322 = arith.mulf %320, %321 : vector<8x16xf32>
    %323 = arith.addf %316, %322 : vector<8x16xf32>
    %324 = vector.extract_strided_slice %318 {offsets = [0, 1], sizes = [1, 16], strides = [1, 1]} : vector<1x18xf32> to vector<1x16xf32>
    %325 = vector.broadcast %18 : vector<8x1xf32> to vector<8x16xf32>
    %326 = vector.broadcast %324 : vector<1x16xf32> to vector<8x16xf32>
    %327 = arith.mulf %325, %326 : vector<8x16xf32>
    %328 = arith.addf %323, %327 : vector<8x16xf32>
    %329 = vector.extract_strided_slice %318 {offsets = [0, 2], sizes = [1, 16], strides = [1, 1]} : vector<1x18xf32> to vector<1x16xf32>
    %330 = vector.broadcast %19 : vector<8x1xf32> to vector<8x16xf32>
    %331 = vector.broadcast %329 : vector<1x16xf32> to vector<8x16xf32>
    %332 = arith.mulf %330, %331 : vector<8x16xf32>
    %333 = arith.addf %328, %332 : vector<8x16xf32>
    %334 = vector.extract_strided_slice %1 {offsets = [1, 3, 0], sizes = [1, 1, 18], strides = [1, 1, 1]} : vector<4x16x18xf32> to vector<1x1x18xf32>
    %335 = vector.shape_cast %334 : vector<1x1x18xf32> to vector<1x18xf32>
    %336 = vector.extract_strided_slice %335 {offsets = [0, 0], sizes = [1, 16], strides = [1, 1]} : vector<1x18xf32> to vector<1x16xf32>
    %337 = vector.broadcast %20 : vector<8x1xf32> to vector<8x16xf32>
    %338 = vector.broadcast %336 : vector<1x16xf32> to vector<8x16xf32>
    %339 = arith.mulf %337, %338 : vector<8x16xf32>
    %340 = arith.addf %333, %339 : vector<8x16xf32>
    %341 = vector.extract_strided_slice %335 {offsets = [0, 1], sizes = [1, 16], strides = [1, 1]} : vector<1x18xf32> to vector<1x16xf32>
    %342 = vector.broadcast %21 : vector<8x1xf32> to vector<8x16xf32>
    %343 = vector.broadcast %341 : vector<1x16xf32> to vector<8x16xf32>
    %344 = arith.mulf %342, %343 : vector<8x16xf32>
    %345 = arith.addf %340, %344 : vector<8x16xf32>
    %346 = vector.extract_strided_slice %335 {offsets = [0, 2], sizes = [1, 16], strides = [1, 1]} : vector<1x18xf32> to vector<1x16xf32>
    %347 = vector.broadcast %22 : vector<8x1xf32> to vector<8x16xf32>
    %348 = vector.broadcast %346 : vector<1x16xf32> to vector<8x16xf32>
    %349 = arith.mulf %347, %348 : vector<8x16xf32>
    %350 = arith.addf %345, %349 : vector<8x16xf32>
    %351 = vector.extract_strided_slice %1 {offsets = [2, 1, 0], sizes = [1, 1, 18], strides = [1, 1, 1]} : vector<4x16x18xf32> to vector<1x1x18xf32>
    %352 = vector.shape_cast %351 : vector<1x1x18xf32> to vector<1x18xf32>
    %353 = vector.extract_strided_slice %352 {offsets = [0, 0], sizes = [1, 16], strides = [1, 1]} : vector<1x18xf32> to vector<1x16xf32>
    %354 = vector.broadcast %23 : vector<8x1xf32> to vector<8x16xf32>
    %355 = vector.broadcast %353 : vector<1x16xf32> to vector<8x16xf32>
    %356 = arith.mulf %354, %355 : vector<8x16xf32>
    %357 = arith.addf %350, %356 : vector<8x16xf32>
    %358 = vector.extract_strided_slice %352 {offsets = [0, 1], sizes = [1, 16], strides = [1, 1]} : vector<1x18xf32> to vector<1x16xf32>
    %359 = vector.broadcast %24 : vector<8x1xf32> to vector<8x16xf32>
    %360 = vector.broadcast %358 : vector<1x16xf32> to vector<8x16xf32>
    %361 = arith.mulf %359, %360 : vector<8x16xf32>
    %362 = arith.addf %357, %361 : vector<8x16xf32>
    %363 = vector.extract_strided_slice %352 {offsets = [0, 2], sizes = [1, 16], strides = [1, 1]} : vector<1x18xf32> to vector<1x16xf32>
    %364 = vector.broadcast %25 : vector<8x1xf32> to vector<8x16xf32>
    %365 = vector.broadcast %363 : vector<1x16xf32> to vector<8x16xf32>
    %366 = arith.mulf %364, %365 : vector<8x16xf32>
    %367 = arith.addf %362, %366 : vector<8x16xf32>
    %368 = vector.extract_strided_slice %1 {offsets = [2, 2, 0], sizes = [1, 1, 18], strides = [1, 1, 1]} : vector<4x16x18xf32> to vector<1x1x18xf32>
    %369 = vector.shape_cast %368 : vector<1x1x18xf32> to vector<1x18xf32>
    %370 = vector.extract_strided_slice %369 {offsets = [0, 0], sizes = [1, 16], strides = [1, 1]} : vector<1x18xf32> to vector<1x16xf32>
    %371 = vector.broadcast %26 : vector<8x1xf32> to vector<8x16xf32>
    %372 = vector.broadcast %370 : vector<1x16xf32> to vector<8x16xf32>
    %373 = arith.mulf %371, %372 : vector<8x16xf32>
    %374 = arith.addf %367, %373 : vector<8x16xf32>
    %375 = vector.extract_strided_slice %369 {offsets = [0, 1], sizes = [1, 16], strides = [1, 1]} : vector<1x18xf32> to vector<1x16xf32>
    %376 = vector.broadcast %27 : vector<8x1xf32> to vector<8x16xf32>
    %377 = vector.broadcast %375 : vector<1x16xf32> to vector<8x16xf32>
    %378 = arith.mulf %376, %377 : vector<8x16xf32>
    %379 = arith.addf %374, %378 : vector<8x16xf32>
    %380 = vector.extract_strided_slice %369 {offsets = [0, 2], sizes = [1, 16], strides = [1, 1]} : vector<1x18xf32> to vector<1x16xf32>
    %381 = vector.broadcast %28 : vector<8x1xf32> to vector<8x16xf32>
    %382 = vector.broadcast %380 : vector<1x16xf32> to vector<8x16xf32>
    %383 = arith.mulf %381, %382 : vector<8x16xf32>
    %384 = arith.addf %379, %383 : vector<8x16xf32>
    %385 = vector.extract_strided_slice %1 {offsets = [2, 3, 0], sizes = [1, 1, 18], strides = [1, 1, 1]} : vector<4x16x18xf32> to vector<1x1x18xf32>
    %386 = vector.shape_cast %385 : vector<1x1x18xf32> to vector<1x18xf32>
    %387 = vector.extract_strided_slice %386 {offsets = [0, 0], sizes = [1, 16], strides = [1, 1]} : vector<1x18xf32> to vector<1x16xf32>
    %388 = vector.broadcast %29 : vector<8x1xf32> to vector<8x16xf32>
    %389 = vector.broadcast %387 : vector<1x16xf32> to vector<8x16xf32>
    %390 = arith.mulf %388, %389 : vector<8x16xf32>
    %391 = arith.addf %384, %390 : vector<8x16xf32>
    %392 = vector.extract_strided_slice %386 {offsets = [0, 1], sizes = [1, 16], strides = [1, 1]} : vector<1x18xf32> to vector<1x16xf32>
    %393 = vector.broadcast %30 : vector<8x1xf32> to vector<8x16xf32>
    %394 = vector.broadcast %392 : vector<1x16xf32> to vector<8x16xf32>
    %395 = arith.mulf %393, %394 : vector<8x16xf32>
    %396 = arith.addf %391, %395 : vector<8x16xf32>
    %397 = vector.extract_strided_slice %386 {offsets = [0, 2], sizes = [1, 16], strides = [1, 1]} : vector<1x18xf32> to vector<1x16xf32>
    %398 = vector.broadcast %31 : vector<8x1xf32> to vector<8x16xf32>
    %399 = vector.broadcast %397 : vector<1x16xf32> to vector<8x16xf32>
    %400 = arith.mulf %398, %399 : vector<8x16xf32>
    %401 = arith.addf %396, %400 : vector<8x16xf32>
    %402 = vector.extract_strided_slice %1 {offsets = [3, 1, 0], sizes = [1, 1, 18], strides = [1, 1, 1]} : vector<4x16x18xf32> to vector<1x1x18xf32>
    %403 = vector.shape_cast %402 : vector<1x1x18xf32> to vector<1x18xf32>
    %404 = vector.extract_strided_slice %403 {offsets = [0, 0], sizes = [1, 16], strides = [1, 1]} : vector<1x18xf32> to vector<1x16xf32>
    %405 = vector.broadcast %32 : vector<8x1xf32> to vector<8x16xf32>
    %406 = vector.broadcast %404 : vector<1x16xf32> to vector<8x16xf32>
    %407 = arith.mulf %405, %406 : vector<8x16xf32>
    %408 = arith.addf %401, %407 : vector<8x16xf32>
    %409 = vector.extract_strided_slice %403 {offsets = [0, 1], sizes = [1, 16], strides = [1, 1]} : vector<1x18xf32> to vector<1x16xf32>
    %410 = vector.broadcast %33 : vector<8x1xf32> to vector<8x16xf32>
    %411 = vector.broadcast %409 : vector<1x16xf32> to vector<8x16xf32>
    %412 = arith.mulf %410, %411 : vector<8x16xf32>
    %413 = arith.addf %408, %412 : vector<8x16xf32>
    %414 = vector.extract_strided_slice %403 {offsets = [0, 2], sizes = [1, 16], strides = [1, 1]} : vector<1x18xf32> to vector<1x16xf32>
    %415 = vector.broadcast %34 : vector<8x1xf32> to vector<8x16xf32>
    %416 = vector.broadcast %414 : vector<1x16xf32> to vector<8x16xf32>
    %417 = arith.mulf %415, %416 : vector<8x16xf32>
    %418 = arith.addf %413, %417 : vector<8x16xf32>
    %419 = vector.extract_strided_slice %1 {offsets = [3, 2, 0], sizes = [1, 1, 18], strides = [1, 1, 1]} : vector<4x16x18xf32> to vector<1x1x18xf32>
    %420 = vector.shape_cast %419 : vector<1x1x18xf32> to vector<1x18xf32>
    %421 = vector.extract_strided_slice %420 {offsets = [0, 0], sizes = [1, 16], strides = [1, 1]} : vector<1x18xf32> to vector<1x16xf32>
    %422 = vector.broadcast %35 : vector<8x1xf32> to vector<8x16xf32>
    %423 = vector.broadcast %421 : vector<1x16xf32> to vector<8x16xf32>
    %424 = arith.mulf %422, %423 : vector<8x16xf32>
    %425 = arith.addf %418, %424 : vector<8x16xf32>
    %426 = vector.extract_strided_slice %420 {offsets = [0, 1], sizes = [1, 16], strides = [1, 1]} : vector<1x18xf32> to vector<1x16xf32>
    %427 = vector.broadcast %36 : vector<8x1xf32> to vector<8x16xf32>
    %428 = vector.broadcast %426 : vector<1x16xf32> to vector<8x16xf32>
    %429 = arith.mulf %427, %428 : vector<8x16xf32>
    %430 = arith.addf %425, %429 : vector<8x16xf32>
    %431 = vector.extract_strided_slice %420 {offsets = [0, 2], sizes = [1, 16], strides = [1, 1]} : vector<1x18xf32> to vector<1x16xf32>
    %432 = vector.broadcast %37 : vector<8x1xf32> to vector<8x16xf32>
    %433 = vector.broadcast %431 : vector<1x16xf32> to vector<8x16xf32>
    %434 = arith.mulf %432, %433 : vector<8x16xf32>
    %435 = arith.addf %430, %434 : vector<8x16xf32>
    %436 = vector.extract_strided_slice %1 {offsets = [3, 3, 0], sizes = [1, 1, 18], strides = [1, 1, 1]} : vector<4x16x18xf32> to vector<1x1x18xf32>
    %437 = vector.shape_cast %436 : vector<1x1x18xf32> to vector<1x18xf32>
    %438 = vector.extract_strided_slice %437 {offsets = [0, 0], sizes = [1, 16], strides = [1, 1]} : vector<1x18xf32> to vector<1x16xf32>
    %439 = vector.broadcast %38 : vector<8x1xf32> to vector<8x16xf32>
    %440 = vector.broadcast %438 : vector<1x16xf32> to vector<8x16xf32>
    %441 = arith.mulf %439, %440 : vector<8x16xf32>
    %442 = arith.addf %435, %441 : vector<8x16xf32>
    %443 = vector.extract_strided_slice %437 {offsets = [0, 1], sizes = [1, 16], strides = [1, 1]} : vector<1x18xf32> to vector<1x16xf32>
    %444 = vector.broadcast %39 : vector<8x1xf32> to vector<8x16xf32>
    %445 = vector.broadcast %443 : vector<1x16xf32> to vector<8x16xf32>
    %446 = arith.mulf %444, %445 : vector<8x16xf32>
    %447 = arith.addf %442, %446 : vector<8x16xf32>
    %448 = vector.extract_strided_slice %437 {offsets = [0, 2], sizes = [1, 16], strides = [1, 1]} : vector<1x18xf32> to vector<1x16xf32>
    %449 = vector.broadcast %40 : vector<8x1xf32> to vector<8x16xf32>
    %450 = vector.broadcast %448 : vector<1x16xf32> to vector<8x16xf32>
    %451 = arith.mulf %449, %450 : vector<8x16xf32>
    %452 = arith.addf %447, %451 : vector<8x16xf32>
    %453 = vector.broadcast %2 : vector<8x1xf32> to vector<8x16xf32>
    %454 = arith.mulf %452, %453 : vector<8x16xf32>
    %455 = vector.broadcast %3 : vector<8x1xf32> to vector<8x16xf32>
    %456 = arith.addf %454, %455 : vector<8x16xf32>
    %cst_9 = arith.constant 0.000000e+00 : f32
    %457 = vector.broadcast %cst_9 : f32 to vector<8x16xf32>
    %458 = arith.maximumf %456, %457 : vector<8x16xf32>
    %459 = arith.maximumf %249, %458 : vector<8x16xf32>
    %460 = vector.extract_strided_slice %1 {offsets = [0, 2, 0], sizes = [1, 1, 18], strides = [1, 1, 1]} : vector<4x16x18xf32> to vector<1x1x18xf32>
    %461 = vector.shape_cast %460 : vector<1x1x18xf32> to vector<1x18xf32>
    %462 = vector.extract_strided_slice %461 {offsets = [0, 0], sizes = [1, 16], strides = [1, 1]} : vector<1x18xf32> to vector<1x16xf32>
    %463 = vector.broadcast %5 : vector<8x1xf32> to vector<8x16xf32>
    %464 = vector.broadcast %462 : vector<1x16xf32> to vector<8x16xf32>
    %465 = arith.mulf %463, %464 : vector<8x16xf32>
    %466 = vector.extract_strided_slice %461 {offsets = [0, 1], sizes = [1, 16], strides = [1, 1]} : vector<1x18xf32> to vector<1x16xf32>
    %467 = vector.broadcast %6 : vector<8x1xf32> to vector<8x16xf32>
    %468 = vector.broadcast %466 : vector<1x16xf32> to vector<8x16xf32>
    %469 = arith.mulf %467, %468 : vector<8x16xf32>
    %470 = arith.addf %465, %469 : vector<8x16xf32>
    %471 = vector.extract_strided_slice %461 {offsets = [0, 2], sizes = [1, 16], strides = [1, 1]} : vector<1x18xf32> to vector<1x16xf32>
    %472 = vector.broadcast %7 : vector<8x1xf32> to vector<8x16xf32>
    %473 = vector.broadcast %471 : vector<1x16xf32> to vector<8x16xf32>
    %474 = arith.mulf %472, %473 : vector<8x16xf32>
    %475 = arith.addf %470, %474 : vector<8x16xf32>
    %476 = vector.extract_strided_slice %1 {offsets = [0, 3, 0], sizes = [1, 1, 18], strides = [1, 1, 1]} : vector<4x16x18xf32> to vector<1x1x18xf32>
    %477 = vector.shape_cast %476 : vector<1x1x18xf32> to vector<1x18xf32>
    %478 = vector.extract_strided_slice %477 {offsets = [0, 0], sizes = [1, 16], strides = [1, 1]} : vector<1x18xf32> to vector<1x16xf32>
    %479 = vector.broadcast %8 : vector<8x1xf32> to vector<8x16xf32>
    %480 = vector.broadcast %478 : vector<1x16xf32> to vector<8x16xf32>
    %481 = arith.mulf %479, %480 : vector<8x16xf32>
    %482 = arith.addf %475, %481 : vector<8x16xf32>
    %483 = vector.extract_strided_slice %477 {offsets = [0, 1], sizes = [1, 16], strides = [1, 1]} : vector<1x18xf32> to vector<1x16xf32>
    %484 = vector.broadcast %9 : vector<8x1xf32> to vector<8x16xf32>
    %485 = vector.broadcast %483 : vector<1x16xf32> to vector<8x16xf32>
    %486 = arith.mulf %484, %485 : vector<8x16xf32>
    %487 = arith.addf %482, %486 : vector<8x16xf32>
    %488 = vector.extract_strided_slice %477 {offsets = [0, 2], sizes = [1, 16], strides = [1, 1]} : vector<1x18xf32> to vector<1x16xf32>
    %489 = vector.broadcast %10 : vector<8x1xf32> to vector<8x16xf32>
    %490 = vector.broadcast %488 : vector<1x16xf32> to vector<8x16xf32>
    %491 = arith.mulf %489, %490 : vector<8x16xf32>
    %492 = arith.addf %487, %491 : vector<8x16xf32>
    %493 = vector.extract_strided_slice %1 {offsets = [0, 4, 0], sizes = [1, 1, 18], strides = [1, 1, 1]} : vector<4x16x18xf32> to vector<1x1x18xf32>
    %494 = vector.shape_cast %493 : vector<1x1x18xf32> to vector<1x18xf32>
    %495 = vector.extract_strided_slice %494 {offsets = [0, 0], sizes = [1, 16], strides = [1, 1]} : vector<1x18xf32> to vector<1x16xf32>
    %496 = vector.broadcast %11 : vector<8x1xf32> to vector<8x16xf32>
    %497 = vector.broadcast %495 : vector<1x16xf32> to vector<8x16xf32>
    %498 = arith.mulf %496, %497 : vector<8x16xf32>
    %499 = arith.addf %492, %498 : vector<8x16xf32>
    %500 = vector.extract_strided_slice %494 {offsets = [0, 1], sizes = [1, 16], strides = [1, 1]} : vector<1x18xf32> to vector<1x16xf32>
    %501 = vector.broadcast %12 : vector<8x1xf32> to vector<8x16xf32>
    %502 = vector.broadcast %500 : vector<1x16xf32> to vector<8x16xf32>
    %503 = arith.mulf %501, %502 : vector<8x16xf32>
    %504 = arith.addf %499, %503 : vector<8x16xf32>
    %505 = vector.extract_strided_slice %494 {offsets = [0, 2], sizes = [1, 16], strides = [1, 1]} : vector<1x18xf32> to vector<1x16xf32>
    %506 = vector.broadcast %13 : vector<8x1xf32> to vector<8x16xf32>
    %507 = vector.broadcast %505 : vector<1x16xf32> to vector<8x16xf32>
    %508 = arith.mulf %506, %507 : vector<8x16xf32>
    %509 = arith.addf %504, %508 : vector<8x16xf32>
    %510 = vector.extract_strided_slice %1 {offsets = [1, 2, 0], sizes = [1, 1, 18], strides = [1, 1, 1]} : vector<4x16x18xf32> to vector<1x1x18xf32>
    %511 = vector.shape_cast %510 : vector<1x1x18xf32> to vector<1x18xf32>
    %512 = vector.extract_strided_slice %511 {offsets = [0, 0], sizes = [1, 16], strides = [1, 1]} : vector<1x18xf32> to vector<1x16xf32>
    %513 = vector.broadcast %14 : vector<8x1xf32> to vector<8x16xf32>
    %514 = vector.broadcast %512 : vector<1x16xf32> to vector<8x16xf32>
    %515 = arith.mulf %513, %514 : vector<8x16xf32>
    %516 = arith.addf %509, %515 : vector<8x16xf32>
    %517 = vector.extract_strided_slice %511 {offsets = [0, 1], sizes = [1, 16], strides = [1, 1]} : vector<1x18xf32> to vector<1x16xf32>
    %518 = vector.broadcast %15 : vector<8x1xf32> to vector<8x16xf32>
    %519 = vector.broadcast %517 : vector<1x16xf32> to vector<8x16xf32>
    %520 = arith.mulf %518, %519 : vector<8x16xf32>
    %521 = arith.addf %516, %520 : vector<8x16xf32>
    %522 = vector.extract_strided_slice %511 {offsets = [0, 2], sizes = [1, 16], strides = [1, 1]} : vector<1x18xf32> to vector<1x16xf32>
    %523 = vector.broadcast %16 : vector<8x1xf32> to vector<8x16xf32>
    %524 = vector.broadcast %522 : vector<1x16xf32> to vector<8x16xf32>
    %525 = arith.mulf %523, %524 : vector<8x16xf32>
    %526 = arith.addf %521, %525 : vector<8x16xf32>
    %527 = vector.extract_strided_slice %1 {offsets = [1, 3, 0], sizes = [1, 1, 18], strides = [1, 1, 1]} : vector<4x16x18xf32> to vector<1x1x18xf32>
    %528 = vector.shape_cast %527 : vector<1x1x18xf32> to vector<1x18xf32>
    %529 = vector.extract_strided_slice %528 {offsets = [0, 0], sizes = [1, 16], strides = [1, 1]} : vector<1x18xf32> to vector<1x16xf32>
    %530 = vector.broadcast %17 : vector<8x1xf32> to vector<8x16xf32>
    %531 = vector.broadcast %529 : vector<1x16xf32> to vector<8x16xf32>
    %532 = arith.mulf %530, %531 : vector<8x16xf32>
    %533 = arith.addf %526, %532 : vector<8x16xf32>
    %534 = vector.extract_strided_slice %528 {offsets = [0, 1], sizes = [1, 16], strides = [1, 1]} : vector<1x18xf32> to vector<1x16xf32>
    %535 = vector.broadcast %18 : vector<8x1xf32> to vector<8x16xf32>
    %536 = vector.broadcast %534 : vector<1x16xf32> to vector<8x16xf32>
    %537 = arith.mulf %535, %536 : vector<8x16xf32>
    %538 = arith.addf %533, %537 : vector<8x16xf32>
    %539 = vector.extract_strided_slice %528 {offsets = [0, 2], sizes = [1, 16], strides = [1, 1]} : vector<1x18xf32> to vector<1x16xf32>
    %540 = vector.broadcast %19 : vector<8x1xf32> to vector<8x16xf32>
    %541 = vector.broadcast %539 : vector<1x16xf32> to vector<8x16xf32>
    %542 = arith.mulf %540, %541 : vector<8x16xf32>
    %543 = arith.addf %538, %542 : vector<8x16xf32>
    %544 = vector.extract_strided_slice %1 {offsets = [1, 4, 0], sizes = [1, 1, 18], strides = [1, 1, 1]} : vector<4x16x18xf32> to vector<1x1x18xf32>
    %545 = vector.shape_cast %544 : vector<1x1x18xf32> to vector<1x18xf32>
    %546 = vector.extract_strided_slice %545 {offsets = [0, 0], sizes = [1, 16], strides = [1, 1]} : vector<1x18xf32> to vector<1x16xf32>
    %547 = vector.broadcast %20 : vector<8x1xf32> to vector<8x16xf32>
    %548 = vector.broadcast %546 : vector<1x16xf32> to vector<8x16xf32>
    %549 = arith.mulf %547, %548 : vector<8x16xf32>
    %550 = arith.addf %543, %549 : vector<8x16xf32>
    %551 = vector.extract_strided_slice %545 {offsets = [0, 1], sizes = [1, 16], strides = [1, 1]} : vector<1x18xf32> to vector<1x16xf32>
    %552 = vector.broadcast %21 : vector<8x1xf32> to vector<8x16xf32>
    %553 = vector.broadcast %551 : vector<1x16xf32> to vector<8x16xf32>
    %554 = arith.mulf %552, %553 : vector<8x16xf32>
    %555 = arith.addf %550, %554 : vector<8x16xf32>
    %556 = vector.extract_strided_slice %545 {offsets = [0, 2], sizes = [1, 16], strides = [1, 1]} : vector<1x18xf32> to vector<1x16xf32>
    %557 = vector.broadcast %22 : vector<8x1xf32> to vector<8x16xf32>
    %558 = vector.broadcast %556 : vector<1x16xf32> to vector<8x16xf32>
    %559 = arith.mulf %557, %558 : vector<8x16xf32>
    %560 = arith.addf %555, %559 : vector<8x16xf32>
    %561 = vector.extract_strided_slice %1 {offsets = [2, 2, 0], sizes = [1, 1, 18], strides = [1, 1, 1]} : vector<4x16x18xf32> to vector<1x1x18xf32>
    %562 = vector.shape_cast %561 : vector<1x1x18xf32> to vector<1x18xf32>
    %563 = vector.extract_strided_slice %562 {offsets = [0, 0], sizes = [1, 16], strides = [1, 1]} : vector<1x18xf32> to vector<1x16xf32>
    %564 = vector.broadcast %23 : vector<8x1xf32> to vector<8x16xf32>
    %565 = vector.broadcast %563 : vector<1x16xf32> to vector<8x16xf32>
    %566 = arith.mulf %564, %565 : vector<8x16xf32>
    %567 = arith.addf %560, %566 : vector<8x16xf32>
    %568 = vector.extract_strided_slice %562 {offsets = [0, 1], sizes = [1, 16], strides = [1, 1]} : vector<1x18xf32> to vector<1x16xf32>
    %569 = vector.broadcast %24 : vector<8x1xf32> to vector<8x16xf32>
    %570 = vector.broadcast %568 : vector<1x16xf32> to vector<8x16xf32>
    %571 = arith.mulf %569, %570 : vector<8x16xf32>
    %572 = arith.addf %567, %571 : vector<8x16xf32>
    %573 = vector.extract_strided_slice %562 {offsets = [0, 2], sizes = [1, 16], strides = [1, 1]} : vector<1x18xf32> to vector<1x16xf32>
    %574 = vector.broadcast %25 : vector<8x1xf32> to vector<8x16xf32>
    %575 = vector.broadcast %573 : vector<1x16xf32> to vector<8x16xf32>
    %576 = arith.mulf %574, %575 : vector<8x16xf32>
    %577 = arith.addf %572, %576 : vector<8x16xf32>
    %578 = vector.extract_strided_slice %1 {offsets = [2, 3, 0], sizes = [1, 1, 18], strides = [1, 1, 1]} : vector<4x16x18xf32> to vector<1x1x18xf32>
    %579 = vector.shape_cast %578 : vector<1x1x18xf32> to vector<1x18xf32>
    %580 = vector.extract_strided_slice %579 {offsets = [0, 0], sizes = [1, 16], strides = [1, 1]} : vector<1x18xf32> to vector<1x16xf32>
    %581 = vector.broadcast %26 : vector<8x1xf32> to vector<8x16xf32>
    %582 = vector.broadcast %580 : vector<1x16xf32> to vector<8x16xf32>
    %583 = arith.mulf %581, %582 : vector<8x16xf32>
    %584 = arith.addf %577, %583 : vector<8x16xf32>
    %585 = vector.extract_strided_slice %579 {offsets = [0, 1], sizes = [1, 16], strides = [1, 1]} : vector<1x18xf32> to vector<1x16xf32>
    %586 = vector.broadcast %27 : vector<8x1xf32> to vector<8x16xf32>
    %587 = vector.broadcast %585 : vector<1x16xf32> to vector<8x16xf32>
    %588 = arith.mulf %586, %587 : vector<8x16xf32>
    %589 = arith.addf %584, %588 : vector<8x16xf32>
    %590 = vector.extract_strided_slice %579 {offsets = [0, 2], sizes = [1, 16], strides = [1, 1]} : vector<1x18xf32> to vector<1x16xf32>
    %591 = vector.broadcast %28 : vector<8x1xf32> to vector<8x16xf32>
    %592 = vector.broadcast %590 : vector<1x16xf32> to vector<8x16xf32>
    %593 = arith.mulf %591, %592 : vector<8x16xf32>
    %594 = arith.addf %589, %593 : vector<8x16xf32>
    %595 = vector.extract_strided_slice %1 {offsets = [2, 4, 0], sizes = [1, 1, 18], strides = [1, 1, 1]} : vector<4x16x18xf32> to vector<1x1x18xf32>
    %596 = vector.shape_cast %595 : vector<1x1x18xf32> to vector<1x18xf32>
    %597 = vector.extract_strided_slice %596 {offsets = [0, 0], sizes = [1, 16], strides = [1, 1]} : vector<1x18xf32> to vector<1x16xf32>
    %598 = vector.broadcast %29 : vector<8x1xf32> to vector<8x16xf32>
    %599 = vector.broadcast %597 : vector<1x16xf32> to vector<8x16xf32>
    %600 = arith.mulf %598, %599 : vector<8x16xf32>
    %601 = arith.addf %594, %600 : vector<8x16xf32>
    %602 = vector.extract_strided_slice %596 {offsets = [0, 1], sizes = [1, 16], strides = [1, 1]} : vector<1x18xf32> to vector<1x16xf32>
    %603 = vector.broadcast %30 : vector<8x1xf32> to vector<8x16xf32>
    %604 = vector.broadcast %602 : vector<1x16xf32> to vector<8x16xf32>
    %605 = arith.mulf %603, %604 : vector<8x16xf32>
    %606 = arith.addf %601, %605 : vector<8x16xf32>
    %607 = vector.extract_strided_slice %596 {offsets = [0, 2], sizes = [1, 16], strides = [1, 1]} : vector<1x18xf32> to vector<1x16xf32>
    %608 = vector.broadcast %31 : vector<8x1xf32> to vector<8x16xf32>
    %609 = vector.broadcast %607 : vector<1x16xf32> to vector<8x16xf32>
    %610 = arith.mulf %608, %609 : vector<8x16xf32>
    %611 = arith.addf %606, %610 : vector<8x16xf32>
    %612 = vector.extract_strided_slice %1 {offsets = [3, 2, 0], sizes = [1, 1, 18], strides = [1, 1, 1]} : vector<4x16x18xf32> to vector<1x1x18xf32>
    %613 = vector.shape_cast %612 : vector<1x1x18xf32> to vector<1x18xf32>
    %614 = vector.extract_strided_slice %613 {offsets = [0, 0], sizes = [1, 16], strides = [1, 1]} : vector<1x18xf32> to vector<1x16xf32>
    %615 = vector.broadcast %32 : vector<8x1xf32> to vector<8x16xf32>
    %616 = vector.broadcast %614 : vector<1x16xf32> to vector<8x16xf32>
    %617 = arith.mulf %615, %616 : vector<8x16xf32>
    %618 = arith.addf %611, %617 : vector<8x16xf32>
    %619 = vector.extract_strided_slice %613 {offsets = [0, 1], sizes = [1, 16], strides = [1, 1]} : vector<1x18xf32> to vector<1x16xf32>
    %620 = vector.broadcast %33 : vector<8x1xf32> to vector<8x16xf32>
    %621 = vector.broadcast %619 : vector<1x16xf32> to vector<8x16xf32>
    %622 = arith.mulf %620, %621 : vector<8x16xf32>
    %623 = arith.addf %618, %622 : vector<8x16xf32>
    %624 = vector.extract_strided_slice %613 {offsets = [0, 2], sizes = [1, 16], strides = [1, 1]} : vector<1x18xf32> to vector<1x16xf32>
    %625 = vector.broadcast %34 : vector<8x1xf32> to vector<8x16xf32>
    %626 = vector.broadcast %624 : vector<1x16xf32> to vector<8x16xf32>
    %627 = arith.mulf %625, %626 : vector<8x16xf32>
    %628 = arith.addf %623, %627 : vector<8x16xf32>
    %629 = vector.extract_strided_slice %1 {offsets = [3, 3, 0], sizes = [1, 1, 18], strides = [1, 1, 1]} : vector<4x16x18xf32> to vector<1x1x18xf32>
    %630 = vector.shape_cast %629 : vector<1x1x18xf32> to vector<1x18xf32>
    %631 = vector.extract_strided_slice %630 {offsets = [0, 0], sizes = [1, 16], strides = [1, 1]} : vector<1x18xf32> to vector<1x16xf32>
    %632 = vector.broadcast %35 : vector<8x1xf32> to vector<8x16xf32>
    %633 = vector.broadcast %631 : vector<1x16xf32> to vector<8x16xf32>
    %634 = arith.mulf %632, %633 : vector<8x16xf32>
    %635 = arith.addf %628, %634 : vector<8x16xf32>
    %636 = vector.extract_strided_slice %630 {offsets = [0, 1], sizes = [1, 16], strides = [1, 1]} : vector<1x18xf32> to vector<1x16xf32>
    %637 = vector.broadcast %36 : vector<8x1xf32> to vector<8x16xf32>
    %638 = vector.broadcast %636 : vector<1x16xf32> to vector<8x16xf32>
    %639 = arith.mulf %637, %638 : vector<8x16xf32>
    %640 = arith.addf %635, %639 : vector<8x16xf32>
    %641 = vector.extract_strided_slice %630 {offsets = [0, 2], sizes = [1, 16], strides = [1, 1]} : vector<1x18xf32> to vector<1x16xf32>
    %642 = vector.broadcast %37 : vector<8x1xf32> to vector<8x16xf32>
    %643 = vector.broadcast %641 : vector<1x16xf32> to vector<8x16xf32>
    %644 = arith.mulf %642, %643 : vector<8x16xf32>
    %645 = arith.addf %640, %644 : vector<8x16xf32>
    %646 = vector.extract_strided_slice %1 {offsets = [3, 4, 0], sizes = [1, 1, 18], strides = [1, 1, 1]} : vector<4x16x18xf32> to vector<1x1x18xf32>
    %647 = vector.shape_cast %646 : vector<1x1x18xf32> to vector<1x18xf32>
    %648 = vector.extract_strided_slice %647 {offsets = [0, 0], sizes = [1, 16], strides = [1, 1]} : vector<1x18xf32> to vector<1x16xf32>
    %649 = vector.broadcast %38 : vector<8x1xf32> to vector<8x16xf32>
    %650 = vector.broadcast %648 : vector<1x16xf32> to vector<8x16xf32>
    %651 = arith.mulf %649, %650 : vector<8x16xf32>
    %652 = arith.addf %645, %651 : vector<8x16xf32>
    %653 = vector.extract_strided_slice %647 {offsets = [0, 1], sizes = [1, 16], strides = [1, 1]} : vector<1x18xf32> to vector<1x16xf32>
    %654 = vector.broadcast %39 : vector<8x1xf32> to vector<8x16xf32>
    %655 = vector.broadcast %653 : vector<1x16xf32> to vector<8x16xf32>
    %656 = arith.mulf %654, %655 : vector<8x16xf32>
    %657 = arith.addf %652, %656 : vector<8x16xf32>
    %658 = vector.extract_strided_slice %647 {offsets = [0, 2], sizes = [1, 16], strides = [1, 1]} : vector<1x18xf32> to vector<1x16xf32>
    %659 = vector.broadcast %40 : vector<8x1xf32> to vector<8x16xf32>
    %660 = vector.broadcast %658 : vector<1x16xf32> to vector<8x16xf32>
    %661 = arith.mulf %659, %660 : vector<8x16xf32>
    %662 = arith.addf %657, %661 : vector<8x16xf32>
    %663 = vector.broadcast %2 : vector<8x1xf32> to vector<8x16xf32>
    %664 = arith.mulf %662, %663 : vector<8x16xf32>
    %665 = vector.broadcast %3 : vector<8x1xf32> to vector<8x16xf32>
    %666 = arith.addf %664, %665 : vector<8x16xf32>
    %cst_10 = arith.constant 0.000000e+00 : f32
    %667 = vector.broadcast %cst_10 : f32 to vector<8x16xf32>
    %668 = arith.maximumf %666, %667 : vector<8x16xf32>
    %669 = arith.maximumf %459, %668 : vector<8x16xf32>
    %670 = vector.extract_strided_slice %1 {offsets = [0, 3, 0], sizes = [1, 1, 18], strides = [1, 1, 1]} : vector<4x16x18xf32> to vector<1x1x18xf32>
    %671 = vector.shape_cast %670 : vector<1x1x18xf32> to vector<1x18xf32>
    %672 = vector.extract_strided_slice %671 {offsets = [0, 0], sizes = [1, 16], strides = [1, 1]} : vector<1x18xf32> to vector<1x16xf32>
    %673 = vector.broadcast %5 : vector<8x1xf32> to vector<8x16xf32>
    %674 = vector.broadcast %672 : vector<1x16xf32> to vector<8x16xf32>
    %675 = arith.mulf %673, %674 : vector<8x16xf32>
    %676 = vector.extract_strided_slice %671 {offsets = [0, 1], sizes = [1, 16], strides = [1, 1]} : vector<1x18xf32> to vector<1x16xf32>
    %677 = vector.broadcast %6 : vector<8x1xf32> to vector<8x16xf32>
    %678 = vector.broadcast %676 : vector<1x16xf32> to vector<8x16xf32>
    %679 = arith.mulf %677, %678 : vector<8x16xf32>
    %680 = arith.addf %675, %679 : vector<8x16xf32>
    %681 = vector.extract_strided_slice %671 {offsets = [0, 2], sizes = [1, 16], strides = [1, 1]} : vector<1x18xf32> to vector<1x16xf32>
    %682 = vector.broadcast %7 : vector<8x1xf32> to vector<8x16xf32>
    %683 = vector.broadcast %681 : vector<1x16xf32> to vector<8x16xf32>
    %684 = arith.mulf %682, %683 : vector<8x16xf32>
    %685 = arith.addf %680, %684 : vector<8x16xf32>
    %686 = vector.extract_strided_slice %1 {offsets = [0, 4, 0], sizes = [1, 1, 18], strides = [1, 1, 1]} : vector<4x16x18xf32> to vector<1x1x18xf32>
    %687 = vector.shape_cast %686 : vector<1x1x18xf32> to vector<1x18xf32>
    %688 = vector.extract_strided_slice %687 {offsets = [0, 0], sizes = [1, 16], strides = [1, 1]} : vector<1x18xf32> to vector<1x16xf32>
    %689 = vector.broadcast %8 : vector<8x1xf32> to vector<8x16xf32>
    %690 = vector.broadcast %688 : vector<1x16xf32> to vector<8x16xf32>
    %691 = arith.mulf %689, %690 : vector<8x16xf32>
    %692 = arith.addf %685, %691 : vector<8x16xf32>
    %693 = vector.extract_strided_slice %687 {offsets = [0, 1], sizes = [1, 16], strides = [1, 1]} : vector<1x18xf32> to vector<1x16xf32>
    %694 = vector.broadcast %9 : vector<8x1xf32> to vector<8x16xf32>
    %695 = vector.broadcast %693 : vector<1x16xf32> to vector<8x16xf32>
    %696 = arith.mulf %694, %695 : vector<8x16xf32>
    %697 = arith.addf %692, %696 : vector<8x16xf32>
    %698 = vector.extract_strided_slice %687 {offsets = [0, 2], sizes = [1, 16], strides = [1, 1]} : vector<1x18xf32> to vector<1x16xf32>
    %699 = vector.broadcast %10 : vector<8x1xf32> to vector<8x16xf32>
    %700 = vector.broadcast %698 : vector<1x16xf32> to vector<8x16xf32>
    %701 = arith.mulf %699, %700 : vector<8x16xf32>
    %702 = arith.addf %697, %701 : vector<8x16xf32>
    %703 = vector.extract_strided_slice %1 {offsets = [0, 5, 0], sizes = [1, 1, 18], strides = [1, 1, 1]} : vector<4x16x18xf32> to vector<1x1x18xf32>
    %704 = vector.shape_cast %703 : vector<1x1x18xf32> to vector<1x18xf32>
    %705 = vector.extract_strided_slice %704 {offsets = [0, 0], sizes = [1, 16], strides = [1, 1]} : vector<1x18xf32> to vector<1x16xf32>
    %706 = vector.broadcast %11 : vector<8x1xf32> to vector<8x16xf32>
    %707 = vector.broadcast %705 : vector<1x16xf32> to vector<8x16xf32>
    %708 = arith.mulf %706, %707 : vector<8x16xf32>
    %709 = arith.addf %702, %708 : vector<8x16xf32>
    %710 = vector.extract_strided_slice %704 {offsets = [0, 1], sizes = [1, 16], strides = [1, 1]} : vector<1x18xf32> to vector<1x16xf32>
    %711 = vector.broadcast %12 : vector<8x1xf32> to vector<8x16xf32>
    %712 = vector.broadcast %710 : vector<1x16xf32> to vector<8x16xf32>
    %713 = arith.mulf %711, %712 : vector<8x16xf32>
    %714 = arith.addf %709, %713 : vector<8x16xf32>
    %715 = vector.extract_strided_slice %704 {offsets = [0, 2], sizes = [1, 16], strides = [1, 1]} : vector<1x18xf32> to vector<1x16xf32>
    %716 = vector.broadcast %13 : vector<8x1xf32> to vector<8x16xf32>
    %717 = vector.broadcast %715 : vector<1x16xf32> to vector<8x16xf32>
    %718 = arith.mulf %716, %717 : vector<8x16xf32>
    %719 = arith.addf %714, %718 : vector<8x16xf32>
    %720 = vector.extract_strided_slice %1 {offsets = [1, 3, 0], sizes = [1, 1, 18], strides = [1, 1, 1]} : vector<4x16x18xf32> to vector<1x1x18xf32>
    %721 = vector.shape_cast %720 : vector<1x1x18xf32> to vector<1x18xf32>
    %722 = vector.extract_strided_slice %721 {offsets = [0, 0], sizes = [1, 16], strides = [1, 1]} : vector<1x18xf32> to vector<1x16xf32>
    %723 = vector.broadcast %14 : vector<8x1xf32> to vector<8x16xf32>
    %724 = vector.broadcast %722 : vector<1x16xf32> to vector<8x16xf32>
    %725 = arith.mulf %723, %724 : vector<8x16xf32>
    %726 = arith.addf %719, %725 : vector<8x16xf32>
    %727 = vector.extract_strided_slice %721 {offsets = [0, 1], sizes = [1, 16], strides = [1, 1]} : vector<1x18xf32> to vector<1x16xf32>
    %728 = vector.broadcast %15 : vector<8x1xf32> to vector<8x16xf32>
    %729 = vector.broadcast %727 : vector<1x16xf32> to vector<8x16xf32>
    %730 = arith.mulf %728, %729 : vector<8x16xf32>
    %731 = arith.addf %726, %730 : vector<8x16xf32>
    %732 = vector.extract_strided_slice %721 {offsets = [0, 2], sizes = [1, 16], strides = [1, 1]} : vector<1x18xf32> to vector<1x16xf32>
    %733 = vector.broadcast %16 : vector<8x1xf32> to vector<8x16xf32>
    %734 = vector.broadcast %732 : vector<1x16xf32> to vector<8x16xf32>
    %735 = arith.mulf %733, %734 : vector<8x16xf32>
    %736 = arith.addf %731, %735 : vector<8x16xf32>
    %737 = vector.extract_strided_slice %1 {offsets = [1, 4, 0], sizes = [1, 1, 18], strides = [1, 1, 1]} : vector<4x16x18xf32> to vector<1x1x18xf32>
    %738 = vector.shape_cast %737 : vector<1x1x18xf32> to vector<1x18xf32>
    %739 = vector.extract_strided_slice %738 {offsets = [0, 0], sizes = [1, 16], strides = [1, 1]} : vector<1x18xf32> to vector<1x16xf32>
    %740 = vector.broadcast %17 : vector<8x1xf32> to vector<8x16xf32>
    %741 = vector.broadcast %739 : vector<1x16xf32> to vector<8x16xf32>
    %742 = arith.mulf %740, %741 : vector<8x16xf32>
    %743 = arith.addf %736, %742 : vector<8x16xf32>
    %744 = vector.extract_strided_slice %738 {offsets = [0, 1], sizes = [1, 16], strides = [1, 1]} : vector<1x18xf32> to vector<1x16xf32>
    %745 = vector.broadcast %18 : vector<8x1xf32> to vector<8x16xf32>
    %746 = vector.broadcast %744 : vector<1x16xf32> to vector<8x16xf32>
    %747 = arith.mulf %745, %746 : vector<8x16xf32>
    %748 = arith.addf %743, %747 : vector<8x16xf32>
    %749 = vector.extract_strided_slice %738 {offsets = [0, 2], sizes = [1, 16], strides = [1, 1]} : vector<1x18xf32> to vector<1x16xf32>
    %750 = vector.broadcast %19 : vector<8x1xf32> to vector<8x16xf32>
    %751 = vector.broadcast %749 : vector<1x16xf32> to vector<8x16xf32>
    %752 = arith.mulf %750, %751 : vector<8x16xf32>
    %753 = arith.addf %748, %752 : vector<8x16xf32>
    %754 = vector.extract_strided_slice %1 {offsets = [1, 5, 0], sizes = [1, 1, 18], strides = [1, 1, 1]} : vector<4x16x18xf32> to vector<1x1x18xf32>
    %755 = vector.shape_cast %754 : vector<1x1x18xf32> to vector<1x18xf32>
    %756 = vector.extract_strided_slice %755 {offsets = [0, 0], sizes = [1, 16], strides = [1, 1]} : vector<1x18xf32> to vector<1x16xf32>
    %757 = vector.broadcast %20 : vector<8x1xf32> to vector<8x16xf32>
    %758 = vector.broadcast %756 : vector<1x16xf32> to vector<8x16xf32>
    %759 = arith.mulf %757, %758 : vector<8x16xf32>
    %760 = arith.addf %753, %759 : vector<8x16xf32>
    %761 = vector.extract_strided_slice %755 {offsets = [0, 1], sizes = [1, 16], strides = [1, 1]} : vector<1x18xf32> to vector<1x16xf32>
    %762 = vector.broadcast %21 : vector<8x1xf32> to vector<8x16xf32>
    %763 = vector.broadcast %761 : vector<1x16xf32> to vector<8x16xf32>
    %764 = arith.mulf %762, %763 : vector<8x16xf32>
    %765 = arith.addf %760, %764 : vector<8x16xf32>
    %766 = vector.extract_strided_slice %755 {offsets = [0, 2], sizes = [1, 16], strides = [1, 1]} : vector<1x18xf32> to vector<1x16xf32>
    %767 = vector.broadcast %22 : vector<8x1xf32> to vector<8x16xf32>
    %768 = vector.broadcast %766 : vector<1x16xf32> to vector<8x16xf32>
    %769 = arith.mulf %767, %768 : vector<8x16xf32>
    %770 = arith.addf %765, %769 : vector<8x16xf32>
    %771 = vector.extract_strided_slice %1 {offsets = [2, 3, 0], sizes = [1, 1, 18], strides = [1, 1, 1]} : vector<4x16x18xf32> to vector<1x1x18xf32>
    %772 = vector.shape_cast %771 : vector<1x1x18xf32> to vector<1x18xf32>
    %773 = vector.extract_strided_slice %772 {offsets = [0, 0], sizes = [1, 16], strides = [1, 1]} : vector<1x18xf32> to vector<1x16xf32>
    %774 = vector.broadcast %23 : vector<8x1xf32> to vector<8x16xf32>
    %775 = vector.broadcast %773 : vector<1x16xf32> to vector<8x16xf32>
    %776 = arith.mulf %774, %775 : vector<8x16xf32>
    %777 = arith.addf %770, %776 : vector<8x16xf32>
    %778 = vector.extract_strided_slice %772 {offsets = [0, 1], sizes = [1, 16], strides = [1, 1]} : vector<1x18xf32> to vector<1x16xf32>
    %779 = vector.broadcast %24 : vector<8x1xf32> to vector<8x16xf32>
    %780 = vector.broadcast %778 : vector<1x16xf32> to vector<8x16xf32>
    %781 = arith.mulf %779, %780 : vector<8x16xf32>
    %782 = arith.addf %777, %781 : vector<8x16xf32>
    %783 = vector.extract_strided_slice %772 {offsets = [0, 2], sizes = [1, 16], strides = [1, 1]} : vector<1x18xf32> to vector<1x16xf32>
    %784 = vector.broadcast %25 : vector<8x1xf32> to vector<8x16xf32>
    %785 = vector.broadcast %783 : vector<1x16xf32> to vector<8x16xf32>
    %786 = arith.mulf %784, %785 : vector<8x16xf32>
    %787 = arith.addf %782, %786 : vector<8x16xf32>
    %788 = vector.extract_strided_slice %1 {offsets = [2, 4, 0], sizes = [1, 1, 18], strides = [1, 1, 1]} : vector<4x16x18xf32> to vector<1x1x18xf32>
    %789 = vector.shape_cast %788 : vector<1x1x18xf32> to vector<1x18xf32>
    %790 = vector.extract_strided_slice %789 {offsets = [0, 0], sizes = [1, 16], strides = [1, 1]} : vector<1x18xf32> to vector<1x16xf32>
    %791 = vector.broadcast %26 : vector<8x1xf32> to vector<8x16xf32>
    %792 = vector.broadcast %790 : vector<1x16xf32> to vector<8x16xf32>
    %793 = arith.mulf %791, %792 : vector<8x16xf32>
    %794 = arith.addf %787, %793 : vector<8x16xf32>
    %795 = vector.extract_strided_slice %789 {offsets = [0, 1], sizes = [1, 16], strides = [1, 1]} : vector<1x18xf32> to vector<1x16xf32>
    %796 = vector.broadcast %27 : vector<8x1xf32> to vector<8x16xf32>
    %797 = vector.broadcast %795 : vector<1x16xf32> to vector<8x16xf32>
    %798 = arith.mulf %796, %797 : vector<8x16xf32>
    %799 = arith.addf %794, %798 : vector<8x16xf32>
    %800 = vector.extract_strided_slice %789 {offsets = [0, 2], sizes = [1, 16], strides = [1, 1]} : vector<1x18xf32> to vector<1x16xf32>
    %801 = vector.broadcast %28 : vector<8x1xf32> to vector<8x16xf32>
    %802 = vector.broadcast %800 : vector<1x16xf32> to vector<8x16xf32>
    %803 = arith.mulf %801, %802 : vector<8x16xf32>
    %804 = arith.addf %799, %803 : vector<8x16xf32>
    %805 = vector.extract_strided_slice %1 {offsets = [2, 5, 0], sizes = [1, 1, 18], strides = [1, 1, 1]} : vector<4x16x18xf32> to vector<1x1x18xf32>
    %806 = vector.shape_cast %805 : vector<1x1x18xf32> to vector<1x18xf32>
    %807 = vector.extract_strided_slice %806 {offsets = [0, 0], sizes = [1, 16], strides = [1, 1]} : vector<1x18xf32> to vector<1x16xf32>
    %808 = vector.broadcast %29 : vector<8x1xf32> to vector<8x16xf32>
    %809 = vector.broadcast %807 : vector<1x16xf32> to vector<8x16xf32>
    %810 = arith.mulf %808, %809 : vector<8x16xf32>
    %811 = arith.addf %804, %810 : vector<8x16xf32>
    %812 = vector.extract_strided_slice %806 {offsets = [0, 1], sizes = [1, 16], strides = [1, 1]} : vector<1x18xf32> to vector<1x16xf32>
    %813 = vector.broadcast %30 : vector<8x1xf32> to vector<8x16xf32>
    %814 = vector.broadcast %812 : vector<1x16xf32> to vector<8x16xf32>
    %815 = arith.mulf %813, %814 : vector<8x16xf32>
    %816 = arith.addf %811, %815 : vector<8x16xf32>
    %817 = vector.extract_strided_slice %806 {offsets = [0, 2], sizes = [1, 16], strides = [1, 1]} : vector<1x18xf32> to vector<1x16xf32>
    %818 = vector.broadcast %31 : vector<8x1xf32> to vector<8x16xf32>
    %819 = vector.broadcast %817 : vector<1x16xf32> to vector<8x16xf32>
    %820 = arith.mulf %818, %819 : vector<8x16xf32>
    %821 = arith.addf %816, %820 : vector<8x16xf32>
    %822 = vector.extract_strided_slice %1 {offsets = [3, 3, 0], sizes = [1, 1, 18], strides = [1, 1, 1]} : vector<4x16x18xf32> to vector<1x1x18xf32>
    %823 = vector.shape_cast %822 : vector<1x1x18xf32> to vector<1x18xf32>
    %824 = vector.extract_strided_slice %823 {offsets = [0, 0], sizes = [1, 16], strides = [1, 1]} : vector<1x18xf32> to vector<1x16xf32>
    %825 = vector.broadcast %32 : vector<8x1xf32> to vector<8x16xf32>
    %826 = vector.broadcast %824 : vector<1x16xf32> to vector<8x16xf32>
    %827 = arith.mulf %825, %826 : vector<8x16xf32>
    %828 = arith.addf %821, %827 : vector<8x16xf32>
    %829 = vector.extract_strided_slice %823 {offsets = [0, 1], sizes = [1, 16], strides = [1, 1]} : vector<1x18xf32> to vector<1x16xf32>
    %830 = vector.broadcast %33 : vector<8x1xf32> to vector<8x16xf32>
    %831 = vector.broadcast %829 : vector<1x16xf32> to vector<8x16xf32>
    %832 = arith.mulf %830, %831 : vector<8x16xf32>
    %833 = arith.addf %828, %832 : vector<8x16xf32>
    %834 = vector.extract_strided_slice %823 {offsets = [0, 2], sizes = [1, 16], strides = [1, 1]} : vector<1x18xf32> to vector<1x16xf32>
    %835 = vector.broadcast %34 : vector<8x1xf32> to vector<8x16xf32>
    %836 = vector.broadcast %834 : vector<1x16xf32> to vector<8x16xf32>
    %837 = arith.mulf %835, %836 : vector<8x16xf32>
    %838 = arith.addf %833, %837 : vector<8x16xf32>
    %839 = vector.extract_strided_slice %1 {offsets = [3, 4, 0], sizes = [1, 1, 18], strides = [1, 1, 1]} : vector<4x16x18xf32> to vector<1x1x18xf32>
    %840 = vector.shape_cast %839 : vector<1x1x18xf32> to vector<1x18xf32>
    %841 = vector.extract_strided_slice %840 {offsets = [0, 0], sizes = [1, 16], strides = [1, 1]} : vector<1x18xf32> to vector<1x16xf32>
    %842 = vector.broadcast %35 : vector<8x1xf32> to vector<8x16xf32>
    %843 = vector.broadcast %841 : vector<1x16xf32> to vector<8x16xf32>
    %844 = arith.mulf %842, %843 : vector<8x16xf32>
    %845 = arith.addf %838, %844 : vector<8x16xf32>
    %846 = vector.extract_strided_slice %840 {offsets = [0, 1], sizes = [1, 16], strides = [1, 1]} : vector<1x18xf32> to vector<1x16xf32>
    %847 = vector.broadcast %36 : vector<8x1xf32> to vector<8x16xf32>
    %848 = vector.broadcast %846 : vector<1x16xf32> to vector<8x16xf32>
    %849 = arith.mulf %847, %848 : vector<8x16xf32>
    %850 = arith.addf %845, %849 : vector<8x16xf32>
    %851 = vector.extract_strided_slice %840 {offsets = [0, 2], sizes = [1, 16], strides = [1, 1]} : vector<1x18xf32> to vector<1x16xf32>
    %852 = vector.broadcast %37 : vector<8x1xf32> to vector<8x16xf32>
    %853 = vector.broadcast %851 : vector<1x16xf32> to vector<8x16xf32>
    %854 = arith.mulf %852, %853 : vector<8x16xf32>
    %855 = arith.addf %850, %854 : vector<8x16xf32>
    %856 = vector.extract_strided_slice %1 {offsets = [3, 5, 0], sizes = [1, 1, 18], strides = [1, 1, 1]} : vector<4x16x18xf32> to vector<1x1x18xf32>
    %857 = vector.shape_cast %856 : vector<1x1x18xf32> to vector<1x18xf32>
    %858 = vector.extract_strided_slice %857 {offsets = [0, 0], sizes = [1, 16], strides = [1, 1]} : vector<1x18xf32> to vector<1x16xf32>
    %859 = vector.broadcast %38 : vector<8x1xf32> to vector<8x16xf32>
    %860 = vector.broadcast %858 : vector<1x16xf32> to vector<8x16xf32>
    %861 = arith.mulf %859, %860 : vector<8x16xf32>
    %862 = arith.addf %855, %861 : vector<8x16xf32>
    %863 = vector.extract_strided_slice %857 {offsets = [0, 1], sizes = [1, 16], strides = [1, 1]} : vector<1x18xf32> to vector<1x16xf32>
    %864 = vector.broadcast %39 : vector<8x1xf32> to vector<8x16xf32>
    %865 = vector.broadcast %863 : vector<1x16xf32> to vector<8x16xf32>
    %866 = arith.mulf %864, %865 : vector<8x16xf32>
    %867 = arith.addf %862, %866 : vector<8x16xf32>
    %868 = vector.extract_strided_slice %857 {offsets = [0, 2], sizes = [1, 16], strides = [1, 1]} : vector<1x18xf32> to vector<1x16xf32>
    %869 = vector.broadcast %40 : vector<8x1xf32> to vector<8x16xf32>
    %870 = vector.broadcast %868 : vector<1x16xf32> to vector<8x16xf32>
    %871 = arith.mulf %869, %870 : vector<8x16xf32>
    %872 = arith.addf %867, %871 : vector<8x16xf32>
    %873 = vector.broadcast %2 : vector<8x1xf32> to vector<8x16xf32>
    %874 = arith.mulf %872, %873 : vector<8x16xf32>
    %875 = vector.broadcast %3 : vector<8x1xf32> to vector<8x16xf32>
    %876 = arith.addf %874, %875 : vector<8x16xf32>
    %cst_11 = arith.constant 0.000000e+00 : f32
    %877 = vector.broadcast %cst_11 : f32 to vector<8x16xf32>
    %878 = arith.maximumf %876, %877 : vector<8x16xf32>
    %879 = arith.maximumf %669, %878 : vector<8x16xf32>
    %880 = vector.extract_strided_slice %1 {offsets = [0, 4, 0], sizes = [1, 1, 18], strides = [1, 1, 1]} : vector<4x16x18xf32> to vector<1x1x18xf32>
    %881 = vector.shape_cast %880 : vector<1x1x18xf32> to vector<1x18xf32>
    %882 = vector.extract_strided_slice %881 {offsets = [0, 0], sizes = [1, 16], strides = [1, 1]} : vector<1x18xf32> to vector<1x16xf32>
    %883 = vector.broadcast %5 : vector<8x1xf32> to vector<8x16xf32>
    %884 = vector.broadcast %882 : vector<1x16xf32> to vector<8x16xf32>
    %885 = arith.mulf %883, %884 : vector<8x16xf32>
    %886 = vector.extract_strided_slice %881 {offsets = [0, 1], sizes = [1, 16], strides = [1, 1]} : vector<1x18xf32> to vector<1x16xf32>
    %887 = vector.broadcast %6 : vector<8x1xf32> to vector<8x16xf32>
    %888 = vector.broadcast %886 : vector<1x16xf32> to vector<8x16xf32>
    %889 = arith.mulf %887, %888 : vector<8x16xf32>
    %890 = arith.addf %885, %889 : vector<8x16xf32>
    %891 = vector.extract_strided_slice %881 {offsets = [0, 2], sizes = [1, 16], strides = [1, 1]} : vector<1x18xf32> to vector<1x16xf32>
    %892 = vector.broadcast %7 : vector<8x1xf32> to vector<8x16xf32>
    %893 = vector.broadcast %891 : vector<1x16xf32> to vector<8x16xf32>
    %894 = arith.mulf %892, %893 : vector<8x16xf32>
    %895 = arith.addf %890, %894 : vector<8x16xf32>
    %896 = vector.extract_strided_slice %1 {offsets = [0, 5, 0], sizes = [1, 1, 18], strides = [1, 1, 1]} : vector<4x16x18xf32> to vector<1x1x18xf32>
    %897 = vector.shape_cast %896 : vector<1x1x18xf32> to vector<1x18xf32>
    %898 = vector.extract_strided_slice %897 {offsets = [0, 0], sizes = [1, 16], strides = [1, 1]} : vector<1x18xf32> to vector<1x16xf32>
    %899 = vector.broadcast %8 : vector<8x1xf32> to vector<8x16xf32>
    %900 = vector.broadcast %898 : vector<1x16xf32> to vector<8x16xf32>
    %901 = arith.mulf %899, %900 : vector<8x16xf32>
    %902 = arith.addf %895, %901 : vector<8x16xf32>
    %903 = vector.extract_strided_slice %897 {offsets = [0, 1], sizes = [1, 16], strides = [1, 1]} : vector<1x18xf32> to vector<1x16xf32>
    %904 = vector.broadcast %9 : vector<8x1xf32> to vector<8x16xf32>
    %905 = vector.broadcast %903 : vector<1x16xf32> to vector<8x16xf32>
    %906 = arith.mulf %904, %905 : vector<8x16xf32>
    %907 = arith.addf %902, %906 : vector<8x16xf32>
    %908 = vector.extract_strided_slice %897 {offsets = [0, 2], sizes = [1, 16], strides = [1, 1]} : vector<1x18xf32> to vector<1x16xf32>
    %909 = vector.broadcast %10 : vector<8x1xf32> to vector<8x16xf32>
    %910 = vector.broadcast %908 : vector<1x16xf32> to vector<8x16xf32>
    %911 = arith.mulf %909, %910 : vector<8x16xf32>
    %912 = arith.addf %907, %911 : vector<8x16xf32>
    %913 = vector.extract_strided_slice %1 {offsets = [0, 6, 0], sizes = [1, 1, 18], strides = [1, 1, 1]} : vector<4x16x18xf32> to vector<1x1x18xf32>
    %914 = vector.shape_cast %913 : vector<1x1x18xf32> to vector<1x18xf32>
    %915 = vector.extract_strided_slice %914 {offsets = [0, 0], sizes = [1, 16], strides = [1, 1]} : vector<1x18xf32> to vector<1x16xf32>
    %916 = vector.broadcast %11 : vector<8x1xf32> to vector<8x16xf32>
    %917 = vector.broadcast %915 : vector<1x16xf32> to vector<8x16xf32>
    %918 = arith.mulf %916, %917 : vector<8x16xf32>
    %919 = arith.addf %912, %918 : vector<8x16xf32>
    %920 = vector.extract_strided_slice %914 {offsets = [0, 1], sizes = [1, 16], strides = [1, 1]} : vector<1x18xf32> to vector<1x16xf32>
    %921 = vector.broadcast %12 : vector<8x1xf32> to vector<8x16xf32>
    %922 = vector.broadcast %920 : vector<1x16xf32> to vector<8x16xf32>
    %923 = arith.mulf %921, %922 : vector<8x16xf32>
    %924 = arith.addf %919, %923 : vector<8x16xf32>
    %925 = vector.extract_strided_slice %914 {offsets = [0, 2], sizes = [1, 16], strides = [1, 1]} : vector<1x18xf32> to vector<1x16xf32>
    %926 = vector.broadcast %13 : vector<8x1xf32> to vector<8x16xf32>
    %927 = vector.broadcast %925 : vector<1x16xf32> to vector<8x16xf32>
    %928 = arith.mulf %926, %927 : vector<8x16xf32>
    %929 = arith.addf %924, %928 : vector<8x16xf32>
    %930 = vector.extract_strided_slice %1 {offsets = [1, 4, 0], sizes = [1, 1, 18], strides = [1, 1, 1]} : vector<4x16x18xf32> to vector<1x1x18xf32>
    %931 = vector.shape_cast %930 : vector<1x1x18xf32> to vector<1x18xf32>
    %932 = vector.extract_strided_slice %931 {offsets = [0, 0], sizes = [1, 16], strides = [1, 1]} : vector<1x18xf32> to vector<1x16xf32>
    %933 = vector.broadcast %14 : vector<8x1xf32> to vector<8x16xf32>
    %934 = vector.broadcast %932 : vector<1x16xf32> to vector<8x16xf32>
    %935 = arith.mulf %933, %934 : vector<8x16xf32>
    %936 = arith.addf %929, %935 : vector<8x16xf32>
    %937 = vector.extract_strided_slice %931 {offsets = [0, 1], sizes = [1, 16], strides = [1, 1]} : vector<1x18xf32> to vector<1x16xf32>
    %938 = vector.broadcast %15 : vector<8x1xf32> to vector<8x16xf32>
    %939 = vector.broadcast %937 : vector<1x16xf32> to vector<8x16xf32>
    %940 = arith.mulf %938, %939 : vector<8x16xf32>
    %941 = arith.addf %936, %940 : vector<8x16xf32>
    %942 = vector.extract_strided_slice %931 {offsets = [0, 2], sizes = [1, 16], strides = [1, 1]} : vector<1x18xf32> to vector<1x16xf32>
    %943 = vector.broadcast %16 : vector<8x1xf32> to vector<8x16xf32>
    %944 = vector.broadcast %942 : vector<1x16xf32> to vector<8x16xf32>
    %945 = arith.mulf %943, %944 : vector<8x16xf32>
    %946 = arith.addf %941, %945 : vector<8x16xf32>
    %947 = vector.extract_strided_slice %1 {offsets = [1, 5, 0], sizes = [1, 1, 18], strides = [1, 1, 1]} : vector<4x16x18xf32> to vector<1x1x18xf32>
    %948 = vector.shape_cast %947 : vector<1x1x18xf32> to vector<1x18xf32>
    %949 = vector.extract_strided_slice %948 {offsets = [0, 0], sizes = [1, 16], strides = [1, 1]} : vector<1x18xf32> to vector<1x16xf32>
    %950 = vector.broadcast %17 : vector<8x1xf32> to vector<8x16xf32>
    %951 = vector.broadcast %949 : vector<1x16xf32> to vector<8x16xf32>
    %952 = arith.mulf %950, %951 : vector<8x16xf32>
    %953 = arith.addf %946, %952 : vector<8x16xf32>
    %954 = vector.extract_strided_slice %948 {offsets = [0, 1], sizes = [1, 16], strides = [1, 1]} : vector<1x18xf32> to vector<1x16xf32>
    %955 = vector.broadcast %18 : vector<8x1xf32> to vector<8x16xf32>
    %956 = vector.broadcast %954 : vector<1x16xf32> to vector<8x16xf32>
    %957 = arith.mulf %955, %956 : vector<8x16xf32>
    %958 = arith.addf %953, %957 : vector<8x16xf32>
    %959 = vector.extract_strided_slice %948 {offsets = [0, 2], sizes = [1, 16], strides = [1, 1]} : vector<1x18xf32> to vector<1x16xf32>
    %960 = vector.broadcast %19 : vector<8x1xf32> to vector<8x16xf32>
    %961 = vector.broadcast %959 : vector<1x16xf32> to vector<8x16xf32>
    %962 = arith.mulf %960, %961 : vector<8x16xf32>
    %963 = arith.addf %958, %962 : vector<8x16xf32>
    %964 = vector.extract_strided_slice %1 {offsets = [1, 6, 0], sizes = [1, 1, 18], strides = [1, 1, 1]} : vector<4x16x18xf32> to vector<1x1x18xf32>
    %965 = vector.shape_cast %964 : vector<1x1x18xf32> to vector<1x18xf32>
    %966 = vector.extract_strided_slice %965 {offsets = [0, 0], sizes = [1, 16], strides = [1, 1]} : vector<1x18xf32> to vector<1x16xf32>
    %967 = vector.broadcast %20 : vector<8x1xf32> to vector<8x16xf32>
    %968 = vector.broadcast %966 : vector<1x16xf32> to vector<8x16xf32>
    %969 = arith.mulf %967, %968 : vector<8x16xf32>
    %970 = arith.addf %963, %969 : vector<8x16xf32>
    %971 = vector.extract_strided_slice %965 {offsets = [0, 1], sizes = [1, 16], strides = [1, 1]} : vector<1x18xf32> to vector<1x16xf32>
    %972 = vector.broadcast %21 : vector<8x1xf32> to vector<8x16xf32>
    %973 = vector.broadcast %971 : vector<1x16xf32> to vector<8x16xf32>
    %974 = arith.mulf %972, %973 : vector<8x16xf32>
    %975 = arith.addf %970, %974 : vector<8x16xf32>
    %976 = vector.extract_strided_slice %965 {offsets = [0, 2], sizes = [1, 16], strides = [1, 1]} : vector<1x18xf32> to vector<1x16xf32>
    %977 = vector.broadcast %22 : vector<8x1xf32> to vector<8x16xf32>
    %978 = vector.broadcast %976 : vector<1x16xf32> to vector<8x16xf32>
    %979 = arith.mulf %977, %978 : vector<8x16xf32>
    %980 = arith.addf %975, %979 : vector<8x16xf32>
    %981 = vector.extract_strided_slice %1 {offsets = [2, 4, 0], sizes = [1, 1, 18], strides = [1, 1, 1]} : vector<4x16x18xf32> to vector<1x1x18xf32>
    %982 = vector.shape_cast %981 : vector<1x1x18xf32> to vector<1x18xf32>
    %983 = vector.extract_strided_slice %982 {offsets = [0, 0], sizes = [1, 16], strides = [1, 1]} : vector<1x18xf32> to vector<1x16xf32>
    %984 = vector.broadcast %23 : vector<8x1xf32> to vector<8x16xf32>
    %985 = vector.broadcast %983 : vector<1x16xf32> to vector<8x16xf32>
    %986 = arith.mulf %984, %985 : vector<8x16xf32>
    %987 = arith.addf %980, %986 : vector<8x16xf32>
    %988 = vector.extract_strided_slice %982 {offsets = [0, 1], sizes = [1, 16], strides = [1, 1]} : vector<1x18xf32> to vector<1x16xf32>
    %989 = vector.broadcast %24 : vector<8x1xf32> to vector<8x16xf32>
    %990 = vector.broadcast %988 : vector<1x16xf32> to vector<8x16xf32>
    %991 = arith.mulf %989, %990 : vector<8x16xf32>
    %992 = arith.addf %987, %991 : vector<8x16xf32>
    %993 = vector.extract_strided_slice %982 {offsets = [0, 2], sizes = [1, 16], strides = [1, 1]} : vector<1x18xf32> to vector<1x16xf32>
    %994 = vector.broadcast %25 : vector<8x1xf32> to vector<8x16xf32>
    %995 = vector.broadcast %993 : vector<1x16xf32> to vector<8x16xf32>
    %996 = arith.mulf %994, %995 : vector<8x16xf32>
    %997 = arith.addf %992, %996 : vector<8x16xf32>
    %998 = vector.extract_strided_slice %1 {offsets = [2, 5, 0], sizes = [1, 1, 18], strides = [1, 1, 1]} : vector<4x16x18xf32> to vector<1x1x18xf32>
    %999 = vector.shape_cast %998 : vector<1x1x18xf32> to vector<1x18xf32>
    %1000 = vector.extract_strided_slice %999 {offsets = [0, 0], sizes = [1, 16], strides = [1, 1]} : vector<1x18xf32> to vector<1x16xf32>
    %1001 = vector.broadcast %26 : vector<8x1xf32> to vector<8x16xf32>
    %1002 = vector.broadcast %1000 : vector<1x16xf32> to vector<8x16xf32>
    %1003 = arith.mulf %1001, %1002 : vector<8x16xf32>
    %1004 = arith.addf %997, %1003 : vector<8x16xf32>
    %1005 = vector.extract_strided_slice %999 {offsets = [0, 1], sizes = [1, 16], strides = [1, 1]} : vector<1x18xf32> to vector<1x16xf32>
    %1006 = vector.broadcast %27 : vector<8x1xf32> to vector<8x16xf32>
    %1007 = vector.broadcast %1005 : vector<1x16xf32> to vector<8x16xf32>
    %1008 = arith.mulf %1006, %1007 : vector<8x16xf32>
    %1009 = arith.addf %1004, %1008 : vector<8x16xf32>
    %1010 = vector.extract_strided_slice %999 {offsets = [0, 2], sizes = [1, 16], strides = [1, 1]} : vector<1x18xf32> to vector<1x16xf32>
    %1011 = vector.broadcast %28 : vector<8x1xf32> to vector<8x16xf32>
    %1012 = vector.broadcast %1010 : vector<1x16xf32> to vector<8x16xf32>
    %1013 = arith.mulf %1011, %1012 : vector<8x16xf32>
    %1014 = arith.addf %1009, %1013 : vector<8x16xf32>
    %1015 = vector.extract_strided_slice %1 {offsets = [2, 6, 0], sizes = [1, 1, 18], strides = [1, 1, 1]} : vector<4x16x18xf32> to vector<1x1x18xf32>
    %1016 = vector.shape_cast %1015 : vector<1x1x18xf32> to vector<1x18xf32>
    %1017 = vector.extract_strided_slice %1016 {offsets = [0, 0], sizes = [1, 16], strides = [1, 1]} : vector<1x18xf32> to vector<1x16xf32>
    %1018 = vector.broadcast %29 : vector<8x1xf32> to vector<8x16xf32>
    %1019 = vector.broadcast %1017 : vector<1x16xf32> to vector<8x16xf32>
    %1020 = arith.mulf %1018, %1019 : vector<8x16xf32>
    %1021 = arith.addf %1014, %1020 : vector<8x16xf32>
    %1022 = vector.extract_strided_slice %1016 {offsets = [0, 1], sizes = [1, 16], strides = [1, 1]} : vector<1x18xf32> to vector<1x16xf32>
    %1023 = vector.broadcast %30 : vector<8x1xf32> to vector<8x16xf32>
    %1024 = vector.broadcast %1022 : vector<1x16xf32> to vector<8x16xf32>
    %1025 = arith.mulf %1023, %1024 : vector<8x16xf32>
    %1026 = arith.addf %1021, %1025 : vector<8x16xf32>
    %1027 = vector.extract_strided_slice %1016 {offsets = [0, 2], sizes = [1, 16], strides = [1, 1]} : vector<1x18xf32> to vector<1x16xf32>
    %1028 = vector.broadcast %31 : vector<8x1xf32> to vector<8x16xf32>
    %1029 = vector.broadcast %1027 : vector<1x16xf32> to vector<8x16xf32>
    %1030 = arith.mulf %1028, %1029 : vector<8x16xf32>
    %1031 = arith.addf %1026, %1030 : vector<8x16xf32>
    %1032 = vector.extract_strided_slice %1 {offsets = [3, 4, 0], sizes = [1, 1, 18], strides = [1, 1, 1]} : vector<4x16x18xf32> to vector<1x1x18xf32>
    %1033 = vector.shape_cast %1032 : vector<1x1x18xf32> to vector<1x18xf32>
    %1034 = vector.extract_strided_slice %1033 {offsets = [0, 0], sizes = [1, 16], strides = [1, 1]} : vector<1x18xf32> to vector<1x16xf32>
    %1035 = vector.broadcast %32 : vector<8x1xf32> to vector<8x16xf32>
    %1036 = vector.broadcast %1034 : vector<1x16xf32> to vector<8x16xf32>
    %1037 = arith.mulf %1035, %1036 : vector<8x16xf32>
    %1038 = arith.addf %1031, %1037 : vector<8x16xf32>
    %1039 = vector.extract_strided_slice %1033 {offsets = [0, 1], sizes = [1, 16], strides = [1, 1]} : vector<1x18xf32> to vector<1x16xf32>
    %1040 = vector.broadcast %33 : vector<8x1xf32> to vector<8x16xf32>
    %1041 = vector.broadcast %1039 : vector<1x16xf32> to vector<8x16xf32>
    %1042 = arith.mulf %1040, %1041 : vector<8x16xf32>
    %1043 = arith.addf %1038, %1042 : vector<8x16xf32>
    %1044 = vector.extract_strided_slice %1033 {offsets = [0, 2], sizes = [1, 16], strides = [1, 1]} : vector<1x18xf32> to vector<1x16xf32>
    %1045 = vector.broadcast %34 : vector<8x1xf32> to vector<8x16xf32>
    %1046 = vector.broadcast %1044 : vector<1x16xf32> to vector<8x16xf32>
    %1047 = arith.mulf %1045, %1046 : vector<8x16xf32>
    %1048 = arith.addf %1043, %1047 : vector<8x16xf32>
    %1049 = vector.extract_strided_slice %1 {offsets = [3, 5, 0], sizes = [1, 1, 18], strides = [1, 1, 1]} : vector<4x16x18xf32> to vector<1x1x18xf32>
    %1050 = vector.shape_cast %1049 : vector<1x1x18xf32> to vector<1x18xf32>
    %1051 = vector.extract_strided_slice %1050 {offsets = [0, 0], sizes = [1, 16], strides = [1, 1]} : vector<1x18xf32> to vector<1x16xf32>
    %1052 = vector.broadcast %35 : vector<8x1xf32> to vector<8x16xf32>
    %1053 = vector.broadcast %1051 : vector<1x16xf32> to vector<8x16xf32>
    %1054 = arith.mulf %1052, %1053 : vector<8x16xf32>
    %1055 = arith.addf %1048, %1054 : vector<8x16xf32>
    %1056 = vector.extract_strided_slice %1050 {offsets = [0, 1], sizes = [1, 16], strides = [1, 1]} : vector<1x18xf32> to vector<1x16xf32>
    %1057 = vector.broadcast %36 : vector<8x1xf32> to vector<8x16xf32>
    %1058 = vector.broadcast %1056 : vector<1x16xf32> to vector<8x16xf32>
    %1059 = arith.mulf %1057, %1058 : vector<8x16xf32>
    %1060 = arith.addf %1055, %1059 : vector<8x16xf32>
    %1061 = vector.extract_strided_slice %1050 {offsets = [0, 2], sizes = [1, 16], strides = [1, 1]} : vector<1x18xf32> to vector<1x16xf32>
    %1062 = vector.broadcast %37 : vector<8x1xf32> to vector<8x16xf32>
    %1063 = vector.broadcast %1061 : vector<1x16xf32> to vector<8x16xf32>
    %1064 = arith.mulf %1062, %1063 : vector<8x16xf32>
    %1065 = arith.addf %1060, %1064 : vector<8x16xf32>
    %1066 = vector.extract_strided_slice %1 {offsets = [3, 6, 0], sizes = [1, 1, 18], strides = [1, 1, 1]} : vector<4x16x18xf32> to vector<1x1x18xf32>
    %1067 = vector.shape_cast %1066 : vector<1x1x18xf32> to vector<1x18xf32>
    %1068 = vector.extract_strided_slice %1067 {offsets = [0, 0], sizes = [1, 16], strides = [1, 1]} : vector<1x18xf32> to vector<1x16xf32>
    %1069 = vector.broadcast %38 : vector<8x1xf32> to vector<8x16xf32>
    %1070 = vector.broadcast %1068 : vector<1x16xf32> to vector<8x16xf32>
    %1071 = arith.mulf %1069, %1070 : vector<8x16xf32>
    %1072 = arith.addf %1065, %1071 : vector<8x16xf32>
    %1073 = vector.extract_strided_slice %1067 {offsets = [0, 1], sizes = [1, 16], strides = [1, 1]} : vector<1x18xf32> to vector<1x16xf32>
    %1074 = vector.broadcast %39 : vector<8x1xf32> to vector<8x16xf32>
    %1075 = vector.broadcast %1073 : vector<1x16xf32> to vector<8x16xf32>
    %1076 = arith.mulf %1074, %1075 : vector<8x16xf32>
    %1077 = arith.addf %1072, %1076 : vector<8x16xf32>
    %1078 = vector.extract_strided_slice %1067 {offsets = [0, 2], sizes = [1, 16], strides = [1, 1]} : vector<1x18xf32> to vector<1x16xf32>
    %1079 = vector.broadcast %40 : vector<8x1xf32> to vector<8x16xf32>
    %1080 = vector.broadcast %1078 : vector<1x16xf32> to vector<8x16xf32>
    %1081 = arith.mulf %1079, %1080 : vector<8x16xf32>
    %1082 = arith.addf %1077, %1081 : vector<8x16xf32>
    %1083 = vector.broadcast %2 : vector<8x1xf32> to vector<8x16xf32>
    %1084 = arith.mulf %1082, %1083 : vector<8x16xf32>
    %1085 = vector.broadcast %3 : vector<8x1xf32> to vector<8x16xf32>
    %1086 = arith.addf %1084, %1085 : vector<8x16xf32>
    %cst_12 = arith.constant 0.000000e+00 : f32
    %1087 = vector.broadcast %cst_12 : f32 to vector<8x16xf32>
    %1088 = arith.maximumf %1086, %1087 : vector<8x16xf32>
    %1089 = arith.maximumf %879, %1088 : vector<8x16xf32>
    %1090 = vector.extract_strided_slice %1 {offsets = [0, 5, 0], sizes = [1, 1, 18], strides = [1, 1, 1]} : vector<4x16x18xf32> to vector<1x1x18xf32>
    %1091 = vector.shape_cast %1090 : vector<1x1x18xf32> to vector<1x18xf32>
    %1092 = vector.extract_strided_slice %1091 {offsets = [0, 0], sizes = [1, 16], strides = [1, 1]} : vector<1x18xf32> to vector<1x16xf32>
    %1093 = vector.broadcast %5 : vector<8x1xf32> to vector<8x16xf32>
    %1094 = vector.broadcast %1092 : vector<1x16xf32> to vector<8x16xf32>
    %1095 = arith.mulf %1093, %1094 : vector<8x16xf32>
    %1096 = vector.extract_strided_slice %1091 {offsets = [0, 1], sizes = [1, 16], strides = [1, 1]} : vector<1x18xf32> to vector<1x16xf32>
    %1097 = vector.broadcast %6 : vector<8x1xf32> to vector<8x16xf32>
    %1098 = vector.broadcast %1096 : vector<1x16xf32> to vector<8x16xf32>
    %1099 = arith.mulf %1097, %1098 : vector<8x16xf32>
    %1100 = arith.addf %1095, %1099 : vector<8x16xf32>
    %1101 = vector.extract_strided_slice %1091 {offsets = [0, 2], sizes = [1, 16], strides = [1, 1]} : vector<1x18xf32> to vector<1x16xf32>
    %1102 = vector.broadcast %7 : vector<8x1xf32> to vector<8x16xf32>
    %1103 = vector.broadcast %1101 : vector<1x16xf32> to vector<8x16xf32>
    %1104 = arith.mulf %1102, %1103 : vector<8x16xf32>
    %1105 = arith.addf %1100, %1104 : vector<8x16xf32>
    %1106 = vector.extract_strided_slice %1 {offsets = [0, 6, 0], sizes = [1, 1, 18], strides = [1, 1, 1]} : vector<4x16x18xf32> to vector<1x1x18xf32>
    %1107 = vector.shape_cast %1106 : vector<1x1x18xf32> to vector<1x18xf32>
    %1108 = vector.extract_strided_slice %1107 {offsets = [0, 0], sizes = [1, 16], strides = [1, 1]} : vector<1x18xf32> to vector<1x16xf32>
    %1109 = vector.broadcast %8 : vector<8x1xf32> to vector<8x16xf32>
    %1110 = vector.broadcast %1108 : vector<1x16xf32> to vector<8x16xf32>
    %1111 = arith.mulf %1109, %1110 : vector<8x16xf32>
    %1112 = arith.addf %1105, %1111 : vector<8x16xf32>
    %1113 = vector.extract_strided_slice %1107 {offsets = [0, 1], sizes = [1, 16], strides = [1, 1]} : vector<1x18xf32> to vector<1x16xf32>
    %1114 = vector.broadcast %9 : vector<8x1xf32> to vector<8x16xf32>
    %1115 = vector.broadcast %1113 : vector<1x16xf32> to vector<8x16xf32>
    %1116 = arith.mulf %1114, %1115 : vector<8x16xf32>
    %1117 = arith.addf %1112, %1116 : vector<8x16xf32>
    %1118 = vector.extract_strided_slice %1107 {offsets = [0, 2], sizes = [1, 16], strides = [1, 1]} : vector<1x18xf32> to vector<1x16xf32>
    %1119 = vector.broadcast %10 : vector<8x1xf32> to vector<8x16xf32>
    %1120 = vector.broadcast %1118 : vector<1x16xf32> to vector<8x16xf32>
    %1121 = arith.mulf %1119, %1120 : vector<8x16xf32>
    %1122 = arith.addf %1117, %1121 : vector<8x16xf32>
    %1123 = vector.extract_strided_slice %1 {offsets = [0, 7, 0], sizes = [1, 1, 18], strides = [1, 1, 1]} : vector<4x16x18xf32> to vector<1x1x18xf32>
    %1124 = vector.shape_cast %1123 : vector<1x1x18xf32> to vector<1x18xf32>
    %1125 = vector.extract_strided_slice %1124 {offsets = [0, 0], sizes = [1, 16], strides = [1, 1]} : vector<1x18xf32> to vector<1x16xf32>
    %1126 = vector.broadcast %11 : vector<8x1xf32> to vector<8x16xf32>
    %1127 = vector.broadcast %1125 : vector<1x16xf32> to vector<8x16xf32>
    %1128 = arith.mulf %1126, %1127 : vector<8x16xf32>
    %1129 = arith.addf %1122, %1128 : vector<8x16xf32>
    %1130 = vector.extract_strided_slice %1124 {offsets = [0, 1], sizes = [1, 16], strides = [1, 1]} : vector<1x18xf32> to vector<1x16xf32>
    %1131 = vector.broadcast %12 : vector<8x1xf32> to vector<8x16xf32>
    %1132 = vector.broadcast %1130 : vector<1x16xf32> to vector<8x16xf32>
    %1133 = arith.mulf %1131, %1132 : vector<8x16xf32>
    %1134 = arith.addf %1129, %1133 : vector<8x16xf32>
    %1135 = vector.extract_strided_slice %1124 {offsets = [0, 2], sizes = [1, 16], strides = [1, 1]} : vector<1x18xf32> to vector<1x16xf32>
    %1136 = vector.broadcast %13 : vector<8x1xf32> to vector<8x16xf32>
    %1137 = vector.broadcast %1135 : vector<1x16xf32> to vector<8x16xf32>
    %1138 = arith.mulf %1136, %1137 : vector<8x16xf32>
    %1139 = arith.addf %1134, %1138 : vector<8x16xf32>
    %1140 = vector.extract_strided_slice %1 {offsets = [1, 5, 0], sizes = [1, 1, 18], strides = [1, 1, 1]} : vector<4x16x18xf32> to vector<1x1x18xf32>
    %1141 = vector.shape_cast %1140 : vector<1x1x18xf32> to vector<1x18xf32>
    %1142 = vector.extract_strided_slice %1141 {offsets = [0, 0], sizes = [1, 16], strides = [1, 1]} : vector<1x18xf32> to vector<1x16xf32>
    %1143 = vector.broadcast %14 : vector<8x1xf32> to vector<8x16xf32>
    %1144 = vector.broadcast %1142 : vector<1x16xf32> to vector<8x16xf32>
    %1145 = arith.mulf %1143, %1144 : vector<8x16xf32>
    %1146 = arith.addf %1139, %1145 : vector<8x16xf32>
    %1147 = vector.extract_strided_slice %1141 {offsets = [0, 1], sizes = [1, 16], strides = [1, 1]} : vector<1x18xf32> to vector<1x16xf32>
    %1148 = vector.broadcast %15 : vector<8x1xf32> to vector<8x16xf32>
    %1149 = vector.broadcast %1147 : vector<1x16xf32> to vector<8x16xf32>
    %1150 = arith.mulf %1148, %1149 : vector<8x16xf32>
    %1151 = arith.addf %1146, %1150 : vector<8x16xf32>
    %1152 = vector.extract_strided_slice %1141 {offsets = [0, 2], sizes = [1, 16], strides = [1, 1]} : vector<1x18xf32> to vector<1x16xf32>
    %1153 = vector.broadcast %16 : vector<8x1xf32> to vector<8x16xf32>
    %1154 = vector.broadcast %1152 : vector<1x16xf32> to vector<8x16xf32>
    %1155 = arith.mulf %1153, %1154 : vector<8x16xf32>
    %1156 = arith.addf %1151, %1155 : vector<8x16xf32>
    %1157 = vector.extract_strided_slice %1 {offsets = [1, 6, 0], sizes = [1, 1, 18], strides = [1, 1, 1]} : vector<4x16x18xf32> to vector<1x1x18xf32>
    %1158 = vector.shape_cast %1157 : vector<1x1x18xf32> to vector<1x18xf32>
    %1159 = vector.extract_strided_slice %1158 {offsets = [0, 0], sizes = [1, 16], strides = [1, 1]} : vector<1x18xf32> to vector<1x16xf32>
    %1160 = vector.broadcast %17 : vector<8x1xf32> to vector<8x16xf32>
    %1161 = vector.broadcast %1159 : vector<1x16xf32> to vector<8x16xf32>
    %1162 = arith.mulf %1160, %1161 : vector<8x16xf32>
    %1163 = arith.addf %1156, %1162 : vector<8x16xf32>
    %1164 = vector.extract_strided_slice %1158 {offsets = [0, 1], sizes = [1, 16], strides = [1, 1]} : vector<1x18xf32> to vector<1x16xf32>
    %1165 = vector.broadcast %18 : vector<8x1xf32> to vector<8x16xf32>
    %1166 = vector.broadcast %1164 : vector<1x16xf32> to vector<8x16xf32>
    %1167 = arith.mulf %1165, %1166 : vector<8x16xf32>
    %1168 = arith.addf %1163, %1167 : vector<8x16xf32>
    %1169 = vector.extract_strided_slice %1158 {offsets = [0, 2], sizes = [1, 16], strides = [1, 1]} : vector<1x18xf32> to vector<1x16xf32>
    %1170 = vector.broadcast %19 : vector<8x1xf32> to vector<8x16xf32>
    %1171 = vector.broadcast %1169 : vector<1x16xf32> to vector<8x16xf32>
    %1172 = arith.mulf %1170, %1171 : vector<8x16xf32>
    %1173 = arith.addf %1168, %1172 : vector<8x16xf32>
    %1174 = vector.extract_strided_slice %1 {offsets = [1, 7, 0], sizes = [1, 1, 18], strides = [1, 1, 1]} : vector<4x16x18xf32> to vector<1x1x18xf32>
    %1175 = vector.shape_cast %1174 : vector<1x1x18xf32> to vector<1x18xf32>
    %1176 = vector.extract_strided_slice %1175 {offsets = [0, 0], sizes = [1, 16], strides = [1, 1]} : vector<1x18xf32> to vector<1x16xf32>
    %1177 = vector.broadcast %20 : vector<8x1xf32> to vector<8x16xf32>
    %1178 = vector.broadcast %1176 : vector<1x16xf32> to vector<8x16xf32>
    %1179 = arith.mulf %1177, %1178 : vector<8x16xf32>
    %1180 = arith.addf %1173, %1179 : vector<8x16xf32>
    %1181 = vector.extract_strided_slice %1175 {offsets = [0, 1], sizes = [1, 16], strides = [1, 1]} : vector<1x18xf32> to vector<1x16xf32>
    %1182 = vector.broadcast %21 : vector<8x1xf32> to vector<8x16xf32>
    %1183 = vector.broadcast %1181 : vector<1x16xf32> to vector<8x16xf32>
    %1184 = arith.mulf %1182, %1183 : vector<8x16xf32>
    %1185 = arith.addf %1180, %1184 : vector<8x16xf32>
    %1186 = vector.extract_strided_slice %1175 {offsets = [0, 2], sizes = [1, 16], strides = [1, 1]} : vector<1x18xf32> to vector<1x16xf32>
    %1187 = vector.broadcast %22 : vector<8x1xf32> to vector<8x16xf32>
    %1188 = vector.broadcast %1186 : vector<1x16xf32> to vector<8x16xf32>
    %1189 = arith.mulf %1187, %1188 : vector<8x16xf32>
    %1190 = arith.addf %1185, %1189 : vector<8x16xf32>
    %1191 = vector.extract_strided_slice %1 {offsets = [2, 5, 0], sizes = [1, 1, 18], strides = [1, 1, 1]} : vector<4x16x18xf32> to vector<1x1x18xf32>
    %1192 = vector.shape_cast %1191 : vector<1x1x18xf32> to vector<1x18xf32>
    %1193 = vector.extract_strided_slice %1192 {offsets = [0, 0], sizes = [1, 16], strides = [1, 1]} : vector<1x18xf32> to vector<1x16xf32>
    %1194 = vector.broadcast %23 : vector<8x1xf32> to vector<8x16xf32>
    %1195 = vector.broadcast %1193 : vector<1x16xf32> to vector<8x16xf32>
    %1196 = arith.mulf %1194, %1195 : vector<8x16xf32>
    %1197 = arith.addf %1190, %1196 : vector<8x16xf32>
    %1198 = vector.extract_strided_slice %1192 {offsets = [0, 1], sizes = [1, 16], strides = [1, 1]} : vector<1x18xf32> to vector<1x16xf32>
    %1199 = vector.broadcast %24 : vector<8x1xf32> to vector<8x16xf32>
    %1200 = vector.broadcast %1198 : vector<1x16xf32> to vector<8x16xf32>
    %1201 = arith.mulf %1199, %1200 : vector<8x16xf32>
    %1202 = arith.addf %1197, %1201 : vector<8x16xf32>
    %1203 = vector.extract_strided_slice %1192 {offsets = [0, 2], sizes = [1, 16], strides = [1, 1]} : vector<1x18xf32> to vector<1x16xf32>
    %1204 = vector.broadcast %25 : vector<8x1xf32> to vector<8x16xf32>
    %1205 = vector.broadcast %1203 : vector<1x16xf32> to vector<8x16xf32>
    %1206 = arith.mulf %1204, %1205 : vector<8x16xf32>
    %1207 = arith.addf %1202, %1206 : vector<8x16xf32>
    %1208 = vector.extract_strided_slice %1 {offsets = [2, 6, 0], sizes = [1, 1, 18], strides = [1, 1, 1]} : vector<4x16x18xf32> to vector<1x1x18xf32>
    %1209 = vector.shape_cast %1208 : vector<1x1x18xf32> to vector<1x18xf32>
    %1210 = vector.extract_strided_slice %1209 {offsets = [0, 0], sizes = [1, 16], strides = [1, 1]} : vector<1x18xf32> to vector<1x16xf32>
    %1211 = vector.broadcast %26 : vector<8x1xf32> to vector<8x16xf32>
    %1212 = vector.broadcast %1210 : vector<1x16xf32> to vector<8x16xf32>
    %1213 = arith.mulf %1211, %1212 : vector<8x16xf32>
    %1214 = arith.addf %1207, %1213 : vector<8x16xf32>
    %1215 = vector.extract_strided_slice %1209 {offsets = [0, 1], sizes = [1, 16], strides = [1, 1]} : vector<1x18xf32> to vector<1x16xf32>
    %1216 = vector.broadcast %27 : vector<8x1xf32> to vector<8x16xf32>
    %1217 = vector.broadcast %1215 : vector<1x16xf32> to vector<8x16xf32>
    %1218 = arith.mulf %1216, %1217 : vector<8x16xf32>
    %1219 = arith.addf %1214, %1218 : vector<8x16xf32>
    %1220 = vector.extract_strided_slice %1209 {offsets = [0, 2], sizes = [1, 16], strides = [1, 1]} : vector<1x18xf32> to vector<1x16xf32>
    %1221 = vector.broadcast %28 : vector<8x1xf32> to vector<8x16xf32>
    %1222 = vector.broadcast %1220 : vector<1x16xf32> to vector<8x16xf32>
    %1223 = arith.mulf %1221, %1222 : vector<8x16xf32>
    %1224 = arith.addf %1219, %1223 : vector<8x16xf32>
    %1225 = vector.extract_strided_slice %1 {offsets = [2, 7, 0], sizes = [1, 1, 18], strides = [1, 1, 1]} : vector<4x16x18xf32> to vector<1x1x18xf32>
    %1226 = vector.shape_cast %1225 : vector<1x1x18xf32> to vector<1x18xf32>
    %1227 = vector.extract_strided_slice %1226 {offsets = [0, 0], sizes = [1, 16], strides = [1, 1]} : vector<1x18xf32> to vector<1x16xf32>
    %1228 = vector.broadcast %29 : vector<8x1xf32> to vector<8x16xf32>
    %1229 = vector.broadcast %1227 : vector<1x16xf32> to vector<8x16xf32>
    %1230 = arith.mulf %1228, %1229 : vector<8x16xf32>
    %1231 = arith.addf %1224, %1230 : vector<8x16xf32>
    %1232 = vector.extract_strided_slice %1226 {offsets = [0, 1], sizes = [1, 16], strides = [1, 1]} : vector<1x18xf32> to vector<1x16xf32>
    %1233 = vector.broadcast %30 : vector<8x1xf32> to vector<8x16xf32>
    %1234 = vector.broadcast %1232 : vector<1x16xf32> to vector<8x16xf32>
    %1235 = arith.mulf %1233, %1234 : vector<8x16xf32>
    %1236 = arith.addf %1231, %1235 : vector<8x16xf32>
    %1237 = vector.extract_strided_slice %1226 {offsets = [0, 2], sizes = [1, 16], strides = [1, 1]} : vector<1x18xf32> to vector<1x16xf32>
    %1238 = vector.broadcast %31 : vector<8x1xf32> to vector<8x16xf32>
    %1239 = vector.broadcast %1237 : vector<1x16xf32> to vector<8x16xf32>
    %1240 = arith.mulf %1238, %1239 : vector<8x16xf32>
    %1241 = arith.addf %1236, %1240 : vector<8x16xf32>
    %1242 = vector.extract_strided_slice %1 {offsets = [3, 5, 0], sizes = [1, 1, 18], strides = [1, 1, 1]} : vector<4x16x18xf32> to vector<1x1x18xf32>
    %1243 = vector.shape_cast %1242 : vector<1x1x18xf32> to vector<1x18xf32>
    %1244 = vector.extract_strided_slice %1243 {offsets = [0, 0], sizes = [1, 16], strides = [1, 1]} : vector<1x18xf32> to vector<1x16xf32>
    %1245 = vector.broadcast %32 : vector<8x1xf32> to vector<8x16xf32>
    %1246 = vector.broadcast %1244 : vector<1x16xf32> to vector<8x16xf32>
    %1247 = arith.mulf %1245, %1246 : vector<8x16xf32>
    %1248 = arith.addf %1241, %1247 : vector<8x16xf32>
    %1249 = vector.extract_strided_slice %1243 {offsets = [0, 1], sizes = [1, 16], strides = [1, 1]} : vector<1x18xf32> to vector<1x16xf32>
    %1250 = vector.broadcast %33 : vector<8x1xf32> to vector<8x16xf32>
    %1251 = vector.broadcast %1249 : vector<1x16xf32> to vector<8x16xf32>
    %1252 = arith.mulf %1250, %1251 : vector<8x16xf32>
    %1253 = arith.addf %1248, %1252 : vector<8x16xf32>
    %1254 = vector.extract_strided_slice %1243 {offsets = [0, 2], sizes = [1, 16], strides = [1, 1]} : vector<1x18xf32> to vector<1x16xf32>
    %1255 = vector.broadcast %34 : vector<8x1xf32> to vector<8x16xf32>
    %1256 = vector.broadcast %1254 : vector<1x16xf32> to vector<8x16xf32>
    %1257 = arith.mulf %1255, %1256 : vector<8x16xf32>
    %1258 = arith.addf %1253, %1257 : vector<8x16xf32>
    %1259 = vector.extract_strided_slice %1 {offsets = [3, 6, 0], sizes = [1, 1, 18], strides = [1, 1, 1]} : vector<4x16x18xf32> to vector<1x1x18xf32>
    %1260 = vector.shape_cast %1259 : vector<1x1x18xf32> to vector<1x18xf32>
    %1261 = vector.extract_strided_slice %1260 {offsets = [0, 0], sizes = [1, 16], strides = [1, 1]} : vector<1x18xf32> to vector<1x16xf32>
    %1262 = vector.broadcast %35 : vector<8x1xf32> to vector<8x16xf32>
    %1263 = vector.broadcast %1261 : vector<1x16xf32> to vector<8x16xf32>
    %1264 = arith.mulf %1262, %1263 : vector<8x16xf32>
    %1265 = arith.addf %1258, %1264 : vector<8x16xf32>
    %1266 = vector.extract_strided_slice %1260 {offsets = [0, 1], sizes = [1, 16], strides = [1, 1]} : vector<1x18xf32> to vector<1x16xf32>
    %1267 = vector.broadcast %36 : vector<8x1xf32> to vector<8x16xf32>
    %1268 = vector.broadcast %1266 : vector<1x16xf32> to vector<8x16xf32>
    %1269 = arith.mulf %1267, %1268 : vector<8x16xf32>
    %1270 = arith.addf %1265, %1269 : vector<8x16xf32>
    %1271 = vector.extract_strided_slice %1260 {offsets = [0, 2], sizes = [1, 16], strides = [1, 1]} : vector<1x18xf32> to vector<1x16xf32>
    %1272 = vector.broadcast %37 : vector<8x1xf32> to vector<8x16xf32>
    %1273 = vector.broadcast %1271 : vector<1x16xf32> to vector<8x16xf32>
    %1274 = arith.mulf %1272, %1273 : vector<8x16xf32>
    %1275 = arith.addf %1270, %1274 : vector<8x16xf32>
    %1276 = vector.extract_strided_slice %1 {offsets = [3, 7, 0], sizes = [1, 1, 18], strides = [1, 1, 1]} : vector<4x16x18xf32> to vector<1x1x18xf32>
    %1277 = vector.shape_cast %1276 : vector<1x1x18xf32> to vector<1x18xf32>
    %1278 = vector.extract_strided_slice %1277 {offsets = [0, 0], sizes = [1, 16], strides = [1, 1]} : vector<1x18xf32> to vector<1x16xf32>
    %1279 = vector.broadcast %38 : vector<8x1xf32> to vector<8x16xf32>
    %1280 = vector.broadcast %1278 : vector<1x16xf32> to vector<8x16xf32>
    %1281 = arith.mulf %1279, %1280 : vector<8x16xf32>
    %1282 = arith.addf %1275, %1281 : vector<8x16xf32>
    %1283 = vector.extract_strided_slice %1277 {offsets = [0, 1], sizes = [1, 16], strides = [1, 1]} : vector<1x18xf32> to vector<1x16xf32>
    %1284 = vector.broadcast %39 : vector<8x1xf32> to vector<8x16xf32>
    %1285 = vector.broadcast %1283 : vector<1x16xf32> to vector<8x16xf32>
    %1286 = arith.mulf %1284, %1285 : vector<8x16xf32>
    %1287 = arith.addf %1282, %1286 : vector<8x16xf32>
    %1288 = vector.extract_strided_slice %1277 {offsets = [0, 2], sizes = [1, 16], strides = [1, 1]} : vector<1x18xf32> to vector<1x16xf32>
    %1289 = vector.broadcast %40 : vector<8x1xf32> to vector<8x16xf32>
    %1290 = vector.broadcast %1288 : vector<1x16xf32> to vector<8x16xf32>
    %1291 = arith.mulf %1289, %1290 : vector<8x16xf32>
    %1292 = arith.addf %1287, %1291 : vector<8x16xf32>
    %1293 = vector.broadcast %2 : vector<8x1xf32> to vector<8x16xf32>
    %1294 = arith.mulf %1292, %1293 : vector<8x16xf32>
    %1295 = vector.broadcast %3 : vector<8x1xf32> to vector<8x16xf32>
    %1296 = arith.addf %1294, %1295 : vector<8x16xf32>
    %cst_13 = arith.constant 0.000000e+00 : f32
    %1297 = vector.broadcast %cst_13 : f32 to vector<8x16xf32>
    %1298 = arith.maximumf %1296, %1297 : vector<8x16xf32>
    %1299 = arith.maximumf %1089, %1298 : vector<8x16xf32>
    %1300 = vector.extract_strided_slice %1 {offsets = [0, 6, 0], sizes = [1, 1, 18], strides = [1, 1, 1]} : vector<4x16x18xf32> to vector<1x1x18xf32>
    %1301 = vector.shape_cast %1300 : vector<1x1x18xf32> to vector<1x18xf32>
    %1302 = vector.extract_strided_slice %1301 {offsets = [0, 0], sizes = [1, 16], strides = [1, 1]} : vector<1x18xf32> to vector<1x16xf32>
    %1303 = vector.broadcast %5 : vector<8x1xf32> to vector<8x16xf32>
    %1304 = vector.broadcast %1302 : vector<1x16xf32> to vector<8x16xf32>
    %1305 = arith.mulf %1303, %1304 : vector<8x16xf32>
    %1306 = vector.extract_strided_slice %1301 {offsets = [0, 1], sizes = [1, 16], strides = [1, 1]} : vector<1x18xf32> to vector<1x16xf32>
    %1307 = vector.broadcast %6 : vector<8x1xf32> to vector<8x16xf32>
    %1308 = vector.broadcast %1306 : vector<1x16xf32> to vector<8x16xf32>
    %1309 = arith.mulf %1307, %1308 : vector<8x16xf32>
    %1310 = arith.addf %1305, %1309 : vector<8x16xf32>
    %1311 = vector.extract_strided_slice %1301 {offsets = [0, 2], sizes = [1, 16], strides = [1, 1]} : vector<1x18xf32> to vector<1x16xf32>
    %1312 = vector.broadcast %7 : vector<8x1xf32> to vector<8x16xf32>
    %1313 = vector.broadcast %1311 : vector<1x16xf32> to vector<8x16xf32>
    %1314 = arith.mulf %1312, %1313 : vector<8x16xf32>
    %1315 = arith.addf %1310, %1314 : vector<8x16xf32>
    %1316 = vector.extract_strided_slice %1 {offsets = [0, 7, 0], sizes = [1, 1, 18], strides = [1, 1, 1]} : vector<4x16x18xf32> to vector<1x1x18xf32>
    %1317 = vector.shape_cast %1316 : vector<1x1x18xf32> to vector<1x18xf32>
    %1318 = vector.extract_strided_slice %1317 {offsets = [0, 0], sizes = [1, 16], strides = [1, 1]} : vector<1x18xf32> to vector<1x16xf32>
    %1319 = vector.broadcast %8 : vector<8x1xf32> to vector<8x16xf32>
    %1320 = vector.broadcast %1318 : vector<1x16xf32> to vector<8x16xf32>
    %1321 = arith.mulf %1319, %1320 : vector<8x16xf32>
    %1322 = arith.addf %1315, %1321 : vector<8x16xf32>
    %1323 = vector.extract_strided_slice %1317 {offsets = [0, 1], sizes = [1, 16], strides = [1, 1]} : vector<1x18xf32> to vector<1x16xf32>
    %1324 = vector.broadcast %9 : vector<8x1xf32> to vector<8x16xf32>
    %1325 = vector.broadcast %1323 : vector<1x16xf32> to vector<8x16xf32>
    %1326 = arith.mulf %1324, %1325 : vector<8x16xf32>
    %1327 = arith.addf %1322, %1326 : vector<8x16xf32>
    %1328 = vector.extract_strided_slice %1317 {offsets = [0, 2], sizes = [1, 16], strides = [1, 1]} : vector<1x18xf32> to vector<1x16xf32>
    %1329 = vector.broadcast %10 : vector<8x1xf32> to vector<8x16xf32>
    %1330 = vector.broadcast %1328 : vector<1x16xf32> to vector<8x16xf32>
    %1331 = arith.mulf %1329, %1330 : vector<8x16xf32>
    %1332 = arith.addf %1327, %1331 : vector<8x16xf32>
    %1333 = vector.extract_strided_slice %1 {offsets = [0, 8, 0], sizes = [1, 1, 18], strides = [1, 1, 1]} : vector<4x16x18xf32> to vector<1x1x18xf32>
    %1334 = vector.shape_cast %1333 : vector<1x1x18xf32> to vector<1x18xf32>
    %1335 = vector.extract_strided_slice %1334 {offsets = [0, 0], sizes = [1, 16], strides = [1, 1]} : vector<1x18xf32> to vector<1x16xf32>
    %1336 = vector.broadcast %11 : vector<8x1xf32> to vector<8x16xf32>
    %1337 = vector.broadcast %1335 : vector<1x16xf32> to vector<8x16xf32>
    %1338 = arith.mulf %1336, %1337 : vector<8x16xf32>
    %1339 = arith.addf %1332, %1338 : vector<8x16xf32>
    %1340 = vector.extract_strided_slice %1334 {offsets = [0, 1], sizes = [1, 16], strides = [1, 1]} : vector<1x18xf32> to vector<1x16xf32>
    %1341 = vector.broadcast %12 : vector<8x1xf32> to vector<8x16xf32>
    %1342 = vector.broadcast %1340 : vector<1x16xf32> to vector<8x16xf32>
    %1343 = arith.mulf %1341, %1342 : vector<8x16xf32>
    %1344 = arith.addf %1339, %1343 : vector<8x16xf32>
    %1345 = vector.extract_strided_slice %1334 {offsets = [0, 2], sizes = [1, 16], strides = [1, 1]} : vector<1x18xf32> to vector<1x16xf32>
    %1346 = vector.broadcast %13 : vector<8x1xf32> to vector<8x16xf32>
    %1347 = vector.broadcast %1345 : vector<1x16xf32> to vector<8x16xf32>
    %1348 = arith.mulf %1346, %1347 : vector<8x16xf32>
    %1349 = arith.addf %1344, %1348 : vector<8x16xf32>
    %1350 = vector.extract_strided_slice %1 {offsets = [1, 6, 0], sizes = [1, 1, 18], strides = [1, 1, 1]} : vector<4x16x18xf32> to vector<1x1x18xf32>
    %1351 = vector.shape_cast %1350 : vector<1x1x18xf32> to vector<1x18xf32>
    %1352 = vector.extract_strided_slice %1351 {offsets = [0, 0], sizes = [1, 16], strides = [1, 1]} : vector<1x18xf32> to vector<1x16xf32>
    %1353 = vector.broadcast %14 : vector<8x1xf32> to vector<8x16xf32>
    %1354 = vector.broadcast %1352 : vector<1x16xf32> to vector<8x16xf32>
    %1355 = arith.mulf %1353, %1354 : vector<8x16xf32>
    %1356 = arith.addf %1349, %1355 : vector<8x16xf32>
    %1357 = vector.extract_strided_slice %1351 {offsets = [0, 1], sizes = [1, 16], strides = [1, 1]} : vector<1x18xf32> to vector<1x16xf32>
    %1358 = vector.broadcast %15 : vector<8x1xf32> to vector<8x16xf32>
    %1359 = vector.broadcast %1357 : vector<1x16xf32> to vector<8x16xf32>
    %1360 = arith.mulf %1358, %1359 : vector<8x16xf32>
    %1361 = arith.addf %1356, %1360 : vector<8x16xf32>
    %1362 = vector.extract_strided_slice %1351 {offsets = [0, 2], sizes = [1, 16], strides = [1, 1]} : vector<1x18xf32> to vector<1x16xf32>
    %1363 = vector.broadcast %16 : vector<8x1xf32> to vector<8x16xf32>
    %1364 = vector.broadcast %1362 : vector<1x16xf32> to vector<8x16xf32>
    %1365 = arith.mulf %1363, %1364 : vector<8x16xf32>
    %1366 = arith.addf %1361, %1365 : vector<8x16xf32>
    %1367 = vector.extract_strided_slice %1 {offsets = [1, 7, 0], sizes = [1, 1, 18], strides = [1, 1, 1]} : vector<4x16x18xf32> to vector<1x1x18xf32>
    %1368 = vector.shape_cast %1367 : vector<1x1x18xf32> to vector<1x18xf32>
    %1369 = vector.extract_strided_slice %1368 {offsets = [0, 0], sizes = [1, 16], strides = [1, 1]} : vector<1x18xf32> to vector<1x16xf32>
    %1370 = vector.broadcast %17 : vector<8x1xf32> to vector<8x16xf32>
    %1371 = vector.broadcast %1369 : vector<1x16xf32> to vector<8x16xf32>
    %1372 = arith.mulf %1370, %1371 : vector<8x16xf32>
    %1373 = arith.addf %1366, %1372 : vector<8x16xf32>
    %1374 = vector.extract_strided_slice %1368 {offsets = [0, 1], sizes = [1, 16], strides = [1, 1]} : vector<1x18xf32> to vector<1x16xf32>
    %1375 = vector.broadcast %18 : vector<8x1xf32> to vector<8x16xf32>
    %1376 = vector.broadcast %1374 : vector<1x16xf32> to vector<8x16xf32>
    %1377 = arith.mulf %1375, %1376 : vector<8x16xf32>
    %1378 = arith.addf %1373, %1377 : vector<8x16xf32>
    %1379 = vector.extract_strided_slice %1368 {offsets = [0, 2], sizes = [1, 16], strides = [1, 1]} : vector<1x18xf32> to vector<1x16xf32>
    %1380 = vector.broadcast %19 : vector<8x1xf32> to vector<8x16xf32>
    %1381 = vector.broadcast %1379 : vector<1x16xf32> to vector<8x16xf32>
    %1382 = arith.mulf %1380, %1381 : vector<8x16xf32>
    %1383 = arith.addf %1378, %1382 : vector<8x16xf32>
    %1384 = vector.extract_strided_slice %1 {offsets = [1, 8, 0], sizes = [1, 1, 18], strides = [1, 1, 1]} : vector<4x16x18xf32> to vector<1x1x18xf32>
    %1385 = vector.shape_cast %1384 : vector<1x1x18xf32> to vector<1x18xf32>
    %1386 = vector.extract_strided_slice %1385 {offsets = [0, 0], sizes = [1, 16], strides = [1, 1]} : vector<1x18xf32> to vector<1x16xf32>
    %1387 = vector.broadcast %20 : vector<8x1xf32> to vector<8x16xf32>
    %1388 = vector.broadcast %1386 : vector<1x16xf32> to vector<8x16xf32>
    %1389 = arith.mulf %1387, %1388 : vector<8x16xf32>
    %1390 = arith.addf %1383, %1389 : vector<8x16xf32>
    %1391 = vector.extract_strided_slice %1385 {offsets = [0, 1], sizes = [1, 16], strides = [1, 1]} : vector<1x18xf32> to vector<1x16xf32>
    %1392 = vector.broadcast %21 : vector<8x1xf32> to vector<8x16xf32>
    %1393 = vector.broadcast %1391 : vector<1x16xf32> to vector<8x16xf32>
    %1394 = arith.mulf %1392, %1393 : vector<8x16xf32>
    %1395 = arith.addf %1390, %1394 : vector<8x16xf32>
    %1396 = vector.extract_strided_slice %1385 {offsets = [0, 2], sizes = [1, 16], strides = [1, 1]} : vector<1x18xf32> to vector<1x16xf32>
    %1397 = vector.broadcast %22 : vector<8x1xf32> to vector<8x16xf32>
    %1398 = vector.broadcast %1396 : vector<1x16xf32> to vector<8x16xf32>
    %1399 = arith.mulf %1397, %1398 : vector<8x16xf32>
    %1400 = arith.addf %1395, %1399 : vector<8x16xf32>
    %1401 = vector.extract_strided_slice %1 {offsets = [2, 6, 0], sizes = [1, 1, 18], strides = [1, 1, 1]} : vector<4x16x18xf32> to vector<1x1x18xf32>
    %1402 = vector.shape_cast %1401 : vector<1x1x18xf32> to vector<1x18xf32>
    %1403 = vector.extract_strided_slice %1402 {offsets = [0, 0], sizes = [1, 16], strides = [1, 1]} : vector<1x18xf32> to vector<1x16xf32>
    %1404 = vector.broadcast %23 : vector<8x1xf32> to vector<8x16xf32>
    %1405 = vector.broadcast %1403 : vector<1x16xf32> to vector<8x16xf32>
    %1406 = arith.mulf %1404, %1405 : vector<8x16xf32>
    %1407 = arith.addf %1400, %1406 : vector<8x16xf32>
    %1408 = vector.extract_strided_slice %1402 {offsets = [0, 1], sizes = [1, 16], strides = [1, 1]} : vector<1x18xf32> to vector<1x16xf32>
    %1409 = vector.broadcast %24 : vector<8x1xf32> to vector<8x16xf32>
    %1410 = vector.broadcast %1408 : vector<1x16xf32> to vector<8x16xf32>
    %1411 = arith.mulf %1409, %1410 : vector<8x16xf32>
    %1412 = arith.addf %1407, %1411 : vector<8x16xf32>
    %1413 = vector.extract_strided_slice %1402 {offsets = [0, 2], sizes = [1, 16], strides = [1, 1]} : vector<1x18xf32> to vector<1x16xf32>
    %1414 = vector.broadcast %25 : vector<8x1xf32> to vector<8x16xf32>
    %1415 = vector.broadcast %1413 : vector<1x16xf32> to vector<8x16xf32>
    %1416 = arith.mulf %1414, %1415 : vector<8x16xf32>
    %1417 = arith.addf %1412, %1416 : vector<8x16xf32>
    %1418 = vector.extract_strided_slice %1 {offsets = [2, 7, 0], sizes = [1, 1, 18], strides = [1, 1, 1]} : vector<4x16x18xf32> to vector<1x1x18xf32>
    %1419 = vector.shape_cast %1418 : vector<1x1x18xf32> to vector<1x18xf32>
    %1420 = vector.extract_strided_slice %1419 {offsets = [0, 0], sizes = [1, 16], strides = [1, 1]} : vector<1x18xf32> to vector<1x16xf32>
    %1421 = vector.broadcast %26 : vector<8x1xf32> to vector<8x16xf32>
    %1422 = vector.broadcast %1420 : vector<1x16xf32> to vector<8x16xf32>
    %1423 = arith.mulf %1421, %1422 : vector<8x16xf32>
    %1424 = arith.addf %1417, %1423 : vector<8x16xf32>
    %1425 = vector.extract_strided_slice %1419 {offsets = [0, 1], sizes = [1, 16], strides = [1, 1]} : vector<1x18xf32> to vector<1x16xf32>
    %1426 = vector.broadcast %27 : vector<8x1xf32> to vector<8x16xf32>
    %1427 = vector.broadcast %1425 : vector<1x16xf32> to vector<8x16xf32>
    %1428 = arith.mulf %1426, %1427 : vector<8x16xf32>
    %1429 = arith.addf %1424, %1428 : vector<8x16xf32>
    %1430 = vector.extract_strided_slice %1419 {offsets = [0, 2], sizes = [1, 16], strides = [1, 1]} : vector<1x18xf32> to vector<1x16xf32>
    %1431 = vector.broadcast %28 : vector<8x1xf32> to vector<8x16xf32>
    %1432 = vector.broadcast %1430 : vector<1x16xf32> to vector<8x16xf32>
    %1433 = arith.mulf %1431, %1432 : vector<8x16xf32>
    %1434 = arith.addf %1429, %1433 : vector<8x16xf32>
    %1435 = vector.extract_strided_slice %1 {offsets = [2, 8, 0], sizes = [1, 1, 18], strides = [1, 1, 1]} : vector<4x16x18xf32> to vector<1x1x18xf32>
    %1436 = vector.shape_cast %1435 : vector<1x1x18xf32> to vector<1x18xf32>
    %1437 = vector.extract_strided_slice %1436 {offsets = [0, 0], sizes = [1, 16], strides = [1, 1]} : vector<1x18xf32> to vector<1x16xf32>
    %1438 = vector.broadcast %29 : vector<8x1xf32> to vector<8x16xf32>
    %1439 = vector.broadcast %1437 : vector<1x16xf32> to vector<8x16xf32>
    %1440 = arith.mulf %1438, %1439 : vector<8x16xf32>
    %1441 = arith.addf %1434, %1440 : vector<8x16xf32>
    %1442 = vector.extract_strided_slice %1436 {offsets = [0, 1], sizes = [1, 16], strides = [1, 1]} : vector<1x18xf32> to vector<1x16xf32>
    %1443 = vector.broadcast %30 : vector<8x1xf32> to vector<8x16xf32>
    %1444 = vector.broadcast %1442 : vector<1x16xf32> to vector<8x16xf32>
    %1445 = arith.mulf %1443, %1444 : vector<8x16xf32>
    %1446 = arith.addf %1441, %1445 : vector<8x16xf32>
    %1447 = vector.extract_strided_slice %1436 {offsets = [0, 2], sizes = [1, 16], strides = [1, 1]} : vector<1x18xf32> to vector<1x16xf32>
    %1448 = vector.broadcast %31 : vector<8x1xf32> to vector<8x16xf32>
    %1449 = vector.broadcast %1447 : vector<1x16xf32> to vector<8x16xf32>
    %1450 = arith.mulf %1448, %1449 : vector<8x16xf32>
    %1451 = arith.addf %1446, %1450 : vector<8x16xf32>
    %1452 = vector.extract_strided_slice %1 {offsets = [3, 6, 0], sizes = [1, 1, 18], strides = [1, 1, 1]} : vector<4x16x18xf32> to vector<1x1x18xf32>
    %1453 = vector.shape_cast %1452 : vector<1x1x18xf32> to vector<1x18xf32>
    %1454 = vector.extract_strided_slice %1453 {offsets = [0, 0], sizes = [1, 16], strides = [1, 1]} : vector<1x18xf32> to vector<1x16xf32>
    %1455 = vector.broadcast %32 : vector<8x1xf32> to vector<8x16xf32>
    %1456 = vector.broadcast %1454 : vector<1x16xf32> to vector<8x16xf32>
    %1457 = arith.mulf %1455, %1456 : vector<8x16xf32>
    %1458 = arith.addf %1451, %1457 : vector<8x16xf32>
    %1459 = vector.extract_strided_slice %1453 {offsets = [0, 1], sizes = [1, 16], strides = [1, 1]} : vector<1x18xf32> to vector<1x16xf32>
    %1460 = vector.broadcast %33 : vector<8x1xf32> to vector<8x16xf32>
    %1461 = vector.broadcast %1459 : vector<1x16xf32> to vector<8x16xf32>
    %1462 = arith.mulf %1460, %1461 : vector<8x16xf32>
    %1463 = arith.addf %1458, %1462 : vector<8x16xf32>
    %1464 = vector.extract_strided_slice %1453 {offsets = [0, 2], sizes = [1, 16], strides = [1, 1]} : vector<1x18xf32> to vector<1x16xf32>
    %1465 = vector.broadcast %34 : vector<8x1xf32> to vector<8x16xf32>
    %1466 = vector.broadcast %1464 : vector<1x16xf32> to vector<8x16xf32>
    %1467 = arith.mulf %1465, %1466 : vector<8x16xf32>
    %1468 = arith.addf %1463, %1467 : vector<8x16xf32>
    %1469 = vector.extract_strided_slice %1 {offsets = [3, 7, 0], sizes = [1, 1, 18], strides = [1, 1, 1]} : vector<4x16x18xf32> to vector<1x1x18xf32>
    %1470 = vector.shape_cast %1469 : vector<1x1x18xf32> to vector<1x18xf32>
    %1471 = vector.extract_strided_slice %1470 {offsets = [0, 0], sizes = [1, 16], strides = [1, 1]} : vector<1x18xf32> to vector<1x16xf32>
    %1472 = vector.broadcast %35 : vector<8x1xf32> to vector<8x16xf32>
    %1473 = vector.broadcast %1471 : vector<1x16xf32> to vector<8x16xf32>
    %1474 = arith.mulf %1472, %1473 : vector<8x16xf32>
    %1475 = arith.addf %1468, %1474 : vector<8x16xf32>
    %1476 = vector.extract_strided_slice %1470 {offsets = [0, 1], sizes = [1, 16], strides = [1, 1]} : vector<1x18xf32> to vector<1x16xf32>
    %1477 = vector.broadcast %36 : vector<8x1xf32> to vector<8x16xf32>
    %1478 = vector.broadcast %1476 : vector<1x16xf32> to vector<8x16xf32>
    %1479 = arith.mulf %1477, %1478 : vector<8x16xf32>
    %1480 = arith.addf %1475, %1479 : vector<8x16xf32>
    %1481 = vector.extract_strided_slice %1470 {offsets = [0, 2], sizes = [1, 16], strides = [1, 1]} : vector<1x18xf32> to vector<1x16xf32>
    %1482 = vector.broadcast %37 : vector<8x1xf32> to vector<8x16xf32>
    %1483 = vector.broadcast %1481 : vector<1x16xf32> to vector<8x16xf32>
    %1484 = arith.mulf %1482, %1483 : vector<8x16xf32>
    %1485 = arith.addf %1480, %1484 : vector<8x16xf32>
    %1486 = vector.extract_strided_slice %1 {offsets = [3, 8, 0], sizes = [1, 1, 18], strides = [1, 1, 1]} : vector<4x16x18xf32> to vector<1x1x18xf32>
    %1487 = vector.shape_cast %1486 : vector<1x1x18xf32> to vector<1x18xf32>
    %1488 = vector.extract_strided_slice %1487 {offsets = [0, 0], sizes = [1, 16], strides = [1, 1]} : vector<1x18xf32> to vector<1x16xf32>
    %1489 = vector.broadcast %38 : vector<8x1xf32> to vector<8x16xf32>
    %1490 = vector.broadcast %1488 : vector<1x16xf32> to vector<8x16xf32>
    %1491 = arith.mulf %1489, %1490 : vector<8x16xf32>
    %1492 = arith.addf %1485, %1491 : vector<8x16xf32>
    %1493 = vector.extract_strided_slice %1487 {offsets = [0, 1], sizes = [1, 16], strides = [1, 1]} : vector<1x18xf32> to vector<1x16xf32>
    %1494 = vector.broadcast %39 : vector<8x1xf32> to vector<8x16xf32>
    %1495 = vector.broadcast %1493 : vector<1x16xf32> to vector<8x16xf32>
    %1496 = arith.mulf %1494, %1495 : vector<8x16xf32>
    %1497 = arith.addf %1492, %1496 : vector<8x16xf32>
    %1498 = vector.extract_strided_slice %1487 {offsets = [0, 2], sizes = [1, 16], strides = [1, 1]} : vector<1x18xf32> to vector<1x16xf32>
    %1499 = vector.broadcast %40 : vector<8x1xf32> to vector<8x16xf32>
    %1500 = vector.broadcast %1498 : vector<1x16xf32> to vector<8x16xf32>
    %1501 = arith.mulf %1499, %1500 : vector<8x16xf32>
    %1502 = arith.addf %1497, %1501 : vector<8x16xf32>
    %1503 = vector.broadcast %2 : vector<8x1xf32> to vector<8x16xf32>
    %1504 = arith.mulf %1502, %1503 : vector<8x16xf32>
    %1505 = vector.broadcast %3 : vector<8x1xf32> to vector<8x16xf32>
    %1506 = arith.addf %1504, %1505 : vector<8x16xf32>
    %cst_14 = arith.constant 0.000000e+00 : f32
    %1507 = vector.broadcast %cst_14 : f32 to vector<8x16xf32>
    %1508 = arith.maximumf %1506, %1507 : vector<8x16xf32>
    %1509 = arith.maximumf %1299, %1508 : vector<8x16xf32>
    %1510 = vector.extract_strided_slice %1 {offsets = [0, 7, 0], sizes = [1, 1, 18], strides = [1, 1, 1]} : vector<4x16x18xf32> to vector<1x1x18xf32>
    %1511 = vector.shape_cast %1510 : vector<1x1x18xf32> to vector<1x18xf32>
    %1512 = vector.extract_strided_slice %1511 {offsets = [0, 0], sizes = [1, 16], strides = [1, 1]} : vector<1x18xf32> to vector<1x16xf32>
    %1513 = vector.broadcast %5 : vector<8x1xf32> to vector<8x16xf32>
    %1514 = vector.broadcast %1512 : vector<1x16xf32> to vector<8x16xf32>
    %1515 = arith.mulf %1513, %1514 : vector<8x16xf32>
    %1516 = vector.extract_strided_slice %1511 {offsets = [0, 1], sizes = [1, 16], strides = [1, 1]} : vector<1x18xf32> to vector<1x16xf32>
    %1517 = vector.broadcast %6 : vector<8x1xf32> to vector<8x16xf32>
    %1518 = vector.broadcast %1516 : vector<1x16xf32> to vector<8x16xf32>
    %1519 = arith.mulf %1517, %1518 : vector<8x16xf32>
    %1520 = arith.addf %1515, %1519 : vector<8x16xf32>
    %1521 = vector.extract_strided_slice %1511 {offsets = [0, 2], sizes = [1, 16], strides = [1, 1]} : vector<1x18xf32> to vector<1x16xf32>
    %1522 = vector.broadcast %7 : vector<8x1xf32> to vector<8x16xf32>
    %1523 = vector.broadcast %1521 : vector<1x16xf32> to vector<8x16xf32>
    %1524 = arith.mulf %1522, %1523 : vector<8x16xf32>
    %1525 = arith.addf %1520, %1524 : vector<8x16xf32>
    %1526 = vector.extract_strided_slice %1 {offsets = [0, 8, 0], sizes = [1, 1, 18], strides = [1, 1, 1]} : vector<4x16x18xf32> to vector<1x1x18xf32>
    %1527 = vector.shape_cast %1526 : vector<1x1x18xf32> to vector<1x18xf32>
    %1528 = vector.extract_strided_slice %1527 {offsets = [0, 0], sizes = [1, 16], strides = [1, 1]} : vector<1x18xf32> to vector<1x16xf32>
    %1529 = vector.broadcast %8 : vector<8x1xf32> to vector<8x16xf32>
    %1530 = vector.broadcast %1528 : vector<1x16xf32> to vector<8x16xf32>
    %1531 = arith.mulf %1529, %1530 : vector<8x16xf32>
    %1532 = arith.addf %1525, %1531 : vector<8x16xf32>
    %1533 = vector.extract_strided_slice %1527 {offsets = [0, 1], sizes = [1, 16], strides = [1, 1]} : vector<1x18xf32> to vector<1x16xf32>
    %1534 = vector.broadcast %9 : vector<8x1xf32> to vector<8x16xf32>
    %1535 = vector.broadcast %1533 : vector<1x16xf32> to vector<8x16xf32>
    %1536 = arith.mulf %1534, %1535 : vector<8x16xf32>
    %1537 = arith.addf %1532, %1536 : vector<8x16xf32>
    %1538 = vector.extract_strided_slice %1527 {offsets = [0, 2], sizes = [1, 16], strides = [1, 1]} : vector<1x18xf32> to vector<1x16xf32>
    %1539 = vector.broadcast %10 : vector<8x1xf32> to vector<8x16xf32>
    %1540 = vector.broadcast %1538 : vector<1x16xf32> to vector<8x16xf32>
    %1541 = arith.mulf %1539, %1540 : vector<8x16xf32>
    %1542 = arith.addf %1537, %1541 : vector<8x16xf32>
    %1543 = vector.extract_strided_slice %1 {offsets = [0, 9, 0], sizes = [1, 1, 18], strides = [1, 1, 1]} : vector<4x16x18xf32> to vector<1x1x18xf32>
    %1544 = vector.shape_cast %1543 : vector<1x1x18xf32> to vector<1x18xf32>
    %1545 = vector.extract_strided_slice %1544 {offsets = [0, 0], sizes = [1, 16], strides = [1, 1]} : vector<1x18xf32> to vector<1x16xf32>
    %1546 = vector.broadcast %11 : vector<8x1xf32> to vector<8x16xf32>
    %1547 = vector.broadcast %1545 : vector<1x16xf32> to vector<8x16xf32>
    %1548 = arith.mulf %1546, %1547 : vector<8x16xf32>
    %1549 = arith.addf %1542, %1548 : vector<8x16xf32>
    %1550 = vector.extract_strided_slice %1544 {offsets = [0, 1], sizes = [1, 16], strides = [1, 1]} : vector<1x18xf32> to vector<1x16xf32>
    %1551 = vector.broadcast %12 : vector<8x1xf32> to vector<8x16xf32>
    %1552 = vector.broadcast %1550 : vector<1x16xf32> to vector<8x16xf32>
    %1553 = arith.mulf %1551, %1552 : vector<8x16xf32>
    %1554 = arith.addf %1549, %1553 : vector<8x16xf32>
    %1555 = vector.extract_strided_slice %1544 {offsets = [0, 2], sizes = [1, 16], strides = [1, 1]} : vector<1x18xf32> to vector<1x16xf32>
    %1556 = vector.broadcast %13 : vector<8x1xf32> to vector<8x16xf32>
    %1557 = vector.broadcast %1555 : vector<1x16xf32> to vector<8x16xf32>
    %1558 = arith.mulf %1556, %1557 : vector<8x16xf32>
    %1559 = arith.addf %1554, %1558 : vector<8x16xf32>
    %1560 = vector.extract_strided_slice %1 {offsets = [1, 7, 0], sizes = [1, 1, 18], strides = [1, 1, 1]} : vector<4x16x18xf32> to vector<1x1x18xf32>
    %1561 = vector.shape_cast %1560 : vector<1x1x18xf32> to vector<1x18xf32>
    %1562 = vector.extract_strided_slice %1561 {offsets = [0, 0], sizes = [1, 16], strides = [1, 1]} : vector<1x18xf32> to vector<1x16xf32>
    %1563 = vector.broadcast %14 : vector<8x1xf32> to vector<8x16xf32>
    %1564 = vector.broadcast %1562 : vector<1x16xf32> to vector<8x16xf32>
    %1565 = arith.mulf %1563, %1564 : vector<8x16xf32>
    %1566 = arith.addf %1559, %1565 : vector<8x16xf32>
    %1567 = vector.extract_strided_slice %1561 {offsets = [0, 1], sizes = [1, 16], strides = [1, 1]} : vector<1x18xf32> to vector<1x16xf32>
    %1568 = vector.broadcast %15 : vector<8x1xf32> to vector<8x16xf32>
    %1569 = vector.broadcast %1567 : vector<1x16xf32> to vector<8x16xf32>
    %1570 = arith.mulf %1568, %1569 : vector<8x16xf32>
    %1571 = arith.addf %1566, %1570 : vector<8x16xf32>
    %1572 = vector.extract_strided_slice %1561 {offsets = [0, 2], sizes = [1, 16], strides = [1, 1]} : vector<1x18xf32> to vector<1x16xf32>
    %1573 = vector.broadcast %16 : vector<8x1xf32> to vector<8x16xf32>
    %1574 = vector.broadcast %1572 : vector<1x16xf32> to vector<8x16xf32>
    %1575 = arith.mulf %1573, %1574 : vector<8x16xf32>
    %1576 = arith.addf %1571, %1575 : vector<8x16xf32>
    %1577 = vector.extract_strided_slice %1 {offsets = [1, 8, 0], sizes = [1, 1, 18], strides = [1, 1, 1]} : vector<4x16x18xf32> to vector<1x1x18xf32>
    %1578 = vector.shape_cast %1577 : vector<1x1x18xf32> to vector<1x18xf32>
    %1579 = vector.extract_strided_slice %1578 {offsets = [0, 0], sizes = [1, 16], strides = [1, 1]} : vector<1x18xf32> to vector<1x16xf32>
    %1580 = vector.broadcast %17 : vector<8x1xf32> to vector<8x16xf32>
    %1581 = vector.broadcast %1579 : vector<1x16xf32> to vector<8x16xf32>
    %1582 = arith.mulf %1580, %1581 : vector<8x16xf32>
    %1583 = arith.addf %1576, %1582 : vector<8x16xf32>
    %1584 = vector.extract_strided_slice %1578 {offsets = [0, 1], sizes = [1, 16], strides = [1, 1]} : vector<1x18xf32> to vector<1x16xf32>
    %1585 = vector.broadcast %18 : vector<8x1xf32> to vector<8x16xf32>
    %1586 = vector.broadcast %1584 : vector<1x16xf32> to vector<8x16xf32>
    %1587 = arith.mulf %1585, %1586 : vector<8x16xf32>
    %1588 = arith.addf %1583, %1587 : vector<8x16xf32>
    %1589 = vector.extract_strided_slice %1578 {offsets = [0, 2], sizes = [1, 16], strides = [1, 1]} : vector<1x18xf32> to vector<1x16xf32>
    %1590 = vector.broadcast %19 : vector<8x1xf32> to vector<8x16xf32>
    %1591 = vector.broadcast %1589 : vector<1x16xf32> to vector<8x16xf32>
    %1592 = arith.mulf %1590, %1591 : vector<8x16xf32>
    %1593 = arith.addf %1588, %1592 : vector<8x16xf32>
    %1594 = vector.extract_strided_slice %1 {offsets = [1, 9, 0], sizes = [1, 1, 18], strides = [1, 1, 1]} : vector<4x16x18xf32> to vector<1x1x18xf32>
    %1595 = vector.shape_cast %1594 : vector<1x1x18xf32> to vector<1x18xf32>
    %1596 = vector.extract_strided_slice %1595 {offsets = [0, 0], sizes = [1, 16], strides = [1, 1]} : vector<1x18xf32> to vector<1x16xf32>
    %1597 = vector.broadcast %20 : vector<8x1xf32> to vector<8x16xf32>
    %1598 = vector.broadcast %1596 : vector<1x16xf32> to vector<8x16xf32>
    %1599 = arith.mulf %1597, %1598 : vector<8x16xf32>
    %1600 = arith.addf %1593, %1599 : vector<8x16xf32>
    %1601 = vector.extract_strided_slice %1595 {offsets = [0, 1], sizes = [1, 16], strides = [1, 1]} : vector<1x18xf32> to vector<1x16xf32>
    %1602 = vector.broadcast %21 : vector<8x1xf32> to vector<8x16xf32>
    %1603 = vector.broadcast %1601 : vector<1x16xf32> to vector<8x16xf32>
    %1604 = arith.mulf %1602, %1603 : vector<8x16xf32>
    %1605 = arith.addf %1600, %1604 : vector<8x16xf32>
    %1606 = vector.extract_strided_slice %1595 {offsets = [0, 2], sizes = [1, 16], strides = [1, 1]} : vector<1x18xf32> to vector<1x16xf32>
    %1607 = vector.broadcast %22 : vector<8x1xf32> to vector<8x16xf32>
    %1608 = vector.broadcast %1606 : vector<1x16xf32> to vector<8x16xf32>
    %1609 = arith.mulf %1607, %1608 : vector<8x16xf32>
    %1610 = arith.addf %1605, %1609 : vector<8x16xf32>
    %1611 = vector.extract_strided_slice %1 {offsets = [2, 7, 0], sizes = [1, 1, 18], strides = [1, 1, 1]} : vector<4x16x18xf32> to vector<1x1x18xf32>
    %1612 = vector.shape_cast %1611 : vector<1x1x18xf32> to vector<1x18xf32>
    %1613 = vector.extract_strided_slice %1612 {offsets = [0, 0], sizes = [1, 16], strides = [1, 1]} : vector<1x18xf32> to vector<1x16xf32>
    %1614 = vector.broadcast %23 : vector<8x1xf32> to vector<8x16xf32>
    %1615 = vector.broadcast %1613 : vector<1x16xf32> to vector<8x16xf32>
    %1616 = arith.mulf %1614, %1615 : vector<8x16xf32>
    %1617 = arith.addf %1610, %1616 : vector<8x16xf32>
    %1618 = vector.extract_strided_slice %1612 {offsets = [0, 1], sizes = [1, 16], strides = [1, 1]} : vector<1x18xf32> to vector<1x16xf32>
    %1619 = vector.broadcast %24 : vector<8x1xf32> to vector<8x16xf32>
    %1620 = vector.broadcast %1618 : vector<1x16xf32> to vector<8x16xf32>
    %1621 = arith.mulf %1619, %1620 : vector<8x16xf32>
    %1622 = arith.addf %1617, %1621 : vector<8x16xf32>
    %1623 = vector.extract_strided_slice %1612 {offsets = [0, 2], sizes = [1, 16], strides = [1, 1]} : vector<1x18xf32> to vector<1x16xf32>
    %1624 = vector.broadcast %25 : vector<8x1xf32> to vector<8x16xf32>
    %1625 = vector.broadcast %1623 : vector<1x16xf32> to vector<8x16xf32>
    %1626 = arith.mulf %1624, %1625 : vector<8x16xf32>
    %1627 = arith.addf %1622, %1626 : vector<8x16xf32>
    %1628 = vector.extract_strided_slice %1 {offsets = [2, 8, 0], sizes = [1, 1, 18], strides = [1, 1, 1]} : vector<4x16x18xf32> to vector<1x1x18xf32>
    %1629 = vector.shape_cast %1628 : vector<1x1x18xf32> to vector<1x18xf32>
    %1630 = vector.extract_strided_slice %1629 {offsets = [0, 0], sizes = [1, 16], strides = [1, 1]} : vector<1x18xf32> to vector<1x16xf32>
    %1631 = vector.broadcast %26 : vector<8x1xf32> to vector<8x16xf32>
    %1632 = vector.broadcast %1630 : vector<1x16xf32> to vector<8x16xf32>
    %1633 = arith.mulf %1631, %1632 : vector<8x16xf32>
    %1634 = arith.addf %1627, %1633 : vector<8x16xf32>
    %1635 = vector.extract_strided_slice %1629 {offsets = [0, 1], sizes = [1, 16], strides = [1, 1]} : vector<1x18xf32> to vector<1x16xf32>
    %1636 = vector.broadcast %27 : vector<8x1xf32> to vector<8x16xf32>
    %1637 = vector.broadcast %1635 : vector<1x16xf32> to vector<8x16xf32>
    %1638 = arith.mulf %1636, %1637 : vector<8x16xf32>
    %1639 = arith.addf %1634, %1638 : vector<8x16xf32>
    %1640 = vector.extract_strided_slice %1629 {offsets = [0, 2], sizes = [1, 16], strides = [1, 1]} : vector<1x18xf32> to vector<1x16xf32>
    %1641 = vector.broadcast %28 : vector<8x1xf32> to vector<8x16xf32>
    %1642 = vector.broadcast %1640 : vector<1x16xf32> to vector<8x16xf32>
    %1643 = arith.mulf %1641, %1642 : vector<8x16xf32>
    %1644 = arith.addf %1639, %1643 : vector<8x16xf32>
    %1645 = vector.extract_strided_slice %1 {offsets = [2, 9, 0], sizes = [1, 1, 18], strides = [1, 1, 1]} : vector<4x16x18xf32> to vector<1x1x18xf32>
    %1646 = vector.shape_cast %1645 : vector<1x1x18xf32> to vector<1x18xf32>
    %1647 = vector.extract_strided_slice %1646 {offsets = [0, 0], sizes = [1, 16], strides = [1, 1]} : vector<1x18xf32> to vector<1x16xf32>
    %1648 = vector.broadcast %29 : vector<8x1xf32> to vector<8x16xf32>
    %1649 = vector.broadcast %1647 : vector<1x16xf32> to vector<8x16xf32>
    %1650 = arith.mulf %1648, %1649 : vector<8x16xf32>
    %1651 = arith.addf %1644, %1650 : vector<8x16xf32>
    %1652 = vector.extract_strided_slice %1646 {offsets = [0, 1], sizes = [1, 16], strides = [1, 1]} : vector<1x18xf32> to vector<1x16xf32>
    %1653 = vector.broadcast %30 : vector<8x1xf32> to vector<8x16xf32>
    %1654 = vector.broadcast %1652 : vector<1x16xf32> to vector<8x16xf32>
    %1655 = arith.mulf %1653, %1654 : vector<8x16xf32>
    %1656 = arith.addf %1651, %1655 : vector<8x16xf32>
    %1657 = vector.extract_strided_slice %1646 {offsets = [0, 2], sizes = [1, 16], strides = [1, 1]} : vector<1x18xf32> to vector<1x16xf32>
    %1658 = vector.broadcast %31 : vector<8x1xf32> to vector<8x16xf32>
    %1659 = vector.broadcast %1657 : vector<1x16xf32> to vector<8x16xf32>
    %1660 = arith.mulf %1658, %1659 : vector<8x16xf32>
    %1661 = arith.addf %1656, %1660 : vector<8x16xf32>
    %1662 = vector.extract_strided_slice %1 {offsets = [3, 7, 0], sizes = [1, 1, 18], strides = [1, 1, 1]} : vector<4x16x18xf32> to vector<1x1x18xf32>
    %1663 = vector.shape_cast %1662 : vector<1x1x18xf32> to vector<1x18xf32>
    %1664 = vector.extract_strided_slice %1663 {offsets = [0, 0], sizes = [1, 16], strides = [1, 1]} : vector<1x18xf32> to vector<1x16xf32>
    %1665 = vector.broadcast %32 : vector<8x1xf32> to vector<8x16xf32>
    %1666 = vector.broadcast %1664 : vector<1x16xf32> to vector<8x16xf32>
    %1667 = arith.mulf %1665, %1666 : vector<8x16xf32>
    %1668 = arith.addf %1661, %1667 : vector<8x16xf32>
    %1669 = vector.extract_strided_slice %1663 {offsets = [0, 1], sizes = [1, 16], strides = [1, 1]} : vector<1x18xf32> to vector<1x16xf32>
    %1670 = vector.broadcast %33 : vector<8x1xf32> to vector<8x16xf32>
    %1671 = vector.broadcast %1669 : vector<1x16xf32> to vector<8x16xf32>
    %1672 = arith.mulf %1670, %1671 : vector<8x16xf32>
    %1673 = arith.addf %1668, %1672 : vector<8x16xf32>
    %1674 = vector.extract_strided_slice %1663 {offsets = [0, 2], sizes = [1, 16], strides = [1, 1]} : vector<1x18xf32> to vector<1x16xf32>
    %1675 = vector.broadcast %34 : vector<8x1xf32> to vector<8x16xf32>
    %1676 = vector.broadcast %1674 : vector<1x16xf32> to vector<8x16xf32>
    %1677 = arith.mulf %1675, %1676 : vector<8x16xf32>
    %1678 = arith.addf %1673, %1677 : vector<8x16xf32>
    %1679 = vector.extract_strided_slice %1 {offsets = [3, 8, 0], sizes = [1, 1, 18], strides = [1, 1, 1]} : vector<4x16x18xf32> to vector<1x1x18xf32>
    %1680 = vector.shape_cast %1679 : vector<1x1x18xf32> to vector<1x18xf32>
    %1681 = vector.extract_strided_slice %1680 {offsets = [0, 0], sizes = [1, 16], strides = [1, 1]} : vector<1x18xf32> to vector<1x16xf32>
    %1682 = vector.broadcast %35 : vector<8x1xf32> to vector<8x16xf32>
    %1683 = vector.broadcast %1681 : vector<1x16xf32> to vector<8x16xf32>
    %1684 = arith.mulf %1682, %1683 : vector<8x16xf32>
    %1685 = arith.addf %1678, %1684 : vector<8x16xf32>
    %1686 = vector.extract_strided_slice %1680 {offsets = [0, 1], sizes = [1, 16], strides = [1, 1]} : vector<1x18xf32> to vector<1x16xf32>
    %1687 = vector.broadcast %36 : vector<8x1xf32> to vector<8x16xf32>
    %1688 = vector.broadcast %1686 : vector<1x16xf32> to vector<8x16xf32>
    %1689 = arith.mulf %1687, %1688 : vector<8x16xf32>
    %1690 = arith.addf %1685, %1689 : vector<8x16xf32>
    %1691 = vector.extract_strided_slice %1680 {offsets = [0, 2], sizes = [1, 16], strides = [1, 1]} : vector<1x18xf32> to vector<1x16xf32>
    %1692 = vector.broadcast %37 : vector<8x1xf32> to vector<8x16xf32>
    %1693 = vector.broadcast %1691 : vector<1x16xf32> to vector<8x16xf32>
    %1694 = arith.mulf %1692, %1693 : vector<8x16xf32>
    %1695 = arith.addf %1690, %1694 : vector<8x16xf32>
    %1696 = vector.extract_strided_slice %1 {offsets = [3, 9, 0], sizes = [1, 1, 18], strides = [1, 1, 1]} : vector<4x16x18xf32> to vector<1x1x18xf32>
    %1697 = vector.shape_cast %1696 : vector<1x1x18xf32> to vector<1x18xf32>
    %1698 = vector.extract_strided_slice %1697 {offsets = [0, 0], sizes = [1, 16], strides = [1, 1]} : vector<1x18xf32> to vector<1x16xf32>
    %1699 = vector.broadcast %38 : vector<8x1xf32> to vector<8x16xf32>
    %1700 = vector.broadcast %1698 : vector<1x16xf32> to vector<8x16xf32>
    %1701 = arith.mulf %1699, %1700 : vector<8x16xf32>
    %1702 = arith.addf %1695, %1701 : vector<8x16xf32>
    %1703 = vector.extract_strided_slice %1697 {offsets = [0, 1], sizes = [1, 16], strides = [1, 1]} : vector<1x18xf32> to vector<1x16xf32>
    %1704 = vector.broadcast %39 : vector<8x1xf32> to vector<8x16xf32>
    %1705 = vector.broadcast %1703 : vector<1x16xf32> to vector<8x16xf32>
    %1706 = arith.mulf %1704, %1705 : vector<8x16xf32>
    %1707 = arith.addf %1702, %1706 : vector<8x16xf32>
    %1708 = vector.extract_strided_slice %1697 {offsets = [0, 2], sizes = [1, 16], strides = [1, 1]} : vector<1x18xf32> to vector<1x16xf32>
    %1709 = vector.broadcast %40 : vector<8x1xf32> to vector<8x16xf32>
    %1710 = vector.broadcast %1708 : vector<1x16xf32> to vector<8x16xf32>
    %1711 = arith.mulf %1709, %1710 : vector<8x16xf32>
    %1712 = arith.addf %1707, %1711 : vector<8x16xf32>
    %1713 = vector.broadcast %2 : vector<8x1xf32> to vector<8x16xf32>
    %1714 = arith.mulf %1712, %1713 : vector<8x16xf32>
    %1715 = vector.broadcast %3 : vector<8x1xf32> to vector<8x16xf32>
    %1716 = arith.addf %1714, %1715 : vector<8x16xf32>
    %cst_15 = arith.constant 0.000000e+00 : f32
    %1717 = vector.broadcast %cst_15 : f32 to vector<8x16xf32>
    %1718 = arith.maximumf %1716, %1717 : vector<8x16xf32>
    %1719 = arith.maximumf %1509, %1718 : vector<8x16xf32>
    %1720 = vector.extract_strided_slice %1 {offsets = [0, 8, 0], sizes = [1, 1, 18], strides = [1, 1, 1]} : vector<4x16x18xf32> to vector<1x1x18xf32>
    %1721 = vector.shape_cast %1720 : vector<1x1x18xf32> to vector<1x18xf32>
    %1722 = vector.extract_strided_slice %1721 {offsets = [0, 0], sizes = [1, 16], strides = [1, 1]} : vector<1x18xf32> to vector<1x16xf32>
    %1723 = vector.broadcast %5 : vector<8x1xf32> to vector<8x16xf32>
    %1724 = vector.broadcast %1722 : vector<1x16xf32> to vector<8x16xf32>
    %1725 = arith.mulf %1723, %1724 : vector<8x16xf32>
    %1726 = vector.extract_strided_slice %1721 {offsets = [0, 1], sizes = [1, 16], strides = [1, 1]} : vector<1x18xf32> to vector<1x16xf32>
    %1727 = vector.broadcast %6 : vector<8x1xf32> to vector<8x16xf32>
    %1728 = vector.broadcast %1726 : vector<1x16xf32> to vector<8x16xf32>
    %1729 = arith.mulf %1727, %1728 : vector<8x16xf32>
    %1730 = arith.addf %1725, %1729 : vector<8x16xf32>
    %1731 = vector.extract_strided_slice %1721 {offsets = [0, 2], sizes = [1, 16], strides = [1, 1]} : vector<1x18xf32> to vector<1x16xf32>
    %1732 = vector.broadcast %7 : vector<8x1xf32> to vector<8x16xf32>
    %1733 = vector.broadcast %1731 : vector<1x16xf32> to vector<8x16xf32>
    %1734 = arith.mulf %1732, %1733 : vector<8x16xf32>
    %1735 = arith.addf %1730, %1734 : vector<8x16xf32>
    %1736 = vector.extract_strided_slice %1 {offsets = [0, 9, 0], sizes = [1, 1, 18], strides = [1, 1, 1]} : vector<4x16x18xf32> to vector<1x1x18xf32>
    %1737 = vector.shape_cast %1736 : vector<1x1x18xf32> to vector<1x18xf32>
    %1738 = vector.extract_strided_slice %1737 {offsets = [0, 0], sizes = [1, 16], strides = [1, 1]} : vector<1x18xf32> to vector<1x16xf32>
    %1739 = vector.broadcast %8 : vector<8x1xf32> to vector<8x16xf32>
    %1740 = vector.broadcast %1738 : vector<1x16xf32> to vector<8x16xf32>
    %1741 = arith.mulf %1739, %1740 : vector<8x16xf32>
    %1742 = arith.addf %1735, %1741 : vector<8x16xf32>
    %1743 = vector.extract_strided_slice %1737 {offsets = [0, 1], sizes = [1, 16], strides = [1, 1]} : vector<1x18xf32> to vector<1x16xf32>
    %1744 = vector.broadcast %9 : vector<8x1xf32> to vector<8x16xf32>
    %1745 = vector.broadcast %1743 : vector<1x16xf32> to vector<8x16xf32>
    %1746 = arith.mulf %1744, %1745 : vector<8x16xf32>
    %1747 = arith.addf %1742, %1746 : vector<8x16xf32>
    %1748 = vector.extract_strided_slice %1737 {offsets = [0, 2], sizes = [1, 16], strides = [1, 1]} : vector<1x18xf32> to vector<1x16xf32>
    %1749 = vector.broadcast %10 : vector<8x1xf32> to vector<8x16xf32>
    %1750 = vector.broadcast %1748 : vector<1x16xf32> to vector<8x16xf32>
    %1751 = arith.mulf %1749, %1750 : vector<8x16xf32>
    %1752 = arith.addf %1747, %1751 : vector<8x16xf32>
    %1753 = vector.extract_strided_slice %1 {offsets = [0, 10, 0], sizes = [1, 1, 18], strides = [1, 1, 1]} : vector<4x16x18xf32> to vector<1x1x18xf32>
    %1754 = vector.shape_cast %1753 : vector<1x1x18xf32> to vector<1x18xf32>
    %1755 = vector.extract_strided_slice %1754 {offsets = [0, 0], sizes = [1, 16], strides = [1, 1]} : vector<1x18xf32> to vector<1x16xf32>
    %1756 = vector.broadcast %11 : vector<8x1xf32> to vector<8x16xf32>
    %1757 = vector.broadcast %1755 : vector<1x16xf32> to vector<8x16xf32>
    %1758 = arith.mulf %1756, %1757 : vector<8x16xf32>
    %1759 = arith.addf %1752, %1758 : vector<8x16xf32>
    %1760 = vector.extract_strided_slice %1754 {offsets = [0, 1], sizes = [1, 16], strides = [1, 1]} : vector<1x18xf32> to vector<1x16xf32>
    %1761 = vector.broadcast %12 : vector<8x1xf32> to vector<8x16xf32>
    %1762 = vector.broadcast %1760 : vector<1x16xf32> to vector<8x16xf32>
    %1763 = arith.mulf %1761, %1762 : vector<8x16xf32>
    %1764 = arith.addf %1759, %1763 : vector<8x16xf32>
    %1765 = vector.extract_strided_slice %1754 {offsets = [0, 2], sizes = [1, 16], strides = [1, 1]} : vector<1x18xf32> to vector<1x16xf32>
    %1766 = vector.broadcast %13 : vector<8x1xf32> to vector<8x16xf32>
    %1767 = vector.broadcast %1765 : vector<1x16xf32> to vector<8x16xf32>
    %1768 = arith.mulf %1766, %1767 : vector<8x16xf32>
    %1769 = arith.addf %1764, %1768 : vector<8x16xf32>
    %1770 = vector.extract_strided_slice %1 {offsets = [1, 8, 0], sizes = [1, 1, 18], strides = [1, 1, 1]} : vector<4x16x18xf32> to vector<1x1x18xf32>
    %1771 = vector.shape_cast %1770 : vector<1x1x18xf32> to vector<1x18xf32>
    %1772 = vector.extract_strided_slice %1771 {offsets = [0, 0], sizes = [1, 16], strides = [1, 1]} : vector<1x18xf32> to vector<1x16xf32>
    %1773 = vector.broadcast %14 : vector<8x1xf32> to vector<8x16xf32>
    %1774 = vector.broadcast %1772 : vector<1x16xf32> to vector<8x16xf32>
    %1775 = arith.mulf %1773, %1774 : vector<8x16xf32>
    %1776 = arith.addf %1769, %1775 : vector<8x16xf32>
    %1777 = vector.extract_strided_slice %1771 {offsets = [0, 1], sizes = [1, 16], strides = [1, 1]} : vector<1x18xf32> to vector<1x16xf32>
    %1778 = vector.broadcast %15 : vector<8x1xf32> to vector<8x16xf32>
    %1779 = vector.broadcast %1777 : vector<1x16xf32> to vector<8x16xf32>
    %1780 = arith.mulf %1778, %1779 : vector<8x16xf32>
    %1781 = arith.addf %1776, %1780 : vector<8x16xf32>
    %1782 = vector.extract_strided_slice %1771 {offsets = [0, 2], sizes = [1, 16], strides = [1, 1]} : vector<1x18xf32> to vector<1x16xf32>
    %1783 = vector.broadcast %16 : vector<8x1xf32> to vector<8x16xf32>
    %1784 = vector.broadcast %1782 : vector<1x16xf32> to vector<8x16xf32>
    %1785 = arith.mulf %1783, %1784 : vector<8x16xf32>
    %1786 = arith.addf %1781, %1785 : vector<8x16xf32>
    %1787 = vector.extract_strided_slice %1 {offsets = [1, 9, 0], sizes = [1, 1, 18], strides = [1, 1, 1]} : vector<4x16x18xf32> to vector<1x1x18xf32>
    %1788 = vector.shape_cast %1787 : vector<1x1x18xf32> to vector<1x18xf32>
    %1789 = vector.extract_strided_slice %1788 {offsets = [0, 0], sizes = [1, 16], strides = [1, 1]} : vector<1x18xf32> to vector<1x16xf32>
    %1790 = vector.broadcast %17 : vector<8x1xf32> to vector<8x16xf32>
    %1791 = vector.broadcast %1789 : vector<1x16xf32> to vector<8x16xf32>
    %1792 = arith.mulf %1790, %1791 : vector<8x16xf32>
    %1793 = arith.addf %1786, %1792 : vector<8x16xf32>
    %1794 = vector.extract_strided_slice %1788 {offsets = [0, 1], sizes = [1, 16], strides = [1, 1]} : vector<1x18xf32> to vector<1x16xf32>
    %1795 = vector.broadcast %18 : vector<8x1xf32> to vector<8x16xf32>
    %1796 = vector.broadcast %1794 : vector<1x16xf32> to vector<8x16xf32>
    %1797 = arith.mulf %1795, %1796 : vector<8x16xf32>
    %1798 = arith.addf %1793, %1797 : vector<8x16xf32>
    %1799 = vector.extract_strided_slice %1788 {offsets = [0, 2], sizes = [1, 16], strides = [1, 1]} : vector<1x18xf32> to vector<1x16xf32>
    %1800 = vector.broadcast %19 : vector<8x1xf32> to vector<8x16xf32>
    %1801 = vector.broadcast %1799 : vector<1x16xf32> to vector<8x16xf32>
    %1802 = arith.mulf %1800, %1801 : vector<8x16xf32>
    %1803 = arith.addf %1798, %1802 : vector<8x16xf32>
    %1804 = vector.extract_strided_slice %1 {offsets = [1, 10, 0], sizes = [1, 1, 18], strides = [1, 1, 1]} : vector<4x16x18xf32> to vector<1x1x18xf32>
    %1805 = vector.shape_cast %1804 : vector<1x1x18xf32> to vector<1x18xf32>
    %1806 = vector.extract_strided_slice %1805 {offsets = [0, 0], sizes = [1, 16], strides = [1, 1]} : vector<1x18xf32> to vector<1x16xf32>
    %1807 = vector.broadcast %20 : vector<8x1xf32> to vector<8x16xf32>
    %1808 = vector.broadcast %1806 : vector<1x16xf32> to vector<8x16xf32>
    %1809 = arith.mulf %1807, %1808 : vector<8x16xf32>
    %1810 = arith.addf %1803, %1809 : vector<8x16xf32>
    %1811 = vector.extract_strided_slice %1805 {offsets = [0, 1], sizes = [1, 16], strides = [1, 1]} : vector<1x18xf32> to vector<1x16xf32>
    %1812 = vector.broadcast %21 : vector<8x1xf32> to vector<8x16xf32>
    %1813 = vector.broadcast %1811 : vector<1x16xf32> to vector<8x16xf32>
    %1814 = arith.mulf %1812, %1813 : vector<8x16xf32>
    %1815 = arith.addf %1810, %1814 : vector<8x16xf32>
    %1816 = vector.extract_strided_slice %1805 {offsets = [0, 2], sizes = [1, 16], strides = [1, 1]} : vector<1x18xf32> to vector<1x16xf32>
    %1817 = vector.broadcast %22 : vector<8x1xf32> to vector<8x16xf32>
    %1818 = vector.broadcast %1816 : vector<1x16xf32> to vector<8x16xf32>
    %1819 = arith.mulf %1817, %1818 : vector<8x16xf32>
    %1820 = arith.addf %1815, %1819 : vector<8x16xf32>
    %1821 = vector.extract_strided_slice %1 {offsets = [2, 8, 0], sizes = [1, 1, 18], strides = [1, 1, 1]} : vector<4x16x18xf32> to vector<1x1x18xf32>
    %1822 = vector.shape_cast %1821 : vector<1x1x18xf32> to vector<1x18xf32>
    %1823 = vector.extract_strided_slice %1822 {offsets = [0, 0], sizes = [1, 16], strides = [1, 1]} : vector<1x18xf32> to vector<1x16xf32>
    %1824 = vector.broadcast %23 : vector<8x1xf32> to vector<8x16xf32>
    %1825 = vector.broadcast %1823 : vector<1x16xf32> to vector<8x16xf32>
    %1826 = arith.mulf %1824, %1825 : vector<8x16xf32>
    %1827 = arith.addf %1820, %1826 : vector<8x16xf32>
    %1828 = vector.extract_strided_slice %1822 {offsets = [0, 1], sizes = [1, 16], strides = [1, 1]} : vector<1x18xf32> to vector<1x16xf32>
    %1829 = vector.broadcast %24 : vector<8x1xf32> to vector<8x16xf32>
    %1830 = vector.broadcast %1828 : vector<1x16xf32> to vector<8x16xf32>
    %1831 = arith.mulf %1829, %1830 : vector<8x16xf32>
    %1832 = arith.addf %1827, %1831 : vector<8x16xf32>
    %1833 = vector.extract_strided_slice %1822 {offsets = [0, 2], sizes = [1, 16], strides = [1, 1]} : vector<1x18xf32> to vector<1x16xf32>
    %1834 = vector.broadcast %25 : vector<8x1xf32> to vector<8x16xf32>
    %1835 = vector.broadcast %1833 : vector<1x16xf32> to vector<8x16xf32>
    %1836 = arith.mulf %1834, %1835 : vector<8x16xf32>
    %1837 = arith.addf %1832, %1836 : vector<8x16xf32>
    %1838 = vector.extract_strided_slice %1 {offsets = [2, 9, 0], sizes = [1, 1, 18], strides = [1, 1, 1]} : vector<4x16x18xf32> to vector<1x1x18xf32>
    %1839 = vector.shape_cast %1838 : vector<1x1x18xf32> to vector<1x18xf32>
    %1840 = vector.extract_strided_slice %1839 {offsets = [0, 0], sizes = [1, 16], strides = [1, 1]} : vector<1x18xf32> to vector<1x16xf32>
    %1841 = vector.broadcast %26 : vector<8x1xf32> to vector<8x16xf32>
    %1842 = vector.broadcast %1840 : vector<1x16xf32> to vector<8x16xf32>
    %1843 = arith.mulf %1841, %1842 : vector<8x16xf32>
    %1844 = arith.addf %1837, %1843 : vector<8x16xf32>
    %1845 = vector.extract_strided_slice %1839 {offsets = [0, 1], sizes = [1, 16], strides = [1, 1]} : vector<1x18xf32> to vector<1x16xf32>
    %1846 = vector.broadcast %27 : vector<8x1xf32> to vector<8x16xf32>
    %1847 = vector.broadcast %1845 : vector<1x16xf32> to vector<8x16xf32>
    %1848 = arith.mulf %1846, %1847 : vector<8x16xf32>
    %1849 = arith.addf %1844, %1848 : vector<8x16xf32>
    %1850 = vector.extract_strided_slice %1839 {offsets = [0, 2], sizes = [1, 16], strides = [1, 1]} : vector<1x18xf32> to vector<1x16xf32>
    %1851 = vector.broadcast %28 : vector<8x1xf32> to vector<8x16xf32>
    %1852 = vector.broadcast %1850 : vector<1x16xf32> to vector<8x16xf32>
    %1853 = arith.mulf %1851, %1852 : vector<8x16xf32>
    %1854 = arith.addf %1849, %1853 : vector<8x16xf32>
    %1855 = vector.extract_strided_slice %1 {offsets = [2, 10, 0], sizes = [1, 1, 18], strides = [1, 1, 1]} : vector<4x16x18xf32> to vector<1x1x18xf32>
    %1856 = vector.shape_cast %1855 : vector<1x1x18xf32> to vector<1x18xf32>
    %1857 = vector.extract_strided_slice %1856 {offsets = [0, 0], sizes = [1, 16], strides = [1, 1]} : vector<1x18xf32> to vector<1x16xf32>
    %1858 = vector.broadcast %29 : vector<8x1xf32> to vector<8x16xf32>
    %1859 = vector.broadcast %1857 : vector<1x16xf32> to vector<8x16xf32>
    %1860 = arith.mulf %1858, %1859 : vector<8x16xf32>
    %1861 = arith.addf %1854, %1860 : vector<8x16xf32>
    %1862 = vector.extract_strided_slice %1856 {offsets = [0, 1], sizes = [1, 16], strides = [1, 1]} : vector<1x18xf32> to vector<1x16xf32>
    %1863 = vector.broadcast %30 : vector<8x1xf32> to vector<8x16xf32>
    %1864 = vector.broadcast %1862 : vector<1x16xf32> to vector<8x16xf32>
    %1865 = arith.mulf %1863, %1864 : vector<8x16xf32>
    %1866 = arith.addf %1861, %1865 : vector<8x16xf32>
    %1867 = vector.extract_strided_slice %1856 {offsets = [0, 2], sizes = [1, 16], strides = [1, 1]} : vector<1x18xf32> to vector<1x16xf32>
    %1868 = vector.broadcast %31 : vector<8x1xf32> to vector<8x16xf32>
    %1869 = vector.broadcast %1867 : vector<1x16xf32> to vector<8x16xf32>
    %1870 = arith.mulf %1868, %1869 : vector<8x16xf32>
    %1871 = arith.addf %1866, %1870 : vector<8x16xf32>
    %1872 = vector.extract_strided_slice %1 {offsets = [3, 8, 0], sizes = [1, 1, 18], strides = [1, 1, 1]} : vector<4x16x18xf32> to vector<1x1x18xf32>
    %1873 = vector.shape_cast %1872 : vector<1x1x18xf32> to vector<1x18xf32>
    %1874 = vector.extract_strided_slice %1873 {offsets = [0, 0], sizes = [1, 16], strides = [1, 1]} : vector<1x18xf32> to vector<1x16xf32>
    %1875 = vector.broadcast %32 : vector<8x1xf32> to vector<8x16xf32>
    %1876 = vector.broadcast %1874 : vector<1x16xf32> to vector<8x16xf32>
    %1877 = arith.mulf %1875, %1876 : vector<8x16xf32>
    %1878 = arith.addf %1871, %1877 : vector<8x16xf32>
    %1879 = vector.extract_strided_slice %1873 {offsets = [0, 1], sizes = [1, 16], strides = [1, 1]} : vector<1x18xf32> to vector<1x16xf32>
    %1880 = vector.broadcast %33 : vector<8x1xf32> to vector<8x16xf32>
    %1881 = vector.broadcast %1879 : vector<1x16xf32> to vector<8x16xf32>
    %1882 = arith.mulf %1880, %1881 : vector<8x16xf32>
    %1883 = arith.addf %1878, %1882 : vector<8x16xf32>
    %1884 = vector.extract_strided_slice %1873 {offsets = [0, 2], sizes = [1, 16], strides = [1, 1]} : vector<1x18xf32> to vector<1x16xf32>
    %1885 = vector.broadcast %34 : vector<8x1xf32> to vector<8x16xf32>
    %1886 = vector.broadcast %1884 : vector<1x16xf32> to vector<8x16xf32>
    %1887 = arith.mulf %1885, %1886 : vector<8x16xf32>
    %1888 = arith.addf %1883, %1887 : vector<8x16xf32>
    %1889 = vector.extract_strided_slice %1 {offsets = [3, 9, 0], sizes = [1, 1, 18], strides = [1, 1, 1]} : vector<4x16x18xf32> to vector<1x1x18xf32>
    %1890 = vector.shape_cast %1889 : vector<1x1x18xf32> to vector<1x18xf32>
    %1891 = vector.extract_strided_slice %1890 {offsets = [0, 0], sizes = [1, 16], strides = [1, 1]} : vector<1x18xf32> to vector<1x16xf32>
    %1892 = vector.broadcast %35 : vector<8x1xf32> to vector<8x16xf32>
    %1893 = vector.broadcast %1891 : vector<1x16xf32> to vector<8x16xf32>
    %1894 = arith.mulf %1892, %1893 : vector<8x16xf32>
    %1895 = arith.addf %1888, %1894 : vector<8x16xf32>
    %1896 = vector.extract_strided_slice %1890 {offsets = [0, 1], sizes = [1, 16], strides = [1, 1]} : vector<1x18xf32> to vector<1x16xf32>
    %1897 = vector.broadcast %36 : vector<8x1xf32> to vector<8x16xf32>
    %1898 = vector.broadcast %1896 : vector<1x16xf32> to vector<8x16xf32>
    %1899 = arith.mulf %1897, %1898 : vector<8x16xf32>
    %1900 = arith.addf %1895, %1899 : vector<8x16xf32>
    %1901 = vector.extract_strided_slice %1890 {offsets = [0, 2], sizes = [1, 16], strides = [1, 1]} : vector<1x18xf32> to vector<1x16xf32>
    %1902 = vector.broadcast %37 : vector<8x1xf32> to vector<8x16xf32>
    %1903 = vector.broadcast %1901 : vector<1x16xf32> to vector<8x16xf32>
    %1904 = arith.mulf %1902, %1903 : vector<8x16xf32>
    %1905 = arith.addf %1900, %1904 : vector<8x16xf32>
    %1906 = vector.extract_strided_slice %1 {offsets = [3, 10, 0], sizes = [1, 1, 18], strides = [1, 1, 1]} : vector<4x16x18xf32> to vector<1x1x18xf32>
    %1907 = vector.shape_cast %1906 : vector<1x1x18xf32> to vector<1x18xf32>
    %1908 = vector.extract_strided_slice %1907 {offsets = [0, 0], sizes = [1, 16], strides = [1, 1]} : vector<1x18xf32> to vector<1x16xf32>
    %1909 = vector.broadcast %38 : vector<8x1xf32> to vector<8x16xf32>
    %1910 = vector.broadcast %1908 : vector<1x16xf32> to vector<8x16xf32>
    %1911 = arith.mulf %1909, %1910 : vector<8x16xf32>
    %1912 = arith.addf %1905, %1911 : vector<8x16xf32>
    %1913 = vector.extract_strided_slice %1907 {offsets = [0, 1], sizes = [1, 16], strides = [1, 1]} : vector<1x18xf32> to vector<1x16xf32>
    %1914 = vector.broadcast %39 : vector<8x1xf32> to vector<8x16xf32>
    %1915 = vector.broadcast %1913 : vector<1x16xf32> to vector<8x16xf32>
    %1916 = arith.mulf %1914, %1915 : vector<8x16xf32>
    %1917 = arith.addf %1912, %1916 : vector<8x16xf32>
    %1918 = vector.extract_strided_slice %1907 {offsets = [0, 2], sizes = [1, 16], strides = [1, 1]} : vector<1x18xf32> to vector<1x16xf32>
    %1919 = vector.broadcast %40 : vector<8x1xf32> to vector<8x16xf32>
    %1920 = vector.broadcast %1918 : vector<1x16xf32> to vector<8x16xf32>
    %1921 = arith.mulf %1919, %1920 : vector<8x16xf32>
    %1922 = arith.addf %1917, %1921 : vector<8x16xf32>
    %1923 = vector.broadcast %2 : vector<8x1xf32> to vector<8x16xf32>
    %1924 = arith.mulf %1922, %1923 : vector<8x16xf32>
    %1925 = vector.broadcast %3 : vector<8x1xf32> to vector<8x16xf32>
    %1926 = arith.addf %1924, %1925 : vector<8x16xf32>
    %cst_16 = arith.constant 0.000000e+00 : f32
    %1927 = vector.broadcast %cst_16 : f32 to vector<8x16xf32>
    %1928 = arith.maximumf %1926, %1927 : vector<8x16xf32>
    %1929 = arith.maximumf %1719, %1928 : vector<8x16xf32>
    %1930 = vector.extract_strided_slice %1 {offsets = [0, 9, 0], sizes = [1, 1, 18], strides = [1, 1, 1]} : vector<4x16x18xf32> to vector<1x1x18xf32>
    %1931 = vector.shape_cast %1930 : vector<1x1x18xf32> to vector<1x18xf32>
    %1932 = vector.extract_strided_slice %1931 {offsets = [0, 0], sizes = [1, 16], strides = [1, 1]} : vector<1x18xf32> to vector<1x16xf32>
    %1933 = vector.broadcast %5 : vector<8x1xf32> to vector<8x16xf32>
    %1934 = vector.broadcast %1932 : vector<1x16xf32> to vector<8x16xf32>
    %1935 = arith.mulf %1933, %1934 : vector<8x16xf32>
    %1936 = vector.extract_strided_slice %1931 {offsets = [0, 1], sizes = [1, 16], strides = [1, 1]} : vector<1x18xf32> to vector<1x16xf32>
    %1937 = vector.broadcast %6 : vector<8x1xf32> to vector<8x16xf32>
    %1938 = vector.broadcast %1936 : vector<1x16xf32> to vector<8x16xf32>
    %1939 = arith.mulf %1937, %1938 : vector<8x16xf32>
    %1940 = arith.addf %1935, %1939 : vector<8x16xf32>
    %1941 = vector.extract_strided_slice %1931 {offsets = [0, 2], sizes = [1, 16], strides = [1, 1]} : vector<1x18xf32> to vector<1x16xf32>
    %1942 = vector.broadcast %7 : vector<8x1xf32> to vector<8x16xf32>
    %1943 = vector.broadcast %1941 : vector<1x16xf32> to vector<8x16xf32>
    %1944 = arith.mulf %1942, %1943 : vector<8x16xf32>
    %1945 = arith.addf %1940, %1944 : vector<8x16xf32>
    %1946 = vector.extract_strided_slice %1 {offsets = [0, 10, 0], sizes = [1, 1, 18], strides = [1, 1, 1]} : vector<4x16x18xf32> to vector<1x1x18xf32>
    %1947 = vector.shape_cast %1946 : vector<1x1x18xf32> to vector<1x18xf32>
    %1948 = vector.extract_strided_slice %1947 {offsets = [0, 0], sizes = [1, 16], strides = [1, 1]} : vector<1x18xf32> to vector<1x16xf32>
    %1949 = vector.broadcast %8 : vector<8x1xf32> to vector<8x16xf32>
    %1950 = vector.broadcast %1948 : vector<1x16xf32> to vector<8x16xf32>
    %1951 = arith.mulf %1949, %1950 : vector<8x16xf32>
    %1952 = arith.addf %1945, %1951 : vector<8x16xf32>
    %1953 = vector.extract_strided_slice %1947 {offsets = [0, 1], sizes = [1, 16], strides = [1, 1]} : vector<1x18xf32> to vector<1x16xf32>
    %1954 = vector.broadcast %9 : vector<8x1xf32> to vector<8x16xf32>
    %1955 = vector.broadcast %1953 : vector<1x16xf32> to vector<8x16xf32>
    %1956 = arith.mulf %1954, %1955 : vector<8x16xf32>
    %1957 = arith.addf %1952, %1956 : vector<8x16xf32>
    %1958 = vector.extract_strided_slice %1947 {offsets = [0, 2], sizes = [1, 16], strides = [1, 1]} : vector<1x18xf32> to vector<1x16xf32>
    %1959 = vector.broadcast %10 : vector<8x1xf32> to vector<8x16xf32>
    %1960 = vector.broadcast %1958 : vector<1x16xf32> to vector<8x16xf32>
    %1961 = arith.mulf %1959, %1960 : vector<8x16xf32>
    %1962 = arith.addf %1957, %1961 : vector<8x16xf32>
    %1963 = vector.extract_strided_slice %1 {offsets = [0, 11, 0], sizes = [1, 1, 18], strides = [1, 1, 1]} : vector<4x16x18xf32> to vector<1x1x18xf32>
    %1964 = vector.shape_cast %1963 : vector<1x1x18xf32> to vector<1x18xf32>
    %1965 = vector.extract_strided_slice %1964 {offsets = [0, 0], sizes = [1, 16], strides = [1, 1]} : vector<1x18xf32> to vector<1x16xf32>
    %1966 = vector.broadcast %11 : vector<8x1xf32> to vector<8x16xf32>
    %1967 = vector.broadcast %1965 : vector<1x16xf32> to vector<8x16xf32>
    %1968 = arith.mulf %1966, %1967 : vector<8x16xf32>
    %1969 = arith.addf %1962, %1968 : vector<8x16xf32>
    %1970 = vector.extract_strided_slice %1964 {offsets = [0, 1], sizes = [1, 16], strides = [1, 1]} : vector<1x18xf32> to vector<1x16xf32>
    %1971 = vector.broadcast %12 : vector<8x1xf32> to vector<8x16xf32>
    %1972 = vector.broadcast %1970 : vector<1x16xf32> to vector<8x16xf32>
    %1973 = arith.mulf %1971, %1972 : vector<8x16xf32>
    %1974 = arith.addf %1969, %1973 : vector<8x16xf32>
    %1975 = vector.extract_strided_slice %1964 {offsets = [0, 2], sizes = [1, 16], strides = [1, 1]} : vector<1x18xf32> to vector<1x16xf32>
    %1976 = vector.broadcast %13 : vector<8x1xf32> to vector<8x16xf32>
    %1977 = vector.broadcast %1975 : vector<1x16xf32> to vector<8x16xf32>
    %1978 = arith.mulf %1976, %1977 : vector<8x16xf32>
    %1979 = arith.addf %1974, %1978 : vector<8x16xf32>
    %1980 = vector.extract_strided_slice %1 {offsets = [1, 9, 0], sizes = [1, 1, 18], strides = [1, 1, 1]} : vector<4x16x18xf32> to vector<1x1x18xf32>
    %1981 = vector.shape_cast %1980 : vector<1x1x18xf32> to vector<1x18xf32>
    %1982 = vector.extract_strided_slice %1981 {offsets = [0, 0], sizes = [1, 16], strides = [1, 1]} : vector<1x18xf32> to vector<1x16xf32>
    %1983 = vector.broadcast %14 : vector<8x1xf32> to vector<8x16xf32>
    %1984 = vector.broadcast %1982 : vector<1x16xf32> to vector<8x16xf32>
    %1985 = arith.mulf %1983, %1984 : vector<8x16xf32>
    %1986 = arith.addf %1979, %1985 : vector<8x16xf32>
    %1987 = vector.extract_strided_slice %1981 {offsets = [0, 1], sizes = [1, 16], strides = [1, 1]} : vector<1x18xf32> to vector<1x16xf32>
    %1988 = vector.broadcast %15 : vector<8x1xf32> to vector<8x16xf32>
    %1989 = vector.broadcast %1987 : vector<1x16xf32> to vector<8x16xf32>
    %1990 = arith.mulf %1988, %1989 : vector<8x16xf32>
    %1991 = arith.addf %1986, %1990 : vector<8x16xf32>
    %1992 = vector.extract_strided_slice %1981 {offsets = [0, 2], sizes = [1, 16], strides = [1, 1]} : vector<1x18xf32> to vector<1x16xf32>
    %1993 = vector.broadcast %16 : vector<8x1xf32> to vector<8x16xf32>
    %1994 = vector.broadcast %1992 : vector<1x16xf32> to vector<8x16xf32>
    %1995 = arith.mulf %1993, %1994 : vector<8x16xf32>
    %1996 = arith.addf %1991, %1995 : vector<8x16xf32>
    %1997 = vector.extract_strided_slice %1 {offsets = [1, 10, 0], sizes = [1, 1, 18], strides = [1, 1, 1]} : vector<4x16x18xf32> to vector<1x1x18xf32>
    %1998 = vector.shape_cast %1997 : vector<1x1x18xf32> to vector<1x18xf32>
    %1999 = vector.extract_strided_slice %1998 {offsets = [0, 0], sizes = [1, 16], strides = [1, 1]} : vector<1x18xf32> to vector<1x16xf32>
    %2000 = vector.broadcast %17 : vector<8x1xf32> to vector<8x16xf32>
    %2001 = vector.broadcast %1999 : vector<1x16xf32> to vector<8x16xf32>
    %2002 = arith.mulf %2000, %2001 : vector<8x16xf32>
    %2003 = arith.addf %1996, %2002 : vector<8x16xf32>
    %2004 = vector.extract_strided_slice %1998 {offsets = [0, 1], sizes = [1, 16], strides = [1, 1]} : vector<1x18xf32> to vector<1x16xf32>
    %2005 = vector.broadcast %18 : vector<8x1xf32> to vector<8x16xf32>
    %2006 = vector.broadcast %2004 : vector<1x16xf32> to vector<8x16xf32>
    %2007 = arith.mulf %2005, %2006 : vector<8x16xf32>
    %2008 = arith.addf %2003, %2007 : vector<8x16xf32>
    %2009 = vector.extract_strided_slice %1998 {offsets = [0, 2], sizes = [1, 16], strides = [1, 1]} : vector<1x18xf32> to vector<1x16xf32>
    %2010 = vector.broadcast %19 : vector<8x1xf32> to vector<8x16xf32>
    %2011 = vector.broadcast %2009 : vector<1x16xf32> to vector<8x16xf32>
    %2012 = arith.mulf %2010, %2011 : vector<8x16xf32>
    %2013 = arith.addf %2008, %2012 : vector<8x16xf32>
    %2014 = vector.extract_strided_slice %1 {offsets = [1, 11, 0], sizes = [1, 1, 18], strides = [1, 1, 1]} : vector<4x16x18xf32> to vector<1x1x18xf32>
    %2015 = vector.shape_cast %2014 : vector<1x1x18xf32> to vector<1x18xf32>
    %2016 = vector.extract_strided_slice %2015 {offsets = [0, 0], sizes = [1, 16], strides = [1, 1]} : vector<1x18xf32> to vector<1x16xf32>
    %2017 = vector.broadcast %20 : vector<8x1xf32> to vector<8x16xf32>
    %2018 = vector.broadcast %2016 : vector<1x16xf32> to vector<8x16xf32>
    %2019 = arith.mulf %2017, %2018 : vector<8x16xf32>
    %2020 = arith.addf %2013, %2019 : vector<8x16xf32>
    %2021 = vector.extract_strided_slice %2015 {offsets = [0, 1], sizes = [1, 16], strides = [1, 1]} : vector<1x18xf32> to vector<1x16xf32>
    %2022 = vector.broadcast %21 : vector<8x1xf32> to vector<8x16xf32>
    %2023 = vector.broadcast %2021 : vector<1x16xf32> to vector<8x16xf32>
    %2024 = arith.mulf %2022, %2023 : vector<8x16xf32>
    %2025 = arith.addf %2020, %2024 : vector<8x16xf32>
    %2026 = vector.extract_strided_slice %2015 {offsets = [0, 2], sizes = [1, 16], strides = [1, 1]} : vector<1x18xf32> to vector<1x16xf32>
    %2027 = vector.broadcast %22 : vector<8x1xf32> to vector<8x16xf32>
    %2028 = vector.broadcast %2026 : vector<1x16xf32> to vector<8x16xf32>
    %2029 = arith.mulf %2027, %2028 : vector<8x16xf32>
    %2030 = arith.addf %2025, %2029 : vector<8x16xf32>
    %2031 = vector.extract_strided_slice %1 {offsets = [2, 9, 0], sizes = [1, 1, 18], strides = [1, 1, 1]} : vector<4x16x18xf32> to vector<1x1x18xf32>
    %2032 = vector.shape_cast %2031 : vector<1x1x18xf32> to vector<1x18xf32>
    %2033 = vector.extract_strided_slice %2032 {offsets = [0, 0], sizes = [1, 16], strides = [1, 1]} : vector<1x18xf32> to vector<1x16xf32>
    %2034 = vector.broadcast %23 : vector<8x1xf32> to vector<8x16xf32>
    %2035 = vector.broadcast %2033 : vector<1x16xf32> to vector<8x16xf32>
    %2036 = arith.mulf %2034, %2035 : vector<8x16xf32>
    %2037 = arith.addf %2030, %2036 : vector<8x16xf32>
    %2038 = vector.extract_strided_slice %2032 {offsets = [0, 1], sizes = [1, 16], strides = [1, 1]} : vector<1x18xf32> to vector<1x16xf32>
    %2039 = vector.broadcast %24 : vector<8x1xf32> to vector<8x16xf32>
    %2040 = vector.broadcast %2038 : vector<1x16xf32> to vector<8x16xf32>
    %2041 = arith.mulf %2039, %2040 : vector<8x16xf32>
    %2042 = arith.addf %2037, %2041 : vector<8x16xf32>
    %2043 = vector.extract_strided_slice %2032 {offsets = [0, 2], sizes = [1, 16], strides = [1, 1]} : vector<1x18xf32> to vector<1x16xf32>
    %2044 = vector.broadcast %25 : vector<8x1xf32> to vector<8x16xf32>
    %2045 = vector.broadcast %2043 : vector<1x16xf32> to vector<8x16xf32>
    %2046 = arith.mulf %2044, %2045 : vector<8x16xf32>
    %2047 = arith.addf %2042, %2046 : vector<8x16xf32>
    %2048 = vector.extract_strided_slice %1 {offsets = [2, 10, 0], sizes = [1, 1, 18], strides = [1, 1, 1]} : vector<4x16x18xf32> to vector<1x1x18xf32>
    %2049 = vector.shape_cast %2048 : vector<1x1x18xf32> to vector<1x18xf32>
    %2050 = vector.extract_strided_slice %2049 {offsets = [0, 0], sizes = [1, 16], strides = [1, 1]} : vector<1x18xf32> to vector<1x16xf32>
    %2051 = vector.broadcast %26 : vector<8x1xf32> to vector<8x16xf32>
    %2052 = vector.broadcast %2050 : vector<1x16xf32> to vector<8x16xf32>
    %2053 = arith.mulf %2051, %2052 : vector<8x16xf32>
    %2054 = arith.addf %2047, %2053 : vector<8x16xf32>
    %2055 = vector.extract_strided_slice %2049 {offsets = [0, 1], sizes = [1, 16], strides = [1, 1]} : vector<1x18xf32> to vector<1x16xf32>
    %2056 = vector.broadcast %27 : vector<8x1xf32> to vector<8x16xf32>
    %2057 = vector.broadcast %2055 : vector<1x16xf32> to vector<8x16xf32>
    %2058 = arith.mulf %2056, %2057 : vector<8x16xf32>
    %2059 = arith.addf %2054, %2058 : vector<8x16xf32>
    %2060 = vector.extract_strided_slice %2049 {offsets = [0, 2], sizes = [1, 16], strides = [1, 1]} : vector<1x18xf32> to vector<1x16xf32>
    %2061 = vector.broadcast %28 : vector<8x1xf32> to vector<8x16xf32>
    %2062 = vector.broadcast %2060 : vector<1x16xf32> to vector<8x16xf32>
    %2063 = arith.mulf %2061, %2062 : vector<8x16xf32>
    %2064 = arith.addf %2059, %2063 : vector<8x16xf32>
    %2065 = vector.extract_strided_slice %1 {offsets = [2, 11, 0], sizes = [1, 1, 18], strides = [1, 1, 1]} : vector<4x16x18xf32> to vector<1x1x18xf32>
    %2066 = vector.shape_cast %2065 : vector<1x1x18xf32> to vector<1x18xf32>
    %2067 = vector.extract_strided_slice %2066 {offsets = [0, 0], sizes = [1, 16], strides = [1, 1]} : vector<1x18xf32> to vector<1x16xf32>
    %2068 = vector.broadcast %29 : vector<8x1xf32> to vector<8x16xf32>
    %2069 = vector.broadcast %2067 : vector<1x16xf32> to vector<8x16xf32>
    %2070 = arith.mulf %2068, %2069 : vector<8x16xf32>
    %2071 = arith.addf %2064, %2070 : vector<8x16xf32>
    %2072 = vector.extract_strided_slice %2066 {offsets = [0, 1], sizes = [1, 16], strides = [1, 1]} : vector<1x18xf32> to vector<1x16xf32>
    %2073 = vector.broadcast %30 : vector<8x1xf32> to vector<8x16xf32>
    %2074 = vector.broadcast %2072 : vector<1x16xf32> to vector<8x16xf32>
    %2075 = arith.mulf %2073, %2074 : vector<8x16xf32>
    %2076 = arith.addf %2071, %2075 : vector<8x16xf32>
    %2077 = vector.extract_strided_slice %2066 {offsets = [0, 2], sizes = [1, 16], strides = [1, 1]} : vector<1x18xf32> to vector<1x16xf32>
    %2078 = vector.broadcast %31 : vector<8x1xf32> to vector<8x16xf32>
    %2079 = vector.broadcast %2077 : vector<1x16xf32> to vector<8x16xf32>
    %2080 = arith.mulf %2078, %2079 : vector<8x16xf32>
    %2081 = arith.addf %2076, %2080 : vector<8x16xf32>
    %2082 = vector.extract_strided_slice %1 {offsets = [3, 9, 0], sizes = [1, 1, 18], strides = [1, 1, 1]} : vector<4x16x18xf32> to vector<1x1x18xf32>
    %2083 = vector.shape_cast %2082 : vector<1x1x18xf32> to vector<1x18xf32>
    %2084 = vector.extract_strided_slice %2083 {offsets = [0, 0], sizes = [1, 16], strides = [1, 1]} : vector<1x18xf32> to vector<1x16xf32>
    %2085 = vector.broadcast %32 : vector<8x1xf32> to vector<8x16xf32>
    %2086 = vector.broadcast %2084 : vector<1x16xf32> to vector<8x16xf32>
    %2087 = arith.mulf %2085, %2086 : vector<8x16xf32>
    %2088 = arith.addf %2081, %2087 : vector<8x16xf32>
    %2089 = vector.extract_strided_slice %2083 {offsets = [0, 1], sizes = [1, 16], strides = [1, 1]} : vector<1x18xf32> to vector<1x16xf32>
    %2090 = vector.broadcast %33 : vector<8x1xf32> to vector<8x16xf32>
    %2091 = vector.broadcast %2089 : vector<1x16xf32> to vector<8x16xf32>
    %2092 = arith.mulf %2090, %2091 : vector<8x16xf32>
    %2093 = arith.addf %2088, %2092 : vector<8x16xf32>
    %2094 = vector.extract_strided_slice %2083 {offsets = [0, 2], sizes = [1, 16], strides = [1, 1]} : vector<1x18xf32> to vector<1x16xf32>
    %2095 = vector.broadcast %34 : vector<8x1xf32> to vector<8x16xf32>
    %2096 = vector.broadcast %2094 : vector<1x16xf32> to vector<8x16xf32>
    %2097 = arith.mulf %2095, %2096 : vector<8x16xf32>
    %2098 = arith.addf %2093, %2097 : vector<8x16xf32>
    %2099 = vector.extract_strided_slice %1 {offsets = [3, 10, 0], sizes = [1, 1, 18], strides = [1, 1, 1]} : vector<4x16x18xf32> to vector<1x1x18xf32>
    %2100 = vector.shape_cast %2099 : vector<1x1x18xf32> to vector<1x18xf32>
    %2101 = vector.extract_strided_slice %2100 {offsets = [0, 0], sizes = [1, 16], strides = [1, 1]} : vector<1x18xf32> to vector<1x16xf32>
    %2102 = vector.broadcast %35 : vector<8x1xf32> to vector<8x16xf32>
    %2103 = vector.broadcast %2101 : vector<1x16xf32> to vector<8x16xf32>
    %2104 = arith.mulf %2102, %2103 : vector<8x16xf32>
    %2105 = arith.addf %2098, %2104 : vector<8x16xf32>
    %2106 = vector.extract_strided_slice %2100 {offsets = [0, 1], sizes = [1, 16], strides = [1, 1]} : vector<1x18xf32> to vector<1x16xf32>
    %2107 = vector.broadcast %36 : vector<8x1xf32> to vector<8x16xf32>
    %2108 = vector.broadcast %2106 : vector<1x16xf32> to vector<8x16xf32>
    %2109 = arith.mulf %2107, %2108 : vector<8x16xf32>
    %2110 = arith.addf %2105, %2109 : vector<8x16xf32>
    %2111 = vector.extract_strided_slice %2100 {offsets = [0, 2], sizes = [1, 16], strides = [1, 1]} : vector<1x18xf32> to vector<1x16xf32>
    %2112 = vector.broadcast %37 : vector<8x1xf32> to vector<8x16xf32>
    %2113 = vector.broadcast %2111 : vector<1x16xf32> to vector<8x16xf32>
    %2114 = arith.mulf %2112, %2113 : vector<8x16xf32>
    %2115 = arith.addf %2110, %2114 : vector<8x16xf32>
    %2116 = vector.extract_strided_slice %1 {offsets = [3, 11, 0], sizes = [1, 1, 18], strides = [1, 1, 1]} : vector<4x16x18xf32> to vector<1x1x18xf32>
    %2117 = vector.shape_cast %2116 : vector<1x1x18xf32> to vector<1x18xf32>
    %2118 = vector.extract_strided_slice %2117 {offsets = [0, 0], sizes = [1, 16], strides = [1, 1]} : vector<1x18xf32> to vector<1x16xf32>
    %2119 = vector.broadcast %38 : vector<8x1xf32> to vector<8x16xf32>
    %2120 = vector.broadcast %2118 : vector<1x16xf32> to vector<8x16xf32>
    %2121 = arith.mulf %2119, %2120 : vector<8x16xf32>
    %2122 = arith.addf %2115, %2121 : vector<8x16xf32>
    %2123 = vector.extract_strided_slice %2117 {offsets = [0, 1], sizes = [1, 16], strides = [1, 1]} : vector<1x18xf32> to vector<1x16xf32>
    %2124 = vector.broadcast %39 : vector<8x1xf32> to vector<8x16xf32>
    %2125 = vector.broadcast %2123 : vector<1x16xf32> to vector<8x16xf32>
    %2126 = arith.mulf %2124, %2125 : vector<8x16xf32>
    %2127 = arith.addf %2122, %2126 : vector<8x16xf32>
    %2128 = vector.extract_strided_slice %2117 {offsets = [0, 2], sizes = [1, 16], strides = [1, 1]} : vector<1x18xf32> to vector<1x16xf32>
    %2129 = vector.broadcast %40 : vector<8x1xf32> to vector<8x16xf32>
    %2130 = vector.broadcast %2128 : vector<1x16xf32> to vector<8x16xf32>
    %2131 = arith.mulf %2129, %2130 : vector<8x16xf32>
    %2132 = arith.addf %2127, %2131 : vector<8x16xf32>
    %2133 = vector.broadcast %2 : vector<8x1xf32> to vector<8x16xf32>
    %2134 = arith.mulf %2132, %2133 : vector<8x16xf32>
    %2135 = vector.broadcast %3 : vector<8x1xf32> to vector<8x16xf32>
    %2136 = arith.addf %2134, %2135 : vector<8x16xf32>
    %cst_17 = arith.constant 0.000000e+00 : f32
    %2137 = vector.broadcast %cst_17 : f32 to vector<8x16xf32>
    %2138 = arith.maximumf %2136, %2137 : vector<8x16xf32>
    %2139 = arith.maximumf %1929, %2138 : vector<8x16xf32>
    %2140 = vector.extract_strided_slice %1 {offsets = [0, 10, 0], sizes = [1, 1, 18], strides = [1, 1, 1]} : vector<4x16x18xf32> to vector<1x1x18xf32>
    %2141 = vector.shape_cast %2140 : vector<1x1x18xf32> to vector<1x18xf32>
    %2142 = vector.extract_strided_slice %2141 {offsets = [0, 0], sizes = [1, 16], strides = [1, 1]} : vector<1x18xf32> to vector<1x16xf32>
    %2143 = vector.broadcast %5 : vector<8x1xf32> to vector<8x16xf32>
    %2144 = vector.broadcast %2142 : vector<1x16xf32> to vector<8x16xf32>
    %2145 = arith.mulf %2143, %2144 : vector<8x16xf32>
    %2146 = vector.extract_strided_slice %2141 {offsets = [0, 1], sizes = [1, 16], strides = [1, 1]} : vector<1x18xf32> to vector<1x16xf32>
    %2147 = vector.broadcast %6 : vector<8x1xf32> to vector<8x16xf32>
    %2148 = vector.broadcast %2146 : vector<1x16xf32> to vector<8x16xf32>
    %2149 = arith.mulf %2147, %2148 : vector<8x16xf32>
    %2150 = arith.addf %2145, %2149 : vector<8x16xf32>
    %2151 = vector.extract_strided_slice %2141 {offsets = [0, 2], sizes = [1, 16], strides = [1, 1]} : vector<1x18xf32> to vector<1x16xf32>
    %2152 = vector.broadcast %7 : vector<8x1xf32> to vector<8x16xf32>
    %2153 = vector.broadcast %2151 : vector<1x16xf32> to vector<8x16xf32>
    %2154 = arith.mulf %2152, %2153 : vector<8x16xf32>
    %2155 = arith.addf %2150, %2154 : vector<8x16xf32>
    %2156 = vector.extract_strided_slice %1 {offsets = [0, 11, 0], sizes = [1, 1, 18], strides = [1, 1, 1]} : vector<4x16x18xf32> to vector<1x1x18xf32>
    %2157 = vector.shape_cast %2156 : vector<1x1x18xf32> to vector<1x18xf32>
    %2158 = vector.extract_strided_slice %2157 {offsets = [0, 0], sizes = [1, 16], strides = [1, 1]} : vector<1x18xf32> to vector<1x16xf32>
    %2159 = vector.broadcast %8 : vector<8x1xf32> to vector<8x16xf32>
    %2160 = vector.broadcast %2158 : vector<1x16xf32> to vector<8x16xf32>
    %2161 = arith.mulf %2159, %2160 : vector<8x16xf32>
    %2162 = arith.addf %2155, %2161 : vector<8x16xf32>
    %2163 = vector.extract_strided_slice %2157 {offsets = [0, 1], sizes = [1, 16], strides = [1, 1]} : vector<1x18xf32> to vector<1x16xf32>
    %2164 = vector.broadcast %9 : vector<8x1xf32> to vector<8x16xf32>
    %2165 = vector.broadcast %2163 : vector<1x16xf32> to vector<8x16xf32>
    %2166 = arith.mulf %2164, %2165 : vector<8x16xf32>
    %2167 = arith.addf %2162, %2166 : vector<8x16xf32>
    %2168 = vector.extract_strided_slice %2157 {offsets = [0, 2], sizes = [1, 16], strides = [1, 1]} : vector<1x18xf32> to vector<1x16xf32>
    %2169 = vector.broadcast %10 : vector<8x1xf32> to vector<8x16xf32>
    %2170 = vector.broadcast %2168 : vector<1x16xf32> to vector<8x16xf32>
    %2171 = arith.mulf %2169, %2170 : vector<8x16xf32>
    %2172 = arith.addf %2167, %2171 : vector<8x16xf32>
    %2173 = vector.extract_strided_slice %1 {offsets = [0, 12, 0], sizes = [1, 1, 18], strides = [1, 1, 1]} : vector<4x16x18xf32> to vector<1x1x18xf32>
    %2174 = vector.shape_cast %2173 : vector<1x1x18xf32> to vector<1x18xf32>
    %2175 = vector.extract_strided_slice %2174 {offsets = [0, 0], sizes = [1, 16], strides = [1, 1]} : vector<1x18xf32> to vector<1x16xf32>
    %2176 = vector.broadcast %11 : vector<8x1xf32> to vector<8x16xf32>
    %2177 = vector.broadcast %2175 : vector<1x16xf32> to vector<8x16xf32>
    %2178 = arith.mulf %2176, %2177 : vector<8x16xf32>
    %2179 = arith.addf %2172, %2178 : vector<8x16xf32>
    %2180 = vector.extract_strided_slice %2174 {offsets = [0, 1], sizes = [1, 16], strides = [1, 1]} : vector<1x18xf32> to vector<1x16xf32>
    %2181 = vector.broadcast %12 : vector<8x1xf32> to vector<8x16xf32>
    %2182 = vector.broadcast %2180 : vector<1x16xf32> to vector<8x16xf32>
    %2183 = arith.mulf %2181, %2182 : vector<8x16xf32>
    %2184 = arith.addf %2179, %2183 : vector<8x16xf32>
    %2185 = vector.extract_strided_slice %2174 {offsets = [0, 2], sizes = [1, 16], strides = [1, 1]} : vector<1x18xf32> to vector<1x16xf32>
    %2186 = vector.broadcast %13 : vector<8x1xf32> to vector<8x16xf32>
    %2187 = vector.broadcast %2185 : vector<1x16xf32> to vector<8x16xf32>
    %2188 = arith.mulf %2186, %2187 : vector<8x16xf32>
    %2189 = arith.addf %2184, %2188 : vector<8x16xf32>
    %2190 = vector.extract_strided_slice %1 {offsets = [1, 10, 0], sizes = [1, 1, 18], strides = [1, 1, 1]} : vector<4x16x18xf32> to vector<1x1x18xf32>
    %2191 = vector.shape_cast %2190 : vector<1x1x18xf32> to vector<1x18xf32>
    %2192 = vector.extract_strided_slice %2191 {offsets = [0, 0], sizes = [1, 16], strides = [1, 1]} : vector<1x18xf32> to vector<1x16xf32>
    %2193 = vector.broadcast %14 : vector<8x1xf32> to vector<8x16xf32>
    %2194 = vector.broadcast %2192 : vector<1x16xf32> to vector<8x16xf32>
    %2195 = arith.mulf %2193, %2194 : vector<8x16xf32>
    %2196 = arith.addf %2189, %2195 : vector<8x16xf32>
    %2197 = vector.extract_strided_slice %2191 {offsets = [0, 1], sizes = [1, 16], strides = [1, 1]} : vector<1x18xf32> to vector<1x16xf32>
    %2198 = vector.broadcast %15 : vector<8x1xf32> to vector<8x16xf32>
    %2199 = vector.broadcast %2197 : vector<1x16xf32> to vector<8x16xf32>
    %2200 = arith.mulf %2198, %2199 : vector<8x16xf32>
    %2201 = arith.addf %2196, %2200 : vector<8x16xf32>
    %2202 = vector.extract_strided_slice %2191 {offsets = [0, 2], sizes = [1, 16], strides = [1, 1]} : vector<1x18xf32> to vector<1x16xf32>
    %2203 = vector.broadcast %16 : vector<8x1xf32> to vector<8x16xf32>
    %2204 = vector.broadcast %2202 : vector<1x16xf32> to vector<8x16xf32>
    %2205 = arith.mulf %2203, %2204 : vector<8x16xf32>
    %2206 = arith.addf %2201, %2205 : vector<8x16xf32>
    %2207 = vector.extract_strided_slice %1 {offsets = [1, 11, 0], sizes = [1, 1, 18], strides = [1, 1, 1]} : vector<4x16x18xf32> to vector<1x1x18xf32>
    %2208 = vector.shape_cast %2207 : vector<1x1x18xf32> to vector<1x18xf32>
    %2209 = vector.extract_strided_slice %2208 {offsets = [0, 0], sizes = [1, 16], strides = [1, 1]} : vector<1x18xf32> to vector<1x16xf32>
    %2210 = vector.broadcast %17 : vector<8x1xf32> to vector<8x16xf32>
    %2211 = vector.broadcast %2209 : vector<1x16xf32> to vector<8x16xf32>
    %2212 = arith.mulf %2210, %2211 : vector<8x16xf32>
    %2213 = arith.addf %2206, %2212 : vector<8x16xf32>
    %2214 = vector.extract_strided_slice %2208 {offsets = [0, 1], sizes = [1, 16], strides = [1, 1]} : vector<1x18xf32> to vector<1x16xf32>
    %2215 = vector.broadcast %18 : vector<8x1xf32> to vector<8x16xf32>
    %2216 = vector.broadcast %2214 : vector<1x16xf32> to vector<8x16xf32>
    %2217 = arith.mulf %2215, %2216 : vector<8x16xf32>
    %2218 = arith.addf %2213, %2217 : vector<8x16xf32>
    %2219 = vector.extract_strided_slice %2208 {offsets = [0, 2], sizes = [1, 16], strides = [1, 1]} : vector<1x18xf32> to vector<1x16xf32>
    %2220 = vector.broadcast %19 : vector<8x1xf32> to vector<8x16xf32>
    %2221 = vector.broadcast %2219 : vector<1x16xf32> to vector<8x16xf32>
    %2222 = arith.mulf %2220, %2221 : vector<8x16xf32>
    %2223 = arith.addf %2218, %2222 : vector<8x16xf32>
    %2224 = vector.extract_strided_slice %1 {offsets = [1, 12, 0], sizes = [1, 1, 18], strides = [1, 1, 1]} : vector<4x16x18xf32> to vector<1x1x18xf32>
    %2225 = vector.shape_cast %2224 : vector<1x1x18xf32> to vector<1x18xf32>
    %2226 = vector.extract_strided_slice %2225 {offsets = [0, 0], sizes = [1, 16], strides = [1, 1]} : vector<1x18xf32> to vector<1x16xf32>
    %2227 = vector.broadcast %20 : vector<8x1xf32> to vector<8x16xf32>
    %2228 = vector.broadcast %2226 : vector<1x16xf32> to vector<8x16xf32>
    %2229 = arith.mulf %2227, %2228 : vector<8x16xf32>
    %2230 = arith.addf %2223, %2229 : vector<8x16xf32>
    %2231 = vector.extract_strided_slice %2225 {offsets = [0, 1], sizes = [1, 16], strides = [1, 1]} : vector<1x18xf32> to vector<1x16xf32>
    %2232 = vector.broadcast %21 : vector<8x1xf32> to vector<8x16xf32>
    %2233 = vector.broadcast %2231 : vector<1x16xf32> to vector<8x16xf32>
    %2234 = arith.mulf %2232, %2233 : vector<8x16xf32>
    %2235 = arith.addf %2230, %2234 : vector<8x16xf32>
    %2236 = vector.extract_strided_slice %2225 {offsets = [0, 2], sizes = [1, 16], strides = [1, 1]} : vector<1x18xf32> to vector<1x16xf32>
    %2237 = vector.broadcast %22 : vector<8x1xf32> to vector<8x16xf32>
    %2238 = vector.broadcast %2236 : vector<1x16xf32> to vector<8x16xf32>
    %2239 = arith.mulf %2237, %2238 : vector<8x16xf32>
    %2240 = arith.addf %2235, %2239 : vector<8x16xf32>
    %2241 = vector.extract_strided_slice %1 {offsets = [2, 10, 0], sizes = [1, 1, 18], strides = [1, 1, 1]} : vector<4x16x18xf32> to vector<1x1x18xf32>
    %2242 = vector.shape_cast %2241 : vector<1x1x18xf32> to vector<1x18xf32>
    %2243 = vector.extract_strided_slice %2242 {offsets = [0, 0], sizes = [1, 16], strides = [1, 1]} : vector<1x18xf32> to vector<1x16xf32>
    %2244 = vector.broadcast %23 : vector<8x1xf32> to vector<8x16xf32>
    %2245 = vector.broadcast %2243 : vector<1x16xf32> to vector<8x16xf32>
    %2246 = arith.mulf %2244, %2245 : vector<8x16xf32>
    %2247 = arith.addf %2240, %2246 : vector<8x16xf32>
    %2248 = vector.extract_strided_slice %2242 {offsets = [0, 1], sizes = [1, 16], strides = [1, 1]} : vector<1x18xf32> to vector<1x16xf32>
    %2249 = vector.broadcast %24 : vector<8x1xf32> to vector<8x16xf32>
    %2250 = vector.broadcast %2248 : vector<1x16xf32> to vector<8x16xf32>
    %2251 = arith.mulf %2249, %2250 : vector<8x16xf32>
    %2252 = arith.addf %2247, %2251 : vector<8x16xf32>
    %2253 = vector.extract_strided_slice %2242 {offsets = [0, 2], sizes = [1, 16], strides = [1, 1]} : vector<1x18xf32> to vector<1x16xf32>
    %2254 = vector.broadcast %25 : vector<8x1xf32> to vector<8x16xf32>
    %2255 = vector.broadcast %2253 : vector<1x16xf32> to vector<8x16xf32>
    %2256 = arith.mulf %2254, %2255 : vector<8x16xf32>
    %2257 = arith.addf %2252, %2256 : vector<8x16xf32>
    %2258 = vector.extract_strided_slice %1 {offsets = [2, 11, 0], sizes = [1, 1, 18], strides = [1, 1, 1]} : vector<4x16x18xf32> to vector<1x1x18xf32>
    %2259 = vector.shape_cast %2258 : vector<1x1x18xf32> to vector<1x18xf32>
    %2260 = vector.extract_strided_slice %2259 {offsets = [0, 0], sizes = [1, 16], strides = [1, 1]} : vector<1x18xf32> to vector<1x16xf32>
    %2261 = vector.broadcast %26 : vector<8x1xf32> to vector<8x16xf32>
    %2262 = vector.broadcast %2260 : vector<1x16xf32> to vector<8x16xf32>
    %2263 = arith.mulf %2261, %2262 : vector<8x16xf32>
    %2264 = arith.addf %2257, %2263 : vector<8x16xf32>
    %2265 = vector.extract_strided_slice %2259 {offsets = [0, 1], sizes = [1, 16], strides = [1, 1]} : vector<1x18xf32> to vector<1x16xf32>
    %2266 = vector.broadcast %27 : vector<8x1xf32> to vector<8x16xf32>
    %2267 = vector.broadcast %2265 : vector<1x16xf32> to vector<8x16xf32>
    %2268 = arith.mulf %2266, %2267 : vector<8x16xf32>
    %2269 = arith.addf %2264, %2268 : vector<8x16xf32>
    %2270 = vector.extract_strided_slice %2259 {offsets = [0, 2], sizes = [1, 16], strides = [1, 1]} : vector<1x18xf32> to vector<1x16xf32>
    %2271 = vector.broadcast %28 : vector<8x1xf32> to vector<8x16xf32>
    %2272 = vector.broadcast %2270 : vector<1x16xf32> to vector<8x16xf32>
    %2273 = arith.mulf %2271, %2272 : vector<8x16xf32>
    %2274 = arith.addf %2269, %2273 : vector<8x16xf32>
    %2275 = vector.extract_strided_slice %1 {offsets = [2, 12, 0], sizes = [1, 1, 18], strides = [1, 1, 1]} : vector<4x16x18xf32> to vector<1x1x18xf32>
    %2276 = vector.shape_cast %2275 : vector<1x1x18xf32> to vector<1x18xf32>
    %2277 = vector.extract_strided_slice %2276 {offsets = [0, 0], sizes = [1, 16], strides = [1, 1]} : vector<1x18xf32> to vector<1x16xf32>
    %2278 = vector.broadcast %29 : vector<8x1xf32> to vector<8x16xf32>
    %2279 = vector.broadcast %2277 : vector<1x16xf32> to vector<8x16xf32>
    %2280 = arith.mulf %2278, %2279 : vector<8x16xf32>
    %2281 = arith.addf %2274, %2280 : vector<8x16xf32>
    %2282 = vector.extract_strided_slice %2276 {offsets = [0, 1], sizes = [1, 16], strides = [1, 1]} : vector<1x18xf32> to vector<1x16xf32>
    %2283 = vector.broadcast %30 : vector<8x1xf32> to vector<8x16xf32>
    %2284 = vector.broadcast %2282 : vector<1x16xf32> to vector<8x16xf32>
    %2285 = arith.mulf %2283, %2284 : vector<8x16xf32>
    %2286 = arith.addf %2281, %2285 : vector<8x16xf32>
    %2287 = vector.extract_strided_slice %2276 {offsets = [0, 2], sizes = [1, 16], strides = [1, 1]} : vector<1x18xf32> to vector<1x16xf32>
    %2288 = vector.broadcast %31 : vector<8x1xf32> to vector<8x16xf32>
    %2289 = vector.broadcast %2287 : vector<1x16xf32> to vector<8x16xf32>
    %2290 = arith.mulf %2288, %2289 : vector<8x16xf32>
    %2291 = arith.addf %2286, %2290 : vector<8x16xf32>
    %2292 = vector.extract_strided_slice %1 {offsets = [3, 10, 0], sizes = [1, 1, 18], strides = [1, 1, 1]} : vector<4x16x18xf32> to vector<1x1x18xf32>
    %2293 = vector.shape_cast %2292 : vector<1x1x18xf32> to vector<1x18xf32>
    %2294 = vector.extract_strided_slice %2293 {offsets = [0, 0], sizes = [1, 16], strides = [1, 1]} : vector<1x18xf32> to vector<1x16xf32>
    %2295 = vector.broadcast %32 : vector<8x1xf32> to vector<8x16xf32>
    %2296 = vector.broadcast %2294 : vector<1x16xf32> to vector<8x16xf32>
    %2297 = arith.mulf %2295, %2296 : vector<8x16xf32>
    %2298 = arith.addf %2291, %2297 : vector<8x16xf32>
    %2299 = vector.extract_strided_slice %2293 {offsets = [0, 1], sizes = [1, 16], strides = [1, 1]} : vector<1x18xf32> to vector<1x16xf32>
    %2300 = vector.broadcast %33 : vector<8x1xf32> to vector<8x16xf32>
    %2301 = vector.broadcast %2299 : vector<1x16xf32> to vector<8x16xf32>
    %2302 = arith.mulf %2300, %2301 : vector<8x16xf32>
    %2303 = arith.addf %2298, %2302 : vector<8x16xf32>
    %2304 = vector.extract_strided_slice %2293 {offsets = [0, 2], sizes = [1, 16], strides = [1, 1]} : vector<1x18xf32> to vector<1x16xf32>
    %2305 = vector.broadcast %34 : vector<8x1xf32> to vector<8x16xf32>
    %2306 = vector.broadcast %2304 : vector<1x16xf32> to vector<8x16xf32>
    %2307 = arith.mulf %2305, %2306 : vector<8x16xf32>
    %2308 = arith.addf %2303, %2307 : vector<8x16xf32>
    %2309 = vector.extract_strided_slice %1 {offsets = [3, 11, 0], sizes = [1, 1, 18], strides = [1, 1, 1]} : vector<4x16x18xf32> to vector<1x1x18xf32>
    %2310 = vector.shape_cast %2309 : vector<1x1x18xf32> to vector<1x18xf32>
    %2311 = vector.extract_strided_slice %2310 {offsets = [0, 0], sizes = [1, 16], strides = [1, 1]} : vector<1x18xf32> to vector<1x16xf32>
    %2312 = vector.broadcast %35 : vector<8x1xf32> to vector<8x16xf32>
    %2313 = vector.broadcast %2311 : vector<1x16xf32> to vector<8x16xf32>
    %2314 = arith.mulf %2312, %2313 : vector<8x16xf32>
    %2315 = arith.addf %2308, %2314 : vector<8x16xf32>
    %2316 = vector.extract_strided_slice %2310 {offsets = [0, 1], sizes = [1, 16], strides = [1, 1]} : vector<1x18xf32> to vector<1x16xf32>
    %2317 = vector.broadcast %36 : vector<8x1xf32> to vector<8x16xf32>
    %2318 = vector.broadcast %2316 : vector<1x16xf32> to vector<8x16xf32>
    %2319 = arith.mulf %2317, %2318 : vector<8x16xf32>
    %2320 = arith.addf %2315, %2319 : vector<8x16xf32>
    %2321 = vector.extract_strided_slice %2310 {offsets = [0, 2], sizes = [1, 16], strides = [1, 1]} : vector<1x18xf32> to vector<1x16xf32>
    %2322 = vector.broadcast %37 : vector<8x1xf32> to vector<8x16xf32>
    %2323 = vector.broadcast %2321 : vector<1x16xf32> to vector<8x16xf32>
    %2324 = arith.mulf %2322, %2323 : vector<8x16xf32>
    %2325 = arith.addf %2320, %2324 : vector<8x16xf32>
    %2326 = vector.extract_strided_slice %1 {offsets = [3, 12, 0], sizes = [1, 1, 18], strides = [1, 1, 1]} : vector<4x16x18xf32> to vector<1x1x18xf32>
    %2327 = vector.shape_cast %2326 : vector<1x1x18xf32> to vector<1x18xf32>
    %2328 = vector.extract_strided_slice %2327 {offsets = [0, 0], sizes = [1, 16], strides = [1, 1]} : vector<1x18xf32> to vector<1x16xf32>
    %2329 = vector.broadcast %38 : vector<8x1xf32> to vector<8x16xf32>
    %2330 = vector.broadcast %2328 : vector<1x16xf32> to vector<8x16xf32>
    %2331 = arith.mulf %2329, %2330 : vector<8x16xf32>
    %2332 = arith.addf %2325, %2331 : vector<8x16xf32>
    %2333 = vector.extract_strided_slice %2327 {offsets = [0, 1], sizes = [1, 16], strides = [1, 1]} : vector<1x18xf32> to vector<1x16xf32>
    %2334 = vector.broadcast %39 : vector<8x1xf32> to vector<8x16xf32>
    %2335 = vector.broadcast %2333 : vector<1x16xf32> to vector<8x16xf32>
    %2336 = arith.mulf %2334, %2335 : vector<8x16xf32>
    %2337 = arith.addf %2332, %2336 : vector<8x16xf32>
    %2338 = vector.extract_strided_slice %2327 {offsets = [0, 2], sizes = [1, 16], strides = [1, 1]} : vector<1x18xf32> to vector<1x16xf32>
    %2339 = vector.broadcast %40 : vector<8x1xf32> to vector<8x16xf32>
    %2340 = vector.broadcast %2338 : vector<1x16xf32> to vector<8x16xf32>
    %2341 = arith.mulf %2339, %2340 : vector<8x16xf32>
    %2342 = arith.addf %2337, %2341 : vector<8x16xf32>
    %2343 = vector.broadcast %2 : vector<8x1xf32> to vector<8x16xf32>
    %2344 = arith.mulf %2342, %2343 : vector<8x16xf32>
    %2345 = vector.broadcast %3 : vector<8x1xf32> to vector<8x16xf32>
    %2346 = arith.addf %2344, %2345 : vector<8x16xf32>
    %cst_18 = arith.constant 0.000000e+00 : f32
    %2347 = vector.broadcast %cst_18 : f32 to vector<8x16xf32>
    %2348 = arith.maximumf %2346, %2347 : vector<8x16xf32>
    %2349 = arith.maximumf %2139, %2348 : vector<8x16xf32>
    %2350 = vector.extract_strided_slice %1 {offsets = [0, 11, 0], sizes = [1, 1, 18], strides = [1, 1, 1]} : vector<4x16x18xf32> to vector<1x1x18xf32>
    %2351 = vector.shape_cast %2350 : vector<1x1x18xf32> to vector<1x18xf32>
    %2352 = vector.extract_strided_slice %2351 {offsets = [0, 0], sizes = [1, 16], strides = [1, 1]} : vector<1x18xf32> to vector<1x16xf32>
    %2353 = vector.broadcast %5 : vector<8x1xf32> to vector<8x16xf32>
    %2354 = vector.broadcast %2352 : vector<1x16xf32> to vector<8x16xf32>
    %2355 = arith.mulf %2353, %2354 : vector<8x16xf32>
    %2356 = vector.extract_strided_slice %2351 {offsets = [0, 1], sizes = [1, 16], strides = [1, 1]} : vector<1x18xf32> to vector<1x16xf32>
    %2357 = vector.broadcast %6 : vector<8x1xf32> to vector<8x16xf32>
    %2358 = vector.broadcast %2356 : vector<1x16xf32> to vector<8x16xf32>
    %2359 = arith.mulf %2357, %2358 : vector<8x16xf32>
    %2360 = arith.addf %2355, %2359 : vector<8x16xf32>
    %2361 = vector.extract_strided_slice %2351 {offsets = [0, 2], sizes = [1, 16], strides = [1, 1]} : vector<1x18xf32> to vector<1x16xf32>
    %2362 = vector.broadcast %7 : vector<8x1xf32> to vector<8x16xf32>
    %2363 = vector.broadcast %2361 : vector<1x16xf32> to vector<8x16xf32>
    %2364 = arith.mulf %2362, %2363 : vector<8x16xf32>
    %2365 = arith.addf %2360, %2364 : vector<8x16xf32>
    %2366 = vector.extract_strided_slice %1 {offsets = [0, 12, 0], sizes = [1, 1, 18], strides = [1, 1, 1]} : vector<4x16x18xf32> to vector<1x1x18xf32>
    %2367 = vector.shape_cast %2366 : vector<1x1x18xf32> to vector<1x18xf32>
    %2368 = vector.extract_strided_slice %2367 {offsets = [0, 0], sizes = [1, 16], strides = [1, 1]} : vector<1x18xf32> to vector<1x16xf32>
    %2369 = vector.broadcast %8 : vector<8x1xf32> to vector<8x16xf32>
    %2370 = vector.broadcast %2368 : vector<1x16xf32> to vector<8x16xf32>
    %2371 = arith.mulf %2369, %2370 : vector<8x16xf32>
    %2372 = arith.addf %2365, %2371 : vector<8x16xf32>
    %2373 = vector.extract_strided_slice %2367 {offsets = [0, 1], sizes = [1, 16], strides = [1, 1]} : vector<1x18xf32> to vector<1x16xf32>
    %2374 = vector.broadcast %9 : vector<8x1xf32> to vector<8x16xf32>
    %2375 = vector.broadcast %2373 : vector<1x16xf32> to vector<8x16xf32>
    %2376 = arith.mulf %2374, %2375 : vector<8x16xf32>
    %2377 = arith.addf %2372, %2376 : vector<8x16xf32>
    %2378 = vector.extract_strided_slice %2367 {offsets = [0, 2], sizes = [1, 16], strides = [1, 1]} : vector<1x18xf32> to vector<1x16xf32>
    %2379 = vector.broadcast %10 : vector<8x1xf32> to vector<8x16xf32>
    %2380 = vector.broadcast %2378 : vector<1x16xf32> to vector<8x16xf32>
    %2381 = arith.mulf %2379, %2380 : vector<8x16xf32>
    %2382 = arith.addf %2377, %2381 : vector<8x16xf32>
    %2383 = vector.extract_strided_slice %1 {offsets = [0, 13, 0], sizes = [1, 1, 18], strides = [1, 1, 1]} : vector<4x16x18xf32> to vector<1x1x18xf32>
    %2384 = vector.shape_cast %2383 : vector<1x1x18xf32> to vector<1x18xf32>
    %2385 = vector.extract_strided_slice %2384 {offsets = [0, 0], sizes = [1, 16], strides = [1, 1]} : vector<1x18xf32> to vector<1x16xf32>
    %2386 = vector.broadcast %11 : vector<8x1xf32> to vector<8x16xf32>
    %2387 = vector.broadcast %2385 : vector<1x16xf32> to vector<8x16xf32>
    %2388 = arith.mulf %2386, %2387 : vector<8x16xf32>
    %2389 = arith.addf %2382, %2388 : vector<8x16xf32>
    %2390 = vector.extract_strided_slice %2384 {offsets = [0, 1], sizes = [1, 16], strides = [1, 1]} : vector<1x18xf32> to vector<1x16xf32>
    %2391 = vector.broadcast %12 : vector<8x1xf32> to vector<8x16xf32>
    %2392 = vector.broadcast %2390 : vector<1x16xf32> to vector<8x16xf32>
    %2393 = arith.mulf %2391, %2392 : vector<8x16xf32>
    %2394 = arith.addf %2389, %2393 : vector<8x16xf32>
    %2395 = vector.extract_strided_slice %2384 {offsets = [0, 2], sizes = [1, 16], strides = [1, 1]} : vector<1x18xf32> to vector<1x16xf32>
    %2396 = vector.broadcast %13 : vector<8x1xf32> to vector<8x16xf32>
    %2397 = vector.broadcast %2395 : vector<1x16xf32> to vector<8x16xf32>
    %2398 = arith.mulf %2396, %2397 : vector<8x16xf32>
    %2399 = arith.addf %2394, %2398 : vector<8x16xf32>
    %2400 = vector.extract_strided_slice %1 {offsets = [1, 11, 0], sizes = [1, 1, 18], strides = [1, 1, 1]} : vector<4x16x18xf32> to vector<1x1x18xf32>
    %2401 = vector.shape_cast %2400 : vector<1x1x18xf32> to vector<1x18xf32>
    %2402 = vector.extract_strided_slice %2401 {offsets = [0, 0], sizes = [1, 16], strides = [1, 1]} : vector<1x18xf32> to vector<1x16xf32>
    %2403 = vector.broadcast %14 : vector<8x1xf32> to vector<8x16xf32>
    %2404 = vector.broadcast %2402 : vector<1x16xf32> to vector<8x16xf32>
    %2405 = arith.mulf %2403, %2404 : vector<8x16xf32>
    %2406 = arith.addf %2399, %2405 : vector<8x16xf32>
    %2407 = vector.extract_strided_slice %2401 {offsets = [0, 1], sizes = [1, 16], strides = [1, 1]} : vector<1x18xf32> to vector<1x16xf32>
    %2408 = vector.broadcast %15 : vector<8x1xf32> to vector<8x16xf32>
    %2409 = vector.broadcast %2407 : vector<1x16xf32> to vector<8x16xf32>
    %2410 = arith.mulf %2408, %2409 : vector<8x16xf32>
    %2411 = arith.addf %2406, %2410 : vector<8x16xf32>
    %2412 = vector.extract_strided_slice %2401 {offsets = [0, 2], sizes = [1, 16], strides = [1, 1]} : vector<1x18xf32> to vector<1x16xf32>
    %2413 = vector.broadcast %16 : vector<8x1xf32> to vector<8x16xf32>
    %2414 = vector.broadcast %2412 : vector<1x16xf32> to vector<8x16xf32>
    %2415 = arith.mulf %2413, %2414 : vector<8x16xf32>
    %2416 = arith.addf %2411, %2415 : vector<8x16xf32>
    %2417 = vector.extract_strided_slice %1 {offsets = [1, 12, 0], sizes = [1, 1, 18], strides = [1, 1, 1]} : vector<4x16x18xf32> to vector<1x1x18xf32>
    %2418 = vector.shape_cast %2417 : vector<1x1x18xf32> to vector<1x18xf32>
    %2419 = vector.extract_strided_slice %2418 {offsets = [0, 0], sizes = [1, 16], strides = [1, 1]} : vector<1x18xf32> to vector<1x16xf32>
    %2420 = vector.broadcast %17 : vector<8x1xf32> to vector<8x16xf32>
    %2421 = vector.broadcast %2419 : vector<1x16xf32> to vector<8x16xf32>
    %2422 = arith.mulf %2420, %2421 : vector<8x16xf32>
    %2423 = arith.addf %2416, %2422 : vector<8x16xf32>
    %2424 = vector.extract_strided_slice %2418 {offsets = [0, 1], sizes = [1, 16], strides = [1, 1]} : vector<1x18xf32> to vector<1x16xf32>
    %2425 = vector.broadcast %18 : vector<8x1xf32> to vector<8x16xf32>
    %2426 = vector.broadcast %2424 : vector<1x16xf32> to vector<8x16xf32>
    %2427 = arith.mulf %2425, %2426 : vector<8x16xf32>
    %2428 = arith.addf %2423, %2427 : vector<8x16xf32>
    %2429 = vector.extract_strided_slice %2418 {offsets = [0, 2], sizes = [1, 16], strides = [1, 1]} : vector<1x18xf32> to vector<1x16xf32>
    %2430 = vector.broadcast %19 : vector<8x1xf32> to vector<8x16xf32>
    %2431 = vector.broadcast %2429 : vector<1x16xf32> to vector<8x16xf32>
    %2432 = arith.mulf %2430, %2431 : vector<8x16xf32>
    %2433 = arith.addf %2428, %2432 : vector<8x16xf32>
    %2434 = vector.extract_strided_slice %1 {offsets = [1, 13, 0], sizes = [1, 1, 18], strides = [1, 1, 1]} : vector<4x16x18xf32> to vector<1x1x18xf32>
    %2435 = vector.shape_cast %2434 : vector<1x1x18xf32> to vector<1x18xf32>
    %2436 = vector.extract_strided_slice %2435 {offsets = [0, 0], sizes = [1, 16], strides = [1, 1]} : vector<1x18xf32> to vector<1x16xf32>
    %2437 = vector.broadcast %20 : vector<8x1xf32> to vector<8x16xf32>
    %2438 = vector.broadcast %2436 : vector<1x16xf32> to vector<8x16xf32>
    %2439 = arith.mulf %2437, %2438 : vector<8x16xf32>
    %2440 = arith.addf %2433, %2439 : vector<8x16xf32>
    %2441 = vector.extract_strided_slice %2435 {offsets = [0, 1], sizes = [1, 16], strides = [1, 1]} : vector<1x18xf32> to vector<1x16xf32>
    %2442 = vector.broadcast %21 : vector<8x1xf32> to vector<8x16xf32>
    %2443 = vector.broadcast %2441 : vector<1x16xf32> to vector<8x16xf32>
    %2444 = arith.mulf %2442, %2443 : vector<8x16xf32>
    %2445 = arith.addf %2440, %2444 : vector<8x16xf32>
    %2446 = vector.extract_strided_slice %2435 {offsets = [0, 2], sizes = [1, 16], strides = [1, 1]} : vector<1x18xf32> to vector<1x16xf32>
    %2447 = vector.broadcast %22 : vector<8x1xf32> to vector<8x16xf32>
    %2448 = vector.broadcast %2446 : vector<1x16xf32> to vector<8x16xf32>
    %2449 = arith.mulf %2447, %2448 : vector<8x16xf32>
    %2450 = arith.addf %2445, %2449 : vector<8x16xf32>
    %2451 = vector.extract_strided_slice %1 {offsets = [2, 11, 0], sizes = [1, 1, 18], strides = [1, 1, 1]} : vector<4x16x18xf32> to vector<1x1x18xf32>
    %2452 = vector.shape_cast %2451 : vector<1x1x18xf32> to vector<1x18xf32>
    %2453 = vector.extract_strided_slice %2452 {offsets = [0, 0], sizes = [1, 16], strides = [1, 1]} : vector<1x18xf32> to vector<1x16xf32>
    %2454 = vector.broadcast %23 : vector<8x1xf32> to vector<8x16xf32>
    %2455 = vector.broadcast %2453 : vector<1x16xf32> to vector<8x16xf32>
    %2456 = arith.mulf %2454, %2455 : vector<8x16xf32>
    %2457 = arith.addf %2450, %2456 : vector<8x16xf32>
    %2458 = vector.extract_strided_slice %2452 {offsets = [0, 1], sizes = [1, 16], strides = [1, 1]} : vector<1x18xf32> to vector<1x16xf32>
    %2459 = vector.broadcast %24 : vector<8x1xf32> to vector<8x16xf32>
    %2460 = vector.broadcast %2458 : vector<1x16xf32> to vector<8x16xf32>
    %2461 = arith.mulf %2459, %2460 : vector<8x16xf32>
    %2462 = arith.addf %2457, %2461 : vector<8x16xf32>
    %2463 = vector.extract_strided_slice %2452 {offsets = [0, 2], sizes = [1, 16], strides = [1, 1]} : vector<1x18xf32> to vector<1x16xf32>
    %2464 = vector.broadcast %25 : vector<8x1xf32> to vector<8x16xf32>
    %2465 = vector.broadcast %2463 : vector<1x16xf32> to vector<8x16xf32>
    %2466 = arith.mulf %2464, %2465 : vector<8x16xf32>
    %2467 = arith.addf %2462, %2466 : vector<8x16xf32>
    %2468 = vector.extract_strided_slice %1 {offsets = [2, 12, 0], sizes = [1, 1, 18], strides = [1, 1, 1]} : vector<4x16x18xf32> to vector<1x1x18xf32>
    %2469 = vector.shape_cast %2468 : vector<1x1x18xf32> to vector<1x18xf32>
    %2470 = vector.extract_strided_slice %2469 {offsets = [0, 0], sizes = [1, 16], strides = [1, 1]} : vector<1x18xf32> to vector<1x16xf32>
    %2471 = vector.broadcast %26 : vector<8x1xf32> to vector<8x16xf32>
    %2472 = vector.broadcast %2470 : vector<1x16xf32> to vector<8x16xf32>
    %2473 = arith.mulf %2471, %2472 : vector<8x16xf32>
    %2474 = arith.addf %2467, %2473 : vector<8x16xf32>
    %2475 = vector.extract_strided_slice %2469 {offsets = [0, 1], sizes = [1, 16], strides = [1, 1]} : vector<1x18xf32> to vector<1x16xf32>
    %2476 = vector.broadcast %27 : vector<8x1xf32> to vector<8x16xf32>
    %2477 = vector.broadcast %2475 : vector<1x16xf32> to vector<8x16xf32>
    %2478 = arith.mulf %2476, %2477 : vector<8x16xf32>
    %2479 = arith.addf %2474, %2478 : vector<8x16xf32>
    %2480 = vector.extract_strided_slice %2469 {offsets = [0, 2], sizes = [1, 16], strides = [1, 1]} : vector<1x18xf32> to vector<1x16xf32>
    %2481 = vector.broadcast %28 : vector<8x1xf32> to vector<8x16xf32>
    %2482 = vector.broadcast %2480 : vector<1x16xf32> to vector<8x16xf32>
    %2483 = arith.mulf %2481, %2482 : vector<8x16xf32>
    %2484 = arith.addf %2479, %2483 : vector<8x16xf32>
    %2485 = vector.extract_strided_slice %1 {offsets = [2, 13, 0], sizes = [1, 1, 18], strides = [1, 1, 1]} : vector<4x16x18xf32> to vector<1x1x18xf32>
    %2486 = vector.shape_cast %2485 : vector<1x1x18xf32> to vector<1x18xf32>
    %2487 = vector.extract_strided_slice %2486 {offsets = [0, 0], sizes = [1, 16], strides = [1, 1]} : vector<1x18xf32> to vector<1x16xf32>
    %2488 = vector.broadcast %29 : vector<8x1xf32> to vector<8x16xf32>
    %2489 = vector.broadcast %2487 : vector<1x16xf32> to vector<8x16xf32>
    %2490 = arith.mulf %2488, %2489 : vector<8x16xf32>
    %2491 = arith.addf %2484, %2490 : vector<8x16xf32>
    %2492 = vector.extract_strided_slice %2486 {offsets = [0, 1], sizes = [1, 16], strides = [1, 1]} : vector<1x18xf32> to vector<1x16xf32>
    %2493 = vector.broadcast %30 : vector<8x1xf32> to vector<8x16xf32>
    %2494 = vector.broadcast %2492 : vector<1x16xf32> to vector<8x16xf32>
    %2495 = arith.mulf %2493, %2494 : vector<8x16xf32>
    %2496 = arith.addf %2491, %2495 : vector<8x16xf32>
    %2497 = vector.extract_strided_slice %2486 {offsets = [0, 2], sizes = [1, 16], strides = [1, 1]} : vector<1x18xf32> to vector<1x16xf32>
    %2498 = vector.broadcast %31 : vector<8x1xf32> to vector<8x16xf32>
    %2499 = vector.broadcast %2497 : vector<1x16xf32> to vector<8x16xf32>
    %2500 = arith.mulf %2498, %2499 : vector<8x16xf32>
    %2501 = arith.addf %2496, %2500 : vector<8x16xf32>
    %2502 = vector.extract_strided_slice %1 {offsets = [3, 11, 0], sizes = [1, 1, 18], strides = [1, 1, 1]} : vector<4x16x18xf32> to vector<1x1x18xf32>
    %2503 = vector.shape_cast %2502 : vector<1x1x18xf32> to vector<1x18xf32>
    %2504 = vector.extract_strided_slice %2503 {offsets = [0, 0], sizes = [1, 16], strides = [1, 1]} : vector<1x18xf32> to vector<1x16xf32>
    %2505 = vector.broadcast %32 : vector<8x1xf32> to vector<8x16xf32>
    %2506 = vector.broadcast %2504 : vector<1x16xf32> to vector<8x16xf32>
    %2507 = arith.mulf %2505, %2506 : vector<8x16xf32>
    %2508 = arith.addf %2501, %2507 : vector<8x16xf32>
    %2509 = vector.extract_strided_slice %2503 {offsets = [0, 1], sizes = [1, 16], strides = [1, 1]} : vector<1x18xf32> to vector<1x16xf32>
    %2510 = vector.broadcast %33 : vector<8x1xf32> to vector<8x16xf32>
    %2511 = vector.broadcast %2509 : vector<1x16xf32> to vector<8x16xf32>
    %2512 = arith.mulf %2510, %2511 : vector<8x16xf32>
    %2513 = arith.addf %2508, %2512 : vector<8x16xf32>
    %2514 = vector.extract_strided_slice %2503 {offsets = [0, 2], sizes = [1, 16], strides = [1, 1]} : vector<1x18xf32> to vector<1x16xf32>
    %2515 = vector.broadcast %34 : vector<8x1xf32> to vector<8x16xf32>
    %2516 = vector.broadcast %2514 : vector<1x16xf32> to vector<8x16xf32>
    %2517 = arith.mulf %2515, %2516 : vector<8x16xf32>
    %2518 = arith.addf %2513, %2517 : vector<8x16xf32>
    %2519 = vector.extract_strided_slice %1 {offsets = [3, 12, 0], sizes = [1, 1, 18], strides = [1, 1, 1]} : vector<4x16x18xf32> to vector<1x1x18xf32>
    %2520 = vector.shape_cast %2519 : vector<1x1x18xf32> to vector<1x18xf32>
    %2521 = vector.extract_strided_slice %2520 {offsets = [0, 0], sizes = [1, 16], strides = [1, 1]} : vector<1x18xf32> to vector<1x16xf32>
    %2522 = vector.broadcast %35 : vector<8x1xf32> to vector<8x16xf32>
    %2523 = vector.broadcast %2521 : vector<1x16xf32> to vector<8x16xf32>
    %2524 = arith.mulf %2522, %2523 : vector<8x16xf32>
    %2525 = arith.addf %2518, %2524 : vector<8x16xf32>
    %2526 = vector.extract_strided_slice %2520 {offsets = [0, 1], sizes = [1, 16], strides = [1, 1]} : vector<1x18xf32> to vector<1x16xf32>
    %2527 = vector.broadcast %36 : vector<8x1xf32> to vector<8x16xf32>
    %2528 = vector.broadcast %2526 : vector<1x16xf32> to vector<8x16xf32>
    %2529 = arith.mulf %2527, %2528 : vector<8x16xf32>
    %2530 = arith.addf %2525, %2529 : vector<8x16xf32>
    %2531 = vector.extract_strided_slice %2520 {offsets = [0, 2], sizes = [1, 16], strides = [1, 1]} : vector<1x18xf32> to vector<1x16xf32>
    %2532 = vector.broadcast %37 : vector<8x1xf32> to vector<8x16xf32>
    %2533 = vector.broadcast %2531 : vector<1x16xf32> to vector<8x16xf32>
    %2534 = arith.mulf %2532, %2533 : vector<8x16xf32>
    %2535 = arith.addf %2530, %2534 : vector<8x16xf32>
    %2536 = vector.extract_strided_slice %1 {offsets = [3, 13, 0], sizes = [1, 1, 18], strides = [1, 1, 1]} : vector<4x16x18xf32> to vector<1x1x18xf32>
    %2537 = vector.shape_cast %2536 : vector<1x1x18xf32> to vector<1x18xf32>
    %2538 = vector.extract_strided_slice %2537 {offsets = [0, 0], sizes = [1, 16], strides = [1, 1]} : vector<1x18xf32> to vector<1x16xf32>
    %2539 = vector.broadcast %38 : vector<8x1xf32> to vector<8x16xf32>
    %2540 = vector.broadcast %2538 : vector<1x16xf32> to vector<8x16xf32>
    %2541 = arith.mulf %2539, %2540 : vector<8x16xf32>
    %2542 = arith.addf %2535, %2541 : vector<8x16xf32>
    %2543 = vector.extract_strided_slice %2537 {offsets = [0, 1], sizes = [1, 16], strides = [1, 1]} : vector<1x18xf32> to vector<1x16xf32>
    %2544 = vector.broadcast %39 : vector<8x1xf32> to vector<8x16xf32>
    %2545 = vector.broadcast %2543 : vector<1x16xf32> to vector<8x16xf32>
    %2546 = arith.mulf %2544, %2545 : vector<8x16xf32>
    %2547 = arith.addf %2542, %2546 : vector<8x16xf32>
    %2548 = vector.extract_strided_slice %2537 {offsets = [0, 2], sizes = [1, 16], strides = [1, 1]} : vector<1x18xf32> to vector<1x16xf32>
    %2549 = vector.broadcast %40 : vector<8x1xf32> to vector<8x16xf32>
    %2550 = vector.broadcast %2548 : vector<1x16xf32> to vector<8x16xf32>
    %2551 = arith.mulf %2549, %2550 : vector<8x16xf32>
    %2552 = arith.addf %2547, %2551 : vector<8x16xf32>
    %2553 = vector.broadcast %2 : vector<8x1xf32> to vector<8x16xf32>
    %2554 = arith.mulf %2552, %2553 : vector<8x16xf32>
    %2555 = vector.broadcast %3 : vector<8x1xf32> to vector<8x16xf32>
    %2556 = arith.addf %2554, %2555 : vector<8x16xf32>
    %cst_19 = arith.constant 0.000000e+00 : f32
    %2557 = vector.broadcast %cst_19 : f32 to vector<8x16xf32>
    %2558 = arith.maximumf %2556, %2557 : vector<8x16xf32>
    %2559 = arith.maximumf %2349, %2558 : vector<8x16xf32>
    %2560 = vector.extract_strided_slice %1 {offsets = [0, 12, 0], sizes = [1, 1, 18], strides = [1, 1, 1]} : vector<4x16x18xf32> to vector<1x1x18xf32>
    %2561 = vector.shape_cast %2560 : vector<1x1x18xf32> to vector<1x18xf32>
    %2562 = vector.extract_strided_slice %2561 {offsets = [0, 0], sizes = [1, 16], strides = [1, 1]} : vector<1x18xf32> to vector<1x16xf32>
    %2563 = vector.broadcast %5 : vector<8x1xf32> to vector<8x16xf32>
    %2564 = vector.broadcast %2562 : vector<1x16xf32> to vector<8x16xf32>
    %2565 = arith.mulf %2563, %2564 : vector<8x16xf32>
    %2566 = vector.extract_strided_slice %2561 {offsets = [0, 1], sizes = [1, 16], strides = [1, 1]} : vector<1x18xf32> to vector<1x16xf32>
    %2567 = vector.broadcast %6 : vector<8x1xf32> to vector<8x16xf32>
    %2568 = vector.broadcast %2566 : vector<1x16xf32> to vector<8x16xf32>
    %2569 = arith.mulf %2567, %2568 : vector<8x16xf32>
    %2570 = arith.addf %2565, %2569 : vector<8x16xf32>
    %2571 = vector.extract_strided_slice %2561 {offsets = [0, 2], sizes = [1, 16], strides = [1, 1]} : vector<1x18xf32> to vector<1x16xf32>
    %2572 = vector.broadcast %7 : vector<8x1xf32> to vector<8x16xf32>
    %2573 = vector.broadcast %2571 : vector<1x16xf32> to vector<8x16xf32>
    %2574 = arith.mulf %2572, %2573 : vector<8x16xf32>
    %2575 = arith.addf %2570, %2574 : vector<8x16xf32>
    %2576 = vector.extract_strided_slice %1 {offsets = [0, 13, 0], sizes = [1, 1, 18], strides = [1, 1, 1]} : vector<4x16x18xf32> to vector<1x1x18xf32>
    %2577 = vector.shape_cast %2576 : vector<1x1x18xf32> to vector<1x18xf32>
    %2578 = vector.extract_strided_slice %2577 {offsets = [0, 0], sizes = [1, 16], strides = [1, 1]} : vector<1x18xf32> to vector<1x16xf32>
    %2579 = vector.broadcast %8 : vector<8x1xf32> to vector<8x16xf32>
    %2580 = vector.broadcast %2578 : vector<1x16xf32> to vector<8x16xf32>
    %2581 = arith.mulf %2579, %2580 : vector<8x16xf32>
    %2582 = arith.addf %2575, %2581 : vector<8x16xf32>
    %2583 = vector.extract_strided_slice %2577 {offsets = [0, 1], sizes = [1, 16], strides = [1, 1]} : vector<1x18xf32> to vector<1x16xf32>
    %2584 = vector.broadcast %9 : vector<8x1xf32> to vector<8x16xf32>
    %2585 = vector.broadcast %2583 : vector<1x16xf32> to vector<8x16xf32>
    %2586 = arith.mulf %2584, %2585 : vector<8x16xf32>
    %2587 = arith.addf %2582, %2586 : vector<8x16xf32>
    %2588 = vector.extract_strided_slice %2577 {offsets = [0, 2], sizes = [1, 16], strides = [1, 1]} : vector<1x18xf32> to vector<1x16xf32>
    %2589 = vector.broadcast %10 : vector<8x1xf32> to vector<8x16xf32>
    %2590 = vector.broadcast %2588 : vector<1x16xf32> to vector<8x16xf32>
    %2591 = arith.mulf %2589, %2590 : vector<8x16xf32>
    %2592 = arith.addf %2587, %2591 : vector<8x16xf32>
    %2593 = vector.extract_strided_slice %1 {offsets = [0, 14, 0], sizes = [1, 1, 18], strides = [1, 1, 1]} : vector<4x16x18xf32> to vector<1x1x18xf32>
    %2594 = vector.shape_cast %2593 : vector<1x1x18xf32> to vector<1x18xf32>
    %2595 = vector.extract_strided_slice %2594 {offsets = [0, 0], sizes = [1, 16], strides = [1, 1]} : vector<1x18xf32> to vector<1x16xf32>
    %2596 = vector.broadcast %11 : vector<8x1xf32> to vector<8x16xf32>
    %2597 = vector.broadcast %2595 : vector<1x16xf32> to vector<8x16xf32>
    %2598 = arith.mulf %2596, %2597 : vector<8x16xf32>
    %2599 = arith.addf %2592, %2598 : vector<8x16xf32>
    %2600 = vector.extract_strided_slice %2594 {offsets = [0, 1], sizes = [1, 16], strides = [1, 1]} : vector<1x18xf32> to vector<1x16xf32>
    %2601 = vector.broadcast %12 : vector<8x1xf32> to vector<8x16xf32>
    %2602 = vector.broadcast %2600 : vector<1x16xf32> to vector<8x16xf32>
    %2603 = arith.mulf %2601, %2602 : vector<8x16xf32>
    %2604 = arith.addf %2599, %2603 : vector<8x16xf32>
    %2605 = vector.extract_strided_slice %2594 {offsets = [0, 2], sizes = [1, 16], strides = [1, 1]} : vector<1x18xf32> to vector<1x16xf32>
    %2606 = vector.broadcast %13 : vector<8x1xf32> to vector<8x16xf32>
    %2607 = vector.broadcast %2605 : vector<1x16xf32> to vector<8x16xf32>
    %2608 = arith.mulf %2606, %2607 : vector<8x16xf32>
    %2609 = arith.addf %2604, %2608 : vector<8x16xf32>
    %2610 = vector.extract_strided_slice %1 {offsets = [1, 12, 0], sizes = [1, 1, 18], strides = [1, 1, 1]} : vector<4x16x18xf32> to vector<1x1x18xf32>
    %2611 = vector.shape_cast %2610 : vector<1x1x18xf32> to vector<1x18xf32>
    %2612 = vector.extract_strided_slice %2611 {offsets = [0, 0], sizes = [1, 16], strides = [1, 1]} : vector<1x18xf32> to vector<1x16xf32>
    %2613 = vector.broadcast %14 : vector<8x1xf32> to vector<8x16xf32>
    %2614 = vector.broadcast %2612 : vector<1x16xf32> to vector<8x16xf32>
    %2615 = arith.mulf %2613, %2614 : vector<8x16xf32>
    %2616 = arith.addf %2609, %2615 : vector<8x16xf32>
    %2617 = vector.extract_strided_slice %2611 {offsets = [0, 1], sizes = [1, 16], strides = [1, 1]} : vector<1x18xf32> to vector<1x16xf32>
    %2618 = vector.broadcast %15 : vector<8x1xf32> to vector<8x16xf32>
    %2619 = vector.broadcast %2617 : vector<1x16xf32> to vector<8x16xf32>
    %2620 = arith.mulf %2618, %2619 : vector<8x16xf32>
    %2621 = arith.addf %2616, %2620 : vector<8x16xf32>
    %2622 = vector.extract_strided_slice %2611 {offsets = [0, 2], sizes = [1, 16], strides = [1, 1]} : vector<1x18xf32> to vector<1x16xf32>
    %2623 = vector.broadcast %16 : vector<8x1xf32> to vector<8x16xf32>
    %2624 = vector.broadcast %2622 : vector<1x16xf32> to vector<8x16xf32>
    %2625 = arith.mulf %2623, %2624 : vector<8x16xf32>
    %2626 = arith.addf %2621, %2625 : vector<8x16xf32>
    %2627 = vector.extract_strided_slice %1 {offsets = [1, 13, 0], sizes = [1, 1, 18], strides = [1, 1, 1]} : vector<4x16x18xf32> to vector<1x1x18xf32>
    %2628 = vector.shape_cast %2627 : vector<1x1x18xf32> to vector<1x18xf32>
    %2629 = vector.extract_strided_slice %2628 {offsets = [0, 0], sizes = [1, 16], strides = [1, 1]} : vector<1x18xf32> to vector<1x16xf32>
    %2630 = vector.broadcast %17 : vector<8x1xf32> to vector<8x16xf32>
    %2631 = vector.broadcast %2629 : vector<1x16xf32> to vector<8x16xf32>
    %2632 = arith.mulf %2630, %2631 : vector<8x16xf32>
    %2633 = arith.addf %2626, %2632 : vector<8x16xf32>
    %2634 = vector.extract_strided_slice %2628 {offsets = [0, 1], sizes = [1, 16], strides = [1, 1]} : vector<1x18xf32> to vector<1x16xf32>
    %2635 = vector.broadcast %18 : vector<8x1xf32> to vector<8x16xf32>
    %2636 = vector.broadcast %2634 : vector<1x16xf32> to vector<8x16xf32>
    %2637 = arith.mulf %2635, %2636 : vector<8x16xf32>
    %2638 = arith.addf %2633, %2637 : vector<8x16xf32>
    %2639 = vector.extract_strided_slice %2628 {offsets = [0, 2], sizes = [1, 16], strides = [1, 1]} : vector<1x18xf32> to vector<1x16xf32>
    %2640 = vector.broadcast %19 : vector<8x1xf32> to vector<8x16xf32>
    %2641 = vector.broadcast %2639 : vector<1x16xf32> to vector<8x16xf32>
    %2642 = arith.mulf %2640, %2641 : vector<8x16xf32>
    %2643 = arith.addf %2638, %2642 : vector<8x16xf32>
    %2644 = vector.extract_strided_slice %1 {offsets = [1, 14, 0], sizes = [1, 1, 18], strides = [1, 1, 1]} : vector<4x16x18xf32> to vector<1x1x18xf32>
    %2645 = vector.shape_cast %2644 : vector<1x1x18xf32> to vector<1x18xf32>
    %2646 = vector.extract_strided_slice %2645 {offsets = [0, 0], sizes = [1, 16], strides = [1, 1]} : vector<1x18xf32> to vector<1x16xf32>
    %2647 = vector.broadcast %20 : vector<8x1xf32> to vector<8x16xf32>
    %2648 = vector.broadcast %2646 : vector<1x16xf32> to vector<8x16xf32>
    %2649 = arith.mulf %2647, %2648 : vector<8x16xf32>
    %2650 = arith.addf %2643, %2649 : vector<8x16xf32>
    %2651 = vector.extract_strided_slice %2645 {offsets = [0, 1], sizes = [1, 16], strides = [1, 1]} : vector<1x18xf32> to vector<1x16xf32>
    %2652 = vector.broadcast %21 : vector<8x1xf32> to vector<8x16xf32>
    %2653 = vector.broadcast %2651 : vector<1x16xf32> to vector<8x16xf32>
    %2654 = arith.mulf %2652, %2653 : vector<8x16xf32>
    %2655 = arith.addf %2650, %2654 : vector<8x16xf32>
    %2656 = vector.extract_strided_slice %2645 {offsets = [0, 2], sizes = [1, 16], strides = [1, 1]} : vector<1x18xf32> to vector<1x16xf32>
    %2657 = vector.broadcast %22 : vector<8x1xf32> to vector<8x16xf32>
    %2658 = vector.broadcast %2656 : vector<1x16xf32> to vector<8x16xf32>
    %2659 = arith.mulf %2657, %2658 : vector<8x16xf32>
    %2660 = arith.addf %2655, %2659 : vector<8x16xf32>
    %2661 = vector.extract_strided_slice %1 {offsets = [2, 12, 0], sizes = [1, 1, 18], strides = [1, 1, 1]} : vector<4x16x18xf32> to vector<1x1x18xf32>
    %2662 = vector.shape_cast %2661 : vector<1x1x18xf32> to vector<1x18xf32>
    %2663 = vector.extract_strided_slice %2662 {offsets = [0, 0], sizes = [1, 16], strides = [1, 1]} : vector<1x18xf32> to vector<1x16xf32>
    %2664 = vector.broadcast %23 : vector<8x1xf32> to vector<8x16xf32>
    %2665 = vector.broadcast %2663 : vector<1x16xf32> to vector<8x16xf32>
    %2666 = arith.mulf %2664, %2665 : vector<8x16xf32>
    %2667 = arith.addf %2660, %2666 : vector<8x16xf32>
    %2668 = vector.extract_strided_slice %2662 {offsets = [0, 1], sizes = [1, 16], strides = [1, 1]} : vector<1x18xf32> to vector<1x16xf32>
    %2669 = vector.broadcast %24 : vector<8x1xf32> to vector<8x16xf32>
    %2670 = vector.broadcast %2668 : vector<1x16xf32> to vector<8x16xf32>
    %2671 = arith.mulf %2669, %2670 : vector<8x16xf32>
    %2672 = arith.addf %2667, %2671 : vector<8x16xf32>
    %2673 = vector.extract_strided_slice %2662 {offsets = [0, 2], sizes = [1, 16], strides = [1, 1]} : vector<1x18xf32> to vector<1x16xf32>
    %2674 = vector.broadcast %25 : vector<8x1xf32> to vector<8x16xf32>
    %2675 = vector.broadcast %2673 : vector<1x16xf32> to vector<8x16xf32>
    %2676 = arith.mulf %2674, %2675 : vector<8x16xf32>
    %2677 = arith.addf %2672, %2676 : vector<8x16xf32>
    %2678 = vector.extract_strided_slice %1 {offsets = [2, 13, 0], sizes = [1, 1, 18], strides = [1, 1, 1]} : vector<4x16x18xf32> to vector<1x1x18xf32>
    %2679 = vector.shape_cast %2678 : vector<1x1x18xf32> to vector<1x18xf32>
    %2680 = vector.extract_strided_slice %2679 {offsets = [0, 0], sizes = [1, 16], strides = [1, 1]} : vector<1x18xf32> to vector<1x16xf32>
    %2681 = vector.broadcast %26 : vector<8x1xf32> to vector<8x16xf32>
    %2682 = vector.broadcast %2680 : vector<1x16xf32> to vector<8x16xf32>
    %2683 = arith.mulf %2681, %2682 : vector<8x16xf32>
    %2684 = arith.addf %2677, %2683 : vector<8x16xf32>
    %2685 = vector.extract_strided_slice %2679 {offsets = [0, 1], sizes = [1, 16], strides = [1, 1]} : vector<1x18xf32> to vector<1x16xf32>
    %2686 = vector.broadcast %27 : vector<8x1xf32> to vector<8x16xf32>
    %2687 = vector.broadcast %2685 : vector<1x16xf32> to vector<8x16xf32>
    %2688 = arith.mulf %2686, %2687 : vector<8x16xf32>
    %2689 = arith.addf %2684, %2688 : vector<8x16xf32>
    %2690 = vector.extract_strided_slice %2679 {offsets = [0, 2], sizes = [1, 16], strides = [1, 1]} : vector<1x18xf32> to vector<1x16xf32>
    %2691 = vector.broadcast %28 : vector<8x1xf32> to vector<8x16xf32>
    %2692 = vector.broadcast %2690 : vector<1x16xf32> to vector<8x16xf32>
    %2693 = arith.mulf %2691, %2692 : vector<8x16xf32>
    %2694 = arith.addf %2689, %2693 : vector<8x16xf32>
    %2695 = vector.extract_strided_slice %1 {offsets = [2, 14, 0], sizes = [1, 1, 18], strides = [1, 1, 1]} : vector<4x16x18xf32> to vector<1x1x18xf32>
    %2696 = vector.shape_cast %2695 : vector<1x1x18xf32> to vector<1x18xf32>
    %2697 = vector.extract_strided_slice %2696 {offsets = [0, 0], sizes = [1, 16], strides = [1, 1]} : vector<1x18xf32> to vector<1x16xf32>
    %2698 = vector.broadcast %29 : vector<8x1xf32> to vector<8x16xf32>
    %2699 = vector.broadcast %2697 : vector<1x16xf32> to vector<8x16xf32>
    %2700 = arith.mulf %2698, %2699 : vector<8x16xf32>
    %2701 = arith.addf %2694, %2700 : vector<8x16xf32>
    %2702 = vector.extract_strided_slice %2696 {offsets = [0, 1], sizes = [1, 16], strides = [1, 1]} : vector<1x18xf32> to vector<1x16xf32>
    %2703 = vector.broadcast %30 : vector<8x1xf32> to vector<8x16xf32>
    %2704 = vector.broadcast %2702 : vector<1x16xf32> to vector<8x16xf32>
    %2705 = arith.mulf %2703, %2704 : vector<8x16xf32>
    %2706 = arith.addf %2701, %2705 : vector<8x16xf32>
    %2707 = vector.extract_strided_slice %2696 {offsets = [0, 2], sizes = [1, 16], strides = [1, 1]} : vector<1x18xf32> to vector<1x16xf32>
    %2708 = vector.broadcast %31 : vector<8x1xf32> to vector<8x16xf32>
    %2709 = vector.broadcast %2707 : vector<1x16xf32> to vector<8x16xf32>
    %2710 = arith.mulf %2708, %2709 : vector<8x16xf32>
    %2711 = arith.addf %2706, %2710 : vector<8x16xf32>
    %2712 = vector.extract_strided_slice %1 {offsets = [3, 12, 0], sizes = [1, 1, 18], strides = [1, 1, 1]} : vector<4x16x18xf32> to vector<1x1x18xf32>
    %2713 = vector.shape_cast %2712 : vector<1x1x18xf32> to vector<1x18xf32>
    %2714 = vector.extract_strided_slice %2713 {offsets = [0, 0], sizes = [1, 16], strides = [1, 1]} : vector<1x18xf32> to vector<1x16xf32>
    %2715 = vector.broadcast %32 : vector<8x1xf32> to vector<8x16xf32>
    %2716 = vector.broadcast %2714 : vector<1x16xf32> to vector<8x16xf32>
    %2717 = arith.mulf %2715, %2716 : vector<8x16xf32>
    %2718 = arith.addf %2711, %2717 : vector<8x16xf32>
    %2719 = vector.extract_strided_slice %2713 {offsets = [0, 1], sizes = [1, 16], strides = [1, 1]} : vector<1x18xf32> to vector<1x16xf32>
    %2720 = vector.broadcast %33 : vector<8x1xf32> to vector<8x16xf32>
    %2721 = vector.broadcast %2719 : vector<1x16xf32> to vector<8x16xf32>
    %2722 = arith.mulf %2720, %2721 : vector<8x16xf32>
    %2723 = arith.addf %2718, %2722 : vector<8x16xf32>
    %2724 = vector.extract_strided_slice %2713 {offsets = [0, 2], sizes = [1, 16], strides = [1, 1]} : vector<1x18xf32> to vector<1x16xf32>
    %2725 = vector.broadcast %34 : vector<8x1xf32> to vector<8x16xf32>
    %2726 = vector.broadcast %2724 : vector<1x16xf32> to vector<8x16xf32>
    %2727 = arith.mulf %2725, %2726 : vector<8x16xf32>
    %2728 = arith.addf %2723, %2727 : vector<8x16xf32>
    %2729 = vector.extract_strided_slice %1 {offsets = [3, 13, 0], sizes = [1, 1, 18], strides = [1, 1, 1]} : vector<4x16x18xf32> to vector<1x1x18xf32>
    %2730 = vector.shape_cast %2729 : vector<1x1x18xf32> to vector<1x18xf32>
    %2731 = vector.extract_strided_slice %2730 {offsets = [0, 0], sizes = [1, 16], strides = [1, 1]} : vector<1x18xf32> to vector<1x16xf32>
    %2732 = vector.broadcast %35 : vector<8x1xf32> to vector<8x16xf32>
    %2733 = vector.broadcast %2731 : vector<1x16xf32> to vector<8x16xf32>
    %2734 = arith.mulf %2732, %2733 : vector<8x16xf32>
    %2735 = arith.addf %2728, %2734 : vector<8x16xf32>
    %2736 = vector.extract_strided_slice %2730 {offsets = [0, 1], sizes = [1, 16], strides = [1, 1]} : vector<1x18xf32> to vector<1x16xf32>
    %2737 = vector.broadcast %36 : vector<8x1xf32> to vector<8x16xf32>
    %2738 = vector.broadcast %2736 : vector<1x16xf32> to vector<8x16xf32>
    %2739 = arith.mulf %2737, %2738 : vector<8x16xf32>
    %2740 = arith.addf %2735, %2739 : vector<8x16xf32>
    %2741 = vector.extract_strided_slice %2730 {offsets = [0, 2], sizes = [1, 16], strides = [1, 1]} : vector<1x18xf32> to vector<1x16xf32>
    %2742 = vector.broadcast %37 : vector<8x1xf32> to vector<8x16xf32>
    %2743 = vector.broadcast %2741 : vector<1x16xf32> to vector<8x16xf32>
    %2744 = arith.mulf %2742, %2743 : vector<8x16xf32>
    %2745 = arith.addf %2740, %2744 : vector<8x16xf32>
    %2746 = vector.extract_strided_slice %1 {offsets = [3, 14, 0], sizes = [1, 1, 18], strides = [1, 1, 1]} : vector<4x16x18xf32> to vector<1x1x18xf32>
    %2747 = vector.shape_cast %2746 : vector<1x1x18xf32> to vector<1x18xf32>
    %2748 = vector.extract_strided_slice %2747 {offsets = [0, 0], sizes = [1, 16], strides = [1, 1]} : vector<1x18xf32> to vector<1x16xf32>
    %2749 = vector.broadcast %38 : vector<8x1xf32> to vector<8x16xf32>
    %2750 = vector.broadcast %2748 : vector<1x16xf32> to vector<8x16xf32>
    %2751 = arith.mulf %2749, %2750 : vector<8x16xf32>
    %2752 = arith.addf %2745, %2751 : vector<8x16xf32>
    %2753 = vector.extract_strided_slice %2747 {offsets = [0, 1], sizes = [1, 16], strides = [1, 1]} : vector<1x18xf32> to vector<1x16xf32>
    %2754 = vector.broadcast %39 : vector<8x1xf32> to vector<8x16xf32>
    %2755 = vector.broadcast %2753 : vector<1x16xf32> to vector<8x16xf32>
    %2756 = arith.mulf %2754, %2755 : vector<8x16xf32>
    %2757 = arith.addf %2752, %2756 : vector<8x16xf32>
    %2758 = vector.extract_strided_slice %2747 {offsets = [0, 2], sizes = [1, 16], strides = [1, 1]} : vector<1x18xf32> to vector<1x16xf32>
    %2759 = vector.broadcast %40 : vector<8x1xf32> to vector<8x16xf32>
    %2760 = vector.broadcast %2758 : vector<1x16xf32> to vector<8x16xf32>
    %2761 = arith.mulf %2759, %2760 : vector<8x16xf32>
    %2762 = arith.addf %2757, %2761 : vector<8x16xf32>
    %2763 = vector.broadcast %2 : vector<8x1xf32> to vector<8x16xf32>
    %2764 = arith.mulf %2762, %2763 : vector<8x16xf32>
    %2765 = vector.broadcast %3 : vector<8x1xf32> to vector<8x16xf32>
    %2766 = arith.addf %2764, %2765 : vector<8x16xf32>
    %cst_20 = arith.constant 0.000000e+00 : f32
    %2767 = vector.broadcast %cst_20 : f32 to vector<8x16xf32>
    %2768 = arith.maximumf %2766, %2767 : vector<8x16xf32>
    %2769 = arith.maximumf %2559, %2768 : vector<8x16xf32>
    %2770 = vector.extract_strided_slice %1 {offsets = [0, 13, 0], sizes = [1, 1, 18], strides = [1, 1, 1]} : vector<4x16x18xf32> to vector<1x1x18xf32>
    %2771 = vector.shape_cast %2770 : vector<1x1x18xf32> to vector<1x18xf32>
    %2772 = vector.extract_strided_slice %2771 {offsets = [0, 0], sizes = [1, 16], strides = [1, 1]} : vector<1x18xf32> to vector<1x16xf32>
    %2773 = vector.broadcast %5 : vector<8x1xf32> to vector<8x16xf32>
    %2774 = vector.broadcast %2772 : vector<1x16xf32> to vector<8x16xf32>
    %2775 = arith.mulf %2773, %2774 : vector<8x16xf32>
    %2776 = vector.extract_strided_slice %2771 {offsets = [0, 1], sizes = [1, 16], strides = [1, 1]} : vector<1x18xf32> to vector<1x16xf32>
    %2777 = vector.broadcast %6 : vector<8x1xf32> to vector<8x16xf32>
    %2778 = vector.broadcast %2776 : vector<1x16xf32> to vector<8x16xf32>
    %2779 = arith.mulf %2777, %2778 : vector<8x16xf32>
    %2780 = arith.addf %2775, %2779 : vector<8x16xf32>
    %2781 = vector.extract_strided_slice %2771 {offsets = [0, 2], sizes = [1, 16], strides = [1, 1]} : vector<1x18xf32> to vector<1x16xf32>
    %2782 = vector.broadcast %7 : vector<8x1xf32> to vector<8x16xf32>
    %2783 = vector.broadcast %2781 : vector<1x16xf32> to vector<8x16xf32>
    %2784 = arith.mulf %2782, %2783 : vector<8x16xf32>
    %2785 = arith.addf %2780, %2784 : vector<8x16xf32>
    %2786 = vector.extract_strided_slice %1 {offsets = [0, 14, 0], sizes = [1, 1, 18], strides = [1, 1, 1]} : vector<4x16x18xf32> to vector<1x1x18xf32>
    %2787 = vector.shape_cast %2786 : vector<1x1x18xf32> to vector<1x18xf32>
    %2788 = vector.extract_strided_slice %2787 {offsets = [0, 0], sizes = [1, 16], strides = [1, 1]} : vector<1x18xf32> to vector<1x16xf32>
    %2789 = vector.broadcast %8 : vector<8x1xf32> to vector<8x16xf32>
    %2790 = vector.broadcast %2788 : vector<1x16xf32> to vector<8x16xf32>
    %2791 = arith.mulf %2789, %2790 : vector<8x16xf32>
    %2792 = arith.addf %2785, %2791 : vector<8x16xf32>
    %2793 = vector.extract_strided_slice %2787 {offsets = [0, 1], sizes = [1, 16], strides = [1, 1]} : vector<1x18xf32> to vector<1x16xf32>
    %2794 = vector.broadcast %9 : vector<8x1xf32> to vector<8x16xf32>
    %2795 = vector.broadcast %2793 : vector<1x16xf32> to vector<8x16xf32>
    %2796 = arith.mulf %2794, %2795 : vector<8x16xf32>
    %2797 = arith.addf %2792, %2796 : vector<8x16xf32>
    %2798 = vector.extract_strided_slice %2787 {offsets = [0, 2], sizes = [1, 16], strides = [1, 1]} : vector<1x18xf32> to vector<1x16xf32>
    %2799 = vector.broadcast %10 : vector<8x1xf32> to vector<8x16xf32>
    %2800 = vector.broadcast %2798 : vector<1x16xf32> to vector<8x16xf32>
    %2801 = arith.mulf %2799, %2800 : vector<8x16xf32>
    %2802 = arith.addf %2797, %2801 : vector<8x16xf32>
    %2803 = vector.extract_strided_slice %1 {offsets = [0, 15, 0], sizes = [1, 1, 18], strides = [1, 1, 1]} : vector<4x16x18xf32> to vector<1x1x18xf32>
    %2804 = vector.shape_cast %2803 : vector<1x1x18xf32> to vector<1x18xf32>
    %2805 = vector.extract_strided_slice %2804 {offsets = [0, 0], sizes = [1, 16], strides = [1, 1]} : vector<1x18xf32> to vector<1x16xf32>
    %2806 = vector.broadcast %11 : vector<8x1xf32> to vector<8x16xf32>
    %2807 = vector.broadcast %2805 : vector<1x16xf32> to vector<8x16xf32>
    %2808 = arith.mulf %2806, %2807 : vector<8x16xf32>
    %2809 = arith.addf %2802, %2808 : vector<8x16xf32>
    %2810 = vector.extract_strided_slice %2804 {offsets = [0, 1], sizes = [1, 16], strides = [1, 1]} : vector<1x18xf32> to vector<1x16xf32>
    %2811 = vector.broadcast %12 : vector<8x1xf32> to vector<8x16xf32>
    %2812 = vector.broadcast %2810 : vector<1x16xf32> to vector<8x16xf32>
    %2813 = arith.mulf %2811, %2812 : vector<8x16xf32>
    %2814 = arith.addf %2809, %2813 : vector<8x16xf32>
    %2815 = vector.extract_strided_slice %2804 {offsets = [0, 2], sizes = [1, 16], strides = [1, 1]} : vector<1x18xf32> to vector<1x16xf32>
    %2816 = vector.broadcast %13 : vector<8x1xf32> to vector<8x16xf32>
    %2817 = vector.broadcast %2815 : vector<1x16xf32> to vector<8x16xf32>
    %2818 = arith.mulf %2816, %2817 : vector<8x16xf32>
    %2819 = arith.addf %2814, %2818 : vector<8x16xf32>
    %2820 = vector.extract_strided_slice %1 {offsets = [1, 13, 0], sizes = [1, 1, 18], strides = [1, 1, 1]} : vector<4x16x18xf32> to vector<1x1x18xf32>
    %2821 = vector.shape_cast %2820 : vector<1x1x18xf32> to vector<1x18xf32>
    %2822 = vector.extract_strided_slice %2821 {offsets = [0, 0], sizes = [1, 16], strides = [1, 1]} : vector<1x18xf32> to vector<1x16xf32>
    %2823 = vector.broadcast %14 : vector<8x1xf32> to vector<8x16xf32>
    %2824 = vector.broadcast %2822 : vector<1x16xf32> to vector<8x16xf32>
    %2825 = arith.mulf %2823, %2824 : vector<8x16xf32>
    %2826 = arith.addf %2819, %2825 : vector<8x16xf32>
    %2827 = vector.extract_strided_slice %2821 {offsets = [0, 1], sizes = [1, 16], strides = [1, 1]} : vector<1x18xf32> to vector<1x16xf32>
    %2828 = vector.broadcast %15 : vector<8x1xf32> to vector<8x16xf32>
    %2829 = vector.broadcast %2827 : vector<1x16xf32> to vector<8x16xf32>
    %2830 = arith.mulf %2828, %2829 : vector<8x16xf32>
    %2831 = arith.addf %2826, %2830 : vector<8x16xf32>
    %2832 = vector.extract_strided_slice %2821 {offsets = [0, 2], sizes = [1, 16], strides = [1, 1]} : vector<1x18xf32> to vector<1x16xf32>
    %2833 = vector.broadcast %16 : vector<8x1xf32> to vector<8x16xf32>
    %2834 = vector.broadcast %2832 : vector<1x16xf32> to vector<8x16xf32>
    %2835 = arith.mulf %2833, %2834 : vector<8x16xf32>
    %2836 = arith.addf %2831, %2835 : vector<8x16xf32>
    %2837 = vector.extract_strided_slice %1 {offsets = [1, 14, 0], sizes = [1, 1, 18], strides = [1, 1, 1]} : vector<4x16x18xf32> to vector<1x1x18xf32>
    %2838 = vector.shape_cast %2837 : vector<1x1x18xf32> to vector<1x18xf32>
    %2839 = vector.extract_strided_slice %2838 {offsets = [0, 0], sizes = [1, 16], strides = [1, 1]} : vector<1x18xf32> to vector<1x16xf32>
    %2840 = vector.broadcast %17 : vector<8x1xf32> to vector<8x16xf32>
    %2841 = vector.broadcast %2839 : vector<1x16xf32> to vector<8x16xf32>
    %2842 = arith.mulf %2840, %2841 : vector<8x16xf32>
    %2843 = arith.addf %2836, %2842 : vector<8x16xf32>
    %2844 = vector.extract_strided_slice %2838 {offsets = [0, 1], sizes = [1, 16], strides = [1, 1]} : vector<1x18xf32> to vector<1x16xf32>
    %2845 = vector.broadcast %18 : vector<8x1xf32> to vector<8x16xf32>
    %2846 = vector.broadcast %2844 : vector<1x16xf32> to vector<8x16xf32>
    %2847 = arith.mulf %2845, %2846 : vector<8x16xf32>
    %2848 = arith.addf %2843, %2847 : vector<8x16xf32>
    %2849 = vector.extract_strided_slice %2838 {offsets = [0, 2], sizes = [1, 16], strides = [1, 1]} : vector<1x18xf32> to vector<1x16xf32>
    %2850 = vector.broadcast %19 : vector<8x1xf32> to vector<8x16xf32>
    %2851 = vector.broadcast %2849 : vector<1x16xf32> to vector<8x16xf32>
    %2852 = arith.mulf %2850, %2851 : vector<8x16xf32>
    %2853 = arith.addf %2848, %2852 : vector<8x16xf32>
    %2854 = vector.extract_strided_slice %1 {offsets = [1, 15, 0], sizes = [1, 1, 18], strides = [1, 1, 1]} : vector<4x16x18xf32> to vector<1x1x18xf32>
    %2855 = vector.shape_cast %2854 : vector<1x1x18xf32> to vector<1x18xf32>
    %2856 = vector.extract_strided_slice %2855 {offsets = [0, 0], sizes = [1, 16], strides = [1, 1]} : vector<1x18xf32> to vector<1x16xf32>
    %2857 = vector.broadcast %20 : vector<8x1xf32> to vector<8x16xf32>
    %2858 = vector.broadcast %2856 : vector<1x16xf32> to vector<8x16xf32>
    %2859 = arith.mulf %2857, %2858 : vector<8x16xf32>
    %2860 = arith.addf %2853, %2859 : vector<8x16xf32>
    %2861 = vector.extract_strided_slice %2855 {offsets = [0, 1], sizes = [1, 16], strides = [1, 1]} : vector<1x18xf32> to vector<1x16xf32>
    %2862 = vector.broadcast %21 : vector<8x1xf32> to vector<8x16xf32>
    %2863 = vector.broadcast %2861 : vector<1x16xf32> to vector<8x16xf32>
    %2864 = arith.mulf %2862, %2863 : vector<8x16xf32>
    %2865 = arith.addf %2860, %2864 : vector<8x16xf32>
    %2866 = vector.extract_strided_slice %2855 {offsets = [0, 2], sizes = [1, 16], strides = [1, 1]} : vector<1x18xf32> to vector<1x16xf32>
    %2867 = vector.broadcast %22 : vector<8x1xf32> to vector<8x16xf32>
    %2868 = vector.broadcast %2866 : vector<1x16xf32> to vector<8x16xf32>
    %2869 = arith.mulf %2867, %2868 : vector<8x16xf32>
    %2870 = arith.addf %2865, %2869 : vector<8x16xf32>
    %2871 = vector.extract_strided_slice %1 {offsets = [2, 13, 0], sizes = [1, 1, 18], strides = [1, 1, 1]} : vector<4x16x18xf32> to vector<1x1x18xf32>
    %2872 = vector.shape_cast %2871 : vector<1x1x18xf32> to vector<1x18xf32>
    %2873 = vector.extract_strided_slice %2872 {offsets = [0, 0], sizes = [1, 16], strides = [1, 1]} : vector<1x18xf32> to vector<1x16xf32>
    %2874 = vector.broadcast %23 : vector<8x1xf32> to vector<8x16xf32>
    %2875 = vector.broadcast %2873 : vector<1x16xf32> to vector<8x16xf32>
    %2876 = arith.mulf %2874, %2875 : vector<8x16xf32>
    %2877 = arith.addf %2870, %2876 : vector<8x16xf32>
    %2878 = vector.extract_strided_slice %2872 {offsets = [0, 1], sizes = [1, 16], strides = [1, 1]} : vector<1x18xf32> to vector<1x16xf32>
    %2879 = vector.broadcast %24 : vector<8x1xf32> to vector<8x16xf32>
    %2880 = vector.broadcast %2878 : vector<1x16xf32> to vector<8x16xf32>
    %2881 = arith.mulf %2879, %2880 : vector<8x16xf32>
    %2882 = arith.addf %2877, %2881 : vector<8x16xf32>
    %2883 = vector.extract_strided_slice %2872 {offsets = [0, 2], sizes = [1, 16], strides = [1, 1]} : vector<1x18xf32> to vector<1x16xf32>
    %2884 = vector.broadcast %25 : vector<8x1xf32> to vector<8x16xf32>
    %2885 = vector.broadcast %2883 : vector<1x16xf32> to vector<8x16xf32>
    %2886 = arith.mulf %2884, %2885 : vector<8x16xf32>
    %2887 = arith.addf %2882, %2886 : vector<8x16xf32>
    %2888 = vector.extract_strided_slice %1 {offsets = [2, 14, 0], sizes = [1, 1, 18], strides = [1, 1, 1]} : vector<4x16x18xf32> to vector<1x1x18xf32>
    %2889 = vector.shape_cast %2888 : vector<1x1x18xf32> to vector<1x18xf32>
    %2890 = vector.extract_strided_slice %2889 {offsets = [0, 0], sizes = [1, 16], strides = [1, 1]} : vector<1x18xf32> to vector<1x16xf32>
    %2891 = vector.broadcast %26 : vector<8x1xf32> to vector<8x16xf32>
    %2892 = vector.broadcast %2890 : vector<1x16xf32> to vector<8x16xf32>
    %2893 = arith.mulf %2891, %2892 : vector<8x16xf32>
    %2894 = arith.addf %2887, %2893 : vector<8x16xf32>
    %2895 = vector.extract_strided_slice %2889 {offsets = [0, 1], sizes = [1, 16], strides = [1, 1]} : vector<1x18xf32> to vector<1x16xf32>
    %2896 = vector.broadcast %27 : vector<8x1xf32> to vector<8x16xf32>
    %2897 = vector.broadcast %2895 : vector<1x16xf32> to vector<8x16xf32>
    %2898 = arith.mulf %2896, %2897 : vector<8x16xf32>
    %2899 = arith.addf %2894, %2898 : vector<8x16xf32>
    %2900 = vector.extract_strided_slice %2889 {offsets = [0, 2], sizes = [1, 16], strides = [1, 1]} : vector<1x18xf32> to vector<1x16xf32>
    %2901 = vector.broadcast %28 : vector<8x1xf32> to vector<8x16xf32>
    %2902 = vector.broadcast %2900 : vector<1x16xf32> to vector<8x16xf32>
    %2903 = arith.mulf %2901, %2902 : vector<8x16xf32>
    %2904 = arith.addf %2899, %2903 : vector<8x16xf32>
    %2905 = vector.extract_strided_slice %1 {offsets = [2, 15, 0], sizes = [1, 1, 18], strides = [1, 1, 1]} : vector<4x16x18xf32> to vector<1x1x18xf32>
    %2906 = vector.shape_cast %2905 : vector<1x1x18xf32> to vector<1x18xf32>
    %2907 = vector.extract_strided_slice %2906 {offsets = [0, 0], sizes = [1, 16], strides = [1, 1]} : vector<1x18xf32> to vector<1x16xf32>
    %2908 = vector.broadcast %29 : vector<8x1xf32> to vector<8x16xf32>
    %2909 = vector.broadcast %2907 : vector<1x16xf32> to vector<8x16xf32>
    %2910 = arith.mulf %2908, %2909 : vector<8x16xf32>
    %2911 = arith.addf %2904, %2910 : vector<8x16xf32>
    %2912 = vector.extract_strided_slice %2906 {offsets = [0, 1], sizes = [1, 16], strides = [1, 1]} : vector<1x18xf32> to vector<1x16xf32>
    %2913 = vector.broadcast %30 : vector<8x1xf32> to vector<8x16xf32>
    %2914 = vector.broadcast %2912 : vector<1x16xf32> to vector<8x16xf32>
    %2915 = arith.mulf %2913, %2914 : vector<8x16xf32>
    %2916 = arith.addf %2911, %2915 : vector<8x16xf32>
    %2917 = vector.extract_strided_slice %2906 {offsets = [0, 2], sizes = [1, 16], strides = [1, 1]} : vector<1x18xf32> to vector<1x16xf32>
    %2918 = vector.broadcast %31 : vector<8x1xf32> to vector<8x16xf32>
    %2919 = vector.broadcast %2917 : vector<1x16xf32> to vector<8x16xf32>
    %2920 = arith.mulf %2918, %2919 : vector<8x16xf32>
    %2921 = arith.addf %2916, %2920 : vector<8x16xf32>
    %2922 = vector.extract_strided_slice %1 {offsets = [3, 13, 0], sizes = [1, 1, 18], strides = [1, 1, 1]} : vector<4x16x18xf32> to vector<1x1x18xf32>
    %2923 = vector.shape_cast %2922 : vector<1x1x18xf32> to vector<1x18xf32>
    %2924 = vector.extract_strided_slice %2923 {offsets = [0, 0], sizes = [1, 16], strides = [1, 1]} : vector<1x18xf32> to vector<1x16xf32>
    %2925 = vector.broadcast %32 : vector<8x1xf32> to vector<8x16xf32>
    %2926 = vector.broadcast %2924 : vector<1x16xf32> to vector<8x16xf32>
    %2927 = arith.mulf %2925, %2926 : vector<8x16xf32>
    %2928 = arith.addf %2921, %2927 : vector<8x16xf32>
    %2929 = vector.extract_strided_slice %2923 {offsets = [0, 1], sizes = [1, 16], strides = [1, 1]} : vector<1x18xf32> to vector<1x16xf32>
    %2930 = vector.broadcast %33 : vector<8x1xf32> to vector<8x16xf32>
    %2931 = vector.broadcast %2929 : vector<1x16xf32> to vector<8x16xf32>
    %2932 = arith.mulf %2930, %2931 : vector<8x16xf32>
    %2933 = arith.addf %2928, %2932 : vector<8x16xf32>
    %2934 = vector.extract_strided_slice %2923 {offsets = [0, 2], sizes = [1, 16], strides = [1, 1]} : vector<1x18xf32> to vector<1x16xf32>
    %2935 = vector.broadcast %34 : vector<8x1xf32> to vector<8x16xf32>
    %2936 = vector.broadcast %2934 : vector<1x16xf32> to vector<8x16xf32>
    %2937 = arith.mulf %2935, %2936 : vector<8x16xf32>
    %2938 = arith.addf %2933, %2937 : vector<8x16xf32>
    %2939 = vector.extract_strided_slice %1 {offsets = [3, 14, 0], sizes = [1, 1, 18], strides = [1, 1, 1]} : vector<4x16x18xf32> to vector<1x1x18xf32>
    %2940 = vector.shape_cast %2939 : vector<1x1x18xf32> to vector<1x18xf32>
    %2941 = vector.extract_strided_slice %2940 {offsets = [0, 0], sizes = [1, 16], strides = [1, 1]} : vector<1x18xf32> to vector<1x16xf32>
    %2942 = vector.broadcast %35 : vector<8x1xf32> to vector<8x16xf32>
    %2943 = vector.broadcast %2941 : vector<1x16xf32> to vector<8x16xf32>
    %2944 = arith.mulf %2942, %2943 : vector<8x16xf32>
    %2945 = arith.addf %2938, %2944 : vector<8x16xf32>
    %2946 = vector.extract_strided_slice %2940 {offsets = [0, 1], sizes = [1, 16], strides = [1, 1]} : vector<1x18xf32> to vector<1x16xf32>
    %2947 = vector.broadcast %36 : vector<8x1xf32> to vector<8x16xf32>
    %2948 = vector.broadcast %2946 : vector<1x16xf32> to vector<8x16xf32>
    %2949 = arith.mulf %2947, %2948 : vector<8x16xf32>
    %2950 = arith.addf %2945, %2949 : vector<8x16xf32>
    %2951 = vector.extract_strided_slice %2940 {offsets = [0, 2], sizes = [1, 16], strides = [1, 1]} : vector<1x18xf32> to vector<1x16xf32>
    %2952 = vector.broadcast %37 : vector<8x1xf32> to vector<8x16xf32>
    %2953 = vector.broadcast %2951 : vector<1x16xf32> to vector<8x16xf32>
    %2954 = arith.mulf %2952, %2953 : vector<8x16xf32>
    %2955 = arith.addf %2950, %2954 : vector<8x16xf32>
    %2956 = vector.extract_strided_slice %1 {offsets = [3, 15, 0], sizes = [1, 1, 18], strides = [1, 1, 1]} : vector<4x16x18xf32> to vector<1x1x18xf32>
    %2957 = vector.shape_cast %2956 : vector<1x1x18xf32> to vector<1x18xf32>
    %2958 = vector.extract_strided_slice %2957 {offsets = [0, 0], sizes = [1, 16], strides = [1, 1]} : vector<1x18xf32> to vector<1x16xf32>
    %2959 = vector.broadcast %38 : vector<8x1xf32> to vector<8x16xf32>
    %2960 = vector.broadcast %2958 : vector<1x16xf32> to vector<8x16xf32>
    %2961 = arith.mulf %2959, %2960 : vector<8x16xf32>
    %2962 = arith.addf %2955, %2961 : vector<8x16xf32>
    %2963 = vector.extract_strided_slice %2957 {offsets = [0, 1], sizes = [1, 16], strides = [1, 1]} : vector<1x18xf32> to vector<1x16xf32>
    %2964 = vector.broadcast %39 : vector<8x1xf32> to vector<8x16xf32>
    %2965 = vector.broadcast %2963 : vector<1x16xf32> to vector<8x16xf32>
    %2966 = arith.mulf %2964, %2965 : vector<8x16xf32>
    %2967 = arith.addf %2962, %2966 : vector<8x16xf32>
    %2968 = vector.extract_strided_slice %2957 {offsets = [0, 2], sizes = [1, 16], strides = [1, 1]} : vector<1x18xf32> to vector<1x16xf32>
    %2969 = vector.broadcast %40 : vector<8x1xf32> to vector<8x16xf32>
    %2970 = vector.broadcast %2968 : vector<1x16xf32> to vector<8x16xf32>
    %2971 = arith.mulf %2969, %2970 : vector<8x16xf32>
    %2972 = arith.addf %2967, %2971 : vector<8x16xf32>
    %2973 = vector.broadcast %2 : vector<8x1xf32> to vector<8x16xf32>
    %2974 = arith.mulf %2972, %2973 : vector<8x16xf32>
    %2975 = vector.broadcast %3 : vector<8x1xf32> to vector<8x16xf32>
    %2976 = arith.addf %2974, %2975 : vector<8x16xf32>
    %cst_21 = arith.constant 0.000000e+00 : f32
    %2977 = vector.broadcast %cst_21 : f32 to vector<8x16xf32>
    %2978 = arith.maximumf %2976, %2977 : vector<8x16xf32>
    %2979 = arith.maximumf %2769, %2978 : vector<8x16xf32>
    %c0_22 = arith.constant 0 : index
    %c0_23 = arith.constant 0 : index
    %c0_24 = arith.constant 0 : index
    %2980 = vector.load %arg5[%c0_22, %c0_23, %c0_24] : memref<1x8x16xf32, #tpu.memory_space<vmem>>, vector<1x8x16xf32>
    %2981 = vector.shape_cast %2980 : vector<1x8x16xf32> to vector<8x16xf32>
    %2982 = vector.shape_cast %2979 : vector<8x16xf32> to vector<1x8x16xf32>
    tpu.vector_store %arg5[%c0_22, %c0_23, %c0_24], %2982 {strides = array<i32>} : memref<1x8x16xf32, #tpu.memory_space<vmem>>, vector<1x8x16xf32>,
    return
  }
  func.func @transform_0(%arg0: i32) -> (i32, i32, i32, i32) {
    %c0_i32 = arith.constant 0 : i32
    %c0_i32_0 = arith.constant 0 : i32
    %c0_i32_1 = arith.constant 0 : i32
    %c0_i32_2 = arith.constant 0 : i32
    return %arg0, %c0_i32, %c0_i32_0, %c0_i32_1 : i32, i32, i32, i32
  }
  func.func @transform_1(%arg0: i32) -> (i32, i32) {
    %c0_i32 = arith.constant 0 : i32
    %c0_i32_0 = arith.constant 0 : i32
    %c0_i32_1 = arith.constant 0 : i32
    return %c0_i32, %c0_i32_0 : i32, i32
  }
  func.func @transform_2(%arg0: i32) -> (i32, i32) {
    %c0_i32 = arith.constant 0 : i32
    %c0_i32_0 = arith.constant 0 : i32
    %c0_i32_1 = arith.constant 0 : i32
    return %c0_i32, %c0_i32_0 : i32, i32
  }
  func.func @transform_3(%arg0: i32) -> (i32, i32) {
    %c0_i32 = arith.constant 0 : i32
    %c0_i32_0 = arith.constant 0 : i32
    %c0_i32_1 = arith.constant 0 : i32
    return %c0_i32, %c0_i32_0 : i32, i32
  }
  func.func @transform_4(%arg0: i32) -> (i32, i32, i32) {
    %c0_i32 = arith.constant 0 : i32
    %c0_i32_0 = arith.constant 0 : i32
    %c0_i32_1 = arith.constant 0 : i32
    return %arg0, %c0_i32, %c0_i32_0 : i32, i32, i32
  }
}

</mosaic_0001>

<llo_original>
// kernel: tpu_custom_call.1
$region0: #{tpu_custom_call.1}
  #allocation0 [shape = 'u32[]', space=smem, size = 0x4, offset = 0x4, fixed_abs, tag = 'smem constant byte address 0x4 - core index']
  #allocation1 [shape = 'u32[144,128]{1,0:T(1,128)}', space=vmem, size = 0x12000, scoped, tag = 'internal scratch']
  %s0 = inlined_call_operand.hbm [shape: f32[2,4,16,18], index: 0, kind: input, shape index: {}]
  %s1 = inlined_call_operand.vmem [shape: f32[8,36], index: 1, kind: input, shape index: {}]
  %s2 = inlined_call_operand.vmem [shape: f32[8,1], index: 2, kind: input, shape index: {}]
  %s3 = inlined_call_operand.vmem [shape: f32[8,1], index: 3, kind: input, shape index: {}]
  %s4 = inlined_call_operand.hbm [shape: f32[2,8,16], index: 4, kind: output, shape index: {}]
  %s5 = sld [smem:[#allocation0]]
  $region53: #{tpu_custom_call.1} parent=0
    _
  %s7 = ssub.s32 1, %s5
  %s8 = scalar_select 0, %s7, %s5
  $region1: #{tpu_custom_call.1} parent=0
    #allocation2 [shape = 'u8[65536]{0}', space=vmem, size = 0x10000, scoped, tag = 'input window, operand 0']
    #allocation3 [shape = 's32[2]{0}', space=sflag, size = 0x8, scoped, tag = 'scoped memory for tpu_custom_call.1']
    #allocation4 [shape = 's32[2]{0}', space=sflag, size = 0x8, scoped, tag = 'scoped memory for tpu_custom_call.1']
    #allocation5 [shape = 'u8[8192]{0}', space=vmem, size = 0x2000, scoped, tag = 'output window, operand 0']
    %9 = vsyncpa [#allocation3], 0
    %s10 = scalar_lea.sflag [#allocation3], 1
    %11 = vsyncpa %s10, 0
    %12 = vsyncpa [#allocation4], 0
    %s13 = scalar_lea.sflag [#allocation4], 1
    %14 = vsyncpa %s13, 0
    loop: start=0, step=1, limit=4
    $region2: #{tpu_custom_call.1} parent=1 // loop_pre_header
      _
    $region3: #{tpu_custom_call.1} parent=1 // loop_header
      %s16 = sphi 0, %s20
      %p17 = scmp.ge.s32.totalorder %s16, 4
      %s26 = sphi 0, %s28
      %s29 = sphi 0, %s26
      %s30 = sphi 0, %s29
      %s46 = sphi 0, %s30
      %s50 = sphi 0, %s50
      %s52 = sphi 0, %s50
      %s53 = sphi 0, %s52
      %s67 = sphi 0, %s53
      %s71 = sphi 0, %s71
      %s73 = sphi 0, %s71
      %s74 = sphi 0, %s73
      %s88 = sphi 0, %s74
      %s92 = sphi 0, %s92
      %s94 = sphi 0, %s92
      %s95 = sphi 0, %s94
      %s109 = sphi 0, %s95
      %s115 = sphi 0, %s117
      %s118 = sphi 0, %s115
      %s119 = sphi 0, %s118
      %s135 = sphi 0, %s119
    $region4: #{tpu_custom_call.1} parent=1 // loop_header_branch
      %19 = sbr.rel (%p17) target = $region8
    $region5: #{tpu_custom_call.1} parent=1 // loop_body
      %s21 = ssub.s32 %s16, 1
      %s22 = ssub.s32 %s16, 2
      %s23 = sadd.s32 %s16, 1
      %s24 = ssub.s32 %s16, %s23
      %p25 = scmp.eq.s32.totalorder %s24, 0
      %s27 = sadd.s32 %s26, 1
      %s28 = scalar_select %p25, %s26, %s27
      %p31 = pneg %p25
      %p32 = scmp.eq.s32.totalorder %s16, 1
      %p33 = por %p31, %p32
      %p34 = scmp.ne.s32.totalorder %s26, %s29
      %p35 = scmp.eq.s32.totalorder %s16, 0
      %p36 = por %p34, %p35
      %p37 = scmp.ne.s32.totalorder %s26, %s29
      %p38 = scmp.eq.s32.totalorder %s21, 1
      %p39 = por %p37, %p38
      %p40 = scmp.ne.s32.totalorder %s29, %s30
      %p41 = scmp.eq.s32.totalorder %s21, 0
      %p42 = por %p40, %p41
      %p43 = scmp.ne.s32.totalorder %s29, %s30
      %p44 = scmp.eq.s32.totalorder %s22, 1
      %p45 = por %p43, %p44
      %p47 = scmp.ne.s32.totalorder %s30, %s46
      %p48 = scmp.eq.s32.totalorder %s22, 0
      %p49 = por %p47, %p48
      %s51 = sadd.s32 %s50, 1
      %p54 = scmp.eq.s32.totalorder %s16, 1
      %p55 = scmp.ne.s32.totalorder %s50, %s52
      %p56 = scmp.eq.s32.totalorder %s16, 0
      %p57 = por %p55, %p56
      %p58 = scmp.ne.s32.totalorder %s50, %s52
      %p59 = scmp.eq.s32.totalorder %s21, 1
      %p60 = por %p58, %p59
      %p61 = scmp.ne.s32.totalorder %s52, %s53
      %p62 = scmp.eq.s32.totalorder %s21, 0
      %p63 = por %p61, %p62
      %p64 = scmp.ne.s32.totalorder %s52, %s53
      %p65 = scmp.eq.s32.totalorder %s22, 1
      %p66 = por %p64, %p65
      %p68 = scmp.ne.s32.totalorder %s53, %s67
      %p69 = scmp.eq.s32.totalorder %s22, 0
      %p70 = por %p68, %p69
      %s72 = sadd.s32 %s71, 1
      %p75 = scmp.eq.s32.totalorder %s16, 1
      %p76 = scmp.ne.s32.totalorder %s71, %s73
      %p77 = scmp.eq.s32.totalorder %s16, 0
      %p78 = por %p76, %p77
      %p79 = scmp.ne.s32.totalorder %s71, %s73
      %p80 = scmp.eq.s32.totalorder %s21, 1
      %p81 = por %p79, %p80
      %p82 = scmp.ne.s32.totalorder %s73, %s74
      %p83 = scmp.eq.s32.totalorder %s21, 0
      %p84 = por %p82, %p83
      %p85 = scmp.ne.s32.totalorder %s73, %s74
      %p86 = scmp.eq.s32.totalorder %s22, 1
      %p87 = por %p85, %p86
      %p89 = scmp.ne.s32.totalorder %s74, %s88
      %p90 = scmp.eq.s32.totalorder %s22, 0
      %p91 = por %p89, %p90
      %s93 = sadd.s32 %s92, 1
      %p96 = scmp.eq.s32.totalorder %s16, 1
      %p97 = scmp.ne.s32.totalorder %s92, %s94
      %p98 = scmp.eq.s32.totalorder %s16, 0
      %p99 = por %p97, %p98
      %p100 = scmp.ne.s32.totalorder %s92, %s94
      %p101 = scmp.eq.s32.totalorder %s21, 1
      %p102 = por %p100, %p101
      %p103 = scmp.ne.s32.totalorder %s94, %s95
      %p104 = scmp.eq.s32.totalorder %s21, 0
      %p105 = por %p103, %p104
      %p106 = scmp.ne.s32.totalorder %s94, %s95
      %p107 = scmp.eq.s32.totalorder %s22, 1
      %p108 = por %p106, %p107
      %p110 = scmp.ne.s32.totalorder %s95, %s109
      %p111 = scmp.eq.s32.totalorder %s22, 0
      %p112 = por %p110, %p111
      %s113 = ssub.s32 %s16, %s23
      %p114 = scmp.eq.s32.totalorder %s113, 0
      %s116 = sadd.s32 %s115, 1
      %s117 = scalar_select %p114, %s115, %s116
      %p120 = pneg %p114
      %p121 = scmp.eq.s32.totalorder %s16, 1
      %p122 = por %p120, %p121
      %p123 = scmp.ne.s32.totalorder %s115, %s118
      %p124 = scmp.eq.s32.totalorder %s16, 0
      %p125 = por %p123, %p124
      %p126 = scmp.ne.s32.totalorder %s115, %s118
      %p127 = scmp.eq.s32.totalorder %s21, 1
      %p128 = por %p126, %p127
      %p129 = scmp.ne.s32.totalorder %s118, %s119
      %p130 = scmp.eq.s32.totalorder %s21, 0
      %p131 = por %p129, %p130
      %p132 = scmp.ne.s32.totalorder %s118, %s119
      %p133 = scmp.eq.s32.totalorder %s22, 1
      %p134 = por %p132, %p133
      %p136 = scmp.ne.s32.totalorder %s119, %s135
      %p137 = scmp.eq.s32.totalorder %s22, 0
      %p138 = por %p136, %p137
      %p139 = scmp.le.s32.totalorder 1, %s16
      %p140 = scmp.lt.s32.totalorder %s16, 3
      %p141 = pnand %p139, %p140
      %p142 = pneg %p141
      // Predicated region
      $region9: #{tpu_custom_call.1} parent=5 // pred_check
        _
      $region10: #{tpu_custom_call.1} parent=5 // pred_check_branch
        %144 = sbr.rel (%p141) target = $region12
      $region11: #{tpu_custom_call.1} parent=5 // pred_region
        %s145 = ssub.s32 %s16, 1
        // Predicated region
        $region13: #{tpu_custom_call.1} parent=11 // pred_check
          %p146 = pneg %p63
        $region14: #{tpu_custom_call.1} parent=11 // pred_check_branch
          %148 = sbr.rel (%p146) target = $region16
        $region15: #{tpu_custom_call.1} parent=11 // pred_region
          _
        $region16: #{tpu_custom_call.1} parent=11 // pred_fallthru
          _
        // Predicated region
        $region17: #{tpu_custom_call.1} parent=11 // pred_check
          %p149 = pneg %p84
        $region18: #{tpu_custom_call.1} parent=11 // pred_check_branch
          %151 = sbr.rel (%p149) target = $region20
        $region19: #{tpu_custom_call.1} parent=11 // pred_region
          _
        $region20: #{tpu_custom_call.1} parent=11 // pred_fallthru
          _
        // Predicated region
        $region21: #{tpu_custom_call.1} parent=11 // pred_check
          %p152 = pneg %p105
        $region22: #{tpu_custom_call.1} parent=11 // pred_check_branch
          %154 = sbr.rel (%p152) target = $region24
        $region23: #{tpu_custom_call.1} parent=11 // pred_region
          _
        $region24: #{tpu_custom_call.1} parent=11 // pred_fallthru
          _
      $region12: #{tpu_custom_call.1} parent=5 // pred_fallthru
        _
      %p155 = scmp.lt.s32.totalorder %s16, 2
      // Predicated region
      $region25: #{tpu_custom_call.1} parent=5 // pred_check
        %p156 = pneg %p155
      $region26: #{tpu_custom_call.1} parent=5 // pred_check_branch
        %158 = sbr.rel (%p156) target = $region28
      $region27: #{tpu_custom_call.1} parent=5 // pred_region
        // Predicated region
        $region29: #{tpu_custom_call.1} parent=27 // pred_check
          %p159 = pneg %p36
        $region30: #{tpu_custom_call.1} parent=27 // pred_check_branch
          %161 = sbr.rel (%p159) target = $region32
        $region31: #{tpu_custom_call.1} parent=27 // pred_region
          %s162 = sand.u32 %s26, 1
          %s163 = scalar_lea.sflag [#allocation3], %s162
          %s164 = sand.u32 %s26, 1
          %s165 = smul.addr %s164, 64
          %s166 = scalar_lea.vmem [#allocation2], %s165
          %s168 = ssub.s32 1024, 1024
          %169 = vsyncadd %s163, %s168
          %s170 = smul.addr %s16, 8
          %s171 = smul.addr %s170, 128
          %s172 = scalar_lea.hbm %s0, %s171
          %s173 = sshll.u32 %s166, 4
          %s174 = int_to_ptr.vmem [resolvable:$true] %s173
          %179 = dma.hbm_to_vmem [thread:$0]  %s172, 1024, %s174, %s163, 128, 128, 8
        $region32: #{tpu_custom_call.1} parent=27 // pred_fallthru
          _
      $region28: #{tpu_custom_call.1} parent=5 // pred_fallthru
        _
      %p180 = scmp.le.s32.totalorder 1, %s16
      %p181 = scmp.lt.s32.totalorder %s16, 3
      %p182 = pnand %p180, %p181
      %p183 = pneg %p182
      // Predicated region
      $region33: #{tpu_custom_call.1} parent=5 // pred_check
        _
      $region34: #{tpu_custom_call.1} parent=5 // pred_check_branch
        %185 = sbr.rel (%p182) target = $region36
      $region35: #{tpu_custom_call.1} parent=5 // pred_region
        %s186 = ssub.s32 %s16, 1
        %s187 = sand.u32 %s29, 1
        %s188 = scalar_lea.sflag [#allocation3], %s187
        %s189 = sand.u32 %s29, 1
        %s190 = smul.addr %s189, 64
        %s191 = scalar_lea.vmem [#allocation2], %s190
        // Predicated region
        $region37: #{tpu_custom_call.1} parent=35 // pred_check
          %p192 = pneg %p42
        $region38: #{tpu_custom_call.1} parent=35 // pred_check_branch
          %194 = sbr.rel (%p192) target = $region40
        $region39: #{tpu_custom_call.1} parent=35 // pred_region
          %195 = dma.done %s188, 1024
        $region40: #{tpu_custom_call.1} parent=35 // pred_fallthru
          _
        %s196 = sand.u32 %s29, 1
        %s197 = scalar_lea.sflag [#allocation3], %s196
        %s198 = sand.u32 %s29, 1
        %s199 = smul.addr %s198, 64
        %s200 = scalar_lea.vmem [#allocation2], %s199
        %p201 = pneg %p42
        %p202 = pneg %p39
        %p203 = pneg %p63
        %p204 = pneg %p60
        %p205 = pneg %p84
        %p206 = pneg %p81
        %p207 = pneg %p105
        %p208 = pneg %p102
        %p209 = pneg %p131
        %p210 = pneg %p128
        %s211 = sand.u32 %s118, 1
        %s212 = scalar_lea.sflag [#allocation4], %s211
        %s213 = sand.u32 %s118, 1
        %s214 = smul.addr %s213, 8
        %s215 = scalar_lea.vmem [#allocation5], %s214
        %v216 = vld [vmem:[%s191] sm:$0xff]
        %v217 = vld [vmem:[%s191 + $0x8] sm:$0xff]
        %v218 = vld [vmem:[%s191 + $0x10] sm:$0xff]
        %v219 = vld [vmem:[%s191 + $0x18] sm:$0xff]
        %v220 = vld [vmem:[%s191 + $0x20] sm:$0xff]
        %v221 = vld [vmem:[%s191 + $0x28] sm:$0xff]
        %v222 = vld [vmem:[%s191 + $0x30] sm:$0xff]
        %v223 = vld [vmem:[%s191 + $0x38] sm:$0xff]
        %v224 = vld [vmem:[%s2] sm:$0xff]
        %v225 = vld [vmem:[%s3] sm:$0xff]
        %v226 = vld [vmem:[%s1] sm:$0xff]
        %228 = vset.pattern.permute.xlu0 0
        %229 = vperm.xlu0 %228, %v226
        %v230 = vpop.permute.xlu0 %229
        %v232 = vlaneseq
        %v233 = vshrl.u32 %v232, 7
        %v234 = vsub.s32 0, %v233
        %v235 = vrot.slane %v216, %v234
        %v236 = vmul.f32 %v230, %v235
        %237 = vset.pattern.permute.xlu0 1
        %238 = vperm.xlu0 %237, %v226
        %v239 = vpop.permute.xlu0 %238
        %v241 = vmul.f32 %v239, %v235
        %243 = vrot.lane.b32.xlu0 %v241, 127
        %v244 = vpop.permute.xlu0 %243
        %v246 = vadd.f32 %v236, %v244
        %247 = vset.pattern.permute.xlu0 2
        %248 = vperm.xlu0 %247, %v226
        %v249 = vpop.permute.xlu0 %248
        %v251 = vmul.f32 %v249, %v235
        %253 = vrot.lane.b32.xlu0 %v251, 126
        %v254 = vpop.permute.xlu0 %253
        %v256 = vadd.f32 %v246, %v254
        %257 = vset.pattern.permute.xlu0 3
        %258 = vperm.xlu0 %257, %v226
        %v259 = vpop.permute.xlu0 %258
        %v261 = vlaneseq
        %v262 = vshrl.u32 %v261, 7
        %v263 = vsub.s32 1, %v262
        %v264 = vrot.slane %v216, %v263
        %v265 = vmul.f32 %v259, %v264
        %v266 = vadd.f32 %v256, %v265
        %267 = vset.pattern.permute.xlu0 4
        %268 = vperm.xlu0 %267, %v226
        %v269 = vpop.permute.xlu0 %268
        %v271 = vmul.f32 %v269, %v264
        %273 = vrot.lane.b32.xlu0 %v271, 127
        %v274 = vpop.permute.xlu0 %273
        %v276 = vadd.f32 %v266, %v274
        %277 = vset.pattern.permute.xlu0 5
        %278 = vperm.xlu0 %277, %v226
        %v279 = vpop.permute.xlu0 %278
        %v281 = vmul.f32 %v279, %v264
        %283 = vrot.lane.b32.xlu0 %v281, 126
        %v284 = vpop.permute.xlu0 %283
        %v286 = vadd.f32 %v276, %v284
        %287 = vset.pattern.permute.xlu0 6
        %288 = vperm.xlu0 %287, %v226
        %v289 = vpop.permute.xlu0 %288
        %v291 = vlaneseq
        %v292 = vshrl.u32 %v291, 7
        %v293 = vsub.s32 2, %v292
        %v294 = vrot.slane %v216, %v293
        %v295 = vmul.f32 %v289, %v294
        %v296 = vadd.f32 %v286, %v295
        %297 = vset.pattern.permute.xlu0 7
        %298 = vperm.xlu0 %297, %v226
        %v299 = vpop.permute.xlu0 %298
        %v301 = vmul.f32 %v299, %v294
        %303 = vrot.lane.b32.xlu0 %v301, 127
        %v304 = vpop.permute.xlu0 %303
        %v306 = vadd.f32 %v296, %v304
        %307 = vset.pattern.permute.xlu0 8
        %308 = vperm.xlu0 %307, %v226
        %v309 = vpop.permute.xlu0 %308
        %v311 = vmul.f32 %v309, %v294
        %313 = vrot.lane.b32.xlu0 %v311, 126
        %v314 = vpop.permute.xlu0 %313
        %v316 = vadd.f32 %v306, %v314
        %317 = vset.pattern.permute.xlu0 9
        %318 = vperm.xlu0 %317, %v226
        %v319 = vpop.permute.xlu0 %318
        %v321 = vlaneseq
        %v322 = vshrl.u32 %v321, 7
        %v323 = vsub.s32 0, %v322
        %v324 = vrot.slane %v218, %v323
        %v325 = vmul.f32 %v319, %v324
        %v326 = vadd.f32 %v316, %v325
        %327 = vset.pattern.permute.xlu0 10
        %328 = vperm.xlu0 %327, %v226
        %v329 = vpop.permute.xlu0 %328
        %v331 = vmul.f32 %v329, %v324
        %333 = vrot.lane.b32.xlu0 %v331, 127
        %v334 = vpop.permute.xlu0 %333
        %v336 = vadd.f32 %v326, %v334
        %337 = vset.pattern.permute.xlu0 11
        %338 = vperm.xlu0 %337, %v226
        %v339 = vpop.permute.xlu0 %338
        %v341 = vmul.f32 %v339, %v324
        %343 = vrot.lane.b32.xlu0 %v341, 126
        %v344 = vpop.permute.xlu0 %343
        %v346 = vadd.f32 %v336, %v344
        %347 = vset.pattern.permute.xlu0 12
        %348 = vperm.xlu0 %347, %v226
        %v349 = vpop.permute.xlu0 %348
        %v351 = vlaneseq
        %v352 = vshrl.u32 %v351, 7
        %v353 = vsub.s32 1, %v352
        %v354 = vrot.slane %v218, %v353
        %v355 = vmul.f32 %v349, %v354
        %v356 = vadd.f32 %v346, %v355
        %357 = vset.pattern.permute.xlu0 13
        %358 = vperm.xlu0 %357, %v226
        %v359 = vpop.permute.xlu0 %358
        %v361 = vmul.f32 %v359, %v354
        %363 = vrot.lane.b32.xlu0 %v361, 127
        %v364 = vpop.permute.xlu0 %363
        %v366 = vadd.f32 %v356, %v364
        %367 = vset.pattern.permute.xlu0 14
        %368 = vperm.xlu0 %367, %v226
        %v369 = vpop.permute.xlu0 %368
        %v371 = vmul.f32 %v369, %v354
        %373 = vrot.lane.b32.xlu0 %v371, 126
        %v374 = vpop.permute.xlu0 %373
        %v376 = vadd.f32 %v366, %v374
        %377 = vset.pattern.permute.xlu0 15
        %378 = vperm.xlu0 %377, %v226
        %v379 = vpop.permute.xlu0 %378
        %v381 = vlaneseq
        %v382 = vshrl.u32 %v381, 7
        %v383 = vsub.s32 2, %v382
        %v384 = vrot.slane %v218, %v383
        %v385 = vmul.f32 %v379, %v384
        %v386 = vadd.f32 %v376, %v385
        %387 = vset.pattern.permute.xlu0 16
        %388 = vperm.xlu0 %387, %v226
        %v389 = vpop.permute.xlu0 %388
        %v391 = vmul.f32 %v389, %v384
        %393 = vrot.lane.b32.xlu0 %v391, 127
        %v394 = vpop.permute.xlu0 %393
        %v396 = vadd.f32 %v386, %v394
        %397 = vset.pattern.permute.xlu0 17
        %398 = vperm.xlu0 %397, %v226
        %v399 = vpop.permute.xlu0 %398
        %v401 = vmul.f32 %v399, %v384
        %403 = vrot.lane.b32.xlu0 %v401, 126
        %v404 = vpop.permute.xlu0 %403
        %v406 = vadd.f32 %v396, %v404
        %407 = vset.pattern.permute.xlu0 18
        %408 = vperm.xlu0 %407, %v226
        %v409 = vpop.permute.xlu0 %408
        %v411 = vlaneseq
        %v412 = vshrl.u32 %v411, 7
        %v413 = vsub.s32 0, %v412
        %v414 = vrot.slane %v220, %v413
        %v415 = vmul.f32 %v409, %v414
        %v416 = vadd.f32 %v406, %v415
        %417 = vset.pattern.permute.xlu0 19
        %418 = vperm.xlu0 %417, %v226
        %v419 = vpop.permute.xlu0 %418
        %v421 = vmul.f32 %v419, %v414
        %423 = vrot.lane.b32.xlu0 %v421, 127
        %v424 = vpop.permute.xlu0 %423
        %v426 = vadd.f32 %v416, %v424
        %427 = vset.pattern.permute.xlu0 20
        %428 = vperm.xlu0 %427, %v226
        %v429 = vpop.permute.xlu0 %428
        %v431 = vmul.f32 %v429, %v414
        %433 = vrot.lane.b32.xlu0 %v431, 126
        %v434 = vpop.permute.xlu0 %433
        %v436 = vadd.f32 %v426, %v434
        %437 = vset.pattern.permute.xlu0 21
        %438 = vperm.xlu0 %437, %v226
        %v439 = vpop.permute.xlu0 %438
        %v441 = vlaneseq
        %v442 = vshrl.u32 %v441, 7
        %v443 = vsub.s32 1, %v442
        %v444 = vrot.slane %v220, %v443
        %v445 = vmul.f32 %v439, %v444
        %v446 = vadd.f32 %v436, %v445
        %447 = vset.pattern.permute.xlu0 22
        %448 = vperm.xlu0 %447, %v226
        %v449 = vpop.permute.xlu0 %448
        %v451 = vmul.f32 %v449, %v444
        %453 = vrot.lane.b32.xlu0 %v451, 127
        %v454 = vpop.permute.xlu0 %453
        %v456 = vadd.f32 %v446, %v454
        %457 = vset.pattern.permute.xlu0 23
        %458 = vperm.xlu0 %457, %v226
        %v459 = vpop.permute.xlu0 %458
        %v461 = vmul.f32 %v459, %v444
        %463 = vrot.lane.b32.xlu0 %v461, 126
        %v464 = vpop.permute.xlu0 %463
        %v466 = vadd.f32 %v456, %v464
        %467 = vset.pattern.permute.xlu0 24
        %468 = vperm.xlu0 %467, %v226
        %v469 = vpop.permute.xlu0 %468
        %v471 = vlaneseq
        %v472 = vshrl.u32 %v471, 7
        %v473 = vsub.s32 2, %v472
        %v474 = vrot.slane %v220, %v473
        %v475 = vmul.f32 %v469, %v474
        %v476 = vadd.f32 %v466, %v475
        %477 = vset.pattern.permute.xlu0 25
        %478 = vperm.xlu0 %477, %v226
        %v479 = vpop.permute.xlu0 %478
        %v481 = vmul.f32 %v479, %v474
        %483 = vrot.lane.b32.xlu0 %v481, 127
        %v484 = vpop.permute.xlu0 %483
        %v486 = vadd.f32 %v476, %v484
        %487 = vset.pattern.permute.xlu0 26
        %488 = vperm.xlu0 %487, %v226
        %v489 = vpop.permute.xlu0 %488
        %v491 = vmul.f32 %v489, %v474
        %493 = vrot.lane.b32.xlu0 %v491, 126
        %v494 = vpop.permute.xlu0 %493
        %v496 = vadd.f32 %v486, %v494
        %497 = vset.pattern.permute.xlu0 27
        %498 = vperm.xlu0 %497, %v226
        %v499 = vpop.permute.xlu0 %498
        %v501 = vlaneseq
        %v502 = vshrl.u32 %v501, 7
        %v503 = vsub.s32 0, %v502
        %v504 = vrot.slane %v222, %v503
        %v505 = vmul.f32 %v499, %v504
        %v506 = vadd.f32 %v496, %v505
        %507 = vset.pattern.permute.xlu0 28
        %508 = vperm.xlu0 %507, %v226
        %v509 = vpop.permute.xlu0 %508
        %v511 = vmul.f32 %v509, %v504
        %513 = vrot.lane.b32.xlu0 %v511, 127
        %v514 = vpop.permute.xlu0 %513
        %v516 = vadd.f32 %v506, %v514
        %517 = vset.pattern.permute.xlu0 29
        %518 = vperm.xlu0 %517, %v226
        %v519 = vpop.permute.xlu0 %518
        %v521 = vmul.f32 %v519, %v504
        %523 = vrot.lane.b32.xlu0 %v521, 126
        %v524 = vpop.permute.xlu0 %523
        %v526 = vadd.f32 %v516, %v524
        %527 = vset.pattern.permute.xlu0 30
        %528 = vperm.xlu0 %527, %v226
        %v529 = vpop.permute.xlu0 %528
        %v531 = vlaneseq
        %v532 = vshrl.u32 %v531, 7
        %v533 = vsub.s32 1, %v532
        %v534 = vrot.slane %v222, %v533
        %v535 = vmul.f32 %v529, %v534
        %v536 = vadd.f32 %v526, %v535
        %537 = vset.pattern.permute.xlu0 31
        %538 = vperm.xlu0 %537, %v226
        %v539 = vpop.permute.xlu0 %538
        %v541 = vmul.f32 %v539, %v534
        %543 = vrot.lane.b32.xlu0 %v541, 127
        %v544 = vpop.permute.xlu0 %543
        %v546 = vadd.f32 %v536, %v544
        %547 = vset.pattern.permute.xlu0 32
        %548 = vperm.xlu0 %547, %v226
        %v549 = vpop.permute.xlu0 %548
        %v551 = vmul.f32 %v549, %v534
        %553 = vrot.lane.b32.xlu0 %v551, 126
        %v554 = vpop.permute.xlu0 %553
        %v556 = vadd.f32 %v546, %v554
        %557 = vset.pattern.permute.xlu0 33
        %558 = vperm.xlu0 %557, %v226
        %v559 = vpop.permute.xlu0 %558
        %v561 = vlaneseq
        %v562 = vshrl.u32 %v561, 7
        %v563 = vsub.s32 2, %v562
        %v564 = vrot.slane %v222, %v563
        %v565 = vmul.f32 %v559, %v564
        %v566 = vadd.f32 %v556, %v565
        %567 = vset.pattern.permute.xlu0 34
        %568 = vperm.xlu0 %567, %v226
        %v569 = vpop.permute.xlu0 %568
        %v571 = vmul.f32 %v569, %v564
        %573 = vrot.lane.b32.xlu0 %v571, 127
        %v574 = vpop.permute.xlu0 %573
        %v576 = vadd.f32 %v566, %v574
        %577 = vset.pattern.permute.xlu0 35
        %578 = vperm.xlu0 %577, %v226
        %v579 = vpop.permute.xlu0 %578
        %v581 = vmul.f32 %v579, %v564
        %583 = vrot.lane.b32.xlu0 %v581, 126
        %v584 = vpop.permute.xlu0 %583
        %v586 = vadd.f32 %v576, %v584
        %588 = vset.pattern.permute.xlu0 0
        %589 = vperm.xlu0 %588, %v224
        %v590 = vpop.permute.xlu0 %589
        %v592 = vmul.f32 %v586, %v590
        %594 = vset.pattern.permute.xlu0 0
        %595 = vperm.xlu0 %594, %v225
        %v596 = vpop.permute.xlu0 %595
        %v598 = vadd.f32 %v592, %v596
        %v599 = vmax.f32 %v598, 0.0
        %v600 = vmul.f32 %v230, %v264
        %v601 = vmul.f32 %v239, %v264
        %603 = vrot.lane.b32.xlu0 %v601, 127
        %v604 = vpop.permute.xlu0 %603
        %v606 = vadd.f32 %v600, %v604
        %v607 = vmul.f32 %v249, %v264
        %609 = vrot.lane.b32.xlu0 %v607, 126
        %v610 = vpop.permute.xlu0 %609
        %v612 = vadd.f32 %v606, %v610
        %v613 = vmul.f32 %v259, %v294
        %v614 = vadd.f32 %v612, %v613
        %v615 = vmul.f32 %v269, %v294
        %617 = vrot.lane.b32.xlu0 %v615, 127
        %v618 = vpop.permute.xlu0 %617
        %v620 = vadd.f32 %v614, %v618
        %v621 = vmul.f32 %v279, %v294
        %623 = vrot.lane.b32.xlu0 %v621, 126
        %v624 = vpop.permute.xlu0 %623
        %v626 = vadd.f32 %v620, %v624
        %v627 = vlaneseq
        %v628 = vshrl.u32 %v627, 7
        %v629 = vsub.s32 3, %v628
        %v630 = vrot.slane %v216, %v629
        %v631 = vmul.f32 %v289, %v630
        %v632 = vadd.f32 %v626, %v631
        %v633 = vmul.f32 %v299, %v630
        %635 = vrot.lane.b32.xlu0 %v633, 127
        %v636 = vpop.permute.xlu0 %635
        %v638 = vadd.f32 %v632, %v636
        %v639 = vmul.f32 %v309, %v630
        %641 = vrot.lane.b32.xlu0 %v639, 126
        %v642 = vpop.permute.xlu0 %641
        %v644 = vadd.f32 %v638, %v642
        %v645 = vmul.f32 %v319, %v354
        %v646 = vadd.f32 %v644, %v645
        %v647 = vmul.f32 %v329, %v354
        %649 = vrot.lane.b32.xlu0 %v647, 127
        %v650 = vpop.permute.xlu0 %649
        %v652 = vadd.f32 %v646, %v650
        %v653 = vmul.f32 %v339, %v354
        %655 = vrot.lane.b32.xlu0 %v653, 126
        %v656 = vpop.permute.xlu0 %655
        %v658 = vadd.f32 %v652, %v656
        %v659 = vmul.f32 %v349, %v384
        %v660 = vadd.f32 %v658, %v659
        %v661 = vmul.f32 %v359, %v384
        %663 = vrot.lane.b32.xlu0 %v661, 127
        %v664 = vpop.permute.xlu0 %663
        %v666 = vadd.f32 %v660, %v664
        %v667 = vmul.f32 %v369, %v384
        %669 = vrot.lane.b32.xlu0 %v667, 126
        %v670 = vpop.permute.xlu0 %669
        %v672 = vadd.f32 %v666, %v670
        %v673 = vlaneseq
        %v674 = vshrl.u32 %v673, 7
        %v675 = vsub.s32 3, %v674
        %v676 = vrot.slane %v218, %v675
        %v677 = vmul.f32 %v379, %v676
        %v678 = vadd.f32 %v672, %v677
        %v679 = vmul.f32 %v389, %v676
        %681 = vrot.lane.b32.xlu0 %v679, 127
        %v682 = vpop.permute.xlu0 %681
        %v684 = vadd.f32 %v678, %v682
        %v685 = vmul.f32 %v399, %v676
        %687 = vrot.lane.b32.xlu0 %v685, 126
        %v688 = vpop.permute.xlu0 %687
        %v690 = vadd.f32 %v684, %v688
        %v691 = vmul.f32 %v409, %v444
        %v692 = vadd.f32 %v690, %v691
        %v693 = vmul.f32 %v419, %v444
        %695 = vrot.lane.b32.xlu0 %v693, 127
        %v696 = vpop.permute.xlu0 %695
        %v698 = vadd.f32 %v692, %v696
        %v699 = vmul.f32 %v429, %v444
        %701 = vrot.lane.b32.xlu0 %v699, 126
        %v702 = vpop.permute.xlu0 %701
        %v704 = vadd.f32 %v698, %v702
        %v705 = vmul.f32 %v439, %v474
        %v706 = vadd.f32 %v704, %v705
        %v707 = vmul.f32 %v449, %v474
        %709 = vrot.lane.b32.xlu0 %v707, 127
        %v710 = vpop.permute.xlu0 %709
        %v712 = vadd.f32 %v706, %v710
        %v713 = vmul.f32 %v459, %v474
        %715 = vrot.lane.b32.xlu0 %v713, 126
        %v716 = vpop.permute.xlu0 %715
        %v718 = vadd.f32 %v712, %v716
        %v719 = vlaneseq
        %v720 = vshrl.u32 %v719, 7
        %v721 = vsub.s32 3, %v720
        %v722 = vrot.slane %v220, %v721
        %v723 = vmul.f32 %v469, %v722
        %v724 = vadd.f32 %v718, %v723
        %v725 = vmul.f32 %v479, %v722
        %727 = vrot.lane.b32.xlu0 %v725, 127
        %v728 = vpop.permute.xlu0 %727
        %v730 = vadd.f32 %v724, %v728
        %v731 = vmul.f32 %v489, %v722
        %733 = vrot.lane.b32.xlu0 %v731, 126
        %v734 = vpop.permute.xlu0 %733
        %v736 = vadd.f32 %v730, %v734
        %v737 = vmul.f32 %v499, %v534
        %v738 = vadd.f32 %v736, %v737
        %v739 = vmul.f32 %v509, %v534
        %741 = vrot.lane.b32.xlu0 %v739, 127
        %v742 = vpop.permute.xlu0 %741
        %v744 = vadd.f32 %v738, %v742
        %v745 = vmul.f32 %v519, %v534
        %747 = vrot.lane.b32.xlu0 %v745, 126
        %v748 = vpop.permute.xlu0 %747
        %v750 = vadd.f32 %v744, %v748
        %v751 = vmul.f32 %v529, %v564
        %v752 = vadd.f32 %v750, %v751
        %v753 = vmul.f32 %v539, %v564
        %755 = vrot.lane.b32.xlu0 %v753, 127
        %v756 = vpop.permute.xlu0 %755
        %v758 = vadd.f32 %v752, %v756
        %v759 = vmul.f32 %v549, %v564
        %761 = vrot.lane.b32.xlu0 %v759, 126
        %v762 = vpop.permute.xlu0 %761
        %v764 = vadd.f32 %v758, %v762
        %v765 = vlaneseq
        %v766 = vshrl.u32 %v765, 7
        %v767 = vsub.s32 3, %v766
        %v768 = vrot.slane %v222, %v767
        %v769 = vmul.f32 %v559, %v768
        %v770 = vadd.f32 %v764, %v769
        %v771 = vmul.f32 %v569, %v768
        %773 = vrot.lane.b32.xlu0 %v771, 127
        %v774 = vpop.permute.xlu0 %773
        %v776 = vadd.f32 %v770, %v774
        %v777 = vmul.f32 %v579, %v768
        %779 = vrot.lane.b32.xlu0 %v777, 126
        %v780 = vpop.permute.xlu0 %779
        %v782 = vadd.f32 %v776, %v780
        %v783 = vmul.f32 %v782, %v590
        %v784 = vadd.f32 %v783, %v596
        %v785 = vmax.f32 %v784, 0.0
        %v786 = vmax.f32 %v599, %v785
        %v787 = vmul.f32 %v230, %v294
        %v788 = vmul.f32 %v239, %v294
        %790 = vrot.lane.b32.xlu0 %v788, 127
        %v791 = vpop.permute.xlu0 %790
        %v793 = vadd.f32 %v787, %v791
        %v794 = vmul.f32 %v249, %v294
        %796 = vrot.lane.b32.xlu0 %v794, 126
        %v797 = vpop.permute.xlu0 %796
        %v799 = vadd.f32 %v793, %v797
        %v800 = vmul.f32 %v259, %v630
        %v801 = vadd.f32 %v799, %v800
        %v802 = vmul.f32 %v269, %v630
        %804 = vrot.lane.b32.xlu0 %v802, 127
        %v805 = vpop.permute.xlu0 %804
        %v807 = vadd.f32 %v801, %v805
        %v808 = vmul.f32 %v279, %v630
        %810 = vrot.lane.b32.xlu0 %v808, 126
        %v811 = vpop.permute.xlu0 %810
        %v813 = vadd.f32 %v807, %v811
        %v814 = vlaneseq
        %v815 = vshrl.u32 %v814, 7
        %v816 = vsub.s32 4, %v815
        %v817 = vrot.slane %v216, %v816
        %v818 = vmul.f32 %v289, %v817
        %v819 = vadd.f32 %v813, %v818
        %v820 = vmul.f32 %v299, %v817
        %822 = vrot.lane.b32.xlu0 %v820, 127
        %v823 = vpop.permute.xlu0 %822
        %v825 = vadd.f32 %v819, %v823
        %v826 = vmul.f32 %v309, %v817
        %828 = vrot.lane.b32.xlu0 %v826, 126
        %v829 = vpop.permute.xlu0 %828
        %v831 = vadd.f32 %v825, %v829
        %v832 = vmul.f32 %v319, %v384
        %v833 = vadd.f32 %v831, %v832
        %v834 = vmul.f32 %v329, %v384
        %836 = vrot.lane.b32.xlu0 %v834, 127
        %v837 = vpop.permute.xlu0 %836
        %v839 = vadd.f32 %v833, %v837
        %v840 = vmul.f32 %v339, %v384
        %842 = vrot.lane.b32.xlu0 %v840, 126
        %v843 = vpop.permute.xlu0 %842
        %v845 = vadd.f32 %v839, %v843
        %v846 = vmul.f32 %v349, %v676
        %v847 = vadd.f32 %v845, %v846
        %v848 = vmul.f32 %v359, %v676
        %850 = vrot.lane.b32.xlu0 %v848, 127
        %v851 = vpop.permute.xlu0 %850
        %v853 = vadd.f32 %v847, %v851
        %v854 = vmul.f32 %v369, %v676
        %856 = vrot.lane.b32.xlu0 %v854, 126
        %v857 = vpop.permute.xlu0 %856
        %v859 = vadd.f32 %v853, %v857
        %v860 = vlaneseq
        %v861 = vshrl.u32 %v860, 7
        %v862 = vsub.s32 4, %v861
        %v863 = vrot.slane %v218, %v862
        %v864 = vmul.f32 %v379, %v863
        %v865 = vadd.f32 %v859, %v864
        %v866 = vmul.f32 %v389, %v863
        %868 = vrot.lane.b32.xlu0 %v866, 127
        %v869 = vpop.permute.xlu0 %868
        %v871 = vadd.f32 %v865, %v869
        %v872 = vmul.f32 %v399, %v863
        %874 = vrot.lane.b32.xlu0 %v872, 126
        %v875 = vpop.permute.xlu0 %874
        %v877 = vadd.f32 %v871, %v875
        %v878 = vmul.f32 %v409, %v474
        %v879 = vadd.f32 %v877, %v878
        %v880 = vmul.f32 %v419, %v474
        %882 = vrot.lane.b32.xlu0 %v880, 127
        %v883 = vpop.permute.xlu0 %882
        %v885 = vadd.f32 %v879, %v883
        %v886 = vmul.f32 %v429, %v474
        %888 = vrot.lane.b32.xlu0 %v886, 126
        %v889 = vpop.permute.xlu0 %888
        %v891 = vadd.f32 %v885, %v889
        %v892 = vmul.f32 %v439, %v722
        %v893 = vadd.f32 %v891, %v892
        %v894 = vmul.f32 %v449, %v722
        %896 = vrot.lane.b32.xlu0 %v894, 127
        %v897 = vpop.permute.xlu0 %896
        %v899 = vadd.f32 %v893, %v897
        %v900 = vmul.f32 %v459, %v722
        %902 = vrot.lane.b32.xlu0 %v900, 126
        %v903 = vpop.permute.xlu0 %902
        %v905 = vadd.f32 %v899, %v903
        %v906 = vlaneseq
        %v907 = vshrl.u32 %v906, 7
        %v908 = vsub.s32 4, %v907
        %v909 = vrot.slane %v220, %v908
        %v910 = vmul.f32 %v469, %v909
        %v911 = vadd.f32 %v905, %v910
        %v912 = vmul.f32 %v479, %v909
        %914 = vrot.lane.b32.xlu0 %v912, 127
        %v915 = vpop.permute.xlu0 %914
        %v917 = vadd.f32 %v911, %v915
        %v918 = vmul.f32 %v489, %v909
        %920 = vrot.lane.b32.xlu0 %v918, 126
        %v921 = vpop.permute.xlu0 %920
        %v923 = vadd.f32 %v917, %v921
        %v924 = vmul.f32 %v499, %v564
        %v925 = vadd.f32 %v923, %v924
        %v926 = vmul.f32 %v509, %v564
        %928 = vrot.lane.b32.xlu0 %v926, 127
        %v929 = vpop.permute.xlu0 %928
        %v931 = vadd.f32 %v925, %v929
        %v932 = vmul.f32 %v519, %v564
        %934 = vrot.lane.b32.xlu0 %v932, 126
        %v935 = vpop.permute.xlu0 %934
        %v937 = vadd.f32 %v931, %v935
        %v938 = vmul.f32 %v529, %v768
        %v939 = vadd.f32 %v937, %v938
        %v940 = vmul.f32 %v539, %v768
        %942 = vrot.lane.b32.xlu0 %v940, 127
        %v943 = vpop.permute.xlu0 %942
        %v945 = vadd.f32 %v939, %v943
        %v946 = vmul.f32 %v549, %v768
        %948 = vrot.lane.b32.xlu0 %v946, 126
        %v949 = vpop.permute.xlu0 %948
        %v951 = vadd.f32 %v945, %v949
        %v952 = vlaneseq
        %v953 = vshrl.u32 %v952, 7
        %v954 = vsub.s32 4, %v953
        %v955 = vrot.slane %v222, %v954
        %v956 = vmul.f32 %v559, %v955
        %v957 = vadd.f32 %v951, %v956
        %v958 = vmul.f32 %v569, %v955
        %960 = vrot.lane.b32.xlu0 %v958, 127
        %v961 = vpop.permute.xlu0 %960
        %v963 = vadd.f32 %v957, %v961
        %v964 = vmul.f32 %v579, %v955
        %966 = vrot.lane.b32.xlu0 %v964, 126
        %v967 = vpop.permute.xlu0 %966
        %v969 = vadd.f32 %v963, %v967
        %v970 = vmul.f32 %v969, %v590
        %v971 = vadd.f32 %v970, %v596
        %v972 = vmax.f32 %v971, 0.0
        %v973 = vmax.f32 %v786, %v972
        %v974 = vmul.f32 %v230, %v630
        %v975 = vmul.f32 %v239, %v630
        %977 = vrot.lane.b32.xlu0 %v975, 127
        %v978 = vpop.permute.xlu0 %977
        %v980 = vadd.f32 %v974, %v978
        %v981 = vmul.f32 %v249, %v630
        %983 = vrot.lane.b32.xlu0 %v981, 126
        %v984 = vpop.permute.xlu0 %983
        %v986 = vadd.f32 %v980, %v984
        %v987 = vmul.f32 %v259, %v817
        %v988 = vadd.f32 %v986, %v987
        %v989 = vmul.f32 %v269, %v817
        %991 = vrot.lane.b32.xlu0 %v989, 127
        %v992 = vpop.permute.xlu0 %991
        %v994 = vadd.f32 %v988, %v992
        %v995 = vmul.f32 %v279, %v817
        %997 = vrot.lane.b32.xlu0 %v995, 126
        %v998 = vpop.permute.xlu0 %997
        %v1000 = vadd.f32 %v994, %v998
        %v1001 = vlaneseq
        %v1002 = vshrl.u32 %v1001, 7
        %v1003 = vsub.s32 5, %v1002
        %v1004 = vrot.slane %v216, %v1003
        %v1005 = vmul.f32 %v289, %v1004
        %v1006 = vadd.f32 %v1000, %v1005
        %v1007 = vmul.f32 %v299, %v1004
        %1009 = vrot.lane.b32.xlu0 %v1007, 127
        %v1010 = vpop.permute.xlu0 %1009
        %v1012 = vadd.f32 %v1006, %v1010
        %v1013 = vmul.f32 %v309, %v1004
        %1015 = vrot.lane.b32.xlu0 %v1013, 126
        %v1016 = vpop.permute.xlu0 %1015
        %v1018 = vadd.f32 %v1012, %v1016
        %v1019 = vmul.f32 %v319, %v676
        %v1020 = vadd.f32 %v1018, %v1019
        %v1021 = vmul.f32 %v329, %v676
        %1023 = vrot.lane.b32.xlu0 %v1021, 127
        %v1024 = vpop.permute.xlu0 %1023
        %v1026 = vadd.f32 %v1020, %v1024
        %v1027 = vmul.f32 %v339, %v676
        %1029 = vrot.lane.b32.xlu0 %v1027, 126
        %v1030 = vpop.permute.xlu0 %1029
        %v1032 = vadd.f32 %v1026, %v1030
        %v1033 = vmul.f32 %v349, %v863
        %v1034 = vadd.f32 %v1032, %v1033
        %v1035 = vmul.f32 %v359, %v863
        %1037 = vrot.lane.b32.xlu0 %v1035, 127
        %v1038 = vpop.permute.xlu0 %1037
        %v1040 = vadd.f32 %v1034, %v1038
        %v1041 = vmul.f32 %v369, %v863
        %1043 = vrot.lane.b32.xlu0 %v1041, 126
        %v1044 = vpop.permute.xlu0 %1043
        %v1046 = vadd.f32 %v1040, %v1044
        %v1047 = vlaneseq
        %v1048 = vshrl.u32 %v1047, 7
        %v1049 = vsub.s32 5, %v1048
        %v1050 = vrot.slane %v218, %v1049
        %v1051 = vmul.f32 %v379, %v1050
        %v1052 = vadd.f32 %v1046, %v1051
        %v1053 = vmul.f32 %v389, %v1050
        %1055 = vrot.lane.b32.xlu0 %v1053, 127
        %v1056 = vpop.permute.xlu0 %1055
        %v1058 = vadd.f32 %v1052, %v1056
        %v1059 = vmul.f32 %v399, %v1050
        %1061 = vrot.lane.b32.xlu0 %v1059, 126
        %v1062 = vpop.permute.xlu0 %1061
        %v1064 = vadd.f32 %v1058, %v1062
        %v1065 = vmul.f32 %v409, %v722
        %v1066 = vadd.f32 %v1064, %v1065
        %v1067 = vmul.f32 %v419, %v722
        %1069 = vrot.lane.b32.xlu0 %v1067, 127
        %v1070 = vpop.permute.xlu0 %1069
        %v1072 = vadd.f32 %v1066, %v1070
        %v1073 = vmul.f32 %v429, %v722
        %1075 = vrot.lane.b32.xlu0 %v1073, 126
        %v1076 = vpop.permute.xlu0 %1075
        %v1078 = vadd.f32 %v1072, %v1076
        %v1079 = vmul.f32 %v439, %v909
        %v1080 = vadd.f32 %v1078, %v1079
        %v1081 = vmul.f32 %v449, %v909
        %1083 = vrot.lane.b32.xlu0 %v1081, 127
        %v1084 = vpop.permute.xlu0 %1083
        %v1086 = vadd.f32 %v1080, %v1084
        %v1087 = vmul.f32 %v459, %v909
        %1089 = vrot.lane.b32.xlu0 %v1087, 126
        %v1090 = vpop.permute.xlu0 %1089
        %v1092 = vadd.f32 %v1086, %v1090
        %v1093 = vlaneseq
        %v1094 = vshrl.u32 %v1093, 7
        %v1095 = vsub.s32 5, %v1094
        %v1096 = vrot.slane %v220, %v1095
        %v1097 = vmul.f32 %v469, %v1096
        %v1098 = vadd.f32 %v1092, %v1097
        %v1099 = vmul.f32 %v479, %v1096
        %1101 = vrot.lane.b32.xlu0 %v1099, 127
        %v1102 = vpop.permute.xlu0 %1101
        %v1104 = vadd.f32 %v1098, %v1102
        %v1105 = vmul.f32 %v489, %v1096
        %1107 = vrot.lane.b32.xlu0 %v1105, 126
        %v1108 = vpop.permute.xlu0 %1107
        %v1110 = vadd.f32 %v1104, %v1108
        %v1111 = vmul.f32 %v499, %v768
        %v1112 = vadd.f32 %v1110, %v1111
        %v1113 = vmul.f32 %v509, %v768
        %1115 = vrot.lane.b32.xlu0 %v1113, 127
        %v1116 = vpop.permute.xlu0 %1115
        %v1118 = vadd.f32 %v1112, %v1116
        %v1119 = vmul.f32 %v519, %v768
        %1121 = vrot.lane.b32.xlu0 %v1119, 126
        %v1122 = vpop.permute.xlu0 %1121
        %v1124 = vadd.f32 %v1118, %v1122
        %v1125 = vmul.f32 %v529, %v955
        %v1126 = vadd.f32 %v1124, %v1125
        %v1127 = vmul.f32 %v539, %v955
        %1129 = vrot.lane.b32.xlu0 %v1127, 127
        %v1130 = vpop.permute.xlu0 %1129
        %v1132 = vadd.f32 %v1126, %v1130
        %v1133 = vmul.f32 %v549, %v955
        %1135 = vrot.lane.b32.xlu0 %v1133, 126
        %v1136 = vpop.permute.xlu0 %1135
        %v1138 = vadd.f32 %v1132, %v1136
        %v1139 = vlaneseq
        %v1140 = vshrl.u32 %v1139, 7
        %v1141 = vsub.s32 5, %v1140
        %v1142 = vrot.slane %v222, %v1141
        %v1143 = vmul.f32 %v559, %v1142
        %v1144 = vadd.f32 %v1138, %v1143
        %v1145 = vmul.f32 %v569, %v1142
        %1147 = vrot.lane.b32.xlu0 %v1145, 127
        %v1148 = vpop.permute.xlu0 %1147
        %v1150 = vadd.f32 %v1144, %v1148
        %v1151 = vmul.f32 %v579, %v1142
        %1153 = vrot.lane.b32.xlu0 %v1151, 126
        %v1154 = vpop.permute.xlu0 %1153
        %v1156 = vadd.f32 %v1150, %v1154
        %v1157 = vmul.f32 %v1156, %v590
        %v1158 = vadd.f32 %v1157, %v596
        %v1159 = vmax.f32 %v1158, 0.0
        %v1160 = vmax.f32 %v973, %v1159
        %v1161 = vmul.f32 %v230, %v817
        %v1162 = vmul.f32 %v239, %v817
        %1164 = vrot.lane.b32.xlu0 %v1162, 127
        %v1165 = vpop.permute.xlu0 %1164
        %v1167 = vadd.f32 %v1161, %v1165
        %v1168 = vmul.f32 %v249, %v817
        %1170 = vrot.lane.b32.xlu0 %v1168, 126
        %v1171 = vpop.permute.xlu0 %1170
        %v1173 = vadd.f32 %v1167, %v1171
        %v1174 = vmul.f32 %v259, %v1004
        %v1175 = vadd.f32 %v1173, %v1174
        %v1176 = vmul.f32 %v269, %v1004
        %1178 = vrot.lane.b32.xlu0 %v1176, 127
        %v1179 = vpop.permute.xlu0 %1178
        %v1181 = vadd.f32 %v1175, %v1179
        %v1182 = vmul.f32 %v279, %v1004
        %1184 = vrot.lane.b32.xlu0 %v1182, 126
        %v1185 = vpop.permute.xlu0 %1184
        %v1187 = vadd.f32 %v1181, %v1185
        %v1188 = vlaneseq
        %v1189 = vshrl.u32 %v1188, 7
        %v1190 = vsub.s32 6, %v1189
        %v1191 = vrot.slane %v216, %v1190
        %v1192 = vmul.f32 %v289, %v1191
        %v1193 = vadd.f32 %v1187, %v1192
        %v1194 = vmul.f32 %v299, %v1191
        %1196 = vrot.lane.b32.xlu0 %v1194, 127
        %v1197 = vpop.permute.xlu0 %1196
        %v1199 = vadd.f32 %v1193, %v1197
        %v1200 = vmul.f32 %v309, %v1191
        %1202 = vrot.lane.b32.xlu0 %v1200, 126
        %v1203 = vpop.permute.xlu0 %1202
        %v1205 = vadd.f32 %v1199, %v1203
        %v1206 = vmul.f32 %v319, %v863
        %v1207 = vadd.f32 %v1205, %v1206
        %v1208 = vmul.f32 %v329, %v863
        %1210 = vrot.lane.b32.xlu0 %v1208, 127
        %v1211 = vpop.permute.xlu0 %1210
        %v1213 = vadd.f32 %v1207, %v1211
        %v1214 = vmul.f32 %v339, %v863
        %1216 = vrot.lane.b32.xlu0 %v1214, 126
        %v1217 = vpop.permute.xlu0 %1216
        %v1219 = vadd.f32 %v1213, %v1217
        %v1220 = vmul.f32 %v349, %v1050
        %v1221 = vadd.f32 %v1219, %v1220
        %v1222 = vmul.f32 %v359, %v1050
        %1224 = vrot.lane.b32.xlu0 %v1222, 127
        %v1225 = vpop.permute.xlu0 %1224
        %v1227 = vadd.f32 %v1221, %v1225
        %v1228 = vmul.f32 %v369, %v1050
        %1230 = vrot.lane.b32.xlu0 %v1228, 126
        %v1231 = vpop.permute.xlu0 %1230
        %v1233 = vadd.f32 %v1227, %v1231
        %v1234 = vlaneseq
        %v1235 = vshrl.u32 %v1234, 7
        %v1236 = vsub.s32 6, %v1235
        %v1237 = vrot.slane %v218, %v1236
        %v1238 = vmul.f32 %v379, %v1237
        %v1239 = vadd.f32 %v1233, %v1238
        %v1240 = vmul.f32 %v389, %v1237
        %1242 = vrot.lane.b32.xlu0 %v1240, 127
        %v1243 = vpop.permute.xlu0 %1242
        %v1245 = vadd.f32 %v1239, %v1243
        %v1246 = vmul.f32 %v399, %v1237
        %1248 = vrot.lane.b32.xlu0 %v1246, 126
        %v1249 = vpop.permute.xlu0 %1248
        %v1251 = vadd.f32 %v1245, %v1249
        %v1252 = vmul.f32 %v409, %v909
        %v1253 = vadd.f32 %v1251, %v1252
        %v1254 = vmul.f32 %v419, %v909
        %1256 = vrot.lane.b32.xlu0 %v1254, 127
        %v1257 = vpop.permute.xlu0 %1256
        %v1259 = vadd.f32 %v1253, %v1257
        %v1260 = vmul.f32 %v429, %v909
        %1262 = vrot.lane.b32.xlu0 %v1260, 126
        %v1263 = vpop.permute.xlu0 %1262
        %v1265 = vadd.f32 %v1259, %v1263
        %v1266 = vmul.f32 %v439, %v1096
        %v1267 = vadd.f32 %v1265, %v1266
        %v1268 = vmul.f32 %v449, %v1096
        %1270 = vrot.lane.b32.xlu0 %v1268, 127
        %v1271 = vpop.permute.xlu0 %1270
        %v1273 = vadd.f32 %v1267, %v1271
        %v1274 = vmul.f32 %v459, %v1096
        %1276 = vrot.lane.b32.xlu0 %v1274, 126
        %v1277 = vpop.permute.xlu0 %1276
        %v1279 = vadd.f32 %v1273, %v1277
        %v1280 = vlaneseq
        %v1281 = vshrl.u32 %v1280, 7
        %v1282 = vsub.s32 6, %v1281
        %v1283 = vrot.slane %v220, %v1282
        %v1284 = vmul.f32 %v469, %v1283
        %v1285 = vadd.f32 %v1279, %v1284
        %v1286 = vmul.f32 %v479, %v1283
        %1288 = vrot.lane.b32.xlu0 %v1286, 127
        %v1289 = vpop.permute.xlu0 %1288
        %v1291 = vadd.f32 %v1285, %v1289
        %v1292 = vmul.f32 %v489, %v1283
        %1294 = vrot.lane.b32.xlu0 %v1292, 126
        %v1295 = vpop.permute.xlu0 %1294
        %v1297 = vadd.f32 %v1291, %v1295
        %v1298 = vmul.f32 %v499, %v955
        %v1299 = vadd.f32 %v1297, %v1298
        %v1300 = vmul.f32 %v509, %v955
        %1302 = vrot.lane.b32.xlu0 %v1300, 127
        %v1303 = vpop.permute.xlu0 %1302
        %v1305 = vadd.f32 %v1299, %v1303
        %v1306 = vmul.f32 %v519, %v955
        %1308 = vrot.lane.b32.xlu0 %v1306, 126
        %v1309 = vpop.permute.xlu0 %1308
        %v1311 = vadd.f32 %v1305, %v1309
        %v1312 = vmul.f32 %v529, %v1142
        %v1313 = vadd.f32 %v1311, %v1312
        %v1314 = vmul.f32 %v539, %v1142
        %1316 = vrot.lane.b32.xlu0 %v1314, 127
        %v1317 = vpop.permute.xlu0 %1316
        %v1319 = vadd.f32 %v1313, %v1317
        %v1320 = vmul.f32 %v549, %v1142
        %1322 = vrot.lane.b32.xlu0 %v1320, 126
        %v1323 = vpop.permute.xlu0 %1322
        %v1325 = vadd.f32 %v1319, %v1323
        %v1326 = vlaneseq
        %v1327 = vshrl.u32 %v1326, 7
        %v1328 = vsub.s32 6, %v1327
        %v1329 = vrot.slane %v222, %v1328
        %v1330 = vmul.f32 %v559, %v1329
        %v1331 = vadd.f32 %v1325, %v1330
        %v1332 = vmul.f32 %v569, %v1329
        %1334 = vrot.lane.b32.xlu0 %v1332, 127
        %v1335 = vpop.permute.xlu0 %1334
        %v1337 = vadd.f32 %v1331, %v1335
        %v1338 = vmul.f32 %v579, %v1329
        %1340 = vrot.lane.b32.xlu0 %v1338, 126
        %v1341 = vpop.permute.xlu0 %1340
        %v1343 = vadd.f32 %v1337, %v1341
        %v1344 = vmul.f32 %v1343, %v590
        %v1345 = vadd.f32 %v1344, %v596
        %v1346 = vmax.f32 %v1345, 0.0
        %v1347 = vmax.f32 %v1160, %v1346
        %v1348 = vmul.f32 %v230, %v1004
        %v1349 = vmul.f32 %v239, %v1004
        %1351 = vrot.lane.b32.xlu0 %v1349, 127
        %v1352 = vpop.permute.xlu0 %1351
        %v1354 = vadd.f32 %v1348, %v1352
        %v1355 = vmul.f32 %v249, %v1004
        %1357 = vrot.lane.b32.xlu0 %v1355, 126
        %v1358 = vpop.permute.xlu0 %1357
        %v1360 = vadd.f32 %v1354, %v1358
        %v1361 = vmul.f32 %v259, %v1191
        %v1362 = vadd.f32 %v1360, %v1361
        %v1363 = vmul.f32 %v269, %v1191
        %1365 = vrot.lane.b32.xlu0 %v1363, 127
        %v1366 = vpop.permute.xlu0 %1365
        %v1368 = vadd.f32 %v1362, %v1366
        %v1369 = vmul.f32 %v279, %v1191
        %1371 = vrot.lane.b32.xlu0 %v1369, 126
        %v1372 = vpop.permute.xlu0 %1371
        %v1374 = vadd.f32 %v1368, %v1372
        %v1375 = vlaneseq
        %v1376 = vshrl.u32 %v1375, 7
        %v1377 = vsub.s32 7, %v1376
        %v1378 = vrot.slane %v216, %v1377
        %v1379 = vmul.f32 %v289, %v1378
        %v1380 = vadd.f32 %v1374, %v1379
        %v1381 = vmul.f32 %v299, %v1378
        %1383 = vrot.lane.b32.xlu0 %v1381, 127
        %v1384 = vpop.permute.xlu0 %1383
        %v1386 = vadd.f32 %v1380, %v1384
        %v1387 = vmul.f32 %v309, %v1378
        %1389 = vrot.lane.b32.xlu0 %v1387, 126
        %v1390 = vpop.permute.xlu0 %1389
        %v1392 = vadd.f32 %v1386, %v1390
        %v1393 = vmul.f32 %v319, %v1050
        %v1394 = vadd.f32 %v1392, %v1393
        %v1395 = vmul.f32 %v329, %v1050
        %1397 = vrot.lane.b32.xlu0 %v1395, 127
        %v1398 = vpop.permute.xlu0 %1397
        %v1400 = vadd.f32 %v1394, %v1398
        %v1401 = vmul.f32 %v339, %v1050
        %1403 = vrot.lane.b32.xlu0 %v1401, 126
        %v1404 = vpop.permute.xlu0 %1403
        %v1406 = vadd.f32 %v1400, %v1404
        %v1407 = vmul.f32 %v349, %v1237
        %v1408 = vadd.f32 %v1406, %v1407
        %v1409 = vmul.f32 %v359, %v1237
        %1411 = vrot.lane.b32.xlu0 %v1409, 127
        %v1412 = vpop.permute.xlu0 %1411
        %v1414 = vadd.f32 %v1408, %v1412
        %v1415 = vmul.f32 %v369, %v1237
        %1417 = vrot.lane.b32.xlu0 %v1415, 126
        %v1418 = vpop.permute.xlu0 %1417
        %v1420 = vadd.f32 %v1414, %v1418
        %v1421 = vlaneseq
        %v1422 = vshrl.u32 %v1421, 7
        %v1423 = vsub.s32 7, %v1422
        %v1424 = vrot.slane %v218, %v1423
        %v1425 = vmul.f32 %v379, %v1424
        %v1426 = vadd.f32 %v1420, %v1425
        %v1427 = vmul.f32 %v389, %v1424
        %1429 = vrot.lane.b32.xlu0 %v1427, 127
        %v1430 = vpop.permute.xlu0 %1429
        %v1432 = vadd.f32 %v1426, %v1430
        %v1433 = vmul.f32 %v399, %v1424
        %1435 = vrot.lane.b32.xlu0 %v1433, 126
        %v1436 = vpop.permute.xlu0 %1435
        %v1438 = vadd.f32 %v1432, %v1436
        %v1439 = vmul.f32 %v409, %v1096
        %v1440 = vadd.f32 %v1438, %v1439
        %v1441 = vmul.f32 %v419, %v1096
        %1443 = vrot.lane.b32.xlu0 %v1441, 127
        %v1444 = vpop.permute.xlu0 %1443
        %v1446 = vadd.f32 %v1440, %v1444
        %v1447 = vmul.f32 %v429, %v1096
        %1449 = vrot.lane.b32.xlu0 %v1447, 126
        %v1450 = vpop.permute.xlu0 %1449
        %v1452 = vadd.f32 %v1446, %v1450
        %v1453 = vmul.f32 %v439, %v1283
        %v1454 = vadd.f32 %v1452, %v1453
        %v1455 = vmul.f32 %v449, %v1283
        %1457 = vrot.lane.b32.xlu0 %v1455, 127
        %v1458 = vpop.permute.xlu0 %1457
        %v1460 = vadd.f32 %v1454, %v1458
        %v1461 = vmul.f32 %v459, %v1283
        %1463 = vrot.lane.b32.xlu0 %v1461, 126
        %v1464 = vpop.permute.xlu0 %1463
        %v1466 = vadd.f32 %v1460, %v1464
        %v1467 = vlaneseq
        %v1468 = vshrl.u32 %v1467, 7
        %v1469 = vsub.s32 7, %v1468
        %v1470 = vrot.slane %v220, %v1469
        %v1471 = vmul.f32 %v469, %v1470
        %v1472 = vadd.f32 %v1466, %v1471
        %v1473 = vmul.f32 %v479, %v1470
        %1475 = vrot.lane.b32.xlu0 %v1473, 127
        %v1476 = vpop.permute.xlu0 %1475
        %v1478 = vadd.f32 %v1472, %v1476
        %v1479 = vmul.f32 %v489, %v1470
        %1481 = vrot.lane.b32.xlu0 %v1479, 126
        %v1482 = vpop.permute.xlu0 %1481
        %v1484 = vadd.f32 %v1478, %v1482
        %v1485 = vmul.f32 %v499, %v1142
        %v1486 = vadd.f32 %v1484, %v1485
        %v1487 = vmul.f32 %v509, %v1142
        %1489 = vrot.lane.b32.xlu0 %v1487, 127
        %v1490 = vpop.permute.xlu0 %1489
        %v1492 = vadd.f32 %v1486, %v1490
        %v1493 = vmul.f32 %v519, %v1142
        %1495 = vrot.lane.b32.xlu0 %v1493, 126
        %v1496 = vpop.permute.xlu0 %1495
        %v1498 = vadd.f32 %v1492, %v1496
        %v1499 = vmul.f32 %v529, %v1329
        %v1500 = vadd.f32 %v1498, %v1499
        %v1501 = vmul.f32 %v539, %v1329
        %1503 = vrot.lane.b32.xlu0 %v1501, 127
        %v1504 = vpop.permute.xlu0 %1503
        %v1506 = vadd.f32 %v1500, %v1504
        %v1507 = vmul.f32 %v549, %v1329
        %1509 = vrot.lane.b32.xlu0 %v1507, 126
        %v1510 = vpop.permute.xlu0 %1509
        %v1512 = vadd.f32 %v1506, %v1510
        %v1513 = vlaneseq
        %v1514 = vshrl.u32 %v1513, 7
        %v1515 = vsub.s32 7, %v1514
        %v1516 = vrot.slane %v222, %v1515
        %v1517 = vmul.f32 %v559, %v1516
        %v1518 = vadd.f32 %v1512, %v1517
        %v1519 = vmul.f32 %v569, %v1516
        %1521 = vrot.lane.b32.xlu0 %v1519, 127
        %v1522 = vpop.permute.xlu0 %1521
        %v1524 = vadd.f32 %v1518, %v1522
        %v1525 = vmul.f32 %v579, %v1516
        %1527 = vrot.lane.b32.xlu0 %v1525, 126
        %v1528 = vpop.permute.xlu0 %1527
        %v1530 = vadd.f32 %v1524, %v1528
        %v1531 = vmul.f32 %v1530, %v590
        %v1532 = vadd.f32 %v1531, %v596
        %v1533 = vmax.f32 %v1532, 0.0
        %v1534 = vmax.f32 %v1347, %v1533
        %v1535 = vmul.f32 %v230, %v1191
        %v1536 = vmul.f32 %v239, %v1191
        %1538 = vrot.lane.b32.xlu0 %v1536, 127
        %v1539 = vpop.permute.xlu0 %1538
        %v1541 = vadd.f32 %v1535, %v1539
        %v1542 = vmul.f32 %v249, %v1191
        %1544 = vrot.lane.b32.xlu0 %v1542, 126
        %v1545 = vpop.permute.xlu0 %1544
        %v1547 = vadd.f32 %v1541, %v1545
        %v1548 = vmul.f32 %v259, %v1378
        %v1549 = vadd.f32 %v1547, %v1548
        %v1550 = vmul.f32 %v269, %v1378
        %1552 = vrot.lane.b32.xlu0 %v1550, 127
        %v1553 = vpop.permute.xlu0 %1552
        %v1555 = vadd.f32 %v1549, %v1553
        %v1556 = vmul.f32 %v279, %v1378
        %1558 = vrot.lane.b32.xlu0 %v1556, 126
        %v1559 = vpop.permute.xlu0 %1558
        %v1561 = vadd.f32 %v1555, %v1559
        %v1562 = vlaneseq
        %v1563 = vshrl.u32 %v1562, 7
        %v1564 = vsub.s32 0, %v1563
        %v1565 = vrot.slane %v217, %v1564
        %v1566 = vmul.f32 %v289, %v1565
        %v1567 = vadd.f32 %v1561, %v1566
        %v1568 = vmul.f32 %v299, %v1565
        %1570 = vrot.lane.b32.xlu0 %v1568, 127
        %v1571 = vpop.permute.xlu0 %1570
        %v1573 = vadd.f32 %v1567, %v1571
        %v1574 = vmul.f32 %v309, %v1565
        %1576 = vrot.lane.b32.xlu0 %v1574, 126
        %v1577 = vpop.permute.xlu0 %1576
        %v1579 = vadd.f32 %v1573, %v1577
        %v1580 = vmul.f32 %v319, %v1237
        %v1581 = vadd.f32 %v1579, %v1580
        %v1582 = vmul.f32 %v329, %v1237
        %1584 = vrot.lane.b32.xlu0 %v1582, 127
        %v1585 = vpop.permute.xlu0 %1584
        %v1587 = vadd.f32 %v1581, %v1585
        %v1588 = vmul.f32 %v339, %v1237
        %1590 = vrot.lane.b32.xlu0 %v1588, 126
        %v1591 = vpop.permute.xlu0 %1590
        %v1593 = vadd.f32 %v1587, %v1591
        %v1594 = vmul.f32 %v349, %v1424
        %v1595 = vadd.f32 %v1593, %v1594
        %v1596 = vmul.f32 %v359, %v1424
        %1598 = vrot.lane.b32.xlu0 %v1596, 127
        %v1599 = vpop.permute.xlu0 %1598
        %v1601 = vadd.f32 %v1595, %v1599
        %v1602 = vmul.f32 %v369, %v1424
        %1604 = vrot.lane.b32.xlu0 %v1602, 126
        %v1605 = vpop.permute.xlu0 %1604
        %v1607 = vadd.f32 %v1601, %v1605
        %v1608 = vlaneseq
        %v1609 = vshrl.u32 %v1608, 7
        %v1610 = vsub.s32 0, %v1609
        %v1611 = vrot.slane %v219, %v1610
        %v1612 = vmul.f32 %v379, %v1611
        %v1613 = vadd.f32 %v1607, %v1612
        %v1614 = vmul.f32 %v389, %v1611
        %1616 = vrot.lane.b32.xlu0 %v1614, 127
        %v1617 = vpop.permute.xlu0 %1616
        %v1619 = vadd.f32 %v1613, %v1617
        %v1620 = vmul.f32 %v399, %v1611
        %1622 = vrot.lane.b32.xlu0 %v1620, 126
        %v1623 = vpop.permute.xlu0 %1622
        %v1625 = vadd.f32 %v1619, %v1623
        %v1626 = vmul.f32 %v409, %v1283
        %v1627 = vadd.f32 %v1625, %v1626
        %v1628 = vmul.f32 %v419, %v1283
        %1630 = vrot.lane.b32.xlu0 %v1628, 127
        %v1631 = vpop.permute.xlu0 %1630
        %v1633 = vadd.f32 %v1627, %v1631
        %v1634 = vmul.f32 %v429, %v1283
        %1636 = vrot.lane.b32.xlu0 %v1634, 126
        %v1637 = vpop.permute.xlu0 %1636
        %v1639 = vadd.f32 %v1633, %v1637
        %v1640 = vmul.f32 %v439, %v1470
        %v1641 = vadd.f32 %v1639, %v1640
        %v1642 = vmul.f32 %v449, %v1470
        %1644 = vrot.lane.b32.xlu0 %v1642, 127
        %v1645 = vpop.permute.xlu0 %1644
        %v1647 = vadd.f32 %v1641, %v1645
        %v1648 = vmul.f32 %v459, %v1470
        %1650 = vrot.lane.b32.xlu0 %v1648, 126
        %v1651 = vpop.permute.xlu0 %1650
        %v1653 = vadd.f32 %v1647, %v1651
        %v1654 = vlaneseq
        %v1655 = vshrl.u32 %v1654, 7
        %v1656 = vsub.s32 0, %v1655
        %v1657 = vrot.slane %v221, %v1656
        %v1658 = vmul.f32 %v469, %v1657
        %v1659 = vadd.f32 %v1653, %v1658
        %v1660 = vmul.f32 %v479, %v1657
        %1662 = vrot.lane.b32.xlu0 %v1660, 127
        %v1663 = vpop.permute.xlu0 %1662
        %v1665 = vadd.f32 %v1659, %v1663
        %v1666 = vmul.f32 %v489, %v1657
        %1668 = vrot.lane.b32.xlu0 %v1666, 126
        %v1669 = vpop.permute.xlu0 %1668
        %v1671 = vadd.f32 %v1665, %v1669
        %v1672 = vmul.f32 %v499, %v1329
        %v1673 = vadd.f32 %v1671, %v1672
        %v1674 = vmul.f32 %v509, %v1329
        %1676 = vrot.lane.b32.xlu0 %v1674, 127
        %v1677 = vpop.permute.xlu0 %1676
        %v1679 = vadd.f32 %v1673, %v1677
        %v1680 = vmul.f32 %v519, %v1329
        %1682 = vrot.lane.b32.xlu0 %v1680, 126
        %v1683 = vpop.permute.xlu0 %1682
        %v1685 = vadd.f32 %v1679, %v1683
        %v1686 = vmul.f32 %v529, %v1516
        %v1687 = vadd.f32 %v1685, %v1686
        %v1688 = vmul.f32 %v539, %v1516
        %1690 = vrot.lane.b32.xlu0 %v1688, 127
        %v1691 = vpop.permute.xlu0 %1690
        %v1693 = vadd.f32 %v1687, %v1691
        %v1694 = vmul.f32 %v549, %v1516
        %1696 = vrot.lane.b32.xlu0 %v1694, 126
        %v1697 = vpop.permute.xlu0 %1696
        %v1699 = vadd.f32 %v1693, %v1697
        %v1700 = vlaneseq
        %v1701 = vshrl.u32 %v1700, 7
        %v1702 = vsub.s32 0, %v1701
        %v1703 = vrot.slane %v223, %v1702
        %v1704 = vmul.f32 %v559, %v1703
        %v1705 = vadd.f32 %v1699, %v1704
        %v1706 = vmul.f32 %v569, %v1703
        %1708 = vrot.lane.b32.xlu0 %v1706, 127
        %v1709 = vpop.permute.xlu0 %1708
        %v1711 = vadd.f32 %v1705, %v1709
        %v1712 = vmul.f32 %v579, %v1703
        %1714 = vrot.lane.b32.xlu0 %v1712, 126
        %v1715 = vpop.permute.xlu0 %1714
        %v1717 = vadd.f32 %v1711, %v1715
        %v1718 = vmul.f32 %v1717, %v590
        %v1719 = vadd.f32 %v1718, %v596
        %v1720 = vmax.f32 %v1719, 0.0
        %v1721 = vmax.f32 %v1534, %v1720
        %v1722 = vmul.f32 %v230, %v1378
        %v1723 = vmul.f32 %v239, %v1378
        %1725 = vrot.lane.b32.xlu0 %v1723, 127
        %v1726 = vpop.permute.xlu0 %1725
        %v1728 = vadd.f32 %v1722, %v1726
        %v1729 = vmul.f32 %v249, %v1378
        %1731 = vrot.lane.b32.xlu0 %v1729, 126
        %v1732 = vpop.permute.xlu0 %1731
        %v1734 = vadd.f32 %v1728, %v1732
        %v1735 = vmul.f32 %v259, %v1565
        %v1736 = vadd.f32 %v1734, %v1735
        %v1737 = vmul.f32 %v269, %v1565
        %1739 = vrot.lane.b32.xlu0 %v1737, 127
        %v1740 = vpop.permute.xlu0 %1739
        %v1742 = vadd.f32 %v1736, %v1740
        %v1743 = vmul.f32 %v279, %v1565
        %1745 = vrot.lane.b32.xlu0 %v1743, 126
        %v1746 = vpop.permute.xlu0 %1745
        %v1748 = vadd.f32 %v1742, %v1746
        %v1749 = vlaneseq
        %v1750 = vshrl.u32 %v1749, 7
        %v1751 = vsub.s32 1, %v1750
        %v1752 = vrot.slane %v217, %v1751
        %v1753 = vmul.f32 %v289, %v1752
        %v1754 = vadd.f32 %v1748, %v1753
        %v1755 = vmul.f32 %v299, %v1752
        %1757 = vrot.lane.b32.xlu0 %v1755, 127
        %v1758 = vpop.permute.xlu0 %1757
        %v1760 = vadd.f32 %v1754, %v1758
        %v1761 = vmul.f32 %v309, %v1752
        %1763 = vrot.lane.b32.xlu0 %v1761, 126
        %v1764 = vpop.permute.xlu0 %1763
        %v1766 = vadd.f32 %v1760, %v1764
        %v1767 = vmul.f32 %v319, %v1424
        %v1768 = vadd.f32 %v1766, %v1767
        %v1769 = vmul.f32 %v329, %v1424
        %1771 = vrot.lane.b32.xlu0 %v1769, 127
        %v1772 = vpop.permute.xlu0 %1771
        %v1774 = vadd.f32 %v1768, %v1772
        %v1775 = vmul.f32 %v339, %v1424
        %1777 = vrot.lane.b32.xlu0 %v1775, 126
        %v1778 = vpop.permute.xlu0 %1777
        %v1780 = vadd.f32 %v1774, %v1778
        %v1781 = vmul.f32 %v349, %v1611
        %v1782 = vadd.f32 %v1780, %v1781
        %v1783 = vmul.f32 %v359, %v1611
        %1785 = vrot.lane.b32.xlu0 %v1783, 127
        %v1786 = vpop.permute.xlu0 %1785
        %v1788 = vadd.f32 %v1782, %v1786
        %v1789 = vmul.f32 %v369, %v1611
        %1791 = vrot.lane.b32.xlu0 %v1789, 126
        %v1792 = vpop.permute.xlu0 %1791
        %v1794 = vadd.f32 %v1788, %v1792
        %v1795 = vlaneseq
        %v1796 = vshrl.u32 %v1795, 7
        %v1797 = vsub.s32 1, %v1796
        %v1798 = vrot.slane %v219, %v1797
        %v1799 = vmul.f32 %v379, %v1798
        %v1800 = vadd.f32 %v1794, %v1799
        %v1801 = vmul.f32 %v389, %v1798
        %1803 = vrot.lane.b32.xlu0 %v1801, 127
        %v1804 = vpop.permute.xlu0 %1803
        %v1806 = vadd.f32 %v1800, %v1804
        %v1807 = vmul.f32 %v399, %v1798
        %1809 = vrot.lane.b32.xlu0 %v1807, 126
        %v1810 = vpop.permute.xlu0 %1809
        %v1812 = vadd.f32 %v1806, %v1810
        %v1813 = vmul.f32 %v409, %v1470
        %v1814 = vadd.f32 %v1812, %v1813
        %v1815 = vmul.f32 %v419, %v1470
        %1817 = vrot.lane.b32.xlu0 %v1815, 127
        %v1818 = vpop.permute.xlu0 %1817
        %v1820 = vadd.f32 %v1814, %v1818
        %v1821 = vmul.f32 %v429, %v1470
        %1823 = vrot.lane.b32.xlu0 %v1821, 126
        %v1824 = vpop.permute.xlu0 %1823
        %v1826 = vadd.f32 %v1820, %v1824
        %v1827 = vmul.f32 %v439, %v1657
        %v1828 = vadd.f32 %v1826, %v1827
        %v1829 = vmul.f32 %v449, %v1657
        %1831 = vrot.lane.b32.xlu0 %v1829, 127
        %v1832 = vpop.permute.xlu0 %1831
        %v1834 = vadd.f32 %v1828, %v1832
        %v1835 = vmul.f32 %v459, %v1657
        %1837 = vrot.lane.b32.xlu0 %v1835, 126
        %v1838 = vpop.permute.xlu0 %1837
        %v1840 = vadd.f32 %v1834, %v1838
        %v1841 = vlaneseq
        %v1842 = vshrl.u32 %v1841, 7
        %v1843 = vsub.s32 1, %v1842
        %v1844 = vrot.slane %v221, %v1843
        %v1845 = vmul.f32 %v469, %v1844
        %v1846 = vadd.f32 %v1840, %v1845
        %v1847 = vmul.f32 %v479, %v1844
        %1849 = vrot.lane.b32.xlu0 %v1847, 127
        %v1850 = vpop.permute.xlu0 %1849
        %v1852 = vadd.f32 %v1846, %v1850
        %v1853 = vmul.f32 %v489, %v1844
        %1855 = vrot.lane.b32.xlu0 %v1853, 126
        %v1856 = vpop.permute.xlu0 %1855
        %v1858 = vadd.f32 %v1852, %v1856
        %v1859 = vmul.f32 %v499, %v1516
        %v1860 = vadd.f32 %v1858, %v1859
        %v1861 = vmul.f32 %v509, %v1516
        %1863 = vrot.lane.b32.xlu0 %v1861, 127
        %v1864 = vpop.permute.xlu0 %1863
        %v1866 = vadd.f32 %v1860, %v1864
        %v1867 = vmul.f32 %v519, %v1516
        %1869 = vrot.lane.b32.xlu0 %v1867, 126
        %v1870 = vpop.permute.xlu0 %1869
        %v1872 = vadd.f32 %v1866, %v1870
        %v1873 = vmul.f32 %v529, %v1703
        %v1874 = vadd.f32 %v1872, %v1873
        %v1875 = vmul.f32 %v539, %v1703
        %1877 = vrot.lane.b32.xlu0 %v1875, 127
        %v1878 = vpop.permute.xlu0 %1877
        %v1880 = vadd.f32 %v1874, %v1878
        %v1881 = vmul.f32 %v549, %v1703
        %1883 = vrot.lane.b32.xlu0 %v1881, 126
        %v1884 = vpop.permute.xlu0 %1883
        %v1886 = vadd.f32 %v1880, %v1884
        %v1887 = vlaneseq
        %v1888 = vshrl.u32 %v1887, 7
        %v1889 = vsub.s32 1, %v1888
        %v1890 = vrot.slane %v223, %v1889
        %v1891 = vmul.f32 %v559, %v1890
        %v1892 = vadd.f32 %v1886, %v1891
        %v1893 = vmul.f32 %v569, %v1890
        %1895 = vrot.lane.b32.xlu0 %v1893, 127
        %v1896 = vpop.permute.xlu0 %1895
        %v1898 = vadd.f32 %v1892, %v1896
        %v1899 = vmul.f32 %v579, %v1890
        %1901 = vrot.lane.b32.xlu0 %v1899, 126
        %v1902 = vpop.permute.xlu0 %1901
        %v1904 = vadd.f32 %v1898, %v1902
        %v1905 = vmul.f32 %v1904, %v590
        %v1906 = vadd.f32 %v1905, %v596
        %v1907 = vmax.f32 %v1906, 0.0
        %v1908 = vmax.f32 %v1721, %v1907
        %v1909 = vmul.f32 %v230, %v1565
        %v1910 = vmul.f32 %v239, %v1565
        %1912 = vrot.lane.b32.xlu0 %v1910, 127
        %v1913 = vpop.permute.xlu0 %1912
        %v1915 = vadd.f32 %v1909, %v1913
        %v1916 = vmul.f32 %v249, %v1565
        %1918 = vrot.lane.b32.xlu0 %v1916, 126
        %v1919 = vpop.permute.xlu0 %1918
        %v1921 = vadd.f32 %v1915, %v1919
        %v1922 = vmul.f32 %v259, %v1752
        %v1923 = vadd.f32 %v1921, %v1922
        %v1924 = vmul.f32 %v269, %v1752
        %1926 = vrot.lane.b32.xlu0 %v1924, 127
        %v1927 = vpop.permute.xlu0 %1926
        %v1929 = vadd.f32 %v1923, %v1927
        %v1930 = vmul.f32 %v279, %v1752
        %1932 = vrot.lane.b32.xlu0 %v1930, 126
        %v1933 = vpop.permute.xlu0 %1932
        %v1935 = vadd.f32 %v1929, %v1933
        %v1936 = vlaneseq
        %v1937 = vshrl.u32 %v1936, 7
        %v1938 = vsub.s32 2, %v1937
        %v1939 = vrot.slane %v217, %v1938
        %v1940 = vmul.f32 %v289, %v1939
        %v1941 = vadd.f32 %v1935, %v1940
        %v1942 = vmul.f32 %v299, %v1939
        %1944 = vrot.lane.b32.xlu0 %v1942, 127
        %v1945 = vpop.permute.xlu0 %1944
        %v1947 = vadd.f32 %v1941, %v1945
        %v1948 = vmul.f32 %v309, %v1939
        %1950 = vrot.lane.b32.xlu0 %v1948, 126
        %v1951 = vpop.permute.xlu0 %1950
        %v1953 = vadd.f32 %v1947, %v1951
        %v1954 = vmul.f32 %v319, %v1611
        %v1955 = vadd.f32 %v1953, %v1954
        %v1956 = vmul.f32 %v329, %v1611
        %1958 = vrot.lane.b32.xlu0 %v1956, 127
        %v1959 = vpop.permute.xlu0 %1958
        %v1961 = vadd.f32 %v1955, %v1959
        %v1962 = vmul.f32 %v339, %v1611
        %1964 = vrot.lane.b32.xlu0 %v1962, 126
        %v1965 = vpop.permute.xlu0 %1964
        %v1967 = vadd.f32 %v1961, %v1965
        %v1968 = vmul.f32 %v349, %v1798
        %v1969 = vadd.f32 %v1967, %v1968
        %v1970 = vmul.f32 %v359, %v1798
        %1972 = vrot.lane.b32.xlu0 %v1970, 127
        %v1973 = vpop.permute.xlu0 %1972
        %v1975 = vadd.f32 %v1969, %v1973
        %v1976 = vmul.f32 %v369, %v1798
        %1978 = vrot.lane.b32.xlu0 %v1976, 126
        %v1979 = vpop.permute.xlu0 %1978
        %v1981 = vadd.f32 %v1975, %v1979
        %v1982 = vlaneseq
        %v1983 = vshrl.u32 %v1982, 7
        %v1984 = vsub.s32 2, %v1983
        %v1985 = vrot.slane %v219, %v1984
        %v1986 = vmul.f32 %v379, %v1985
        %v1987 = vadd.f32 %v1981, %v1986
        %v1988 = vmul.f32 %v389, %v1985
        %1990 = vrot.lane.b32.xlu0 %v1988, 127
        %v1991 = vpop.permute.xlu0 %1990
        %v1993 = vadd.f32 %v1987, %v1991
        %v1994 = vmul.f32 %v399, %v1985
        %1996 = vrot.lane.b32.xlu0 %v1994, 126
        %v1997 = vpop.permute.xlu0 %1996
        %v1999 = vadd.f32 %v1993, %v1997
        %v2000 = vmul.f32 %v409, %v1657
        %v2001 = vadd.f32 %v1999, %v2000
        %v2002 = vmul.f32 %v419, %v1657
        %2004 = vrot.lane.b32.xlu0 %v2002, 127
        %v2005 = vpop.permute.xlu0 %2004
        %v2007 = vadd.f32 %v2001, %v2005
        %v2008 = vmul.f32 %v429, %v1657
        %2010 = vrot.lane.b32.xlu0 %v2008, 126
        %v2011 = vpop.permute.xlu0 %2010
        %v2013 = vadd.f32 %v2007, %v2011
        %v2014 = vmul.f32 %v439, %v1844
        %v2015 = vadd.f32 %v2013, %v2014
        %v2016 = vmul.f32 %v449, %v1844
        %2018 = vrot.lane.b32.xlu0 %v2016, 127
        %v2019 = vpop.permute.xlu0 %2018
        %v2021 = vadd.f32 %v2015, %v2019
        %v2022 = vmul.f32 %v459, %v1844
        %2024 = vrot.lane.b32.xlu0 %v2022, 126
        %v2025 = vpop.permute.xlu0 %2024
        %v2027 = vadd.f32 %v2021, %v2025
        %v2028 = vlaneseq
        %v2029 = vshrl.u32 %v2028, 7
        %v2030 = vsub.s32 2, %v2029
        %v2031 = vrot.slane %v221, %v2030
        %v2032 = vmul.f32 %v469, %v2031
        %v2033 = vadd.f32 %v2027, %v2032
        %v2034 = vmul.f32 %v479, %v2031
        %2036 = vrot.lane.b32.xlu0 %v2034, 127
        %v2037 = vpop.permute.xlu0 %2036
        %v2039 = vadd.f32 %v2033, %v2037
        %v2040 = vmul.f32 %v489, %v2031
        %2042 = vrot.lane.b32.xlu0 %v2040, 126
        %v2043 = vpop.permute.xlu0 %2042
        %v2045 = vadd.f32 %v2039, %v2043
        %v2046 = vmul.f32 %v499, %v1703
        %v2047 = vadd.f32 %v2045, %v2046
        %v2048 = vmul.f32 %v509, %v1703
        %2050 = vrot.lane.b32.xlu0 %v2048, 127
        %v2051 = vpop.permute.xlu0 %2050
        %v2053 = vadd.f32 %v2047, %v2051
        %v2054 = vmul.f32 %v519, %v1703
        %2056 = vrot.lane.b32.xlu0 %v2054, 126
        %v2057 = vpop.permute.xlu0 %2056
        %v2059 = vadd.f32 %v2053, %v2057
        %v2060 = vmul.f32 %v529, %v1890
        %v2061 = vadd.f32 %v2059, %v2060
        %v2062 = vmul.f32 %v539, %v1890
        %2064 = vrot.lane.b32.xlu0 %v2062, 127
        %v2065 = vpop.permute.xlu0 %2064
        %v2067 = vadd.f32 %v2061, %v2065
        %v2068 = vmul.f32 %v549, %v1890
        %2070 = vrot.lane.b32.xlu0 %v2068, 126
        %v2071 = vpop.permute.xlu0 %2070
        %v2073 = vadd.f32 %v2067, %v2071
        %v2074 = vlaneseq
        %v2075 = vshrl.u32 %v2074, 7
        %v2076 = vsub.s32 2, %v2075
        %v2077 = vrot.slane %v223, %v2076
        %v2078 = vmul.f32 %v559, %v2077
        %v2079 = vadd.f32 %v2073, %v2078
        %v2080 = vmul.f32 %v569, %v2077
        %2082 = vrot.lane.b32.xlu0 %v2080, 127
        %v2083 = vpop.permute.xlu0 %2082
        %v2085 = vadd.f32 %v2079, %v2083
        %v2086 = vmul.f32 %v579, %v2077
        %2088 = vrot.lane.b32.xlu0 %v2086, 126
        %v2089 = vpop.permute.xlu0 %2088
        %v2091 = vadd.f32 %v2085, %v2089
        %v2092 = vmul.f32 %v2091, %v590
        %v2093 = vadd.f32 %v2092, %v596
        %v2094 = vmax.f32 %v2093, 0.0
        %v2095 = vmax.f32 %v1908, %v2094
        %v2096 = vmul.f32 %v230, %v1752
        %v2097 = vmul.f32 %v239, %v1752
        %2099 = vrot.lane.b32.xlu0 %v2097, 127
        %v2100 = vpop.permute.xlu0 %2099
        %v2102 = vadd.f32 %v2096, %v2100
        %v2103 = vmul.f32 %v249, %v1752
        %2105 = vrot.lane.b32.xlu0 %v2103, 126
        %v2106 = vpop.permute.xlu0 %2105
        %v2108 = vadd.f32 %v2102, %v2106
        %v2109 = vmul.f32 %v259, %v1939
        %v2110 = vadd.f32 %v2108, %v2109
        %v2111 = vmul.f32 %v269, %v1939
        %2113 = vrot.lane.b32.xlu0 %v2111, 127
        %v2114 = vpop.permute.xlu0 %2113
        %v2116 = vadd.f32 %v2110, %v2114
        %v2117 = vmul.f32 %v279, %v1939
        %2119 = vrot.lane.b32.xlu0 %v2117, 126
        %v2120 = vpop.permute.xlu0 %2119
        %v2122 = vadd.f32 %v2116, %v2120
        %v2123 = vlaneseq
        %v2124 = vshrl.u32 %v2123, 7
        %v2125 = vsub.s32 3, %v2124
        %v2126 = vrot.slane %v217, %v2125
        %v2127 = vmul.f32 %v289, %v2126
        %v2128 = vadd.f32 %v2122, %v2127
        %v2129 = vmul.f32 %v299, %v2126
        %2131 = vrot.lane.b32.xlu0 %v2129, 127
        %v2132 = vpop.permute.xlu0 %2131
        %v2134 = vadd.f32 %v2128, %v2132
        %v2135 = vmul.f32 %v309, %v2126
        %2137 = vrot.lane.b32.xlu0 %v2135, 126
        %v2138 = vpop.permute.xlu0 %2137
        %v2140 = vadd.f32 %v2134, %v2138
        %v2141 = vmul.f32 %v319, %v1798
        %v2142 = vadd.f32 %v2140, %v2141
        %v2143 = vmul.f32 %v329, %v1798
        %2145 = vrot.lane.b32.xlu0 %v2143, 127
        %v2146 = vpop.permute.xlu0 %2145
        %v2148 = vadd.f32 %v2142, %v2146
        %v2149 = vmul.f32 %v339, %v1798
        %2151 = vrot.lane.b32.xlu0 %v2149, 126
        %v2152 = vpop.permute.xlu0 %2151
        %v2154 = vadd.f32 %v2148, %v2152
        %v2155 = vmul.f32 %v349, %v1985
        %v2156 = vadd.f32 %v2154, %v2155
        %v2157 = vmul.f32 %v359, %v1985
        %2159 = vrot.lane.b32.xlu0 %v2157, 127
        %v2160 = vpop.permute.xlu0 %2159
        %v2162 = vadd.f32 %v2156, %v2160
        %v2163 = vmul.f32 %v369, %v1985
        %2165 = vrot.lane.b32.xlu0 %v2163, 126
        %v2166 = vpop.permute.xlu0 %2165
        %v2168 = vadd.f32 %v2162, %v2166
        %v2169 = vlaneseq
        %v2170 = vshrl.u32 %v2169, 7
        %v2171 = vsub.s32 3, %v2170
        %v2172 = vrot.slane %v219, %v2171
        %v2173 = vmul.f32 %v379, %v2172
        %v2174 = vadd.f32 %v2168, %v2173
        %v2175 = vmul.f32 %v389, %v2172
        %2177 = vrot.lane.b32.xlu0 %v2175, 127
        %v2178 = vpop.permute.xlu0 %2177
        %v2180 = vadd.f32 %v2174, %v2178
        %v2181 = vmul.f32 %v399, %v2172
        %2183 = vrot.lane.b32.xlu0 %v2181, 126
        %v2184 = vpop.permute.xlu0 %2183
        %v2186 = vadd.f32 %v2180, %v2184
        %v2187 = vmul.f32 %v409, %v1844
        %v2188 = vadd.f32 %v2186, %v2187
        %v2189 = vmul.f32 %v419, %v1844
        %2191 = vrot.lane.b32.xlu0 %v2189, 127
        %v2192 = vpop.permute.xlu0 %2191
        %v2194 = vadd.f32 %v2188, %v2192
        %v2195 = vmul.f32 %v429, %v1844
        %2197 = vrot.lane.b32.xlu0 %v2195, 126
        %v2198 = vpop.permute.xlu0 %2197
        %v2200 = vadd.f32 %v2194, %v2198
        %v2201 = vmul.f32 %v439, %v2031
        %v2202 = vadd.f32 %v2200, %v2201
        %v2203 = vmul.f32 %v449, %v2031
        %2205 = vrot.lane.b32.xlu0 %v2203, 127
        %v2206 = vpop.permute.xlu0 %2205
        %v2208 = vadd.f32 %v2202, %v2206
        %v2209 = vmul.f32 %v459, %v2031
        %2211 = vrot.lane.b32.xlu0 %v2209, 126
        %v2212 = vpop.permute.xlu0 %2211
        %v2214 = vadd.f32 %v2208, %v2212
        %v2215 = vlaneseq
        %v2216 = vshrl.u32 %v2215, 7
        %v2217 = vsub.s32 3, %v2216
        %v2218 = vrot.slane %v221, %v2217
        %v2219 = vmul.f32 %v469, %v2218
        %v2220 = vadd.f32 %v2214, %v2219
        %v2221 = vmul.f32 %v479, %v2218
        %2223 = vrot.lane.b32.xlu0 %v2221, 127
        %v2224 = vpop.permute.xlu0 %2223
        %v2226 = vadd.f32 %v2220, %v2224
        %v2227 = vmul.f32 %v489, %v2218
        %2229 = vrot.lane.b32.xlu0 %v2227, 126
        %v2230 = vpop.permute.xlu0 %2229
        %v2232 = vadd.f32 %v2226, %v2230
        %v2233 = vmul.f32 %v499, %v1890
        %v2234 = vadd.f32 %v2232, %v2233
        %v2235 = vmul.f32 %v509, %v1890
        %2237 = vrot.lane.b32.xlu0 %v2235, 127
        %v2238 = vpop.permute.xlu0 %2237
        %v2240 = vadd.f32 %v2234, %v2238
        %v2241 = vmul.f32 %v519, %v1890
        %2243 = vrot.lane.b32.xlu0 %v2241, 126
        %v2244 = vpop.permute.xlu0 %2243
        %v2246 = vadd.f32 %v2240, %v2244
        %v2247 = vmul.f32 %v529, %v2077
        %v2248 = vadd.f32 %v2246, %v2247
        %v2249 = vmul.f32 %v539, %v2077
        %2251 = vrot.lane.b32.xlu0 %v2249, 127
        %v2252 = vpop.permute.xlu0 %2251
        %v2254 = vadd.f32 %v2248, %v2252
        %v2255 = vmul.f32 %v549, %v2077
        %2257 = vrot.lane.b32.xlu0 %v2255, 126
        %v2258 = vpop.permute.xlu0 %2257
        %v2260 = vadd.f32 %v2254, %v2258
        %v2261 = vlaneseq
        %v2262 = vshrl.u32 %v2261, 7
        %v2263 = vsub.s32 3, %v2262
        %v2264 = vrot.slane %v223, %v2263
        %v2265 = vmul.f32 %v559, %v2264
        %v2266 = vadd.f32 %v2260, %v2265
        %v2267 = vmul.f32 %v569, %v2264
        %2269 = vrot.lane.b32.xlu0 %v2267, 127
        %v2270 = vpop.permute.xlu0 %2269
        %v2272 = vadd.f32 %v2266, %v2270
        %v2273 = vmul.f32 %v579, %v2264
        %2275 = vrot.lane.b32.xlu0 %v2273, 126
        %v2276 = vpop.permute.xlu0 %2275
        %v2278 = vadd.f32 %v2272, %v2276
        %v2279 = vmul.f32 %v2278, %v590
        %v2280 = vadd.f32 %v2279, %v596
        %v2281 = vmax.f32 %v2280, 0.0
        %v2282 = vmax.f32 %v2095, %v2281
        %v2283 = vmul.f32 %v230, %v1939
        %v2284 = vmul.f32 %v239, %v1939
        %2286 = vrot.lane.b32.xlu0 %v2284, 127
        %v2287 = vpop.permute.xlu0 %2286
        %v2289 = vadd.f32 %v2283, %v2287
        %v2290 = vmul.f32 %v249, %v1939
        %2292 = vrot.lane.b32.xlu0 %v2290, 126
        %v2293 = vpop.permute.xlu0 %2292
        %v2295 = vadd.f32 %v2289, %v2293
        %v2296 = vmul.f32 %v259, %v2126
        %v2297 = vadd.f32 %v2295, %v2296
        %v2298 = vmul.f32 %v269, %v2126
        %2300 = vrot.lane.b32.xlu0 %v2298, 127
        %v2301 = vpop.permute.xlu0 %2300
        %v2303 = vadd.f32 %v2297, %v2301
        %v2304 = vmul.f32 %v279, %v2126
        %2306 = vrot.lane.b32.xlu0 %v2304, 126
        %v2307 = vpop.permute.xlu0 %2306
        %v2309 = vadd.f32 %v2303, %v2307
        %v2310 = vlaneseq
        %v2311 = vshrl.u32 %v2310, 7
        %v2312 = vsub.s32 4, %v2311
        %v2313 = vrot.slane %v217, %v2312
        %v2314 = vmul.f32 %v289, %v2313
        %v2315 = vadd.f32 %v2309, %v2314
        %v2316 = vmul.f32 %v299, %v2313
        %2318 = vrot.lane.b32.xlu0 %v2316, 127
        %v2319 = vpop.permute.xlu0 %2318
        %v2321 = vadd.f32 %v2315, %v2319
        %v2322 = vmul.f32 %v309, %v2313
        %2324 = vrot.lane.b32.xlu0 %v2322, 126
        %v2325 = vpop.permute.xlu0 %2324
        %v2327 = vadd.f32 %v2321, %v2325
        %v2328 = vmul.f32 %v319, %v1985
        %v2329 = vadd.f32 %v2327, %v2328
        %v2330 = vmul.f32 %v329, %v1985
        %2332 = vrot.lane.b32.xlu0 %v2330, 127
        %v2333 = vpop.permute.xlu0 %2332
        %v2335 = vadd.f32 %v2329, %v2333
        %v2336 = vmul.f32 %v339, %v1985
        %2338 = vrot.lane.b32.xlu0 %v2336, 126
        %v2339 = vpop.permute.xlu0 %2338
        %v2341 = vadd.f32 %v2335, %v2339
        %v2342 = vmul.f32 %v349, %v2172
        %v2343 = vadd.f32 %v2341, %v2342
        %v2344 = vmul.f32 %v359, %v2172
        %2346 = vrot.lane.b32.xlu0 %v2344, 127
        %v2347 = vpop.permute.xlu0 %2346
        %v2349 = vadd.f32 %v2343, %v2347
        %v2350 = vmul.f32 %v369, %v2172
        %2352 = vrot.lane.b32.xlu0 %v2350, 126
        %v2353 = vpop.permute.xlu0 %2352
        %v2355 = vadd.f32 %v2349, %v2353
        %v2356 = vlaneseq
        %v2357 = vshrl.u32 %v2356, 7
        %v2358 = vsub.s32 4, %v2357
        %v2359 = vrot.slane %v219, %v2358
        %v2360 = vmul.f32 %v379, %v2359
        %v2361 = vadd.f32 %v2355, %v2360
        %v2362 = vmul.f32 %v389, %v2359
        %2364 = vrot.lane.b32.xlu0 %v2362, 127
        %v2365 = vpop.permute.xlu0 %2364
        %v2367 = vadd.f32 %v2361, %v2365
        %v2368 = vmul.f32 %v399, %v2359
        %2370 = vrot.lane.b32.xlu0 %v2368, 126
        %v2371 = vpop.permute.xlu0 %2370
        %v2373 = vadd.f32 %v2367, %v2371
        %v2374 = vmul.f32 %v409, %v2031
        %v2375 = vadd.f32 %v2373, %v2374
        %v2376 = vmul.f32 %v419, %v2031
        %2378 = vrot.lane.b32.xlu0 %v2376, 127
        %v2379 = vpop.permute.xlu0 %2378
        %v2381 = vadd.f32 %v2375, %v2379
        %v2382 = vmul.f32 %v429, %v2031
        %2384 = vrot.lane.b32.xlu0 %v2382, 126
        %v2385 = vpop.permute.xlu0 %2384
        %v2387 = vadd.f32 %v2381, %v2385
        %v2388 = vmul.f32 %v439, %v2218
        %v2389 = vadd.f32 %v2387, %v2388
        %v2390 = vmul.f32 %v449, %v2218
        %2392 = vrot.lane.b32.xlu0 %v2390, 127
        %v2393 = vpop.permute.xlu0 %2392
        %v2395 = vadd.f32 %v2389, %v2393
        %v2396 = vmul.f32 %v459, %v2218
        %2398 = vrot.lane.b32.xlu0 %v2396, 126
        %v2399 = vpop.permute.xlu0 %2398
        %v2401 = vadd.f32 %v2395, %v2399
        %v2402 = vlaneseq
        %v2403 = vshrl.u32 %v2402, 7
        %v2404 = vsub.s32 4, %v2403
        %v2405 = vrot.slane %v221, %v2404
        %v2406 = vmul.f32 %v469, %v2405
        %v2407 = vadd.f32 %v2401, %v2406
        %v2408 = vmul.f32 %v479, %v2405
        %2410 = vrot.lane.b32.xlu0 %v2408, 127
        %v2411 = vpop.permute.xlu0 %2410
        %v2413 = vadd.f32 %v2407, %v2411
        %v2414 = vmul.f32 %v489, %v2405
        %2416 = vrot.lane.b32.xlu0 %v2414, 126
        %v2417 = vpop.permute.xlu0 %2416
        %v2419 = vadd.f32 %v2413, %v2417
        %v2420 = vmul.f32 %v499, %v2077
        %v2421 = vadd.f32 %v2419, %v2420
        %v2422 = vmul.f32 %v509, %v2077
        %2424 = vrot.lane.b32.xlu0 %v2422, 127
        %v2425 = vpop.permute.xlu0 %2424
        %v2427 = vadd.f32 %v2421, %v2425
        %v2428 = vmul.f32 %v519, %v2077
        %2430 = vrot.lane.b32.xlu0 %v2428, 126
        %v2431 = vpop.permute.xlu0 %2430
        %v2433 = vadd.f32 %v2427, %v2431
        %v2434 = vmul.f32 %v529, %v2264
        %v2435 = vadd.f32 %v2433, %v2434
        %v2436 = vmul.f32 %v539, %v2264
        %2438 = vrot.lane.b32.xlu0 %v2436, 127
        %v2439 = vpop.permute.xlu0 %2438
        %v2441 = vadd.f32 %v2435, %v2439
        %v2442 = vmul.f32 %v549, %v2264
        %2444 = vrot.lane.b32.xlu0 %v2442, 126
        %v2445 = vpop.permute.xlu0 %2444
        %v2447 = vadd.f32 %v2441, %v2445
        %v2448 = vlaneseq
        %v2449 = vshrl.u32 %v2448, 7
        %v2450 = vsub.s32 4, %v2449
        %v2451 = vrot.slane %v223, %v2450
        %v2452 = vmul.f32 %v559, %v2451
        %v2453 = vadd.f32 %v2447, %v2452
        %v2454 = vmul.f32 %v569, %v2451
        %2456 = vrot.lane.b32.xlu0 %v2454, 127
        %v2457 = vpop.permute.xlu0 %2456
        %v2459 = vadd.f32 %v2453, %v2457
        %v2460 = vmul.f32 %v579, %v2451
        %2462 = vrot.lane.b32.xlu0 %v2460, 126
        %v2463 = vpop.permute.xlu0 %2462
        %v2465 = vadd.f32 %v2459, %v2463
        %v2466 = vmul.f32 %v2465, %v590
        %v2467 = vadd.f32 %v2466, %v596
        %v2468 = vmax.f32 %v2467, 0.0
        %v2469 = vmax.f32 %v2282, %v2468
        %v2470 = vmul.f32 %v230, %v2126
        %v2471 = vmul.f32 %v239, %v2126
        %2473 = vrot.lane.b32.xlu0 %v2471, 127
        %v2474 = vpop.permute.xlu0 %2473
        %v2476 = vadd.f32 %v2470, %v2474
        %v2477 = vmul.f32 %v249, %v2126
        %2479 = vrot.lane.b32.xlu0 %v2477, 126
        %v2480 = vpop.permute.xlu0 %2479
        %v2482 = vadd.f32 %v2476, %v2480
        %v2483 = vmul.f32 %v259, %v2313
        %v2484 = vadd.f32 %v2482, %v2483
        %v2485 = vmul.f32 %v269, %v2313
        %2487 = vrot.lane.b32.xlu0 %v2485, 127
        %v2488 = vpop.permute.xlu0 %2487
        %v2490 = vadd.f32 %v2484, %v2488
        %v2491 = vmul.f32 %v279, %v2313
        %2493 = vrot.lane.b32.xlu0 %v2491, 126
        %v2494 = vpop.permute.xlu0 %2493
        %v2496 = vadd.f32 %v2490, %v2494
        %v2497 = vlaneseq
        %v2498 = vshrl.u32 %v2497, 7
        %v2499 = vsub.s32 5, %v2498
        %v2500 = vrot.slane %v217, %v2499
        %v2501 = vmul.f32 %v289, %v2500
        %v2502 = vadd.f32 %v2496, %v2501
        %v2503 = vmul.f32 %v299, %v2500
        %2505 = vrot.lane.b32.xlu0 %v2503, 127
        %v2506 = vpop.permute.xlu0 %2505
        %v2508 = vadd.f32 %v2502, %v2506
        %v2509 = vmul.f32 %v309, %v2500
        %2511 = vrot.lane.b32.xlu0 %v2509, 126
        %v2512 = vpop.permute.xlu0 %2511
        %v2514 = vadd.f32 %v2508, %v2512
        %v2515 = vmul.f32 %v319, %v2172
        %v2516 = vadd.f32 %v2514, %v2515
        %v2517 = vmul.f32 %v329, %v2172
        %2519 = vrot.lane.b32.xlu0 %v2517, 127
        %v2520 = vpop.permute.xlu0 %2519
        %v2522 = vadd.f32 %v2516, %v2520
        %v2523 = vmul.f32 %v339, %v2172
        %2525 = vrot.lane.b32.xlu0 %v2523, 126
        %v2526 = vpop.permute.xlu0 %2525
        %v2528 = vadd.f32 %v2522, %v2526
        %v2529 = vmul.f32 %v349, %v2359
        %v2530 = vadd.f32 %v2528, %v2529
        %v2531 = vmul.f32 %v359, %v2359
        %2533 = vrot.lane.b32.xlu0 %v2531, 127
        %v2534 = vpop.permute.xlu0 %2533
        %v2536 = vadd.f32 %v2530, %v2534
        %v2537 = vmul.f32 %v369, %v2359
        %2539 = vrot.lane.b32.xlu0 %v2537, 126
        %v2540 = vpop.permute.xlu0 %2539
        %v2542 = vadd.f32 %v2536, %v2540
        %v2543 = vlaneseq
        %v2544 = vshrl.u32 %v2543, 7
        %v2545 = vsub.s32 5, %v2544
        %v2546 = vrot.slane %v219, %v2545
        %v2547 = vmul.f32 %v379, %v2546
        %v2548 = vadd.f32 %v2542, %v2547
        %v2549 = vmul.f32 %v389, %v2546
        %2551 = vrot.lane.b32.xlu0 %v2549, 127
        %v2552 = vpop.permute.xlu0 %2551
        %v2554 = vadd.f32 %v2548, %v2552
        %v2555 = vmul.f32 %v399, %v2546
        %2557 = vrot.lane.b32.xlu0 %v2555, 126
        %v2558 = vpop.permute.xlu0 %2557
        %v2560 = vadd.f32 %v2554, %v2558
        %v2561 = vmul.f32 %v409, %v2218
        %v2562 = vadd.f32 %v2560, %v2561
        %v2563 = vmul.f32 %v419, %v2218
        %2565 = vrot.lane.b32.xlu0 %v2563, 127
        %v2566 = vpop.permute.xlu0 %2565
        %v2568 = vadd.f32 %v2562, %v2566
        %v2569 = vmul.f32 %v429, %v2218
        %2571 = vrot.lane.b32.xlu0 %v2569, 126
        %v2572 = vpop.permute.xlu0 %2571
        %v2574 = vadd.f32 %v2568, %v2572
        %v2575 = vmul.f32 %v439, %v2405
        %v2576 = vadd.f32 %v2574, %v2575
        %v2577 = vmul.f32 %v449, %v2405
        %2579 = vrot.lane.b32.xlu0 %v2577, 127
        %v2580 = vpop.permute.xlu0 %2579
        %v2582 = vadd.f32 %v2576, %v2580
        %v2583 = vmul.f32 %v459, %v2405
        %2585 = vrot.lane.b32.xlu0 %v2583, 126
        %v2586 = vpop.permute.xlu0 %2585
        %v2588 = vadd.f32 %v2582, %v2586
        %v2589 = vlaneseq
        %v2590 = vshrl.u32 %v2589, 7
        %v2591 = vsub.s32 5, %v2590
        %v2592 = vrot.slane %v221, %v2591
        %v2593 = vmul.f32 %v469, %v2592
        %v2594 = vadd.f32 %v2588, %v2593
        %v2595 = vmul.f32 %v479, %v2592
        %2597 = vrot.lane.b32.xlu0 %v2595, 127
        %v2598 = vpop.permute.xlu0 %2597
        %v2600 = vadd.f32 %v2594, %v2598
        %v2601 = vmul.f32 %v489, %v2592
        %2603 = vrot.lane.b32.xlu0 %v2601, 126
        %v2604 = vpop.permute.xlu0 %2603
        %v2606 = vadd.f32 %v2600, %v2604
        %v2607 = vmul.f32 %v499, %v2264
        %v2608 = vadd.f32 %v2606, %v2607
        %v2609 = vmul.f32 %v509, %v2264
        %2611 = vrot.lane.b32.xlu0 %v2609, 127
        %v2612 = vpop.permute.xlu0 %2611
        %v2614 = vadd.f32 %v2608, %v2612
        %v2615 = vmul.f32 %v519, %v2264
        %2617 = vrot.lane.b32.xlu0 %v2615, 126
        %v2618 = vpop.permute.xlu0 %2617
        %v2620 = vadd.f32 %v2614, %v2618
        %v2621 = vmul.f32 %v529, %v2451
        %v2622 = vadd.f32 %v2620, %v2621
        %v2623 = vmul.f32 %v539, %v2451
        %2625 = vrot.lane.b32.xlu0 %v2623, 127
        %v2626 = vpop.permute.xlu0 %2625
        %v2628 = vadd.f32 %v2622, %v2626
        %v2629 = vmul.f32 %v549, %v2451
        %2631 = vrot.lane.b32.xlu0 %v2629, 126
        %v2632 = vpop.permute.xlu0 %2631
        %v2634 = vadd.f32 %v2628, %v2632
        %v2635 = vlaneseq
        %v2636 = vshrl.u32 %v2635, 7
        %v2637 = vsub.s32 5, %v2636
        %v2638 = vrot.slane %v223, %v2637
        %v2639 = vmul.f32 %v559, %v2638
        %v2640 = vadd.f32 %v2634, %v2639
        %v2641 = vmul.f32 %v569, %v2638
        %2643 = vrot.lane.b32.xlu0 %v2641, 127
        %v2644 = vpop.permute.xlu0 %2643
        %v2646 = vadd.f32 %v2640, %v2644
        %v2647 = vmul.f32 %v579, %v2638
        %2649 = vrot.lane.b32.xlu0 %v2647, 126
        %v2650 = vpop.permute.xlu0 %2649
        %v2652 = vadd.f32 %v2646, %v2650
        %v2653 = vmul.f32 %v2652, %v590
        %v2654 = vadd.f32 %v2653, %v596
        %v2655 = vmax.f32 %v2654, 0.0
        %v2656 = vmax.f32 %v2469, %v2655
        %v2657 = vmul.f32 %v230, %v2313
        %v2658 = vmul.f32 %v239, %v2313
        %2660 = vrot.lane.b32.xlu0 %v2658, 127
        %v2661 = vpop.permute.xlu0 %2660
        %v2663 = vadd.f32 %v2657, %v2661
        %v2664 = vmul.f32 %v249, %v2313
        %2666 = vrot.lane.b32.xlu0 %v2664, 126
        %v2667 = vpop.permute.xlu0 %2666
        %v2669 = vadd.f32 %v2663, %v2667
        %v2670 = vmul.f32 %v259, %v2500
        %v2671 = vadd.f32 %v2669, %v2670
        %v2672 = vmul.f32 %v269, %v2500
        %2674 = vrot.lane.b32.xlu0 %v2672, 127
        %v2675 = vpop.permute.xlu0 %2674
        %v2677 = vadd.f32 %v2671, %v2675
        %v2678 = vmul.f32 %v279, %v2500
        %2680 = vrot.lane.b32.xlu0 %v2678, 126
        %v2681 = vpop.permute.xlu0 %2680
        %v2683 = vadd.f32 %v2677, %v2681
        %v2684 = vlaneseq
        %v2685 = vshrl.u32 %v2684, 7
        %v2686 = vsub.s32 6, %v2685
        %v2687 = vrot.slane %v217, %v2686
        %v2688 = vmul.f32 %v289, %v2687
        %v2689 = vadd.f32 %v2683, %v2688
        %v2690 = vmul.f32 %v299, %v2687
        %2692 = vrot.lane.b32.xlu0 %v2690, 127
        %v2693 = vpop.permute.xlu0 %2692
        %v2695 = vadd.f32 %v2689, %v2693
        %v2696 = vmul.f32 %v309, %v2687
        %2698 = vrot.lane.b32.xlu0 %v2696, 126
        %v2699 = vpop.permute.xlu0 %2698
        %v2701 = vadd.f32 %v2695, %v2699
        %v2702 = vmul.f32 %v319, %v2359
        %v2703 = vadd.f32 %v2701, %v2702
        %v2704 = vmul.f32 %v329, %v2359
        %2706 = vrot.lane.b32.xlu0 %v2704, 127
        %v2707 = vpop.permute.xlu0 %2706
        %v2709 = vadd.f32 %v2703, %v2707
        %v2710 = vmul.f32 %v339, %v2359
        %2712 = vrot.lane.b32.xlu0 %v2710, 126
        %v2713 = vpop.permute.xlu0 %2712
        %v2715 = vadd.f32 %v2709, %v2713
        %v2716 = vmul.f32 %v349, %v2546
        %v2717 = vadd.f32 %v2715, %v2716
        %v2718 = vmul.f32 %v359, %v2546
        %2720 = vrot.lane.b32.xlu0 %v2718, 127
        %v2721 = vpop.permute.xlu0 %2720
        %v2723 = vadd.f32 %v2717, %v2721
        %v2724 = vmul.f32 %v369, %v2546
        %2726 = vrot.lane.b32.xlu0 %v2724, 126
        %v2727 = vpop.permute.xlu0 %2726
        %v2729 = vadd.f32 %v2723, %v2727
        %v2730 = vlaneseq
        %v2731 = vshrl.u32 %v2730, 7
        %v2732 = vsub.s32 6, %v2731
        %v2733 = vrot.slane %v219, %v2732
        %v2734 = vmul.f32 %v379, %v2733
        %v2735 = vadd.f32 %v2729, %v2734
        %v2736 = vmul.f32 %v389, %v2733
        %2738 = vrot.lane.b32.xlu0 %v2736, 127
        %v2739 = vpop.permute.xlu0 %2738
        %v2741 = vadd.f32 %v2735, %v2739
        %v2742 = vmul.f32 %v399, %v2733
        %2744 = vrot.lane.b32.xlu0 %v2742, 126
        %v2745 = vpop.permute.xlu0 %2744
        %v2747 = vadd.f32 %v2741, %v2745
        %v2748 = vmul.f32 %v409, %v2405
        %v2749 = vadd.f32 %v2747, %v2748
        %v2750 = vmul.f32 %v419, %v2405
        %2752 = vrot.lane.b32.xlu0 %v2750, 127
        %v2753 = vpop.permute.xlu0 %2752
        %v2755 = vadd.f32 %v2749, %v2753
        %v2756 = vmul.f32 %v429, %v2405
        %2758 = vrot.lane.b32.xlu0 %v2756, 126
        %v2759 = vpop.permute.xlu0 %2758
        %v2761 = vadd.f32 %v2755, %v2759
        %v2762 = vmul.f32 %v439, %v2592
        %v2763 = vadd.f32 %v2761, %v2762
        %v2764 = vmul.f32 %v449, %v2592
        %2766 = vrot.lane.b32.xlu0 %v2764, 127
        %v2767 = vpop.permute.xlu0 %2766
        %v2769 = vadd.f32 %v2763, %v2767
        %v2770 = vmul.f32 %v459, %v2592
        %2772 = vrot.lane.b32.xlu0 %v2770, 126
        %v2773 = vpop.permute.xlu0 %2772
        %v2775 = vadd.f32 %v2769, %v2773
        %v2776 = vlaneseq
        %v2777 = vshrl.u32 %v2776, 7
        %v2778 = vsub.s32 6, %v2777
        %v2779 = vrot.slane %v221, %v2778
        %v2780 = vmul.f32 %v469, %v2779
        %v2781 = vadd.f32 %v2775, %v2780
        %v2782 = vmul.f32 %v479, %v2779
        %2784 = vrot.lane.b32.xlu0 %v2782, 127
        %v2785 = vpop.permute.xlu0 %2784
        %v2787 = vadd.f32 %v2781, %v2785
        %v2788 = vmul.f32 %v489, %v2779
        %2790 = vrot.lane.b32.xlu0 %v2788, 126
        %v2791 = vpop.permute.xlu0 %2790
        %v2793 = vadd.f32 %v2787, %v2791
        %v2794 = vmul.f32 %v499, %v2451
        %v2795 = vadd.f32 %v2793, %v2794
        %v2796 = vmul.f32 %v509, %v2451
        %2798 = vrot.lane.b32.xlu0 %v2796, 127
        %v2799 = vpop.permute.xlu0 %2798
        %v2801 = vadd.f32 %v2795, %v2799
        %v2802 = vmul.f32 %v519, %v2451
        %2804 = vrot.lane.b32.xlu0 %v2802, 126
        %v2805 = vpop.permute.xlu0 %2804
        %v2807 = vadd.f32 %v2801, %v2805
        %v2808 = vmul.f32 %v529, %v2638
        %v2809 = vadd.f32 %v2807, %v2808
        %v2810 = vmul.f32 %v539, %v2638
        %2812 = vrot.lane.b32.xlu0 %v2810, 127
        %v2813 = vpop.permute.xlu0 %2812
        %v2815 = vadd.f32 %v2809, %v2813
        %v2816 = vmul.f32 %v549, %v2638
        %2818 = vrot.lane.b32.xlu0 %v2816, 126
        %v2819 = vpop.permute.xlu0 %2818
        %v2821 = vadd.f32 %v2815, %v2819
        %v2822 = vlaneseq
        %v2823 = vshrl.u32 %v2822, 7
        %v2824 = vsub.s32 6, %v2823
        %v2825 = vrot.slane %v223, %v2824
        %v2826 = vmul.f32 %v559, %v2825
        %v2827 = vadd.f32 %v2821, %v2826
        %v2828 = vmul.f32 %v569, %v2825
        %2830 = vrot.lane.b32.xlu0 %v2828, 127
        %v2831 = vpop.permute.xlu0 %2830
        %v2833 = vadd.f32 %v2827, %v2831
        %v2834 = vmul.f32 %v579, %v2825
        %2836 = vrot.lane.b32.xlu0 %v2834, 126
        %v2837 = vpop.permute.xlu0 %2836
        %v2839 = vadd.f32 %v2833, %v2837
        %v2840 = vmul.f32 %v2839, %v590
        %v2841 = vadd.f32 %v2840, %v596
        %v2842 = vmax.f32 %v2841, 0.0
        %v2843 = vmax.f32 %v2656, %v2842
        %v2844 = vmul.f32 %v230, %v2500
        %v2845 = vmul.f32 %v239, %v2500
        %2847 = vrot.lane.b32.xlu0 %v2845, 127
        %v2848 = vpop.permute.xlu0 %2847
        %v2850 = vadd.f32 %v2844, %v2848
        %v2851 = vmul.f32 %v249, %v2500
        %2853 = vrot.lane.b32.xlu0 %v2851, 126
        %v2854 = vpop.permute.xlu0 %2853
        %v2856 = vadd.f32 %v2850, %v2854
        %v2857 = vmul.f32 %v259, %v2687
        %v2858 = vadd.f32 %v2856, %v2857
        %v2859 = vmul.f32 %v269, %v2687
        %2861 = vrot.lane.b32.xlu0 %v2859, 127
        %v2862 = vpop.permute.xlu0 %2861
        %v2864 = vadd.f32 %v2858, %v2862
        %v2865 = vmul.f32 %v279, %v2687
        %2867 = vrot.lane.b32.xlu0 %v2865, 126
        %v2868 = vpop.permute.xlu0 %2867
        %v2870 = vadd.f32 %v2864, %v2868
        %v2871 = vlaneseq
        %v2872 = vshrl.u32 %v2871, 7
        %v2873 = vsub.s32 7, %v2872
        %v2874 = vrot.slane %v217, %v2873
        %v2875 = vmul.f32 %v289, %v2874
        %v2876 = vadd.f32 %v2870, %v2875
        %v2877 = vmul.f32 %v299, %v2874
        %2879 = vrot.lane.b32.xlu0 %v2877, 127
        %v2880 = vpop.permute.xlu0 %2879
        %v2882 = vadd.f32 %v2876, %v2880
        %v2883 = vmul.f32 %v309, %v2874
        %2885 = vrot.lane.b32.xlu0 %v2883, 126
        %v2886 = vpop.permute.xlu0 %2885
        %v2888 = vadd.f32 %v2882, %v2886
        %v2889 = vmul.f32 %v319, %v2546
        %v2890 = vadd.f32 %v2888, %v2889
        %v2891 = vmul.f32 %v329, %v2546
        %2893 = vrot.lane.b32.xlu0 %v2891, 127
        %v2894 = vpop.permute.xlu0 %2893
        %v2896 = vadd.f32 %v2890, %v2894
        %v2897 = vmul.f32 %v339, %v2546
        %2899 = vrot.lane.b32.xlu0 %v2897, 126
        %v2900 = vpop.permute.xlu0 %2899
        %v2902 = vadd.f32 %v2896, %v2900
        %v2903 = vmul.f32 %v349, %v2733
        %v2904 = vadd.f32 %v2902, %v2903
        %v2905 = vmul.f32 %v359, %v2733
        %2907 = vrot.lane.b32.xlu0 %v2905, 127
        %v2908 = vpop.permute.xlu0 %2907
        %v2910 = vadd.f32 %v2904, %v2908
        %v2911 = vmul.f32 %v369, %v2733
        %2913 = vrot.lane.b32.xlu0 %v2911, 126
        %v2914 = vpop.permute.xlu0 %2913
        %v2916 = vadd.f32 %v2910, %v2914
        %v2917 = vlaneseq
        %v2918 = vshrl.u32 %v2917, 7
        %v2919 = vsub.s32 7, %v2918
        %v2920 = vrot.slane %v219, %v2919
        %v2921 = vmul.f32 %v379, %v2920
        %v2922 = vadd.f32 %v2916, %v2921
        %v2923 = vmul.f32 %v389, %v2920
        %2925 = vrot.lane.b32.xlu0 %v2923, 127
        %v2926 = vpop.permute.xlu0 %2925
        %v2928 = vadd.f32 %v2922, %v2926
        %v2929 = vmul.f32 %v399, %v2920
        %2931 = vrot.lane.b32.xlu0 %v2929, 126
        %v2932 = vpop.permute.xlu0 %2931
        %v2934 = vadd.f32 %v2928, %v2932
        %v2935 = vmul.f32 %v409, %v2592
        %v2936 = vadd.f32 %v2934, %v2935
        %v2937 = vmul.f32 %v419, %v2592
        %2939 = vrot.lane.b32.xlu0 %v2937, 127
        %v2940 = vpop.permute.xlu0 %2939
        %v2942 = vadd.f32 %v2936, %v2940
        %v2943 = vmul.f32 %v429, %v2592
        %2945 = vrot.lane.b32.xlu0 %v2943, 126
        %v2946 = vpop.permute.xlu0 %2945
        %v2948 = vadd.f32 %v2942, %v2946
        %v2949 = vmul.f32 %v439, %v2779
        %v2950 = vadd.f32 %v2948, %v2949
        %v2951 = vmul.f32 %v449, %v2779
        %2953 = vrot.lane.b32.xlu0 %v2951, 127
        %v2954 = vpop.permute.xlu0 %2953
        %v2956 = vadd.f32 %v2950, %v2954
        %v2957 = vmul.f32 %v459, %v2779
        %2959 = vrot.lane.b32.xlu0 %v2957, 126
        %v2960 = vpop.permute.xlu0 %2959
        %v2962 = vadd.f32 %v2956, %v2960
        %v2963 = vlaneseq
        %v2964 = vshrl.u32 %v2963, 7
        %v2965 = vsub.s32 7, %v2964
        %v2966 = vrot.slane %v221, %v2965
        %v2967 = vmul.f32 %v469, %v2966
        %v2968 = vadd.f32 %v2962, %v2967
        %v2969 = vmul.f32 %v479, %v2966
        %2971 = vrot.lane.b32.xlu0 %v2969, 127
        %v2972 = vpop.permute.xlu0 %2971
        %v2974 = vadd.f32 %v2968, %v2972
        %v2975 = vmul.f32 %v489, %v2966
        %2977 = vrot.lane.b32.xlu0 %v2975, 126
        %v2978 = vpop.permute.xlu0 %2977
        %v2980 = vadd.f32 %v2974, %v2978
        %v2981 = vmul.f32 %v499, %v2638
        %v2982 = vadd.f32 %v2980, %v2981
        %v2983 = vmul.f32 %v509, %v2638
        %2985 = vrot.lane.b32.xlu0 %v2983, 127
        %v2986 = vpop.permute.xlu0 %2985
        %v2988 = vadd.f32 %v2982, %v2986
        %v2989 = vmul.f32 %v519, %v2638
        %2991 = vrot.lane.b32.xlu0 %v2989, 126
        %v2992 = vpop.permute.xlu0 %2991
        %v2994 = vadd.f32 %v2988, %v2992
        %v2995 = vmul.f32 %v529, %v2825
        %v2996 = vadd.f32 %v2994, %v2995
        %v2997 = vmul.f32 %v539, %v2825
        %2999 = vrot.lane.b32.xlu0 %v2997, 127
        %v3000 = vpop.permute.xlu0 %2999
        %v3002 = vadd.f32 %v2996, %v3000
        %v3003 = vmul.f32 %v549, %v2825
        %3005 = vrot.lane.b32.xlu0 %v3003, 126
        %v3006 = vpop.permute.xlu0 %3005
        %v3008 = vadd.f32 %v3002, %v3006
        %v3009 = vlaneseq
        %v3010 = vshrl.u32 %v3009, 7
        %v3011 = vsub.s32 7, %v3010
        %v3012 = vrot.slane %v223, %v3011
        %v3013 = vmul.f32 %v559, %v3012
        %v3014 = vadd.f32 %v3008, %v3013
        %v3015 = vmul.f32 %v569, %v3012
        %3017 = vrot.lane.b32.xlu0 %v3015, 127
        %v3018 = vpop.permute.xlu0 %3017
        %v3020 = vadd.f32 %v3014, %v3018
        %v3021 = vmul.f32 %v579, %v3012
        %3023 = vrot.lane.b32.xlu0 %v3021, 126
        %v3024 = vpop.permute.xlu0 %3023
        %v3026 = vadd.f32 %v3020, %v3024
        %v3027 = vmul.f32 %v3026, %v590
        %v3028 = vadd.f32 %v3027, %v596
        %v3029 = vmax.f32 %v3028, 0.0
        %v3030 = vmax.f32 %v2843, %v3029
        %vm3031 = vcmask 130048
        %3032 = vst.msk [vmem:[%s215] sm:$0xff] %vm3031, %v3030
        %s3033 = sand.u32 %s118, 1
        %s3034 = scalar_lea.sflag [#allocation4], %s3033
        %s3035 = sand.u32 %s118, 1
        %s3036 = smul.addr %s3035, 8
        %s3037 = scalar_lea.vmem [#allocation5], %s3036
        // Predicated region
        $region41: #{tpu_custom_call.1} parent=35 // pred_check
          %p3038 = pneg %p128
        $region42: #{tpu_custom_call.1} parent=35 // pred_check_branch
          %3040 = sbr.rel (%p3038) target = $region44
        $region43: #{tpu_custom_call.1} parent=35 // pred_region
          %s3042 = ssub.s32 128, 128
          %3043 = vsyncadd %s3034, %s3042
          %s3044 = smul.addr %s21, 128
          %s3045 = scalar_lea.hbm %s4, %s3044
          %s3047 = sshll.u32 %s3037, 4
          %s3048 = int_to_ptr.vmem [resolvable:$true] %s3047
          %3050 = dma.vmem_to_hbm [thread:$0]  %s3048, 128, %s3045, %s3034
        $region44: #{tpu_custom_call.1} parent=35 // pred_fallthru
          _
      $region36: #{tpu_custom_call.1} parent=5 // pred_fallthru
        _
      %p3051 = scmp.le.s32.totalorder 2, %s16
      // Predicated region
      $region45: #{tpu_custom_call.1} parent=5 // pred_check
        %p3052 = pneg %p3051
      $region46: #{tpu_custom_call.1} parent=5 // pred_check_branch
        %3054 = sbr.rel (%p3052) target = $region48
      $region47: #{tpu_custom_call.1} parent=5 // pred_region
        %s3055 = ssub.s32 %s16, 2
        // Predicated region
        $region49: #{tpu_custom_call.1} parent=47 // pred_check
          %p3056 = pneg %p134
        $region50: #{tpu_custom_call.1} parent=47 // pred_check_branch
          %3058 = sbr.rel (%p3056) target = $region52
        $region51: #{tpu_custom_call.1} parent=47 // pred_region
          %s3059 = sand.u32 %s119, 1
          %s3060 = scalar_lea.sflag [#allocation4], %s3059
          %s3061 = sand.u32 %s119, 1
          %s3062 = smul.addr %s3061, 8
          %s3063 = scalar_lea.vmem [#allocation5], %s3062
          %3064 = dma.done %s3060, 128
        $region52: #{tpu_custom_call.1} parent=47 // pred_fallthru
          _
      $region48: #{tpu_custom_call.1} parent=5 // pred_fallthru
        _
    $region6: #{tpu_custom_call.1} parent=1 // loop_footer
      %s20 = sadd.s32 1, %s16
    $region7: #{tpu_custom_call.1} parent=1 // loop_footer_branch
      %15 = sbr.rel target = $region3
    $region8: #{tpu_custom_call.1} parent=1 // loop_exit
      _
    %3065 = vsyncpa [#allocation3], 1
    %s3066 = scalar_lea.sflag [#allocation3], 1
    %3067 = vsyncpa %s3066, 1
    %3068 = vsyncpa [#allocation4], 1
    %s3069 = scalar_lea.sflag [#allocation4], 1
    %3070 = vsyncpa %s3069, 1

</llo_original>
